<compile_context>
chip_gen: v7x
topology: tpu7x:2x2x1
jax: 0.10.0
libtpu: 0.0.40
codegen_flags: <defaults>
</compile_context>

<pallas_src>
import math

import jax
import jax.numpy as jnp
from jax import lax
from jax.experimental import pallas as pl
from jax.experimental.pallas import tpu as pltpu

E = 32          # embedding_dim == GRU hidden size
V = 64          # vocab_size
B = 2           # batch
T = 10          # eval-mode decode length (max_length = 10)
VP = 128        # vocab padded to one full lane width
ENC_SEQ = 8     # encoder_output seq length (only its batch dim is used)
NEG = -1e30     # fill value for padded vocab lanes (never wins the argmax)


def tag_decoder_kernel(w0_ref, b0_ref, w1_ref, b1_ref,
                       w_p1_ref, b_p1_ref, w_p2_ref, b_p2_ref,
                       h0_ref, h1_ref, out_ref):
    f32 = jnp.float32
    iota = lax.broadcasted_iota(jnp.int32, (B, VP), 1)   # hoisted broadcast

    def mm(a, b):
        return jnp.dot(a, b, preferred_element_type=f32)

    def gru_layer(x, h, w_ref, b_ref):
        # x: (B, Kx), h: (B, 2E) = [h_fwd | h_bwd]
        # fused gate columns: [ r_f r_b z_f z_b (gi+gh) | n_i (2E) | n_h (2E) ]
        g = mm(jnp.concatenate([x, h], axis=-1), w_ref[...]) + b_ref[...]
        rz = jax.nn.sigmoid(g[:, :4 * E])                 # one 128-lane sigmoid
        r = rz[:, :2 * E]
        z = rz[:, 2 * E:]
        n = jnp.tanh(g[:, 4 * E:6 * E] + r * g[:, 6 * E:])
        return (1.0 - z) * n + z * h                      # == concat(fwd, bwd) output

    def step(t, carry):
        onehot, h0, h1 = carry                            # (B,VP), (B,2E), (B,2E)

        # --- 2-layer bidirectional GRU on a length-1 sequence -----------------
        h0n = gru_layer(onehot, h0, w0_ref, b0_ref)       # embedding folded into w0
        h1n = gru_layer(h0n, h1, w1_ref, b1_ref)

        # --- attention over a length-1 sequence is exactly 1.0 ----------------
        # context == GRU output == h1n (no ops needed)

        # --- output projection (Dropout identity in eval mode) ----------------
        p_hid = jnp.maximum(mm(h1n, w_p1_ref[...]) + b_p1_ref[...], 0.0)
        pred = mm(p_hid, w_p2_ref[...]) + b_p2_ref[...]   # (B, 128), lanes >=V stay NEG
        out_ref[t] = pred                                 # lane-dense store

        # --- greedy argmax (first-max index) -> next one-hot input ------------
        m = jnp.max(pred, axis=-1, keepdims=True)
        idx = jnp.min(jnp.where(pred == m, iota, VP), axis=-1, keepdims=True)
        nxt = (iota == idx).astype(f32)
        return (nxt, h0n, h1n)

    onehot0 = (iota == 0).astype(f32)                     # decoder_input = zeros(B,1,long)
    carry0 = (onehot0, h0_ref[...], h1_ref[...])
    lax.fori_loop(0, T, step, carry0, unroll=True)        # fixed trip count -> unrolled


def init_params(key):
    """Deterministic synthetic parameters in PyTorch layouts."""
    bound = 1.0 / math.sqrt(E)
    keys = iter(jax.random.split(key, 32))

    def u(shape):
        return jax.random.uniform(next(keys), shape, jnp.float32, -bound, bound)

    p = {"emb": jax.random.normal(next(keys), (V, E), jnp.float32)}
    for d in ("", "_rev"):
        p[f"w_ih_l0{d}"] = u((3 * E, E))      # gate rows stacked [r, z, n]
        p[f"w_hh_l0{d}"] = u((3 * E, E))
        p[f"b_ih_l0{d}"] = u((3 * E,))
        p[f"b_hh_l0{d}"] = u((3 * E,))
        p[f"w_ih_l1{d}"] = u((3 * E, 2 * E))
        p[f"w_hh_l1{d}"] = u((3 * E, E))
        p[f"b_ih_l1{d}"] = u((3 * E,))
        p[f"b_hh_l1{d}"] = u((3 * E,))
    p["w_p1"], p["b_p1"] = u((E, 2 * E)), u((E,))   # output_projection[0]
    p["w_p2"], p["b_p2"] = u((V, E)), u((V,))       # output_projection[3]
    # attention.{0,2} parameters are intentionally omitted: the softmax over a
    # length-1 sequence is exactly 1.0, so they cannot affect the forward output.
    return p


def _prep(p, hidden):
    """Offline weight regrouping / fusion (runs once, outside the kernel)."""
    hp = lax.Precision.HIGHEST

    def t(w):
        return jnp.transpose(w)

    def gate_cols(w_f, w_b):
        # torch (3E, K), gate rows [r,z,n] -> (K, 6E) cols [r_f,r_b,z_f,z_b,n_f,n_b]
        cols = []
        for g in range(3):
            cols += [t(w_f[g * E:(g + 1) * E]), t(w_b[g * E:(g + 1) * E])]
        return jnp.concatenate(cols, axis=1)

    def gate_bias(b_f, b_b):
        segs = []
        for g in range(3):
            segs += [b_f[g * E:(g + 1) * E], b_b[g * E:(g + 1) * E]]
        return jnp.concatenate(segs)                                 # (6E,)

    def hh_block_diag(w_f, w_b):
        # per-direction torch (3E, E) -> (2E, 6E); rows 0:E act on h_fwd, E:2E on h_bwd
        z = jnp.zeros((E, E), jnp.float32)
        top, bot = [], []
        for g in range(3):
            top += [t(w_f[g * E:(g + 1) * E]), z]
            bot += [z, t(w_b[g * E:(g + 1) * E])]
        return jnp.concatenate([jnp.concatenate(top, 1),
                                jnp.concatenate(bot, 1)], 0)

    def fuse_layer(w_i, b_i, w_h, b_h, k_in):
        # w_i: (k_in, 6E), w_h: (2E, 6E)  ->  W: (k_in+2E, 8E), b: (1, 8E)
        # fused column layout: [ rz (4E, gi+gh summed) | n_i (2E) | n_h (2E) ]
        K = k_in + 2 * E
        W = jnp.zeros((K, 8 * E), jnp.float32)
        W = W.at[:k_in, :4 * E].set(w_i[:, :4 * E])
        W = W.at[k_in:, :4 * E].set(w_h[:, :4 * E])
        W = W.at[:k_in, 4 * E:6 * E].set(w_i[:, 4 * E:])
        W = W.at[k_in:, 6 * E:].set(w_h[:, 4 * E:])
        b = jnp.concatenate([b_i[:4 * E] + b_h[:4 * E],
                             b_i[4 * E:], b_h[4 * E:]])[None, :]
        return W, b

    # layer 0: fold the embedding lookup into the input weight:
    #   (onehot @ emb) @ W == onehot @ (emb @ W);  pad one-hot K to VP=128
    w_i0 = jnp.dot(p["emb"], gate_cols(p["w_ih_l0"], p["w_ih_l0_rev"]),
                   precision=hp)                                     # (V, 6E)
    w_i0 = jnp.zeros((VP, 6 * E), jnp.float32).at[:V].set(w_i0)
    b_i0 = gate_bias(p["b_ih_l0"], p["b_ih_l0_rev"])
    w_h0 = hh_block_diag(p["w_hh_l0"], p["w_hh_l0_rev"])
    b_h0 = gate_bias(p["b_hh_l0"], p["b_hh_l0_rev"])
    w0, b0 = fuse_layer(w_i0, b_i0, w_h0, b_h0, VP)                  # (192, 256)

    w_i1 = gate_cols(p["w_ih_l1"], p["w_ih_l1_rev"])                 # (2E, 6E)
    b_i1 = gate_bias(p["b_ih_l1"], p["b_ih_l1_rev"])
    w_h1 = hh_block_diag(p["w_hh_l1"], p["w_hh_l1_rev"])
    b_h1 = gate_bias(p["b_hh_l1"], p["b_hh_l1_rev"])
    w1, b1 = fuse_layer(w_i1, b_i1, w_h1, b_h1, 2 * E)               # (128, 256)

    w_p1 = t(p["w_p1"])                                              # (2E, E)
    b_p1 = p["b_p1"][None, :]
    w_p2 = jnp.zeros((E, VP), jnp.float32).at[:, :V].set(t(p["w_p2"]))
    b_p2 = jnp.full((1, VP), NEG, jnp.float32).at[0, :V].set(p["b_p2"])

    # torch hidden layout: (num_layers*dirs, B, E) = [l0_fwd, l0_bwd, l1_fwd, l1_bwd]
    h0c = jnp.concatenate([hidden[0], hidden[1]], axis=-1)           # (B, 2E)
    h1c = jnp.concatenate([hidden[2], hidden[3]], axis=-1)           # (B, 2E)
    return (w0, b0, w1, b1, w_p1, b_p1, w_p2, b_p2, h0c, h1c)


@jax.jit
def tag_decoder_forward(params, hidden):
    """Full autoregressive eval-mode decode in one Pallas kernel invocation."""
    args = _prep(params, hidden)
    out_tbv = pl.pallas_call(
        tag_decoder_kernel,
        out_shape=jax.ShapeDtypeStruct((T, B, VP), jnp.float32),
        in_specs=[pl.BlockSpec(memory_space=pltpu.MemorySpace.VMEM)] * len(args),
        out_specs=pl.BlockSpec(memory_space=pltpu.MemorySpace.VMEM),
    )(*args)
    # drop vocab padding, go batch_first like torch: (B, T, V)
    return jnp.transpose(out_tbv[:, :, :V], (1, 0, 2))
    # Note (v7x): with a larger effective batch, add a leading 'parallel' grid
    # axis over batch tiles to use the second TensorCore; at B=2 it stays single-core.


if __name__ == "__main__":
    key = jax.random.PRNGKey(0)
    k_par, k_enc, k_hid = jax.random.split(key, 3)

    params = init_params(k_par)
    # encoder_output only contributes its batch dimension in the torch forward;
    # it never enters the compute, so it is not a kernel input.
    encoder_output = jax.random.normal(k_enc, (B, ENC_SEQ, 2 * E), jnp.float32)
    hidden = jax.random.normal(k_hid, (4, B, E), jnp.float32)   # (layers*dirs, B, E)

    out = tag_decoder_forward(params, hidden)
    out = jax.block_until_ready(out)

    assert out.shape == (B, T, V), out.shape
    assert bool(jnp.all(jnp.isfinite(out)))
    print("KERNEL_OK")
</pallas_src>

<mosaic_0001>
module attributes {stable_mosaic.version = 11 : i64} {
  func.func @tag_decoder_kernel(%arg0: memref<192x256xf32, #tpu.memory_space<vmem>>, %arg1: memref<1x256xf32, #tpu.memory_space<vmem>>, %arg2: memref<128x256xf32, #tpu.memory_space<vmem>>, %arg3: memref<1x256xf32, #tpu.memory_space<vmem>>, %arg4: memref<64x32xf32, #tpu.memory_space<vmem>>, %arg5: memref<1x32xf32, #tpu.memory_space<vmem>>, %arg6: memref<32x128xf32, #tpu.memory_space<vmem>>, %arg7: memref<1x128xf32, #tpu.memory_space<vmem>>, %arg8: memref<2x64xf32, #tpu.memory_space<vmem>>, %arg9: memref<2x64xf32, #tpu.memory_space<vmem>>, %arg10: memref<10x2x128xf32, #tpu.memory_space<vmem>>) attributes {dimension_semantics = [], scalar_prefetch = 0 : i64, scratch_operands = 0 : i64, tpu.core_type = #tpu.core_type<tc>} {
    %0 = tpu.iota {dimensions = array<i32: 1>} : vector<2x128xi32>
    %c0_i32 = arith.constant 0 : i32
    %1 = vector.broadcast %c0_i32 : i32 to vector<2x128xi32>
    %2 = arith.cmpi eq, %0, %1 : vector<2x128xi32>
    %3 = arith.extui %2 : vector<2x128xi1> to vector<2x128xi32>
    %4 = arith.sitofp %3 : vector<2x128xi32> to vector<2x128xf32>
    %c0 = arith.constant 0 : index
    %c0_0 = arith.constant 0 : index
    %5 = vector.load %arg8[%c0, %c0_0] : memref<2x64xf32, #tpu.memory_space<vmem>>, vector<2x64xf32>
    %c0_1 = arith.constant 0 : index
    %c0_2 = arith.constant 0 : index
    %6 = vector.load %arg9[%c0_1, %c0_2] : memref<2x64xf32, #tpu.memory_space<vmem>>, vector<2x64xf32>
    %c0_i32_3 = arith.constant 0 : i32
    %7 = tpu.concatenate %4, %5 in 1 : vector<2x128xf32>, vector<2x64xf32> -> vector<2x192xf32>
    %c0_4 = arith.constant 0 : index
    %c0_5 = arith.constant 0 : index
    %8 = vector.load %arg0[%c0_4, %c0_5] : memref<192x256xf32, #tpu.memory_space<vmem>>, vector<192x256xf32>
    %cst = arith.constant dense<0.000000e+00> : vector<2x256xf32>
    %9 = tpu.matmul %7, %8, %cst {dimension_numbers = #tpu.dot_dimension_numbers<[1], [0], [0], [1], [0, 0, 1, 1], [], []>} : vector<2x192xf32>, vector<192x256xf32>, vector<2x256xf32> -> vector<2x256xf32>
    %c0_6 = arith.constant 0 : index
    %c0_7 = arith.constant 0 : index
    %10 = vector.load %arg1[%c0_6, %c0_7] : memref<1x256xf32, #tpu.memory_space<vmem>>, vector<1x256xf32>
    %11 = vector.broadcast %10 : vector<1x256xf32> to vector<2x256xf32>
    %12 = arith.addf %9, %11 : vector<2x256xf32>
    %13 = vector.extract_strided_slice %12 {offsets = [0, 0], sizes = [2, 128], strides = [1, 1]} : vector<2x256xf32> to vector<2x128xf32>
    %14 = arith.negf %13 : vector<2x128xf32>
    %15 = math.exp %14 : vector<2x128xf32>
    %cst_8 = arith.constant 1.000000e+00 : f32
    %16 = vector.broadcast %cst_8 : f32 to vector<2x128xf32>
    %17 = arith.addf %16, %15 : vector<2x128xf32>
    %18 = arith.divf %16, %17 : vector<2x128xf32>
    %19 = vector.extract_strided_slice %18 {offsets = [0, 0], sizes = [2, 64], strides = [1, 1]} : vector<2x128xf32> to vector<2x64xf32>
    %20 = vector.extract_strided_slice %18 {offsets = [0, 64], sizes = [2, 64], strides = [1, 1]} : vector<2x128xf32> to vector<2x64xf32>
    %21 = vector.extract_strided_slice %12 {offsets = [0, 128], sizes = [2, 64], strides = [1, 1]} : vector<2x256xf32> to vector<2x64xf32>
    %22 = vector.extract_strided_slice %12 {offsets = [0, 192], sizes = [2, 64], strides = [1, 1]} : vector<2x256xf32> to vector<2x64xf32>
    %23 = arith.mulf %19, %22 : vector<2x64xf32>
    %24 = arith.addf %21, %23 : vector<2x64xf32>
    %25 = math.tanh %24 : vector<2x64xf32>
    %cst_9 = arith.constant 1.000000e+00 : f32
    %26 = vector.broadcast %cst_9 : f32 to vector<2x64xf32>
    %27 = arith.subf %26, %20 : vector<2x64xf32>
    %28 = arith.mulf %27, %25 : vector<2x64xf32>
    %29 = arith.mulf %20, %5 : vector<2x64xf32>
    %30 = arith.addf %28, %29 : vector<2x64xf32>
    %31 = tpu.concatenate %30, %6 in 1 : vector<2x64xf32>, vector<2x64xf32> -> vector<2x128xf32>
    %c0_10 = arith.constant 0 : index
    %c0_11 = arith.constant 0 : index
    %32 = vector.load %arg2[%c0_10, %c0_11] : memref<128x256xf32, #tpu.memory_space<vmem>>, vector<128x256xf32>
    %cst_12 = arith.constant dense<0.000000e+00> : vector<2x256xf32>
    %33 = tpu.matmul %31, %32, %cst_12 {dimension_numbers = #tpu.dot_dimension_numbers<[1], [0], [0], [1], [0, 0, 1, 1], [], []>} : vector<2x128xf32>, vector<128x256xf32>, vector<2x256xf32> -> vector<2x256xf32>
    %c0_13 = arith.constant 0 : index
    %c0_14 = arith.constant 0 : index
    %34 = vector.load %arg3[%c0_13, %c0_14] : memref<1x256xf32, #tpu.memory_space<vmem>>, vector<1x256xf32>
    %35 = vector.broadcast %34 : vector<1x256xf32> to vector<2x256xf32>
    %36 = arith.addf %33, %35 : vector<2x256xf32>
    %37 = vector.extract_strided_slice %36 {offsets = [0, 0], sizes = [2, 128], strides = [1, 1]} : vector<2x256xf32> to vector<2x128xf32>
    %38 = arith.negf %37 : vector<2x128xf32>
    %39 = math.exp %38 : vector<2x128xf32>
    %cst_15 = arith.constant 1.000000e+00 : f32
    %40 = vector.broadcast %cst_15 : f32 to vector<2x128xf32>
    %41 = arith.addf %40, %39 : vector<2x128xf32>
    %42 = arith.divf %40, %41 : vector<2x128xf32>
    %43 = vector.extract_strided_slice %42 {offsets = [0, 0], sizes = [2, 64], strides = [1, 1]} : vector<2x128xf32> to vector<2x64xf32>
    %44 = vector.extract_strided_slice %42 {offsets = [0, 64], sizes = [2, 64], strides = [1, 1]} : vector<2x128xf32> to vector<2x64xf32>
    %45 = vector.extract_strided_slice %36 {offsets = [0, 128], sizes = [2, 64], strides = [1, 1]} : vector<2x256xf32> to vector<2x64xf32>
    %46 = vector.extract_strided_slice %36 {offsets = [0, 192], sizes = [2, 64], strides = [1, 1]} : vector<2x256xf32> to vector<2x64xf32>
    %47 = arith.mulf %43, %46 : vector<2x64xf32>
    %48 = arith.addf %45, %47 : vector<2x64xf32>
    %49 = math.tanh %48 : vector<2x64xf32>
    %cst_16 = arith.constant 1.000000e+00 : f32
    %50 = vector.broadcast %cst_16 : f32 to vector<2x64xf32>
    %51 = arith.subf %50, %44 : vector<2x64xf32>
    %52 = arith.mulf %51, %49 : vector<2x64xf32>
    %53 = arith.mulf %44, %6 : vector<2x64xf32>
    %54 = arith.addf %52, %53 : vector<2x64xf32>
    %c0_17 = arith.constant 0 : index
    %c0_18 = arith.constant 0 : index
    %55 = vector.load %arg4[%c0_17, %c0_18] : memref<64x32xf32, #tpu.memory_space<vmem>>, vector<64x32xf32>
    %cst_19 = arith.constant dense<0.000000e+00> : vector<2x32xf32>
    %56 = tpu.matmul %54, %55, %cst_19 {dimension_numbers = #tpu.dot_dimension_numbers<[1], [0], [0], [1], [0, 0, 1, 1], [], []>} : vector<2x64xf32>, vector<64x32xf32>, vector<2x32xf32> -> vector<2x32xf32>
    %c0_20 = arith.constant 0 : index
    %c0_21 = arith.constant 0 : index
    %57 = vector.load %arg5[%c0_20, %c0_21] : memref<1x32xf32, #tpu.memory_space<vmem>>, vector<1x32xf32>
    %58 = vector.broadcast %57 : vector<1x32xf32> to vector<2x32xf32>
    %59 = arith.addf %56, %58 : vector<2x32xf32>
    %cst_22 = arith.constant 0.000000e+00 : f32
    %60 = vector.broadcast %cst_22 : f32 to vector<2x32xf32>
    %61 = arith.maximumf %59, %60 : vector<2x32xf32>
    %c0_23 = arith.constant 0 : index
    %c0_24 = arith.constant 0 : index
    %62 = vector.load %arg6[%c0_23, %c0_24] : memref<32x128xf32, #tpu.memory_space<vmem>>, vector<32x128xf32>
    %cst_25 = arith.constant dense<0.000000e+00> : vector<2x128xf32>
    %63 = tpu.matmul %61, %62, %cst_25 {dimension_numbers = #tpu.dot_dimension_numbers<[1], [0], [0], [1], [0, 0, 1, 1], [], []>} : vector<2x32xf32>, vector<32x128xf32>, vector<2x128xf32> -> vector<2x128xf32>
    %c0_26 = arith.constant 0 : index
    %c0_27 = arith.constant 0 : index
    %64 = vector.load %arg7[%c0_26, %c0_27] : memref<1x128xf32, #tpu.memory_space<vmem>>, vector<1x128xf32>
    %65 = vector.broadcast %64 : vector<1x128xf32> to vector<2x128xf32>
    %66 = arith.addf %63, %65 : vector<2x128xf32>
    %67 = arith.index_cast %c0_i32_3 : i32 to index
    %c0_28 = arith.constant 0 : index
    %c0_29 = arith.constant 0 : index
    %68 = vector.load %arg10[%67, %c0_28, %c0_29] : memref<10x2x128xf32, #tpu.memory_space<vmem>>, vector<1x2x128xf32>
    %69 = vector.shape_cast %68 : vector<1x2x128xf32> to vector<2x128xf32>
    %70 = vector.shape_cast %66 : vector<2x128xf32> to vector<1x2x128xf32>
    tpu.vector_store %arg10[%67, %c0_28, %c0_29], %70 {strides = array<i32>} : memref<10x2x128xf32, #tpu.memory_space<vmem>>, vector<1x2x128xf32>,
    %cst_30 = arith.constant dense<0xFF800000> : vector<2xf32>
    %71 = vector.multi_reduction <maximumf>, %66, %cst_30 [1] : vector<2x128xf32> to vector<2xf32>
    %72 = vector.shape_cast %71 : vector<2xf32> to vector<2x1xf32>
    %73 = vector.broadcast %72 : vector<2x1xf32> to vector<2x128xf32>
    %74 = arith.cmpf oeq, %66, %73 : vector<2x128xf32>
    %c128_i32 = arith.constant 128 : i32
    %75 = vector.broadcast %c128_i32 : i32 to vector<2x128xi32>
    %76 = arith.select %74, %0, %75 : vector<2x128xi1>, vector<2x128xi32>
    %cst_31 = arith.constant dense<2147483647> : vector<2xi32>
    %77 = vector.multi_reduction <minsi>, %76, %cst_31 [1] : vector<2x128xi32> to vector<2xi32>
    %78 = vector.shape_cast %77 : vector<2xi32> to vector<2x1xi32>
    %79 = vector.broadcast %78 : vector<2x1xi32> to vector<2x128xi32>
    %80 = arith.cmpi eq, %0, %79 : vector<2x128xi32>
    %81 = arith.extui %80 : vector<2x128xi1> to vector<2x128xi32>
    %82 = arith.sitofp %81 : vector<2x128xi32> to vector<2x128xf32>
    %c1_i32 = arith.constant 1 : i32
    %83 = tpu.concatenate %82, %30 in 1 : vector<2x128xf32>, vector<2x64xf32> -> vector<2x192xf32>
    %c0_32 = arith.constant 0 : index
    %c0_33 = arith.constant 0 : index
    %84 = vector.load %arg0[%c0_32, %c0_33] : memref<192x256xf32, #tpu.memory_space<vmem>>, vector<192x256xf32>
    %cst_34 = arith.constant dense<0.000000e+00> : vector<2x256xf32>
    %85 = tpu.matmul %83, %84, %cst_34 {dimension_numbers = #tpu.dot_dimension_numbers<[1], [0], [0], [1], [0, 0, 1, 1], [], []>} : vector<2x192xf32>, vector<192x256xf32>, vector<2x256xf32> -> vector<2x256xf32>
    %c0_35 = arith.constant 0 : index
    %c0_36 = arith.constant 0 : index
    %86 = vector.load %arg1[%c0_35, %c0_36] : memref<1x256xf32, #tpu.memory_space<vmem>>, vector<1x256xf32>
    %87 = vector.broadcast %86 : vector<1x256xf32> to vector<2x256xf32>
    %88 = arith.addf %85, %87 : vector<2x256xf32>
    %89 = vector.extract_strided_slice %88 {offsets = [0, 0], sizes = [2, 128], strides = [1, 1]} : vector<2x256xf32> to vector<2x128xf32>
    %90 = arith.negf %89 : vector<2x128xf32>
    %91 = math.exp %90 : vector<2x128xf32>
    %cst_37 = arith.constant 1.000000e+00 : f32
    %92 = vector.broadcast %cst_37 : f32 to vector<2x128xf32>
    %93 = arith.addf %92, %91 : vector<2x128xf32>
    %94 = arith.divf %92, %93 : vector<2x128xf32>
    %95 = vector.extract_strided_slice %94 {offsets = [0, 0], sizes = [2, 64], strides = [1, 1]} : vector<2x128xf32> to vector<2x64xf32>
    %96 = vector.extract_strided_slice %94 {offsets = [0, 64], sizes = [2, 64], strides = [1, 1]} : vector<2x128xf32> to vector<2x64xf32>
    %97 = vector.extract_strided_slice %88 {offsets = [0, 128], sizes = [2, 64], strides = [1, 1]} : vector<2x256xf32> to vector<2x64xf32>
    %98 = vector.extract_strided_slice %88 {offsets = [0, 192], sizes = [2, 64], strides = [1, 1]} : vector<2x256xf32> to vector<2x64xf32>
    %99 = arith.mulf %95, %98 : vector<2x64xf32>
    %100 = arith.addf %97, %99 : vector<2x64xf32>
    %101 = math.tanh %100 : vector<2x64xf32>
    %cst_38 = arith.constant 1.000000e+00 : f32
    %102 = vector.broadcast %cst_38 : f32 to vector<2x64xf32>
    %103 = arith.subf %102, %96 : vector<2x64xf32>
    %104 = arith.mulf %103, %101 : vector<2x64xf32>
    %105 = arith.mulf %96, %30 : vector<2x64xf32>
    %106 = arith.addf %104, %105 : vector<2x64xf32>
    %107 = tpu.concatenate %106, %54 in 1 : vector<2x64xf32>, vector<2x64xf32> -> vector<2x128xf32>
    %c0_39 = arith.constant 0 : index
    %c0_40 = arith.constant 0 : index
    %108 = vector.load %arg2[%c0_39, %c0_40] : memref<128x256xf32, #tpu.memory_space<vmem>>, vector<128x256xf32>
    %cst_41 = arith.constant dense<0.000000e+00> : vector<2x256xf32>
    %109 = tpu.matmul %107, %108, %cst_41 {dimension_numbers = #tpu.dot_dimension_numbers<[1], [0], [0], [1], [0, 0, 1, 1], [], []>} : vector<2x128xf32>, vector<128x256xf32>, vector<2x256xf32> -> vector<2x256xf32>
    %c0_42 = arith.constant 0 : index
    %c0_43 = arith.constant 0 : index
    %110 = vector.load %arg3[%c0_42, %c0_43] : memref<1x256xf32, #tpu.memory_space<vmem>>, vector<1x256xf32>
    %111 = vector.broadcast %110 : vector<1x256xf32> to vector<2x256xf32>
    %112 = arith.addf %109, %111 : vector<2x256xf32>
    %113 = vector.extract_strided_slice %112 {offsets = [0, 0], sizes = [2, 128], strides = [1, 1]} : vector<2x256xf32> to vector<2x128xf32>
    %114 = arith.negf %113 : vector<2x128xf32>
    %115 = math.exp %114 : vector<2x128xf32>
    %cst_44 = arith.constant 1.000000e+00 : f32
    %116 = vector.broadcast %cst_44 : f32 to vector<2x128xf32>
    %117 = arith.addf %116, %115 : vector<2x128xf32>
    %118 = arith.divf %116, %117 : vector<2x128xf32>
    %119 = vector.extract_strided_slice %118 {offsets = [0, 0], sizes = [2, 64], strides = [1, 1]} : vector<2x128xf32> to vector<2x64xf32>
    %120 = vector.extract_strided_slice %118 {offsets = [0, 64], sizes = [2, 64], strides = [1, 1]} : vector<2x128xf32> to vector<2x64xf32>
    %121 = vector.extract_strided_slice %112 {offsets = [0, 128], sizes = [2, 64], strides = [1, 1]} : vector<2x256xf32> to vector<2x64xf32>
    %122 = vector.extract_strided_slice %112 {offsets = [0, 192], sizes = [2, 64], strides = [1, 1]} : vector<2x256xf32> to vector<2x64xf32>
    %123 = arith.mulf %119, %122 : vector<2x64xf32>
    %124 = arith.addf %121, %123 : vector<2x64xf32>
    %125 = math.tanh %124 : vector<2x64xf32>
    %cst_45 = arith.constant 1.000000e+00 : f32
    %126 = vector.broadcast %cst_45 : f32 to vector<2x64xf32>
    %127 = arith.subf %126, %120 : vector<2x64xf32>
    %128 = arith.mulf %127, %125 : vector<2x64xf32>
    %129 = arith.mulf %120, %54 : vector<2x64xf32>
    %130 = arith.addf %128, %129 : vector<2x64xf32>
    %c0_46 = arith.constant 0 : index
    %c0_47 = arith.constant 0 : index
    %131 = vector.load %arg4[%c0_46, %c0_47] : memref<64x32xf32, #tpu.memory_space<vmem>>, vector<64x32xf32>
    %cst_48 = arith.constant dense<0.000000e+00> : vector<2x32xf32>
    %132 = tpu.matmul %130, %131, %cst_48 {dimension_numbers = #tpu.dot_dimension_numbers<[1], [0], [0], [1], [0, 0, 1, 1], [], []>} : vector<2x64xf32>, vector<64x32xf32>, vector<2x32xf32> -> vector<2x32xf32>
    %c0_49 = arith.constant 0 : index
    %c0_50 = arith.constant 0 : index
    %133 = vector.load %arg5[%c0_49, %c0_50] : memref<1x32xf32, #tpu.memory_space<vmem>>, vector<1x32xf32>
    %134 = vector.broadcast %133 : vector<1x32xf32> to vector<2x32xf32>
    %135 = arith.addf %132, %134 : vector<2x32xf32>
    %cst_51 = arith.constant 0.000000e+00 : f32
    %136 = vector.broadcast %cst_51 : f32 to vector<2x32xf32>
    %137 = arith.maximumf %135, %136 : vector<2x32xf32>
    %c0_52 = arith.constant 0 : index
    %c0_53 = arith.constant 0 : index
    %138 = vector.load %arg6[%c0_52, %c0_53] : memref<32x128xf32, #tpu.memory_space<vmem>>, vector<32x128xf32>
    %cst_54 = arith.constant dense<0.000000e+00> : vector<2x128xf32>
    %139 = tpu.matmul %137, %138, %cst_54 {dimension_numbers = #tpu.dot_dimension_numbers<[1], [0], [0], [1], [0, 0, 1, 1], [], []>} : vector<2x32xf32>, vector<32x128xf32>, vector<2x128xf32> -> vector<2x128xf32>
    %c0_55 = arith.constant 0 : index
    %c0_56 = arith.constant 0 : index
    %140 = vector.load %arg7[%c0_55, %c0_56] : memref<1x128xf32, #tpu.memory_space<vmem>>, vector<1x128xf32>
    %141 = vector.broadcast %140 : vector<1x128xf32> to vector<2x128xf32>
    %142 = arith.addf %139, %141 : vector<2x128xf32>
    %143 = arith.index_cast %c1_i32 : i32 to index
    %c0_57 = arith.constant 0 : index
    %c0_58 = arith.constant 0 : index
    %144 = vector.load %arg10[%143, %c0_57, %c0_58] : memref<10x2x128xf32, #tpu.memory_space<vmem>>, vector<1x2x128xf32>
    %145 = vector.shape_cast %144 : vector<1x2x128xf32> to vector<2x128xf32>
    %146 = vector.shape_cast %142 : vector<2x128xf32> to vector<1x2x128xf32>
    tpu.vector_store %arg10[%143, %c0_57, %c0_58], %146 {strides = array<i32>} : memref<10x2x128xf32, #tpu.memory_space<vmem>>, vector<1x2x128xf32>,
    %cst_59 = arith.constant dense<0xFF800000> : vector<2xf32>
    %147 = vector.multi_reduction <maximumf>, %142, %cst_59 [1] : vector<2x128xf32> to vector<2xf32>
    %148 = vector.shape_cast %147 : vector<2xf32> to vector<2x1xf32>
    %149 = vector.broadcast %148 : vector<2x1xf32> to vector<2x128xf32>
    %150 = arith.cmpf oeq, %142, %149 : vector<2x128xf32>
    %c128_i32_60 = arith.constant 128 : i32
    %151 = vector.broadcast %c128_i32_60 : i32 to vector<2x128xi32>
    %152 = arith.select %150, %0, %151 : vector<2x128xi1>, vector<2x128xi32>
    %cst_61 = arith.constant dense<2147483647> : vector<2xi32>
    %153 = vector.multi_reduction <minsi>, %152, %cst_61 [1] : vector<2x128xi32> to vector<2xi32>
    %154 = vector.shape_cast %153 : vector<2xi32> to vector<2x1xi32>
    %155 = vector.broadcast %154 : vector<2x1xi32> to vector<2x128xi32>
    %156 = arith.cmpi eq, %0, %155 : vector<2x128xi32>
    %157 = arith.extui %156 : vector<2x128xi1> to vector<2x128xi32>
    %158 = arith.sitofp %157 : vector<2x128xi32> to vector<2x128xf32>
    %c2_i32 = arith.constant 2 : i32
    %159 = tpu.concatenate %158, %106 in 1 : vector<2x128xf32>, vector<2x64xf32> -> vector<2x192xf32>
    %c0_62 = arith.constant 0 : index
    %c0_63 = arith.constant 0 : index
    %160 = vector.load %arg0[%c0_62, %c0_63] : memref<192x256xf32, #tpu.memory_space<vmem>>, vector<192x256xf32>
    %cst_64 = arith.constant dense<0.000000e+00> : vector<2x256xf32>
    %161 = tpu.matmul %159, %160, %cst_64 {dimension_numbers = #tpu.dot_dimension_numbers<[1], [0], [0], [1], [0, 0, 1, 1], [], []>} : vector<2x192xf32>, vector<192x256xf32>, vector<2x256xf32> -> vector<2x256xf32>
    %c0_65 = arith.constant 0 : index
    %c0_66 = arith.constant 0 : index
    %162 = vector.load %arg1[%c0_65, %c0_66] : memref<1x256xf32, #tpu.memory_space<vmem>>, vector<1x256xf32>
    %163 = vector.broadcast %162 : vector<1x256xf32> to vector<2x256xf32>
    %164 = arith.addf %161, %163 : vector<2x256xf32>
    %165 = vector.extract_strided_slice %164 {offsets = [0, 0], sizes = [2, 128], strides = [1, 1]} : vector<2x256xf32> to vector<2x128xf32>
    %166 = arith.negf %165 : vector<2x128xf32>
    %167 = math.exp %166 : vector<2x128xf32>
    %cst_67 = arith.constant 1.000000e+00 : f32
    %168 = vector.broadcast %cst_67 : f32 to vector<2x128xf32>
    %169 = arith.addf %168, %167 : vector<2x128xf32>
    %170 = arith.divf %168, %169 : vector<2x128xf32>
    %171 = vector.extract_strided_slice %170 {offsets = [0, 0], sizes = [2, 64], strides = [1, 1]} : vector<2x128xf32> to vector<2x64xf32>
    %172 = vector.extract_strided_slice %170 {offsets = [0, 64], sizes = [2, 64], strides = [1, 1]} : vector<2x128xf32> to vector<2x64xf32>
    %173 = vector.extract_strided_slice %164 {offsets = [0, 128], sizes = [2, 64], strides = [1, 1]} : vector<2x256xf32> to vector<2x64xf32>
    %174 = vector.extract_strided_slice %164 {offsets = [0, 192], sizes = [2, 64], strides = [1, 1]} : vector<2x256xf32> to vector<2x64xf32>
    %175 = arith.mulf %171, %174 : vector<2x64xf32>
    %176 = arith.addf %173, %175 : vector<2x64xf32>
    %177 = math.tanh %176 : vector<2x64xf32>
    %cst_68 = arith.constant 1.000000e+00 : f32
    %178 = vector.broadcast %cst_68 : f32 to vector<2x64xf32>
    %179 = arith.subf %178, %172 : vector<2x64xf32>
    %180 = arith.mulf %179, %177 : vector<2x64xf32>
    %181 = arith.mulf %172, %106 : vector<2x64xf32>
    %182 = arith.addf %180, %181 : vector<2x64xf32>
    %183 = tpu.concatenate %182, %130 in 1 : vector<2x64xf32>, vector<2x64xf32> -> vector<2x128xf32>
    %c0_69 = arith.constant 0 : index
    %c0_70 = arith.constant 0 : index
    %184 = vector.load %arg2[%c0_69, %c0_70] : memref<128x256xf32, #tpu.memory_space<vmem>>, vector<128x256xf32>
    %cst_71 = arith.constant dense<0.000000e+00> : vector<2x256xf32>
    %185 = tpu.matmul %183, %184, %cst_71 {dimension_numbers = #tpu.dot_dimension_numbers<[1], [0], [0], [1], [0, 0, 1, 1], [], []>} : vector<2x128xf32>, vector<128x256xf32>, vector<2x256xf32> -> vector<2x256xf32>
    %c0_72 = arith.constant 0 : index
    %c0_73 = arith.constant 0 : index
    %186 = vector.load %arg3[%c0_72, %c0_73] : memref<1x256xf32, #tpu.memory_space<vmem>>, vector<1x256xf32>
    %187 = vector.broadcast %186 : vector<1x256xf32> to vector<2x256xf32>
    %188 = arith.addf %185, %187 : vector<2x256xf32>
    %189 = vector.extract_strided_slice %188 {offsets = [0, 0], sizes = [2, 128], strides = [1, 1]} : vector<2x256xf32> to vector<2x128xf32>
    %190 = arith.negf %189 : vector<2x128xf32>
    %191 = math.exp %190 : vector<2x128xf32>
    %cst_74 = arith.constant 1.000000e+00 : f32
    %192 = vector.broadcast %cst_74 : f32 to vector<2x128xf32>
    %193 = arith.addf %192, %191 : vector<2x128xf32>
    %194 = arith.divf %192, %193 : vector<2x128xf32>
    %195 = vector.extract_strided_slice %194 {offsets = [0, 0], sizes = [2, 64], strides = [1, 1]} : vector<2x128xf32> to vector<2x64xf32>
    %196 = vector.extract_strided_slice %194 {offsets = [0, 64], sizes = [2, 64], strides = [1, 1]} : vector<2x128xf32> to vector<2x64xf32>
    %197 = vector.extract_strided_slice %188 {offsets = [0, 128], sizes = [2, 64], strides = [1, 1]} : vector<2x256xf32> to vector<2x64xf32>
    %198 = vector.extract_strided_slice %188 {offsets = [0, 192], sizes = [2, 64], strides = [1, 1]} : vector<2x256xf32> to vector<2x64xf32>
    %199 = arith.mulf %195, %198 : vector<2x64xf32>
    %200 = arith.addf %197, %199 : vector<2x64xf32>
    %201 = math.tanh %200 : vector<2x64xf32>
    %cst_75 = arith.constant 1.000000e+00 : f32
    %202 = vector.broadcast %cst_75 : f32 to vector<2x64xf32>
    %203 = arith.subf %202, %196 : vector<2x64xf32>
    %204 = arith.mulf %203, %201 : vector<2x64xf32>
    %205 = arith.mulf %196, %130 : vector<2x64xf32>
    %206 = arith.addf %204, %205 : vector<2x64xf32>
    %c0_76 = arith.constant 0 : index
    %c0_77 = arith.constant 0 : index
    %207 = vector.load %arg4[%c0_76, %c0_77] : memref<64x32xf32, #tpu.memory_space<vmem>>, vector<64x32xf32>
    %cst_78 = arith.constant dense<0.000000e+00> : vector<2x32xf32>
    %208 = tpu.matmul %206, %207, %cst_78 {dimension_numbers = #tpu.dot_dimension_numbers<[1], [0], [0], [1], [0, 0, 1, 1], [], []>} : vector<2x64xf32>, vector<64x32xf32>, vector<2x32xf32> -> vector<2x32xf32>
    %c0_79 = arith.constant 0 : index
    %c0_80 = arith.constant 0 : index
    %209 = vector.load %arg5[%c0_79, %c0_80] : memref<1x32xf32, #tpu.memory_space<vmem>>, vector<1x32xf32>
    %210 = vector.broadcast %209 : vector<1x32xf32> to vector<2x32xf32>
    %211 = arith.addf %208, %210 : vector<2x32xf32>
    %cst_81 = arith.constant 0.000000e+00 : f32
    %212 = vector.broadcast %cst_81 : f32 to vector<2x32xf32>
    %213 = arith.maximumf %211, %212 : vector<2x32xf32>
    %c0_82 = arith.constant 0 : index
    %c0_83 = arith.constant 0 : index
    %214 = vector.load %arg6[%c0_82, %c0_83] : memref<32x128xf32, #tpu.memory_space<vmem>>, vector<32x128xf32>
    %cst_84 = arith.constant dense<0.000000e+00> : vector<2x128xf32>
    %215 = tpu.matmul %213, %214, %cst_84 {dimension_numbers = #tpu.dot_dimension_numbers<[1], [0], [0], [1], [0, 0, 1, 1], [], []>} : vector<2x32xf32>, vector<32x128xf32>, vector<2x128xf32> -> vector<2x128xf32>
    %c0_85 = arith.constant 0 : index
    %c0_86 = arith.constant 0 : index
    %216 = vector.load %arg7[%c0_85, %c0_86] : memref<1x128xf32, #tpu.memory_space<vmem>>, vector<1x128xf32>
    %217 = vector.broadcast %216 : vector<1x128xf32> to vector<2x128xf32>
    %218 = arith.addf %215, %217 : vector<2x128xf32>
    %219 = arith.index_cast %c2_i32 : i32 to index
    %c0_87 = arith.constant 0 : index
    %c0_88 = arith.constant 0 : index
    %220 = vector.load %arg10[%219, %c0_87, %c0_88] : memref<10x2x128xf32, #tpu.memory_space<vmem>>, vector<1x2x128xf32>
    %221 = vector.shape_cast %220 : vector<1x2x128xf32> to vector<2x128xf32>
    %222 = vector.shape_cast %218 : vector<2x128xf32> to vector<1x2x128xf32>
    tpu.vector_store %arg10[%219, %c0_87, %c0_88], %222 {strides = array<i32>} : memref<10x2x128xf32, #tpu.memory_space<vmem>>, vector<1x2x128xf32>,
    %cst_89 = arith.constant dense<0xFF800000> : vector<2xf32>
    %223 = vector.multi_reduction <maximumf>, %218, %cst_89 [1] : vector<2x128xf32> to vector<2xf32>
    %224 = vector.shape_cast %223 : vector<2xf32> to vector<2x1xf32>
    %225 = vector.broadcast %224 : vector<2x1xf32> to vector<2x128xf32>
    %226 = arith.cmpf oeq, %218, %225 : vector<2x128xf32>
    %c128_i32_90 = arith.constant 128 : i32
    %227 = vector.broadcast %c128_i32_90 : i32 to vector<2x128xi32>
    %228 = arith.select %226, %0, %227 : vector<2x128xi1>, vector<2x128xi32>
    %cst_91 = arith.constant dense<2147483647> : vector<2xi32>
    %229 = vector.multi_reduction <minsi>, %228, %cst_91 [1] : vector<2x128xi32> to vector<2xi32>
    %230 = vector.shape_cast %229 : vector<2xi32> to vector<2x1xi32>
    %231 = vector.broadcast %230 : vector<2x1xi32> to vector<2x128xi32>
    %232 = arith.cmpi eq, %0, %231 : vector<2x128xi32>
    %233 = arith.extui %232 : vector<2x128xi1> to vector<2x128xi32>
    %234 = arith.sitofp %233 : vector<2x128xi32> to vector<2x128xf32>
    %c3_i32 = arith.constant 3 : i32
    %235 = tpu.concatenate %234, %182 in 1 : vector<2x128xf32>, vector<2x64xf32> -> vector<2x192xf32>
    %c0_92 = arith.constant 0 : index
    %c0_93 = arith.constant 0 : index
    %236 = vector.load %arg0[%c0_92, %c0_93] : memref<192x256xf32, #tpu.memory_space<vmem>>, vector<192x256xf32>
    %cst_94 = arith.constant dense<0.000000e+00> : vector<2x256xf32>
    %237 = tpu.matmul %235, %236, %cst_94 {dimension_numbers = #tpu.dot_dimension_numbers<[1], [0], [0], [1], [0, 0, 1, 1], [], []>} : vector<2x192xf32>, vector<192x256xf32>, vector<2x256xf32> -> vector<2x256xf32>
    %c0_95 = arith.constant 0 : index
    %c0_96 = arith.constant 0 : index
    %238 = vector.load %arg1[%c0_95, %c0_96] : memref<1x256xf32, #tpu.memory_space<vmem>>, vector<1x256xf32>
    %239 = vector.broadcast %238 : vector<1x256xf32> to vector<2x256xf32>
    %240 = arith.addf %237, %239 : vector<2x256xf32>
    %241 = vector.extract_strided_slice %240 {offsets = [0, 0], sizes = [2, 128], strides = [1, 1]} : vector<2x256xf32> to vector<2x128xf32>
    %242 = arith.negf %241 : vector<2x128xf32>
    %243 = math.exp %242 : vector<2x128xf32>
    %cst_97 = arith.constant 1.000000e+00 : f32
    %244 = vector.broadcast %cst_97 : f32 to vector<2x128xf32>
    %245 = arith.addf %244, %243 : vector<2x128xf32>
    %246 = arith.divf %244, %245 : vector<2x128xf32>
    %247 = vector.extract_strided_slice %246 {offsets = [0, 0], sizes = [2, 64], strides = [1, 1]} : vector<2x128xf32> to vector<2x64xf32>
    %248 = vector.extract_strided_slice %246 {offsets = [0, 64], sizes = [2, 64], strides = [1, 1]} : vector<2x128xf32> to vector<2x64xf32>
    %249 = vector.extract_strided_slice %240 {offsets = [0, 128], sizes = [2, 64], strides = [1, 1]} : vector<2x256xf32> to vector<2x64xf32>
    %250 = vector.extract_strided_slice %240 {offsets = [0, 192], sizes = [2, 64], strides = [1, 1]} : vector<2x256xf32> to vector<2x64xf32>
    %251 = arith.mulf %247, %250 : vector<2x64xf32>
    %252 = arith.addf %249, %251 : vector<2x64xf32>
    %253 = math.tanh %252 : vector<2x64xf32>
    %cst_98 = arith.constant 1.000000e+00 : f32
    %254 = vector.broadcast %cst_98 : f32 to vector<2x64xf32>
    %255 = arith.subf %254, %248 : vector<2x64xf32>
    %256 = arith.mulf %255, %253 : vector<2x64xf32>
    %257 = arith.mulf %248, %182 : vector<2x64xf32>
    %258 = arith.addf %256, %257 : vector<2x64xf32>
    %259 = tpu.concatenate %258, %206 in 1 : vector<2x64xf32>, vector<2x64xf32> -> vector<2x128xf32>
    %c0_99 = arith.constant 0 : index
    %c0_100 = arith.constant 0 : index
    %260 = vector.load %arg2[%c0_99, %c0_100] : memref<128x256xf32, #tpu.memory_space<vmem>>, vector<128x256xf32>
    %cst_101 = arith.constant dense<0.000000e+00> : vector<2x256xf32>
    %261 = tpu.matmul %259, %260, %cst_101 {dimension_numbers = #tpu.dot_dimension_numbers<[1], [0], [0], [1], [0, 0, 1, 1], [], []>} : vector<2x128xf32>, vector<128x256xf32>, vector<2x256xf32> -> vector<2x256xf32>
    %c0_102 = arith.constant 0 : index
    %c0_103 = arith.constant 0 : index
    %262 = vector.load %arg3[%c0_102, %c0_103] : memref<1x256xf32, #tpu.memory_space<vmem>>, vector<1x256xf32>
    %263 = vector.broadcast %262 : vector<1x256xf32> to vector<2x256xf32>
    %264 = arith.addf %261, %263 : vector<2x256xf32>
    %265 = vector.extract_strided_slice %264 {offsets = [0, 0], sizes = [2, 128], strides = [1, 1]} : vector<2x256xf32> to vector<2x128xf32>
    %266 = arith.negf %265 : vector<2x128xf32>
    %267 = math.exp %266 : vector<2x128xf32>
    %cst_104 = arith.constant 1.000000e+00 : f32
    %268 = vector.broadcast %cst_104 : f32 to vector<2x128xf32>
    %269 = arith.addf %268, %267 : vector<2x128xf32>
    %270 = arith.divf %268, %269 : vector<2x128xf32>
    %271 = vector.extract_strided_slice %270 {offsets = [0, 0], sizes = [2, 64], strides = [1, 1]} : vector<2x128xf32> to vector<2x64xf32>
    %272 = vector.extract_strided_slice %270 {offsets = [0, 64], sizes = [2, 64], strides = [1, 1]} : vector<2x128xf32> to vector<2x64xf32>
    %273 = vector.extract_strided_slice %264 {offsets = [0, 128], sizes = [2, 64], strides = [1, 1]} : vector<2x256xf32> to vector<2x64xf32>
    %274 = vector.extract_strided_slice %264 {offsets = [0, 192], sizes = [2, 64], strides = [1, 1]} : vector<2x256xf32> to vector<2x64xf32>
    %275 = arith.mulf %271, %274 : vector<2x64xf32>
    %276 = arith.addf %273, %275 : vector<2x64xf32>
    %277 = math.tanh %276 : vector<2x64xf32>
    %cst_105 = arith.constant 1.000000e+00 : f32
    %278 = vector.broadcast %cst_105 : f32 to vector<2x64xf32>
    %279 = arith.subf %278, %272 : vector<2x64xf32>
    %280 = arith.mulf %279, %277 : vector<2x64xf32>
    %281 = arith.mulf %272, %206 : vector<2x64xf32>
    %282 = arith.addf %280, %281 : vector<2x64xf32>
    %c0_106 = arith.constant 0 : index
    %c0_107 = arith.constant 0 : index
    %283 = vector.load %arg4[%c0_106, %c0_107] : memref<64x32xf32, #tpu.memory_space<vmem>>, vector<64x32xf32>
    %cst_108 = arith.constant dense<0.000000e+00> : vector<2x32xf32>
    %284 = tpu.matmul %282, %283, %cst_108 {dimension_numbers = #tpu.dot_dimension_numbers<[1], [0], [0], [1], [0, 0, 1, 1], [], []>} : vector<2x64xf32>, vector<64x32xf32>, vector<2x32xf32> -> vector<2x32xf32>
    %c0_109 = arith.constant 0 : index
    %c0_110 = arith.constant 0 : index
    %285 = vector.load %arg5[%c0_109, %c0_110] : memref<1x32xf32, #tpu.memory_space<vmem>>, vector<1x32xf32>
    %286 = vector.broadcast %285 : vector<1x32xf32> to vector<2x32xf32>
    %287 = arith.addf %284, %286 : vector<2x32xf32>
    %cst_111 = arith.constant 0.000000e+00 : f32
    %288 = vector.broadcast %cst_111 : f32 to vector<2x32xf32>
    %289 = arith.maximumf %287, %288 : vector<2x32xf32>
    %c0_112 = arith.constant 0 : index
    %c0_113 = arith.constant 0 : index
    %290 = vector.load %arg6[%c0_112, %c0_113] : memref<32x128xf32, #tpu.memory_space<vmem>>, vector<32x128xf32>
    %cst_114 = arith.constant dense<0.000000e+00> : vector<2x128xf32>
    %291 = tpu.matmul %289, %290, %cst_114 {dimension_numbers = #tpu.dot_dimension_numbers<[1], [0], [0], [1], [0, 0, 1, 1], [], []>} : vector<2x32xf32>, vector<32x128xf32>, vector<2x128xf32> -> vector<2x128xf32>
    %c0_115 = arith.constant 0 : index
    %c0_116 = arith.constant 0 : index
    %292 = vector.load %arg7[%c0_115, %c0_116] : memref<1x128xf32, #tpu.memory_space<vmem>>, vector<1x128xf32>
    %293 = vector.broadcast %292 : vector<1x128xf32> to vector<2x128xf32>
    %294 = arith.addf %291, %293 : vector<2x128xf32>
    %295 = arith.index_cast %c3_i32 : i32 to index
    %c0_117 = arith.constant 0 : index
    %c0_118 = arith.constant 0 : index
    %296 = vector.load %arg10[%295, %c0_117, %c0_118] : memref<10x2x128xf32, #tpu.memory_space<vmem>>, vector<1x2x128xf32>
    %297 = vector.shape_cast %296 : vector<1x2x128xf32> to vector<2x128xf32>
    %298 = vector.shape_cast %294 : vector<2x128xf32> to vector<1x2x128xf32>
    tpu.vector_store %arg10[%295, %c0_117, %c0_118], %298 {strides = array<i32>} : memref<10x2x128xf32, #tpu.memory_space<vmem>>, vector<1x2x128xf32>,
    %cst_119 = arith.constant dense<0xFF800000> : vector<2xf32>
    %299 = vector.multi_reduction <maximumf>, %294, %cst_119 [1] : vector<2x128xf32> to vector<2xf32>
    %300 = vector.shape_cast %299 : vector<2xf32> to vector<2x1xf32>
    %301 = vector.broadcast %300 : vector<2x1xf32> to vector<2x128xf32>
    %302 = arith.cmpf oeq, %294, %301 : vector<2x128xf32>
    %c128_i32_120 = arith.constant 128 : i32
    %303 = vector.broadcast %c128_i32_120 : i32 to vector<2x128xi32>
    %304 = arith.select %302, %0, %303 : vector<2x128xi1>, vector<2x128xi32>
    %cst_121 = arith.constant dense<2147483647> : vector<2xi32>
    %305 = vector.multi_reduction <minsi>, %304, %cst_121 [1] : vector<2x128xi32> to vector<2xi32>
    %306 = vector.shape_cast %305 : vector<2xi32> to vector<2x1xi32>
    %307 = vector.broadcast %306 : vector<2x1xi32> to vector<2x128xi32>
    %308 = arith.cmpi eq, %0, %307 : vector<2x128xi32>
    %309 = arith.extui %308 : vector<2x128xi1> to vector<2x128xi32>
    %310 = arith.sitofp %309 : vector<2x128xi32> to vector<2x128xf32>
    %c4_i32 = arith.constant 4 : i32
    %311 = tpu.concatenate %310, %258 in 1 : vector<2x128xf32>, vector<2x64xf32> -> vector<2x192xf32>
    %c0_122 = arith.constant 0 : index
    %c0_123 = arith.constant 0 : index
    %312 = vector.load %arg0[%c0_122, %c0_123] : memref<192x256xf32, #tpu.memory_space<vmem>>, vector<192x256xf32>
    %cst_124 = arith.constant dense<0.000000e+00> : vector<2x256xf32>
    %313 = tpu.matmul %311, %312, %cst_124 {dimension_numbers = #tpu.dot_dimension_numbers<[1], [0], [0], [1], [0, 0, 1, 1], [], []>} : vector<2x192xf32>, vector<192x256xf32>, vector<2x256xf32> -> vector<2x256xf32>
    %c0_125 = arith.constant 0 : index
    %c0_126 = arith.constant 0 : index
    %314 = vector.load %arg1[%c0_125, %c0_126] : memref<1x256xf32, #tpu.memory_space<vmem>>, vector<1x256xf32>
    %315 = vector.broadcast %314 : vector<1x256xf32> to vector<2x256xf32>
    %316 = arith.addf %313, %315 : vector<2x256xf32>
    %317 = vector.extract_strided_slice %316 {offsets = [0, 0], sizes = [2, 128], strides = [1, 1]} : vector<2x256xf32> to vector<2x128xf32>
    %318 = arith.negf %317 : vector<2x128xf32>
    %319 = math.exp %318 : vector<2x128xf32>
    %cst_127 = arith.constant 1.000000e+00 : f32
    %320 = vector.broadcast %cst_127 : f32 to vector<2x128xf32>
    %321 = arith.addf %320, %319 : vector<2x128xf32>
    %322 = arith.divf %320, %321 : vector<2x128xf32>
    %323 = vector.extract_strided_slice %322 {offsets = [0, 0], sizes = [2, 64], strides = [1, 1]} : vector<2x128xf32> to vector<2x64xf32>
    %324 = vector.extract_strided_slice %322 {offsets = [0, 64], sizes = [2, 64], strides = [1, 1]} : vector<2x128xf32> to vector<2x64xf32>
    %325 = vector.extract_strided_slice %316 {offsets = [0, 128], sizes = [2, 64], strides = [1, 1]} : vector<2x256xf32> to vector<2x64xf32>
    %326 = vector.extract_strided_slice %316 {offsets = [0, 192], sizes = [2, 64], strides = [1, 1]} : vector<2x256xf32> to vector<2x64xf32>
    %327 = arith.mulf %323, %326 : vector<2x64xf32>
    %328 = arith.addf %325, %327 : vector<2x64xf32>
    %329 = math.tanh %328 : vector<2x64xf32>
    %cst_128 = arith.constant 1.000000e+00 : f32
    %330 = vector.broadcast %cst_128 : f32 to vector<2x64xf32>
    %331 = arith.subf %330, %324 : vector<2x64xf32>
    %332 = arith.mulf %331, %329 : vector<2x64xf32>
    %333 = arith.mulf %324, %258 : vector<2x64xf32>
    %334 = arith.addf %332, %333 : vector<2x64xf32>
    %335 = tpu.concatenate %334, %282 in 1 : vector<2x64xf32>, vector<2x64xf32> -> vector<2x128xf32>
    %c0_129 = arith.constant 0 : index
    %c0_130 = arith.constant 0 : index
    %336 = vector.load %arg2[%c0_129, %c0_130] : memref<128x256xf32, #tpu.memory_space<vmem>>, vector<128x256xf32>
    %cst_131 = arith.constant dense<0.000000e+00> : vector<2x256xf32>
    %337 = tpu.matmul %335, %336, %cst_131 {dimension_numbers = #tpu.dot_dimension_numbers<[1], [0], [0], [1], [0, 0, 1, 1], [], []>} : vector<2x128xf32>, vector<128x256xf32>, vector<2x256xf32> -> vector<2x256xf32>
    %c0_132 = arith.constant 0 : index
    %c0_133 = arith.constant 0 : index
    %338 = vector.load %arg3[%c0_132, %c0_133] : memref<1x256xf32, #tpu.memory_space<vmem>>, vector<1x256xf32>
    %339 = vector.broadcast %338 : vector<1x256xf32> to vector<2x256xf32>
    %340 = arith.addf %337, %339 : vector<2x256xf32>
    %341 = vector.extract_strided_slice %340 {offsets = [0, 0], sizes = [2, 128], strides = [1, 1]} : vector<2x256xf32> to vector<2x128xf32>
    %342 = arith.negf %341 : vector<2x128xf32>
    %343 = math.exp %342 : vector<2x128xf32>
    %cst_134 = arith.constant 1.000000e+00 : f32
    %344 = vector.broadcast %cst_134 : f32 to vector<2x128xf32>
    %345 = arith.addf %344, %343 : vector<2x128xf32>
    %346 = arith.divf %344, %345 : vector<2x128xf32>
    %347 = vector.extract_strided_slice %346 {offsets = [0, 0], sizes = [2, 64], strides = [1, 1]} : vector<2x128xf32> to vector<2x64xf32>
    %348 = vector.extract_strided_slice %346 {offsets = [0, 64], sizes = [2, 64], strides = [1, 1]} : vector<2x128xf32> to vector<2x64xf32>
    %349 = vector.extract_strided_slice %340 {offsets = [0, 128], sizes = [2, 64], strides = [1, 1]} : vector<2x256xf32> to vector<2x64xf32>
    %350 = vector.extract_strided_slice %340 {offsets = [0, 192], sizes = [2, 64], strides = [1, 1]} : vector<2x256xf32> to vector<2x64xf32>
    %351 = arith.mulf %347, %350 : vector<2x64xf32>
    %352 = arith.addf %349, %351 : vector<2x64xf32>
    %353 = math.tanh %352 : vector<2x64xf32>
    %cst_135 = arith.constant 1.000000e+00 : f32
    %354 = vector.broadcast %cst_135 : f32 to vector<2x64xf32>
    %355 = arith.subf %354, %348 : vector<2x64xf32>
    %356 = arith.mulf %355, %353 : vector<2x64xf32>
    %357 = arith.mulf %348, %282 : vector<2x64xf32>
    %358 = arith.addf %356, %357 : vector<2x64xf32>
    %c0_136 = arith.constant 0 : index
    %c0_137 = arith.constant 0 : index
    %359 = vector.load %arg4[%c0_136, %c0_137] : memref<64x32xf32, #tpu.memory_space<vmem>>, vector<64x32xf32>
    %cst_138 = arith.constant dense<0.000000e+00> : vector<2x32xf32>
    %360 = tpu.matmul %358, %359, %cst_138 {dimension_numbers = #tpu.dot_dimension_numbers<[1], [0], [0], [1], [0, 0, 1, 1], [], []>} : vector<2x64xf32>, vector<64x32xf32>, vector<2x32xf32> -> vector<2x32xf32>
    %c0_139 = arith.constant 0 : index
    %c0_140 = arith.constant 0 : index
    %361 = vector.load %arg5[%c0_139, %c0_140] : memref<1x32xf32, #tpu.memory_space<vmem>>, vector<1x32xf32>
    %362 = vector.broadcast %361 : vector<1x32xf32> to vector<2x32xf32>
    %363 = arith.addf %360, %362 : vector<2x32xf32>
    %cst_141 = arith.constant 0.000000e+00 : f32
    %364 = vector.broadcast %cst_141 : f32 to vector<2x32xf32>
    %365 = arith.maximumf %363, %364 : vector<2x32xf32>
    %c0_142 = arith.constant 0 : index
    %c0_143 = arith.constant 0 : index
    %366 = vector.load %arg6[%c0_142, %c0_143] : memref<32x128xf32, #tpu.memory_space<vmem>>, vector<32x128xf32>
    %cst_144 = arith.constant dense<0.000000e+00> : vector<2x128xf32>
    %367 = tpu.matmul %365, %366, %cst_144 {dimension_numbers = #tpu.dot_dimension_numbers<[1], [0], [0], [1], [0, 0, 1, 1], [], []>} : vector<2x32xf32>, vector<32x128xf32>, vector<2x128xf32> -> vector<2x128xf32>
    %c0_145 = arith.constant 0 : index
    %c0_146 = arith.constant 0 : index
    %368 = vector.load %arg7[%c0_145, %c0_146] : memref<1x128xf32, #tpu.memory_space<vmem>>, vector<1x128xf32>
    %369 = vector.broadcast %368 : vector<1x128xf32> to vector<2x128xf32>
    %370 = arith.addf %367, %369 : vector<2x128xf32>
    %371 = arith.index_cast %c4_i32 : i32 to index
    %c0_147 = arith.constant 0 : index
    %c0_148 = arith.constant 0 : index
    %372 = vector.load %arg10[%371, %c0_147, %c0_148] : memref<10x2x128xf32, #tpu.memory_space<vmem>>, vector<1x2x128xf32>
    %373 = vector.shape_cast %372 : vector<1x2x128xf32> to vector<2x128xf32>
    %374 = vector.shape_cast %370 : vector<2x128xf32> to vector<1x2x128xf32>
    tpu.vector_store %arg10[%371, %c0_147, %c0_148], %374 {strides = array<i32>} : memref<10x2x128xf32, #tpu.memory_space<vmem>>, vector<1x2x128xf32>,
    %cst_149 = arith.constant dense<0xFF800000> : vector<2xf32>
    %375 = vector.multi_reduction <maximumf>, %370, %cst_149 [1] : vector<2x128xf32> to vector<2xf32>
    %376 = vector.shape_cast %375 : vector<2xf32> to vector<2x1xf32>
    %377 = vector.broadcast %376 : vector<2x1xf32> to vector<2x128xf32>
    %378 = arith.cmpf oeq, %370, %377 : vector<2x128xf32>
    %c128_i32_150 = arith.constant 128 : i32
    %379 = vector.broadcast %c128_i32_150 : i32 to vector<2x128xi32>
    %380 = arith.select %378, %0, %379 : vector<2x128xi1>, vector<2x128xi32>
    %cst_151 = arith.constant dense<2147483647> : vector<2xi32>
    %381 = vector.multi_reduction <minsi>, %380, %cst_151 [1] : vector<2x128xi32> to vector<2xi32>
    %382 = vector.shape_cast %381 : vector<2xi32> to vector<2x1xi32>
    %383 = vector.broadcast %382 : vector<2x1xi32> to vector<2x128xi32>
    %384 = arith.cmpi eq, %0, %383 : vector<2x128xi32>
    %385 = arith.extui %384 : vector<2x128xi1> to vector<2x128xi32>
    %386 = arith.sitofp %385 : vector<2x128xi32> to vector<2x128xf32>
    %c5_i32 = arith.constant 5 : i32
    %387 = tpu.concatenate %386, %334 in 1 : vector<2x128xf32>, vector<2x64xf32> -> vector<2x192xf32>
    %c0_152 = arith.constant 0 : index
    %c0_153 = arith.constant 0 : index
    %388 = vector.load %arg0[%c0_152, %c0_153] : memref<192x256xf32, #tpu.memory_space<vmem>>, vector<192x256xf32>
    %cst_154 = arith.constant dense<0.000000e+00> : vector<2x256xf32>
    %389 = tpu.matmul %387, %388, %cst_154 {dimension_numbers = #tpu.dot_dimension_numbers<[1], [0], [0], [1], [0, 0, 1, 1], [], []>} : vector<2x192xf32>, vector<192x256xf32>, vector<2x256xf32> -> vector<2x256xf32>
    %c0_155 = arith.constant 0 : index
    %c0_156 = arith.constant 0 : index
    %390 = vector.load %arg1[%c0_155, %c0_156] : memref<1x256xf32, #tpu.memory_space<vmem>>, vector<1x256xf32>
    %391 = vector.broadcast %390 : vector<1x256xf32> to vector<2x256xf32>
    %392 = arith.addf %389, %391 : vector<2x256xf32>
    %393 = vector.extract_strided_slice %392 {offsets = [0, 0], sizes = [2, 128], strides = [1, 1]} : vector<2x256xf32> to vector<2x128xf32>
    %394 = arith.negf %393 : vector<2x128xf32>
    %395 = math.exp %394 : vector<2x128xf32>
    %cst_157 = arith.constant 1.000000e+00 : f32
    %396 = vector.broadcast %cst_157 : f32 to vector<2x128xf32>
    %397 = arith.addf %396, %395 : vector<2x128xf32>
    %398 = arith.divf %396, %397 : vector<2x128xf32>
    %399 = vector.extract_strided_slice %398 {offsets = [0, 0], sizes = [2, 64], strides = [1, 1]} : vector<2x128xf32> to vector<2x64xf32>
    %400 = vector.extract_strided_slice %398 {offsets = [0, 64], sizes = [2, 64], strides = [1, 1]} : vector<2x128xf32> to vector<2x64xf32>
    %401 = vector.extract_strided_slice %392 {offsets = [0, 128], sizes = [2, 64], strides = [1, 1]} : vector<2x256xf32> to vector<2x64xf32>
    %402 = vector.extract_strided_slice %392 {offsets = [0, 192], sizes = [2, 64], strides = [1, 1]} : vector<2x256xf32> to vector<2x64xf32>
    %403 = arith.mulf %399, %402 : vector<2x64xf32>
    %404 = arith.addf %401, %403 : vector<2x64xf32>
    %405 = math.tanh %404 : vector<2x64xf32>
    %cst_158 = arith.constant 1.000000e+00 : f32
    %406 = vector.broadcast %cst_158 : f32 to vector<2x64xf32>
    %407 = arith.subf %406, %400 : vector<2x64xf32>
    %408 = arith.mulf %407, %405 : vector<2x64xf32>
    %409 = arith.mulf %400, %334 : vector<2x64xf32>
    %410 = arith.addf %408, %409 : vector<2x64xf32>
    %411 = tpu.concatenate %410, %358 in 1 : vector<2x64xf32>, vector<2x64xf32> -> vector<2x128xf32>
    %c0_159 = arith.constant 0 : index
    %c0_160 = arith.constant 0 : index
    %412 = vector.load %arg2[%c0_159, %c0_160] : memref<128x256xf32, #tpu.memory_space<vmem>>, vector<128x256xf32>
    %cst_161 = arith.constant dense<0.000000e+00> : vector<2x256xf32>
    %413 = tpu.matmul %411, %412, %cst_161 {dimension_numbers = #tpu.dot_dimension_numbers<[1], [0], [0], [1], [0, 0, 1, 1], [], []>} : vector<2x128xf32>, vector<128x256xf32>, vector<2x256xf32> -> vector<2x256xf32>
    %c0_162 = arith.constant 0 : index
    %c0_163 = arith.constant 0 : index
    %414 = vector.load %arg3[%c0_162, %c0_163] : memref<1x256xf32, #tpu.memory_space<vmem>>, vector<1x256xf32>
    %415 = vector.broadcast %414 : vector<1x256xf32> to vector<2x256xf32>
    %416 = arith.addf %413, %415 : vector<2x256xf32>
    %417 = vector.extract_strided_slice %416 {offsets = [0, 0], sizes = [2, 128], strides = [1, 1]} : vector<2x256xf32> to vector<2x128xf32>
    %418 = arith.negf %417 : vector<2x128xf32>
    %419 = math.exp %418 : vector<2x128xf32>
    %cst_164 = arith.constant 1.000000e+00 : f32
    %420 = vector.broadcast %cst_164 : f32 to vector<2x128xf32>
    %421 = arith.addf %420, %419 : vector<2x128xf32>
    %422 = arith.divf %420, %421 : vector<2x128xf32>
    %423 = vector.extract_strided_slice %422 {offsets = [0, 0], sizes = [2, 64], strides = [1, 1]} : vector<2x128xf32> to vector<2x64xf32>
    %424 = vector.extract_strided_slice %422 {offsets = [0, 64], sizes = [2, 64], strides = [1, 1]} : vector<2x128xf32> to vector<2x64xf32>
    %425 = vector.extract_strided_slice %416 {offsets = [0, 128], sizes = [2, 64], strides = [1, 1]} : vector<2x256xf32> to vector<2x64xf32>
    %426 = vector.extract_strided_slice %416 {offsets = [0, 192], sizes = [2, 64], strides = [1, 1]} : vector<2x256xf32> to vector<2x64xf32>
    %427 = arith.mulf %423, %426 : vector<2x64xf32>
    %428 = arith.addf %425, %427 : vector<2x64xf32>
    %429 = math.tanh %428 : vector<2x64xf32>
    %cst_165 = arith.constant 1.000000e+00 : f32
    %430 = vector.broadcast %cst_165 : f32 to vector<2x64xf32>
    %431 = arith.subf %430, %424 : vector<2x64xf32>
    %432 = arith.mulf %431, %429 : vector<2x64xf32>
    %433 = arith.mulf %424, %358 : vector<2x64xf32>
    %434 = arith.addf %432, %433 : vector<2x64xf32>
    %c0_166 = arith.constant 0 : index
    %c0_167 = arith.constant 0 : index
    %435 = vector.load %arg4[%c0_166, %c0_167] : memref<64x32xf32, #tpu.memory_space<vmem>>, vector<64x32xf32>
    %cst_168 = arith.constant dense<0.000000e+00> : vector<2x32xf32>
    %436 = tpu.matmul %434, %435, %cst_168 {dimension_numbers = #tpu.dot_dimension_numbers<[1], [0], [0], [1], [0, 0, 1, 1], [], []>} : vector<2x64xf32>, vector<64x32xf32>, vector<2x32xf32> -> vector<2x32xf32>
    %c0_169 = arith.constant 0 : index
    %c0_170 = arith.constant 0 : index
    %437 = vector.load %arg5[%c0_169, %c0_170] : memref<1x32xf32, #tpu.memory_space<vmem>>, vector<1x32xf32>
    %438 = vector.broadcast %437 : vector<1x32xf32> to vector<2x32xf32>
    %439 = arith.addf %436, %438 : vector<2x32xf32>
    %cst_171 = arith.constant 0.000000e+00 : f32
    %440 = vector.broadcast %cst_171 : f32 to vector<2x32xf32>
    %441 = arith.maximumf %439, %440 : vector<2x32xf32>
    %c0_172 = arith.constant 0 : index
    %c0_173 = arith.constant 0 : index
    %442 = vector.load %arg6[%c0_172, %c0_173] : memref<32x128xf32, #tpu.memory_space<vmem>>, vector<32x128xf32>
    %cst_174 = arith.constant dense<0.000000e+00> : vector<2x128xf32>
    %443 = tpu.matmul %441, %442, %cst_174 {dimension_numbers = #tpu.dot_dimension_numbers<[1], [0], [0], [1], [0, 0, 1, 1], [], []>} : vector<2x32xf32>, vector<32x128xf32>, vector<2x128xf32> -> vector<2x128xf32>
    %c0_175 = arith.constant 0 : index
    %c0_176 = arith.constant 0 : index
    %444 = vector.load %arg7[%c0_175, %c0_176] : memref<1x128xf32, #tpu.memory_space<vmem>>, vector<1x128xf32>
    %445 = vector.broadcast %444 : vector<1x128xf32> to vector<2x128xf32>
    %446 = arith.addf %443, %445 : vector<2x128xf32>
    %447 = arith.index_cast %c5_i32 : i32 to index
    %c0_177 = arith.constant 0 : index
    %c0_178 = arith.constant 0 : index
    %448 = vector.load %arg10[%447, %c0_177, %c0_178] : memref<10x2x128xf32, #tpu.memory_space<vmem>>, vector<1x2x128xf32>
    %449 = vector.shape_cast %448 : vector<1x2x128xf32> to vector<2x128xf32>
    %450 = vector.shape_cast %446 : vector<2x128xf32> to vector<1x2x128xf32>
    tpu.vector_store %arg10[%447, %c0_177, %c0_178], %450 {strides = array<i32>} : memref<10x2x128xf32, #tpu.memory_space<vmem>>, vector<1x2x128xf32>,
    %cst_179 = arith.constant dense<0xFF800000> : vector<2xf32>
    %451 = vector.multi_reduction <maximumf>, %446, %cst_179 [1] : vector<2x128xf32> to vector<2xf32>
    %452 = vector.shape_cast %451 : vector<2xf32> to vector<2x1xf32>
    %453 = vector.broadcast %452 : vector<2x1xf32> to vector<2x128xf32>
    %454 = arith.cmpf oeq, %446, %453 : vector<2x128xf32>
    %c128_i32_180 = arith.constant 128 : i32
    %455 = vector.broadcast %c128_i32_180 : i32 to vector<2x128xi32>
    %456 = arith.select %454, %0, %455 : vector<2x128xi1>, vector<2x128xi32>
    %cst_181 = arith.constant dense<2147483647> : vector<2xi32>
    %457 = vector.multi_reduction <minsi>, %456, %cst_181 [1] : vector<2x128xi32> to vector<2xi32>
    %458 = vector.shape_cast %457 : vector<2xi32> to vector<2x1xi32>
    %459 = vector.broadcast %458 : vector<2x1xi32> to vector<2x128xi32>
    %460 = arith.cmpi eq, %0, %459 : vector<2x128xi32>
    %461 = arith.extui %460 : vector<2x128xi1> to vector<2x128xi32>
    %462 = arith.sitofp %461 : vector<2x128xi32> to vector<2x128xf32>
    %c6_i32 = arith.constant 6 : i32
    %463 = tpu.concatenate %462, %410 in 1 : vector<2x128xf32>, vector<2x64xf32> -> vector<2x192xf32>
    %c0_182 = arith.constant 0 : index
    %c0_183 = arith.constant 0 : index
    %464 = vector.load %arg0[%c0_182, %c0_183] : memref<192x256xf32, #tpu.memory_space<vmem>>, vector<192x256xf32>
    %cst_184 = arith.constant dense<0.000000e+00> : vector<2x256xf32>
    %465 = tpu.matmul %463, %464, %cst_184 {dimension_numbers = #tpu.dot_dimension_numbers<[1], [0], [0], [1], [0, 0, 1, 1], [], []>} : vector<2x192xf32>, vector<192x256xf32>, vector<2x256xf32> -> vector<2x256xf32>
    %c0_185 = arith.constant 0 : index
    %c0_186 = arith.constant 0 : index
    %466 = vector.load %arg1[%c0_185, %c0_186] : memref<1x256xf32, #tpu.memory_space<vmem>>, vector<1x256xf32>
    %467 = vector.broadcast %466 : vector<1x256xf32> to vector<2x256xf32>
    %468 = arith.addf %465, %467 : vector<2x256xf32>
    %469 = vector.extract_strided_slice %468 {offsets = [0, 0], sizes = [2, 128], strides = [1, 1]} : vector<2x256xf32> to vector<2x128xf32>
    %470 = arith.negf %469 : vector<2x128xf32>
    %471 = math.exp %470 : vector<2x128xf32>
    %cst_187 = arith.constant 1.000000e+00 : f32
    %472 = vector.broadcast %cst_187 : f32 to vector<2x128xf32>
    %473 = arith.addf %472, %471 : vector<2x128xf32>
    %474 = arith.divf %472, %473 : vector<2x128xf32>
    %475 = vector.extract_strided_slice %474 {offsets = [0, 0], sizes = [2, 64], strides = [1, 1]} : vector<2x128xf32> to vector<2x64xf32>
    %476 = vector.extract_strided_slice %474 {offsets = [0, 64], sizes = [2, 64], strides = [1, 1]} : vector<2x128xf32> to vector<2x64xf32>
    %477 = vector.extract_strided_slice %468 {offsets = [0, 128], sizes = [2, 64], strides = [1, 1]} : vector<2x256xf32> to vector<2x64xf32>
    %478 = vector.extract_strided_slice %468 {offsets = [0, 192], sizes = [2, 64], strides = [1, 1]} : vector<2x256xf32> to vector<2x64xf32>
    %479 = arith.mulf %475, %478 : vector<2x64xf32>
    %480 = arith.addf %477, %479 : vector<2x64xf32>
    %481 = math.tanh %480 : vector<2x64xf32>
    %cst_188 = arith.constant 1.000000e+00 : f32
    %482 = vector.broadcast %cst_188 : f32 to vector<2x64xf32>
    %483 = arith.subf %482, %476 : vector<2x64xf32>
    %484 = arith.mulf %483, %481 : vector<2x64xf32>
    %485 = arith.mulf %476, %410 : vector<2x64xf32>
    %486 = arith.addf %484, %485 : vector<2x64xf32>
    %487 = tpu.concatenate %486, %434 in 1 : vector<2x64xf32>, vector<2x64xf32> -> vector<2x128xf32>
    %c0_189 = arith.constant 0 : index
    %c0_190 = arith.constant 0 : index
    %488 = vector.load %arg2[%c0_189, %c0_190] : memref<128x256xf32, #tpu.memory_space<vmem>>, vector<128x256xf32>
    %cst_191 = arith.constant dense<0.000000e+00> : vector<2x256xf32>
    %489 = tpu.matmul %487, %488, %cst_191 {dimension_numbers = #tpu.dot_dimension_numbers<[1], [0], [0], [1], [0, 0, 1, 1], [], []>} : vector<2x128xf32>, vector<128x256xf32>, vector<2x256xf32> -> vector<2x256xf32>
    %c0_192 = arith.constant 0 : index
    %c0_193 = arith.constant 0 : index
    %490 = vector.load %arg3[%c0_192, %c0_193] : memref<1x256xf32, #tpu.memory_space<vmem>>, vector<1x256xf32>
    %491 = vector.broadcast %490 : vector<1x256xf32> to vector<2x256xf32>
    %492 = arith.addf %489, %491 : vector<2x256xf32>
    %493 = vector.extract_strided_slice %492 {offsets = [0, 0], sizes = [2, 128], strides = [1, 1]} : vector<2x256xf32> to vector<2x128xf32>
    %494 = arith.negf %493 : vector<2x128xf32>
    %495 = math.exp %494 : vector<2x128xf32>
    %cst_194 = arith.constant 1.000000e+00 : f32
    %496 = vector.broadcast %cst_194 : f32 to vector<2x128xf32>
    %497 = arith.addf %496, %495 : vector<2x128xf32>
    %498 = arith.divf %496, %497 : vector<2x128xf32>
    %499 = vector.extract_strided_slice %498 {offsets = [0, 0], sizes = [2, 64], strides = [1, 1]} : vector<2x128xf32> to vector<2x64xf32>
    %500 = vector.extract_strided_slice %498 {offsets = [0, 64], sizes = [2, 64], strides = [1, 1]} : vector<2x128xf32> to vector<2x64xf32>
    %501 = vector.extract_strided_slice %492 {offsets = [0, 128], sizes = [2, 64], strides = [1, 1]} : vector<2x256xf32> to vector<2x64xf32>
    %502 = vector.extract_strided_slice %492 {offsets = [0, 192], sizes = [2, 64], strides = [1, 1]} : vector<2x256xf32> to vector<2x64xf32>
    %503 = arith.mulf %499, %502 : vector<2x64xf32>
    %504 = arith.addf %501, %503 : vector<2x64xf32>
    %505 = math.tanh %504 : vector<2x64xf32>
    %cst_195 = arith.constant 1.000000e+00 : f32
    %506 = vector.broadcast %cst_195 : f32 to vector<2x64xf32>
    %507 = arith.subf %506, %500 : vector<2x64xf32>
    %508 = arith.mulf %507, %505 : vector<2x64xf32>
    %509 = arith.mulf %500, %434 : vector<2x64xf32>
    %510 = arith.addf %508, %509 : vector<2x64xf32>
    %c0_196 = arith.constant 0 : index
    %c0_197 = arith.constant 0 : index
    %511 = vector.load %arg4[%c0_196, %c0_197] : memref<64x32xf32, #tpu.memory_space<vmem>>, vector<64x32xf32>
    %cst_198 = arith.constant dense<0.000000e+00> : vector<2x32xf32>
    %512 = tpu.matmul %510, %511, %cst_198 {dimension_numbers = #tpu.dot_dimension_numbers<[1], [0], [0], [1], [0, 0, 1, 1], [], []>} : vector<2x64xf32>, vector<64x32xf32>, vector<2x32xf32> -> vector<2x32xf32>
    %c0_199 = arith.constant 0 : index
    %c0_200 = arith.constant 0 : index
    %513 = vector.load %arg5[%c0_199, %c0_200] : memref<1x32xf32, #tpu.memory_space<vmem>>, vector<1x32xf32>
    %514 = vector.broadcast %513 : vector<1x32xf32> to vector<2x32xf32>
    %515 = arith.addf %512, %514 : vector<2x32xf32>
    %cst_201 = arith.constant 0.000000e+00 : f32
    %516 = vector.broadcast %cst_201 : f32 to vector<2x32xf32>
    %517 = arith.maximumf %515, %516 : vector<2x32xf32>
    %c0_202 = arith.constant 0 : index
    %c0_203 = arith.constant 0 : index
    %518 = vector.load %arg6[%c0_202, %c0_203] : memref<32x128xf32, #tpu.memory_space<vmem>>, vector<32x128xf32>
    %cst_204 = arith.constant dense<0.000000e+00> : vector<2x128xf32>
    %519 = tpu.matmul %517, %518, %cst_204 {dimension_numbers = #tpu.dot_dimension_numbers<[1], [0], [0], [1], [0, 0, 1, 1], [], []>} : vector<2x32xf32>, vector<32x128xf32>, vector<2x128xf32> -> vector<2x128xf32>
    %c0_205 = arith.constant 0 : index
    %c0_206 = arith.constant 0 : index
    %520 = vector.load %arg7[%c0_205, %c0_206] : memref<1x128xf32, #tpu.memory_space<vmem>>, vector<1x128xf32>
    %521 = vector.broadcast %520 : vector<1x128xf32> to vector<2x128xf32>
    %522 = arith.addf %519, %521 : vector<2x128xf32>
    %523 = arith.index_cast %c6_i32 : i32 to index
    %c0_207 = arith.constant 0 : index
    %c0_208 = arith.constant 0 : index
    %524 = vector.load %arg10[%523, %c0_207, %c0_208] : memref<10x2x128xf32, #tpu.memory_space<vmem>>, vector<1x2x128xf32>
    %525 = vector.shape_cast %524 : vector<1x2x128xf32> to vector<2x128xf32>
    %526 = vector.shape_cast %522 : vector<2x128xf32> to vector<1x2x128xf32>
    tpu.vector_store %arg10[%523, %c0_207, %c0_208], %526 {strides = array<i32>} : memref<10x2x128xf32, #tpu.memory_space<vmem>>, vector<1x2x128xf32>,
    %cst_209 = arith.constant dense<0xFF800000> : vector<2xf32>
    %527 = vector.multi_reduction <maximumf>, %522, %cst_209 [1] : vector<2x128xf32> to vector<2xf32>
    %528 = vector.shape_cast %527 : vector<2xf32> to vector<2x1xf32>
    %529 = vector.broadcast %528 : vector<2x1xf32> to vector<2x128xf32>
    %530 = arith.cmpf oeq, %522, %529 : vector<2x128xf32>
    %c128_i32_210 = arith.constant 128 : i32
    %531 = vector.broadcast %c128_i32_210 : i32 to vector<2x128xi32>
    %532 = arith.select %530, %0, %531 : vector<2x128xi1>, vector<2x128xi32>
    %cst_211 = arith.constant dense<2147483647> : vector<2xi32>
    %533 = vector.multi_reduction <minsi>, %532, %cst_211 [1] : vector<2x128xi32> to vector<2xi32>
    %534 = vector.shape_cast %533 : vector<2xi32> to vector<2x1xi32>
    %535 = vector.broadcast %534 : vector<2x1xi32> to vector<2x128xi32>
    %536 = arith.cmpi eq, %0, %535 : vector<2x128xi32>
    %537 = arith.extui %536 : vector<2x128xi1> to vector<2x128xi32>
    %538 = arith.sitofp %537 : vector<2x128xi32> to vector<2x128xf32>
    %c7_i32 = arith.constant 7 : i32
    %539 = tpu.concatenate %538, %486 in 1 : vector<2x128xf32>, vector<2x64xf32> -> vector<2x192xf32>
    %c0_212 = arith.constant 0 : index
    %c0_213 = arith.constant 0 : index
    %540 = vector.load %arg0[%c0_212, %c0_213] : memref<192x256xf32, #tpu.memory_space<vmem>>, vector<192x256xf32>
    %cst_214 = arith.constant dense<0.000000e+00> : vector<2x256xf32>
    %541 = tpu.matmul %539, %540, %cst_214 {dimension_numbers = #tpu.dot_dimension_numbers<[1], [0], [0], [1], [0, 0, 1, 1], [], []>} : vector<2x192xf32>, vector<192x256xf32>, vector<2x256xf32> -> vector<2x256xf32>
    %c0_215 = arith.constant 0 : index
    %c0_216 = arith.constant 0 : index
    %542 = vector.load %arg1[%c0_215, %c0_216] : memref<1x256xf32, #tpu.memory_space<vmem>>, vector<1x256xf32>
    %543 = vector.broadcast %542 : vector<1x256xf32> to vector<2x256xf32>
    %544 = arith.addf %541, %543 : vector<2x256xf32>
    %545 = vector.extract_strided_slice %544 {offsets = [0, 0], sizes = [2, 128], strides = [1, 1]} : vector<2x256xf32> to vector<2x128xf32>
    %546 = arith.negf %545 : vector<2x128xf32>
    %547 = math.exp %546 : vector<2x128xf32>
    %cst_217 = arith.constant 1.000000e+00 : f32
    %548 = vector.broadcast %cst_217 : f32 to vector<2x128xf32>
    %549 = arith.addf %548, %547 : vector<2x128xf32>
    %550 = arith.divf %548, %549 : vector<2x128xf32>
    %551 = vector.extract_strided_slice %550 {offsets = [0, 0], sizes = [2, 64], strides = [1, 1]} : vector<2x128xf32> to vector<2x64xf32>
    %552 = vector.extract_strided_slice %550 {offsets = [0, 64], sizes = [2, 64], strides = [1, 1]} : vector<2x128xf32> to vector<2x64xf32>
    %553 = vector.extract_strided_slice %544 {offsets = [0, 128], sizes = [2, 64], strides = [1, 1]} : vector<2x256xf32> to vector<2x64xf32>
    %554 = vector.extract_strided_slice %544 {offsets = [0, 192], sizes = [2, 64], strides = [1, 1]} : vector<2x256xf32> to vector<2x64xf32>
    %555 = arith.mulf %551, %554 : vector<2x64xf32>
    %556 = arith.addf %553, %555 : vector<2x64xf32>
    %557 = math.tanh %556 : vector<2x64xf32>
    %cst_218 = arith.constant 1.000000e+00 : f32
    %558 = vector.broadcast %cst_218 : f32 to vector<2x64xf32>
    %559 = arith.subf %558, %552 : vector<2x64xf32>
    %560 = arith.mulf %559, %557 : vector<2x64xf32>
    %561 = arith.mulf %552, %486 : vector<2x64xf32>
    %562 = arith.addf %560, %561 : vector<2x64xf32>
    %563 = tpu.concatenate %562, %510 in 1 : vector<2x64xf32>, vector<2x64xf32> -> vector<2x128xf32>
    %c0_219 = arith.constant 0 : index
    %c0_220 = arith.constant 0 : index
    %564 = vector.load %arg2[%c0_219, %c0_220] : memref<128x256xf32, #tpu.memory_space<vmem>>, vector<128x256xf32>
    %cst_221 = arith.constant dense<0.000000e+00> : vector<2x256xf32>
    %565 = tpu.matmul %563, %564, %cst_221 {dimension_numbers = #tpu.dot_dimension_numbers<[1], [0], [0], [1], [0, 0, 1, 1], [], []>} : vector<2x128xf32>, vector<128x256xf32>, vector<2x256xf32> -> vector<2x256xf32>
    %c0_222 = arith.constant 0 : index
    %c0_223 = arith.constant 0 : index
    %566 = vector.load %arg3[%c0_222, %c0_223] : memref<1x256xf32, #tpu.memory_space<vmem>>, vector<1x256xf32>
    %567 = vector.broadcast %566 : vector<1x256xf32> to vector<2x256xf32>
    %568 = arith.addf %565, %567 : vector<2x256xf32>
    %569 = vector.extract_strided_slice %568 {offsets = [0, 0], sizes = [2, 128], strides = [1, 1]} : vector<2x256xf32> to vector<2x128xf32>
    %570 = arith.negf %569 : vector<2x128xf32>
    %571 = math.exp %570 : vector<2x128xf32>
    %cst_224 = arith.constant 1.000000e+00 : f32
    %572 = vector.broadcast %cst_224 : f32 to vector<2x128xf32>
    %573 = arith.addf %572, %571 : vector<2x128xf32>
    %574 = arith.divf %572, %573 : vector<2x128xf32>
    %575 = vector.extract_strided_slice %574 {offsets = [0, 0], sizes = [2, 64], strides = [1, 1]} : vector<2x128xf32> to vector<2x64xf32>
    %576 = vector.extract_strided_slice %574 {offsets = [0, 64], sizes = [2, 64], strides = [1, 1]} : vector<2x128xf32> to vector<2x64xf32>
    %577 = vector.extract_strided_slice %568 {offsets = [0, 128], sizes = [2, 64], strides = [1, 1]} : vector<2x256xf32> to vector<2x64xf32>
    %578 = vector.extract_strided_slice %568 {offsets = [0, 192], sizes = [2, 64], strides = [1, 1]} : vector<2x256xf32> to vector<2x64xf32>
    %579 = arith.mulf %575, %578 : vector<2x64xf32>
    %580 = arith.addf %577, %579 : vector<2x64xf32>
    %581 = math.tanh %580 : vector<2x64xf32>
    %cst_225 = arith.constant 1.000000e+00 : f32
    %582 = vector.broadcast %cst_225 : f32 to vector<2x64xf32>
    %583 = arith.subf %582, %576 : vector<2x64xf32>
    %584 = arith.mulf %583, %581 : vector<2x64xf32>
    %585 = arith.mulf %576, %510 : vector<2x64xf32>
    %586 = arith.addf %584, %585 : vector<2x64xf32>
    %c0_226 = arith.constant 0 : index
    %c0_227 = arith.constant 0 : index
    %587 = vector.load %arg4[%c0_226, %c0_227] : memref<64x32xf32, #tpu.memory_space<vmem>>, vector<64x32xf32>
    %cst_228 = arith.constant dense<0.000000e+00> : vector<2x32xf32>
    %588 = tpu.matmul %586, %587, %cst_228 {dimension_numbers = #tpu.dot_dimension_numbers<[1], [0], [0], [1], [0, 0, 1, 1], [], []>} : vector<2x64xf32>, vector<64x32xf32>, vector<2x32xf32> -> vector<2x32xf32>
    %c0_229 = arith.constant 0 : index
    %c0_230 = arith.constant 0 : index
    %589 = vector.load %arg5[%c0_229, %c0_230] : memref<1x32xf32, #tpu.memory_space<vmem>>, vector<1x32xf32>
    %590 = vector.broadcast %589 : vector<1x32xf32> to vector<2x32xf32>
    %591 = arith.addf %588, %590 : vector<2x32xf32>
    %cst_231 = arith.constant 0.000000e+00 : f32
    %592 = vector.broadcast %cst_231 : f32 to vector<2x32xf32>
    %593 = arith.maximumf %591, %592 : vector<2x32xf32>
    %c0_232 = arith.constant 0 : index
    %c0_233 = arith.constant 0 : index
    %594 = vector.load %arg6[%c0_232, %c0_233] : memref<32x128xf32, #tpu.memory_space<vmem>>, vector<32x128xf32>
    %cst_234 = arith.constant dense<0.000000e+00> : vector<2x128xf32>
    %595 = tpu.matmul %593, %594, %cst_234 {dimension_numbers = #tpu.dot_dimension_numbers<[1], [0], [0], [1], [0, 0, 1, 1], [], []>} : vector<2x32xf32>, vector<32x128xf32>, vector<2x128xf32> -> vector<2x128xf32>
    %c0_235 = arith.constant 0 : index
    %c0_236 = arith.constant 0 : index
    %596 = vector.load %arg7[%c0_235, %c0_236] : memref<1x128xf32, #tpu.memory_space<vmem>>, vector<1x128xf32>
    %597 = vector.broadcast %596 : vector<1x128xf32> to vector<2x128xf32>
    %598 = arith.addf %595, %597 : vector<2x128xf32>
    %599 = arith.index_cast %c7_i32 : i32 to index
    %c0_237 = arith.constant 0 : index
    %c0_238 = arith.constant 0 : index
    %600 = vector.load %arg10[%599, %c0_237, %c0_238] : memref<10x2x128xf32, #tpu.memory_space<vmem>>, vector<1x2x128xf32>
    %601 = vector.shape_cast %600 : vector<1x2x128xf32> to vector<2x128xf32>
    %602 = vector.shape_cast %598 : vector<2x128xf32> to vector<1x2x128xf32>
    tpu.vector_store %arg10[%599, %c0_237, %c0_238], %602 {strides = array<i32>} : memref<10x2x128xf32, #tpu.memory_space<vmem>>, vector<1x2x128xf32>,
    %cst_239 = arith.constant dense<0xFF800000> : vector<2xf32>
    %603 = vector.multi_reduction <maximumf>, %598, %cst_239 [1] : vector<2x128xf32> to vector<2xf32>
    %604 = vector.shape_cast %603 : vector<2xf32> to vector<2x1xf32>
    %605 = vector.broadcast %604 : vector<2x1xf32> to vector<2x128xf32>
    %606 = arith.cmpf oeq, %598, %605 : vector<2x128xf32>
    %c128_i32_240 = arith.constant 128 : i32
    %607 = vector.broadcast %c128_i32_240 : i32 to vector<2x128xi32>
    %608 = arith.select %606, %0, %607 : vector<2x128xi1>, vector<2x128xi32>
    %cst_241 = arith.constant dense<2147483647> : vector<2xi32>
    %609 = vector.multi_reduction <minsi>, %608, %cst_241 [1] : vector<2x128xi32> to vector<2xi32>
    %610 = vector.shape_cast %609 : vector<2xi32> to vector<2x1xi32>
    %611 = vector.broadcast %610 : vector<2x1xi32> to vector<2x128xi32>
    %612 = arith.cmpi eq, %0, %611 : vector<2x128xi32>
    %613 = arith.extui %612 : vector<2x128xi1> to vector<2x128xi32>
    %614 = arith.sitofp %613 : vector<2x128xi32> to vector<2x128xf32>
    %c8_i32 = arith.constant 8 : i32
    %615 = tpu.concatenate %614, %562 in 1 : vector<2x128xf32>, vector<2x64xf32> -> vector<2x192xf32>
    %c0_242 = arith.constant 0 : index
    %c0_243 = arith.constant 0 : index
    %616 = vector.load %arg0[%c0_242, %c0_243] : memref<192x256xf32, #tpu.memory_space<vmem>>, vector<192x256xf32>
    %cst_244 = arith.constant dense<0.000000e+00> : vector<2x256xf32>
    %617 = tpu.matmul %615, %616, %cst_244 {dimension_numbers = #tpu.dot_dimension_numbers<[1], [0], [0], [1], [0, 0, 1, 1], [], []>} : vector<2x192xf32>, vector<192x256xf32>, vector<2x256xf32> -> vector<2x256xf32>
    %c0_245 = arith.constant 0 : index
    %c0_246 = arith.constant 0 : index
    %618 = vector.load %arg1[%c0_245, %c0_246] : memref<1x256xf32, #tpu.memory_space<vmem>>, vector<1x256xf32>
    %619 = vector.broadcast %618 : vector<1x256xf32> to vector<2x256xf32>
    %620 = arith.addf %617, %619 : vector<2x256xf32>
    %621 = vector.extract_strided_slice %620 {offsets = [0, 0], sizes = [2, 128], strides = [1, 1]} : vector<2x256xf32> to vector<2x128xf32>
    %622 = arith.negf %621 : vector<2x128xf32>
    %623 = math.exp %622 : vector<2x128xf32>
    %cst_247 = arith.constant 1.000000e+00 : f32
    %624 = vector.broadcast %cst_247 : f32 to vector<2x128xf32>
    %625 = arith.addf %624, %623 : vector<2x128xf32>
    %626 = arith.divf %624, %625 : vector<2x128xf32>
    %627 = vector.extract_strided_slice %626 {offsets = [0, 0], sizes = [2, 64], strides = [1, 1]} : vector<2x128xf32> to vector<2x64xf32>
    %628 = vector.extract_strided_slice %626 {offsets = [0, 64], sizes = [2, 64], strides = [1, 1]} : vector<2x128xf32> to vector<2x64xf32>
    %629 = vector.extract_strided_slice %620 {offsets = [0, 128], sizes = [2, 64], strides = [1, 1]} : vector<2x256xf32> to vector<2x64xf32>
    %630 = vector.extract_strided_slice %620 {offsets = [0, 192], sizes = [2, 64], strides = [1, 1]} : vector<2x256xf32> to vector<2x64xf32>
    %631 = arith.mulf %627, %630 : vector<2x64xf32>
    %632 = arith.addf %629, %631 : vector<2x64xf32>
    %633 = math.tanh %632 : vector<2x64xf32>
    %cst_248 = arith.constant 1.000000e+00 : f32
    %634 = vector.broadcast %cst_248 : f32 to vector<2x64xf32>
    %635 = arith.subf %634, %628 : vector<2x64xf32>
    %636 = arith.mulf %635, %633 : vector<2x64xf32>
    %637 = arith.mulf %628, %562 : vector<2x64xf32>
    %638 = arith.addf %636, %637 : vector<2x64xf32>
    %639 = tpu.concatenate %638, %586 in 1 : vector<2x64xf32>, vector<2x64xf32> -> vector<2x128xf32>
    %c0_249 = arith.constant 0 : index
    %c0_250 = arith.constant 0 : index
    %640 = vector.load %arg2[%c0_249, %c0_250] : memref<128x256xf32, #tpu.memory_space<vmem>>, vector<128x256xf32>
    %cst_251 = arith.constant dense<0.000000e+00> : vector<2x256xf32>
    %641 = tpu.matmul %639, %640, %cst_251 {dimension_numbers = #tpu.dot_dimension_numbers<[1], [0], [0], [1], [0, 0, 1, 1], [], []>} : vector<2x128xf32>, vector<128x256xf32>, vector<2x256xf32> -> vector<2x256xf32>
    %c0_252 = arith.constant 0 : index
    %c0_253 = arith.constant 0 : index
    %642 = vector.load %arg3[%c0_252, %c0_253] : memref<1x256xf32, #tpu.memory_space<vmem>>, vector<1x256xf32>
    %643 = vector.broadcast %642 : vector<1x256xf32> to vector<2x256xf32>
    %644 = arith.addf %641, %643 : vector<2x256xf32>
    %645 = vector.extract_strided_slice %644 {offsets = [0, 0], sizes = [2, 128], strides = [1, 1]} : vector<2x256xf32> to vector<2x128xf32>
    %646 = arith.negf %645 : vector<2x128xf32>
    %647 = math.exp %646 : vector<2x128xf32>
    %cst_254 = arith.constant 1.000000e+00 : f32
    %648 = vector.broadcast %cst_254 : f32 to vector<2x128xf32>
    %649 = arith.addf %648, %647 : vector<2x128xf32>
    %650 = arith.divf %648, %649 : vector<2x128xf32>
    %651 = vector.extract_strided_slice %650 {offsets = [0, 0], sizes = [2, 64], strides = [1, 1]} : vector<2x128xf32> to vector<2x64xf32>
    %652 = vector.extract_strided_slice %650 {offsets = [0, 64], sizes = [2, 64], strides = [1, 1]} : vector<2x128xf32> to vector<2x64xf32>
    %653 = vector.extract_strided_slice %644 {offsets = [0, 128], sizes = [2, 64], strides = [1, 1]} : vector<2x256xf32> to vector<2x64xf32>
    %654 = vector.extract_strided_slice %644 {offsets = [0, 192], sizes = [2, 64], strides = [1, 1]} : vector<2x256xf32> to vector<2x64xf32>
    %655 = arith.mulf %651, %654 : vector<2x64xf32>
    %656 = arith.addf %653, %655 : vector<2x64xf32>
    %657 = math.tanh %656 : vector<2x64xf32>
    %cst_255 = arith.constant 1.000000e+00 : f32
    %658 = vector.broadcast %cst_255 : f32 to vector<2x64xf32>
    %659 = arith.subf %658, %652 : vector<2x64xf32>
    %660 = arith.mulf %659, %657 : vector<2x64xf32>
    %661 = arith.mulf %652, %586 : vector<2x64xf32>
    %662 = arith.addf %660, %661 : vector<2x64xf32>
    %c0_256 = arith.constant 0 : index
    %c0_257 = arith.constant 0 : index
    %663 = vector.load %arg4[%c0_256, %c0_257] : memref<64x32xf32, #tpu.memory_space<vmem>>, vector<64x32xf32>
    %cst_258 = arith.constant dense<0.000000e+00> : vector<2x32xf32>
    %664 = tpu.matmul %662, %663, %cst_258 {dimension_numbers = #tpu.dot_dimension_numbers<[1], [0], [0], [1], [0, 0, 1, 1], [], []>} : vector<2x64xf32>, vector<64x32xf32>, vector<2x32xf32> -> vector<2x32xf32>
    %c0_259 = arith.constant 0 : index
    %c0_260 = arith.constant 0 : index
    %665 = vector.load %arg5[%c0_259, %c0_260] : memref<1x32xf32, #tpu.memory_space<vmem>>, vector<1x32xf32>
    %666 = vector.broadcast %665 : vector<1x32xf32> to vector<2x32xf32>
    %667 = arith.addf %664, %666 : vector<2x32xf32>
    %cst_261 = arith.constant 0.000000e+00 : f32
    %668 = vector.broadcast %cst_261 : f32 to vector<2x32xf32>
    %669 = arith.maximumf %667, %668 : vector<2x32xf32>
    %c0_262 = arith.constant 0 : index
    %c0_263 = arith.constant 0 : index
    %670 = vector.load %arg6[%c0_262, %c0_263] : memref<32x128xf32, #tpu.memory_space<vmem>>, vector<32x128xf32>
    %cst_264 = arith.constant dense<0.000000e+00> : vector<2x128xf32>
    %671 = tpu.matmul %669, %670, %cst_264 {dimension_numbers = #tpu.dot_dimension_numbers<[1], [0], [0], [1], [0, 0, 1, 1], [], []>} : vector<2x32xf32>, vector<32x128xf32>, vector<2x128xf32> -> vector<2x128xf32>
    %c0_265 = arith.constant 0 : index
    %c0_266 = arith.constant 0 : index
    %672 = vector.load %arg7[%c0_265, %c0_266] : memref<1x128xf32, #tpu.memory_space<vmem>>, vector<1x128xf32>
    %673 = vector.broadcast %672 : vector<1x128xf32> to vector<2x128xf32>
    %674 = arith.addf %671, %673 : vector<2x128xf32>
    %675 = arith.index_cast %c8_i32 : i32 to index
    %c0_267 = arith.constant 0 : index
    %c0_268 = arith.constant 0 : index
    %676 = vector.load %arg10[%675, %c0_267, %c0_268] : memref<10x2x128xf32, #tpu.memory_space<vmem>>, vector<1x2x128xf32>
    %677 = vector.shape_cast %676 : vector<1x2x128xf32> to vector<2x128xf32>
    %678 = vector.shape_cast %674 : vector<2x128xf32> to vector<1x2x128xf32>
    tpu.vector_store %arg10[%675, %c0_267, %c0_268], %678 {strides = array<i32>} : memref<10x2x128xf32, #tpu.memory_space<vmem>>, vector<1x2x128xf32>,
    %cst_269 = arith.constant dense<0xFF800000> : vector<2xf32>
    %679 = vector.multi_reduction <maximumf>, %674, %cst_269 [1] : vector<2x128xf32> to vector<2xf32>
    %680 = vector.shape_cast %679 : vector<2xf32> to vector<2x1xf32>
    %681 = vector.broadcast %680 : vector<2x1xf32> to vector<2x128xf32>
    %682 = arith.cmpf oeq, %674, %681 : vector<2x128xf32>
    %c128_i32_270 = arith.constant 128 : i32
    %683 = vector.broadcast %c128_i32_270 : i32 to vector<2x128xi32>
    %684 = arith.select %682, %0, %683 : vector<2x128xi1>, vector<2x128xi32>
    %cst_271 = arith.constant dense<2147483647> : vector<2xi32>
    %685 = vector.multi_reduction <minsi>, %684, %cst_271 [1] : vector<2x128xi32> to vector<2xi32>
    %686 = vector.shape_cast %685 : vector<2xi32> to vector<2x1xi32>
    %687 = vector.broadcast %686 : vector<2x1xi32> to vector<2x128xi32>
    %688 = arith.cmpi eq, %0, %687 : vector<2x128xi32>
    %689 = arith.extui %688 : vector<2x128xi1> to vector<2x128xi32>
    %690 = arith.sitofp %689 : vector<2x128xi32> to vector<2x128xf32>
    %c9_i32 = arith.constant 9 : i32
    %691 = tpu.concatenate %690, %638 in 1 : vector<2x128xf32>, vector<2x64xf32> -> vector<2x192xf32>
    %c0_272 = arith.constant 0 : index
    %c0_273 = arith.constant 0 : index
    %692 = vector.load %arg0[%c0_272, %c0_273] : memref<192x256xf32, #tpu.memory_space<vmem>>, vector<192x256xf32>
    %cst_274 = arith.constant dense<0.000000e+00> : vector<2x256xf32>
    %693 = tpu.matmul %691, %692, %cst_274 {dimension_numbers = #tpu.dot_dimension_numbers<[1], [0], [0], [1], [0, 0, 1, 1], [], []>} : vector<2x192xf32>, vector<192x256xf32>, vector<2x256xf32> -> vector<2x256xf32>
    %c0_275 = arith.constant 0 : index
    %c0_276 = arith.constant 0 : index
    %694 = vector.load %arg1[%c0_275, %c0_276] : memref<1x256xf32, #tpu.memory_space<vmem>>, vector<1x256xf32>
    %695 = vector.broadcast %694 : vector<1x256xf32> to vector<2x256xf32>
    %696 = arith.addf %693, %695 : vector<2x256xf32>
    %697 = vector.extract_strided_slice %696 {offsets = [0, 0], sizes = [2, 128], strides = [1, 1]} : vector<2x256xf32> to vector<2x128xf32>
    %698 = arith.negf %697 : vector<2x128xf32>
    %699 = math.exp %698 : vector<2x128xf32>
    %cst_277 = arith.constant 1.000000e+00 : f32
    %700 = vector.broadcast %cst_277 : f32 to vector<2x128xf32>
    %701 = arith.addf %700, %699 : vector<2x128xf32>
    %702 = arith.divf %700, %701 : vector<2x128xf32>
    %703 = vector.extract_strided_slice %702 {offsets = [0, 0], sizes = [2, 64], strides = [1, 1]} : vector<2x128xf32> to vector<2x64xf32>
    %704 = vector.extract_strided_slice %702 {offsets = [0, 64], sizes = [2, 64], strides = [1, 1]} : vector<2x128xf32> to vector<2x64xf32>
    %705 = vector.extract_strided_slice %696 {offsets = [0, 128], sizes = [2, 64], strides = [1, 1]} : vector<2x256xf32> to vector<2x64xf32>
    %706 = vector.extract_strided_slice %696 {offsets = [0, 192], sizes = [2, 64], strides = [1, 1]} : vector<2x256xf32> to vector<2x64xf32>
    %707 = arith.mulf %703, %706 : vector<2x64xf32>
    %708 = arith.addf %705, %707 : vector<2x64xf32>
    %709 = math.tanh %708 : vector<2x64xf32>
    %cst_278 = arith.constant 1.000000e+00 : f32
    %710 = vector.broadcast %cst_278 : f32 to vector<2x64xf32>
    %711 = arith.subf %710, %704 : vector<2x64xf32>
    %712 = arith.mulf %711, %709 : vector<2x64xf32>
    %713 = arith.mulf %704, %638 : vector<2x64xf32>
    %714 = arith.addf %712, %713 : vector<2x64xf32>
    %715 = tpu.concatenate %714, %662 in 1 : vector<2x64xf32>, vector<2x64xf32> -> vector<2x128xf32>
    %c0_279 = arith.constant 0 : index
    %c0_280 = arith.constant 0 : index
    %716 = vector.load %arg2[%c0_279, %c0_280] : memref<128x256xf32, #tpu.memory_space<vmem>>, vector<128x256xf32>
    %cst_281 = arith.constant dense<0.000000e+00> : vector<2x256xf32>
    %717 = tpu.matmul %715, %716, %cst_281 {dimension_numbers = #tpu.dot_dimension_numbers<[1], [0], [0], [1], [0, 0, 1, 1], [], []>} : vector<2x128xf32>, vector<128x256xf32>, vector<2x256xf32> -> vector<2x256xf32>
    %c0_282 = arith.constant 0 : index
    %c0_283 = arith.constant 0 : index
    %718 = vector.load %arg3[%c0_282, %c0_283] : memref<1x256xf32, #tpu.memory_space<vmem>>, vector<1x256xf32>
    %719 = vector.broadcast %718 : vector<1x256xf32> to vector<2x256xf32>
    %720 = arith.addf %717, %719 : vector<2x256xf32>
    %721 = vector.extract_strided_slice %720 {offsets = [0, 0], sizes = [2, 128], strides = [1, 1]} : vector<2x256xf32> to vector<2x128xf32>
    %722 = arith.negf %721 : vector<2x128xf32>
    %723 = math.exp %722 : vector<2x128xf32>
    %cst_284 = arith.constant 1.000000e+00 : f32
    %724 = vector.broadcast %cst_284 : f32 to vector<2x128xf32>
    %725 = arith.addf %724, %723 : vector<2x128xf32>
    %726 = arith.divf %724, %725 : vector<2x128xf32>
    %727 = vector.extract_strided_slice %726 {offsets = [0, 0], sizes = [2, 64], strides = [1, 1]} : vector<2x128xf32> to vector<2x64xf32>
    %728 = vector.extract_strided_slice %726 {offsets = [0, 64], sizes = [2, 64], strides = [1, 1]} : vector<2x128xf32> to vector<2x64xf32>
    %729 = vector.extract_strided_slice %720 {offsets = [0, 128], sizes = [2, 64], strides = [1, 1]} : vector<2x256xf32> to vector<2x64xf32>
    %730 = vector.extract_strided_slice %720 {offsets = [0, 192], sizes = [2, 64], strides = [1, 1]} : vector<2x256xf32> to vector<2x64xf32>
    %731 = arith.mulf %727, %730 : vector<2x64xf32>
    %732 = arith.addf %729, %731 : vector<2x64xf32>
    %733 = math.tanh %732 : vector<2x64xf32>
    %cst_285 = arith.constant 1.000000e+00 : f32
    %734 = vector.broadcast %cst_285 : f32 to vector<2x64xf32>
    %735 = arith.subf %734, %728 : vector<2x64xf32>
    %736 = arith.mulf %735, %733 : vector<2x64xf32>
    %737 = arith.mulf %728, %662 : vector<2x64xf32>
    %738 = arith.addf %736, %737 : vector<2x64xf32>
    %c0_286 = arith.constant 0 : index
    %c0_287 = arith.constant 0 : index
    %739 = vector.load %arg4[%c0_286, %c0_287] : memref<64x32xf32, #tpu.memory_space<vmem>>, vector<64x32xf32>
    %cst_288 = arith.constant dense<0.000000e+00> : vector<2x32xf32>
    %740 = tpu.matmul %738, %739, %cst_288 {dimension_numbers = #tpu.dot_dimension_numbers<[1], [0], [0], [1], [0, 0, 1, 1], [], []>} : vector<2x64xf32>, vector<64x32xf32>, vector<2x32xf32> -> vector<2x32xf32>
    %c0_289 = arith.constant 0 : index
    %c0_290 = arith.constant 0 : index
    %741 = vector.load %arg5[%c0_289, %c0_290] : memref<1x32xf32, #tpu.memory_space<vmem>>, vector<1x32xf32>
    %742 = vector.broadcast %741 : vector<1x32xf32> to vector<2x32xf32>
    %743 = arith.addf %740, %742 : vector<2x32xf32>
    %cst_291 = arith.constant 0.000000e+00 : f32
    %744 = vector.broadcast %cst_291 : f32 to vector<2x32xf32>
    %745 = arith.maximumf %743, %744 : vector<2x32xf32>
    %c0_292 = arith.constant 0 : index
    %c0_293 = arith.constant 0 : index
    %746 = vector.load %arg6[%c0_292, %c0_293] : memref<32x128xf32, #tpu.memory_space<vmem>>, vector<32x128xf32>
    %cst_294 = arith.constant dense<0.000000e+00> : vector<2x128xf32>
    %747 = tpu.matmul %745, %746, %cst_294 {dimension_numbers = #tpu.dot_dimension_numbers<[1], [0], [0], [1], [0, 0, 1, 1], [], []>} : vector<2x32xf32>, vector<32x128xf32>, vector<2x128xf32> -> vector<2x128xf32>
    %c0_295 = arith.constant 0 : index
    %c0_296 = arith.constant 0 : index
    %748 = vector.load %arg7[%c0_295, %c0_296] : memref<1x128xf32, #tpu.memory_space<vmem>>, vector<1x128xf32>
    %749 = vector.broadcast %748 : vector<1x128xf32> to vector<2x128xf32>
    %750 = arith.addf %747, %749 : vector<2x128xf32>
    %751 = arith.index_cast %c9_i32 : i32 to index
    %c0_297 = arith.constant 0 : index
    %c0_298 = arith.constant 0 : index
    %752 = vector.load %arg10[%751, %c0_297, %c0_298] : memref<10x2x128xf32, #tpu.memory_space<vmem>>, vector<1x2x128xf32>
    %753 = vector.shape_cast %752 : vector<1x2x128xf32> to vector<2x128xf32>
    %754 = vector.shape_cast %750 : vector<2x128xf32> to vector<1x2x128xf32>
    tpu.vector_store %arg10[%751, %c0_297, %c0_298], %754 {strides = array<i32>} : memref<10x2x128xf32, #tpu.memory_space<vmem>>, vector<1x2x128xf32>,
    %cst_299 = arith.constant dense<0xFF800000> : vector<2xf32>
    %755 = vector.multi_reduction <maximumf>, %750, %cst_299 [1] : vector<2x128xf32> to vector<2xf32>
    %756 = vector.shape_cast %755 : vector<2xf32> to vector<2x1xf32>
    %757 = vector.broadcast %756 : vector<2x1xf32> to vector<2x128xf32>
    %758 = arith.cmpf oeq, %750, %757 : vector<2x128xf32>
    %c128_i32_300 = arith.constant 128 : i32
    %759 = vector.broadcast %c128_i32_300 : i32 to vector<2x128xi32>
    %760 = arith.select %758, %0, %759 : vector<2x128xi1>, vector<2x128xi32>
    %cst_301 = arith.constant dense<2147483647> : vector<2xi32>
    %761 = vector.multi_reduction <minsi>, %760, %cst_301 [1] : vector<2x128xi32> to vector<2xi32>
    %762 = vector.shape_cast %761 : vector<2xi32> to vector<2x1xi32>
    %763 = vector.broadcast %762 : vector<2x1xi32> to vector<2x128xi32>
    %764 = arith.cmpi eq, %0, %763 : vector<2x128xi32>
    %765 = arith.extui %764 : vector<2x128xi1> to vector<2x128xi32>
    %766 = arith.sitofp %765 : vector<2x128xi32> to vector<2x128xf32>
    %c10_i32 = arith.constant 10 : i32
    return
  }
}

</mosaic_0001>

<llo_original>
// kernel: tag_decoder_forward.1
$region0: #{tag_decoder_forward.1}
  #allocation0 [shape = 'u32[]', space=smem, size = 0x4, offset = 0x4, fixed_abs, tag = 'smem constant byte address 0x4 - core index']
  #allocation1 [shape = 'u32[144,128]{1,0:T(1,128)}', space=vmem, size = 0x12000, scoped, tag = 'internal scratch']
  %s0 = inlined_call_operand.vmem [shape: f32[192,256], index: 0, kind: input, shape index: {}]
  %s1 = inlined_call_operand.vmem [shape: f32[1,256], index: 1, kind: input, shape index: {}]
  %s2 = inlined_call_operand.vmem [shape: f32[128,256], index: 2, kind: input, shape index: {}]
  %s3 = inlined_call_operand.vmem [shape: f32[1,256], index: 3, kind: input, shape index: {}]
  %s4 = inlined_call_operand.vmem [shape: f32[64,32], index: 4, kind: input, shape index: {}]
  %s5 = inlined_call_operand.vmem [shape: f32[1,32], index: 5, kind: input, shape index: {}]
  %s6 = inlined_call_operand.vmem [shape: f32[32,128], index: 6, kind: input, shape index: {}]
  %s7 = inlined_call_operand.vmem [shape: f32[1,128], index: 7, kind: input, shape index: {}]
  %s8 = inlined_call_operand.vmem [shape: f32[2,64], index: 8, kind: input, shape index: {}]
  %s9 = inlined_call_operand.vmem [shape: f32[2,64], index: 9, kind: input, shape index: {}]
  %s10 = inlined_call_operand.vmem [shape: f32[10,2,128], index: 10, kind: output, shape index: {}]
  %s11 = sld [smem:[#allocation0]]
  $region50: #{tag_decoder_forward.1} parent=0
    _
  %s13 = ssub.s32 1, %s11
  %s14 = scalar_select 0, %s13, %s11
  // Predicated region
  $region2: #{tag_decoder_forward.1} parent=0 // pred_check
    _
  $region3: #{tag_decoder_forward.1} parent=0 // pred_check_branch
    %16 = sbr.rel (0) target = $region5
  $region4: #{tag_decoder_forward.1} parent=0 // pred_region
    _
  $region5: #{tag_decoder_forward.1} parent=0 // pred_fallthru
    _
  // Predicated region
  $region6: #{tag_decoder_forward.1} parent=0 // pred_check
    _
  $region7: #{tag_decoder_forward.1} parent=0 // pred_check_branch
    %18 = sbr.rel (0) target = $region9
  $region8: #{tag_decoder_forward.1} parent=0 // pred_region
    _
  $region9: #{tag_decoder_forward.1} parent=0 // pred_fallthru
    _
  // Predicated region
  $region10: #{tag_decoder_forward.1} parent=0 // pred_check
    _
  $region11: #{tag_decoder_forward.1} parent=0 // pred_check_branch
    %20 = sbr.rel (0) target = $region13
  $region12: #{tag_decoder_forward.1} parent=0 // pred_region
    _
  $region13: #{tag_decoder_forward.1} parent=0 // pred_fallthru
    _
  // Predicated region
  $region14: #{tag_decoder_forward.1} parent=0 // pred_check
    _
  $region15: #{tag_decoder_forward.1} parent=0 // pred_check_branch
    %22 = sbr.rel (0) target = $region17
  $region16: #{tag_decoder_forward.1} parent=0 // pred_region
    _
  $region17: #{tag_decoder_forward.1} parent=0 // pred_fallthru
    _
  // Predicated region
  $region18: #{tag_decoder_forward.1} parent=0 // pred_check
    _
  $region19: #{tag_decoder_forward.1} parent=0 // pred_check_branch
    %24 = sbr.rel (0) target = $region21
  $region20: #{tag_decoder_forward.1} parent=0 // pred_region
    _
  $region21: #{tag_decoder_forward.1} parent=0 // pred_fallthru
    _
  // Predicated region
  $region22: #{tag_decoder_forward.1} parent=0 // pred_check
    _
  $region23: #{tag_decoder_forward.1} parent=0 // pred_check_branch
    %26 = sbr.rel (0) target = $region25
  $region24: #{tag_decoder_forward.1} parent=0 // pred_region
    _
  $region25: #{tag_decoder_forward.1} parent=0 // pred_fallthru
    _
  // Predicated region
  $region26: #{tag_decoder_forward.1} parent=0 // pred_check
    _
  $region27: #{tag_decoder_forward.1} parent=0 // pred_check_branch
    %28 = sbr.rel (0) target = $region29
  $region28: #{tag_decoder_forward.1} parent=0 // pred_region
    _
  $region29: #{tag_decoder_forward.1} parent=0 // pred_fallthru
    _
  // Predicated region
  $region30: #{tag_decoder_forward.1} parent=0 // pred_check
    _
  $region31: #{tag_decoder_forward.1} parent=0 // pred_check_branch
    %30 = sbr.rel (0) target = $region33
  $region32: #{tag_decoder_forward.1} parent=0 // pred_region
    _
  $region33: #{tag_decoder_forward.1} parent=0 // pred_fallthru
    _
  // Predicated region
  $region34: #{tag_decoder_forward.1} parent=0 // pred_check
    _
  $region35: #{tag_decoder_forward.1} parent=0 // pred_check_branch
    %32 = sbr.rel (0) target = $region37
  $region36: #{tag_decoder_forward.1} parent=0 // pred_region
    _
  $region37: #{tag_decoder_forward.1} parent=0 // pred_fallthru
    _
  // Predicated region
  $region38: #{tag_decoder_forward.1} parent=0 // pred_check
    _
  $region39: #{tag_decoder_forward.1} parent=0 // pred_check_branch
    %34 = sbr.rel (0) target = $region41
  $region40: #{tag_decoder_forward.1} parent=0 // pred_region
    _
  $region41: #{tag_decoder_forward.1} parent=0 // pred_fallthru
    _
  %v35 = vlaneseq
  %v36 = vand.u32 %v35, 127
  %vm37 = vcmp.eq.s32.totalorder %v36, 0
  %v38 = vsel %vm37, 1, 0
  %v39 = vcvt.s32.f32 %v38
  %v40 = vld [vmem:[%s8] sm:$0x3]
  %v41 = vld [vmem:[%s9] sm:$0x3]
  %v42 = vld [vmem:[%s0] sm:$0xff]
  %v43 = vld [vmem:[%s0 + $0x8] sm:$0xff]
  %v44 = vld [vmem:[%s0 + $0x10] sm:$0xff]
  %v45 = vld [vmem:[%s0 + $0x18] sm:$0xff]
  %v46 = vld [vmem:[%s0 + $0x20] sm:$0xff]
  %v47 = vld [vmem:[%s0 + $0x28] sm:$0xff]
  %v48 = vld [vmem:[%s0 + $0x30] sm:$0xff]
  %v49 = vld [vmem:[%s0 + $0x38] sm:$0xff]
  %v50 = vld [vmem:[%s0 + $0x40] sm:$0xff]
  %v51 = vld [vmem:[%s0 + $0x48] sm:$0xff]
  %v52 = vld [vmem:[%s0 + $0x50] sm:$0xff]
  %v53 = vld [vmem:[%s0 + $0x58] sm:$0xff]
  %v54 = vld [vmem:[%s0 + $0x60] sm:$0xff]
  %v55 = vld [vmem:[%s0 + $0x68] sm:$0xff]
  %v56 = vld [vmem:[%s0 + $0x70] sm:$0xff]
  %v57 = vld [vmem:[%s0 + $0x78] sm:$0xff]
  %v58 = vld [vmem:[%s0 + $0x80] sm:$0xff]
  %v59 = vld [vmem:[%s0 + $0x88] sm:$0xff]
  %v60 = vld [vmem:[%s0 + $0x90] sm:$0xff]
  %v61 = vld [vmem:[%s0 + $0x98] sm:$0xff]
  %v62 = vld [vmem:[%s0 + $0xa0] sm:$0xff]
  %v63 = vld [vmem:[%s0 + $0xa8] sm:$0xff]
  %v64 = vld [vmem:[%s0 + $0xb0] sm:$0xff]
  %v65 = vld [vmem:[%s0 + $0xb8] sm:$0xff]
  %v66 = vld [vmem:[%s0 + $0xc0] sm:$0xff]
  %v67 = vld [vmem:[%s0 + $0xc8] sm:$0xff]
  %v68 = vld [vmem:[%s0 + $0xd0] sm:$0xff]
  %v69 = vld [vmem:[%s0 + $0xd8] sm:$0xff]
  %v70 = vld [vmem:[%s0 + $0xe0] sm:$0xff]
  %v71 = vld [vmem:[%s0 + $0xe8] sm:$0xff]
  %v72 = vld [vmem:[%s0 + $0xf0] sm:$0xff]
  %v73 = vld [vmem:[%s0 + $0xf8] sm:$0xff]
  %v74 = vld [vmem:[%s0 + $0x100] sm:$0xff]
  %v75 = vld [vmem:[%s0 + $0x108] sm:$0xff]
  %v76 = vld [vmem:[%s0 + $0x110] sm:$0xff]
  %v77 = vld [vmem:[%s0 + $0x118] sm:$0xff]
  %v78 = vld [vmem:[%s0 + $0x120] sm:$0xff]
  %v79 = vld [vmem:[%s0 + $0x128] sm:$0xff]
  %v80 = vld [vmem:[%s0 + $0x130] sm:$0xff]
  %v81 = vld [vmem:[%s0 + $0x138] sm:$0xff]
  %v82 = vld [vmem:[%s0 + $0x140] sm:$0xff]
  %v83 = vld [vmem:[%s0 + $0x148] sm:$0xff]
  %v84 = vld [vmem:[%s0 + $0x150] sm:$0xff]
  %v85 = vld [vmem:[%s0 + $0x158] sm:$0xff]
  %v86 = vld [vmem:[%s0 + $0x160] sm:$0xff]
  %v87 = vld [vmem:[%s0 + $0x168] sm:$0xff]
  %v88 = vld [vmem:[%s0 + $0x170] sm:$0xff]
  %v89 = vld [vmem:[%s0 + $0x178] sm:$0xff]
  %v90 = vld [vmem:[%s1] sm:$0x3]
  %v92 = vlaneseq
  %v93 = vshrl.u32 %v92, 7
  %v94 = vsub.s32 0, %v93
  %v95 = vrot.slane %v90, %v94
  %v96 = vlaneseq
  %v97 = vshrl.u32 %v96, 7
  %v98 = vsub.s32 1, %v97
  %v99 = vrot.slane %v90, %v98
  %vm102 = vcmask 523264
  %v104 = vsel %vm102, %v40, 0
  %106 = vmatprep.subr.mxu0 %v43
  %107 = vmatpush1.msra.mxu0 %v42
  %108 = vmatprep.subr.mxu0 %v45
  %109 = vmatpush1.msra.mxu0 %v44
  %110 = vmatprep.subr.mxu0 %v47
  %111 = vmatpush1.msra.mxu0 %v46
  %112 = vmatprep.subr.mxu0 %v49
  %113 = vmatpush1.msra.mxu0 %v48
  %114 = vmatprep.subr.mxu0 %v51
  %115 = vmatpush1.msra.mxu0 %v50
  %116 = vmatprep.subr.mxu0 %v53
  %117 = vmatpush1.msra.mxu0 %v52
  %118 = vmatprep.subr.mxu0 %v55
  %119 = vmatpush1.msra.mxu0 %v54
  %120 = vmatprep.subr.mxu0 %v57
  %121 = vmatpush1.msra.mxu0 %v56
  %122 = vmatprep.subr.mxu0 %v59
  %123 = vmatpush1.msra.mxu0 %v58
  %124 = vmatprep.subr.mxu0 %v61
  %125 = vmatpush1.msra.mxu0 %v60
  %126 = vmatprep.subr.mxu0 %v63
  %127 = vmatpush1.msra.mxu0 %v62
  %128 = vmatprep.subr.mxu0 %v65
  %129 = vmatpush1.msra.mxu0 %v64
  %130 = vmatprep.subr.mxu0 %v67
  %131 = vmatpush1.msra.mxu0 %v66
  %132 = vmatprep.subr.mxu0 %v69
  %133 = vmatpush1.msra.mxu0 %v68
  %134 = vmatprep.subr.mxu0 %v71
  %135 = vmatpush1.msra.mxu0 %v70
  %136 = vmatprep.subr.mxu0 %v73
  %137 = vmatpush1.msra.mxu0 %v72
  %138 = vmatprep.subr.mxu0 %v75
  %139 = vmatpush1.msra.mxu0 %v74
  %140 = vmatprep.subr.mxu0 %v77
  %141 = vmatpush1.msra.mxu0 %v76
  %142 = vmatprep.subr.mxu0 %v79
  %143 = vmatpush1.msra.mxu0 %v78
  %144 = vmatprep.subr.mxu0 %v81
  %145 = vmatpush1.msra.mxu0 %v80
  %146 = vmatprep.subr.mxu0 %v83
  %147 = vmatpush1.msra.mxu0 %v82
  %148 = vmatprep.subr.mxu0 %v85
  %149 = vmatpush1.msra.mxu0 %v84
  %150 = vmatprep.subr.mxu0 %v87
  %151 = vmatpush1.msra.mxu0 %v86
  %152 = vmatprep.subr.mxu0 %v89
  %153 = vmatpush1.msra.mxu0 %v88
  %154 = vmatprep.subr.mxu0 0.0
  %155 = vmatpush1.msra.mxu0 0.0
  %156 = vmatprep.subr.mxu0 0.0
  %157 = vmatpush1.msra.mxu0 0.0
  %158 = vmatprep.subr.mxu0 0.0
  %159 = vmatpush1.msra.mxu0 0.0
  %160 = vmatprep.subr.mxu0 0.0
  %161 = vmatpush1.msra.mxu0 0.0
  %162 = vmatprep.subr.mxu0 0.0
  %163 = vmatpush1.msra.mxu0 0.0
  %164 = vmatprep.subr.mxu0 0.0
  %165 = vmatpush1.msra.mxu0 0.0
  %166 = vmatprep.subr.mxu0 0.0
  %167 = vmatpush1.msra.mxu0 0.0
  %168 = vmatprep.subr.mxu0 0.0
  %169 = vmatpush1.msra.mxu0 0.0
  %170 = vmatprep.mubr.f32.mxu0 %v104
  %171 = vmatmul.mubr.f32.gmra.mrb[0].mxu0 %v39
  %v172 = vpop.f32.mrb[0].mxu0
  %v173 = vadd.f32 %v95, %v172
  %v174 = vpop.f32.mrb[0].mxu0
  %v175 = vadd.f32 %v99, %v174
  %176 = vdwg.mxu0
  %v177 = vxor.u32 %v173, 2147483648
  %v178 = vmul.f32 %v177, 1.442695
  %v179 = vpow.pop %v178
  %v180 = vadd.f32 %v179, 1.0
  %v181 = vrcp.pop %v180
  %v182 = vmul.f32 1.0, %v181
  %184 = vrot.lane.b32.xlu0 %v175, 64
  %v185 = vpop.permute.xlu0 %184
  %v187 = vmul.f32 %v182, %v185
  %v188 = vadd.f32 %v175, %v187
  %v189 = vtanh.pop %v188
  %v190 = vsub.f32 1.0, %v182
  %192 = vrot.lane.b32.xlu0 %v189, 64
  %v193 = vpop.permute.xlu0 %192
  %v195 = vmul.f32 %v190, %v193
  %196 = vrot.lane.b32.xlu0 %v40, 64
  %v197 = vpop.permute.xlu0 %196
  %v199 = vmul.f32 %v182, %v197
  %v200 = vadd.f32 %v195, %v199
  %202 = vrot.lane.b32.xlu0 %v200, 64
  %v203 = vpop.permute.xlu0 %202
  %206 = vrot.lane.b32.xlu0 %v41, 64
  %v207 = vpop.permute.xlu0 %206
  %v209 = vsel %vm102, %v203, %v207
  %v210 = vld [vmem:[%s2] sm:$0xff]
  %v211 = vld [vmem:[%s2 + $0x8] sm:$0xff]
  %v212 = vld [vmem:[%s2 + $0x10] sm:$0xff]
  %v213 = vld [vmem:[%s2 + $0x18] sm:$0xff]
  %v214 = vld [vmem:[%s2 + $0x20] sm:$0xff]
  %v215 = vld [vmem:[%s2 + $0x28] sm:$0xff]
  %v216 = vld [vmem:[%s2 + $0x30] sm:$0xff]
  %v217 = vld [vmem:[%s2 + $0x38] sm:$0xff]
  %v218 = vld [vmem:[%s2 + $0x40] sm:$0xff]
  %v219 = vld [vmem:[%s2 + $0x48] sm:$0xff]
  %v220 = vld [vmem:[%s2 + $0x50] sm:$0xff]
  %v221 = vld [vmem:[%s2 + $0x58] sm:$0xff]
  %v222 = vld [vmem:[%s2 + $0x60] sm:$0xff]
  %v223 = vld [vmem:[%s2 + $0x68] sm:$0xff]
  %v224 = vld [vmem:[%s2 + $0x70] sm:$0xff]
  %v225 = vld [vmem:[%s2 + $0x78] sm:$0xff]
  %v226 = vld [vmem:[%s2 + $0x80] sm:$0xff]
  %v227 = vld [vmem:[%s2 + $0x88] sm:$0xff]
  %v228 = vld [vmem:[%s2 + $0x90] sm:$0xff]
  %v229 = vld [vmem:[%s2 + $0x98] sm:$0xff]
  %v230 = vld [vmem:[%s2 + $0xa0] sm:$0xff]
  %v231 = vld [vmem:[%s2 + $0xa8] sm:$0xff]
  %v232 = vld [vmem:[%s2 + $0xb0] sm:$0xff]
  %v233 = vld [vmem:[%s2 + $0xb8] sm:$0xff]
  %v234 = vld [vmem:[%s2 + $0xc0] sm:$0xff]
  %v235 = vld [vmem:[%s2 + $0xc8] sm:$0xff]
  %v236 = vld [vmem:[%s2 + $0xd0] sm:$0xff]
  %v237 = vld [vmem:[%s2 + $0xd8] sm:$0xff]
  %v238 = vld [vmem:[%s2 + $0xe0] sm:$0xff]
  %v239 = vld [vmem:[%s2 + $0xe8] sm:$0xff]
  %v240 = vld [vmem:[%s2 + $0xf0] sm:$0xff]
  %v241 = vld [vmem:[%s2 + $0xf8] sm:$0xff]
  %v242 = vld [vmem:[%s3] sm:$0x3]
  %v244 = vlaneseq
  %v245 = vshrl.u32 %v244, 7
  %v246 = vsub.s32 0, %v245
  %v247 = vrot.slane %v242, %v246
  %v248 = vlaneseq
  %v249 = vshrl.u32 %v248, 7
  %v250 = vsub.s32 1, %v249
  %v251 = vrot.slane %v242, %v250
  %254 = vmatprep.subr.mxu0 %v211
  %255 = vmatpush1.msra.mxu0 %v210
  %256 = vmatprep.subr.mxu0 %v213
  %257 = vmatpush1.msra.mxu0 %v212
  %258 = vmatprep.subr.mxu0 %v215
  %259 = vmatpush1.msra.mxu0 %v214
  %260 = vmatprep.subr.mxu0 %v217
  %261 = vmatpush1.msra.mxu0 %v216
  %262 = vmatprep.subr.mxu0 %v219
  %263 = vmatpush1.msra.mxu0 %v218
  %264 = vmatprep.subr.mxu0 %v221
  %265 = vmatpush1.msra.mxu0 %v220
  %266 = vmatprep.subr.mxu0 %v223
  %267 = vmatpush1.msra.mxu0 %v222
  %268 = vmatprep.subr.mxu0 %v225
  %269 = vmatpush1.msra.mxu0 %v224
  %270 = vmatprep.subr.mxu0 %v227
  %271 = vmatpush1.msra.mxu0 %v226
  %272 = vmatprep.subr.mxu0 %v229
  %273 = vmatpush1.msra.mxu0 %v228
  %274 = vmatprep.subr.mxu0 %v231
  %275 = vmatpush1.msra.mxu0 %v230
  %276 = vmatprep.subr.mxu0 %v233
  %277 = vmatpush1.msra.mxu0 %v232
  %278 = vmatprep.subr.mxu0 %v235
  %279 = vmatpush1.msra.mxu0 %v234
  %280 = vmatprep.subr.mxu0 %v237
  %281 = vmatpush1.msra.mxu0 %v236
  %282 = vmatprep.subr.mxu0 %v239
  %283 = vmatpush1.msra.mxu0 %v238
  %284 = vmatprep.subr.mxu0 %v241
  %285 = vmatpush1.msra.mxu0 %v240
  %286 = vmatprep.subr.mxu0 0.0
  %287 = vmatpush1.msra.mxu0 0.0
  %288 = vmatprep.subr.mxu0 0.0
  %289 = vmatpush1.msra.mxu0 0.0
  %290 = vmatprep.subr.mxu0 0.0
  %291 = vmatpush1.msra.mxu0 0.0
  %292 = vmatprep.subr.mxu0 0.0
  %293 = vmatpush1.msra.mxu0 0.0
  %294 = vmatprep.subr.mxu0 0.0
  %295 = vmatpush1.msra.mxu0 0.0
  %296 = vmatprep.subr.mxu0 0.0
  %297 = vmatpush1.msra.mxu0 0.0
  %298 = vmatprep.subr.mxu0 0.0
  %299 = vmatpush1.msra.mxu0 0.0
  %300 = vmatprep.subr.mxu0 0.0
  %301 = vmatpush1.msra.mxu0 0.0
  %302 = vmatprep.subr.mxu0 0.0
  %303 = vmatpush1.msra.mxu0 0.0
  %304 = vmatprep.subr.mxu0 0.0
  %305 = vmatpush1.msra.mxu0 0.0
  %306 = vmatprep.subr.mxu0 0.0
  %307 = vmatpush1.msra.mxu0 0.0
  %308 = vmatprep.subr.mxu0 0.0
  %309 = vmatpush1.msra.mxu0 0.0
  %310 = vmatprep.subr.mxu0 0.0
  %311 = vmatpush1.msra.mxu0 0.0
  %312 = vmatprep.subr.mxu0 0.0
  %313 = vmatpush1.msra.mxu0 0.0
  %314 = vmatprep.subr.mxu0 0.0
  %315 = vmatpush1.msra.mxu0 0.0
  %316 = vmatprep.subr.mxu0 0.0
  %317 = vmatpush1.msra.mxu0 0.0
  %318 = vmatprep.mubr.f32.mxu0 0.0
  %319 = vmatmul.mubr.f32.gmra.mrb[0].mxu0 %v209
  %v320 = vpop.f32.mrb[0].mxu0
  %v321 = vadd.f32 %v247, %v320
  %v322 = vpop.f32.mrb[0].mxu0
  %v323 = vadd.f32 %v251, %v322
  %324 = vdwg.mxu0
  %v325 = vxor.u32 %v321, 2147483648
  %v326 = vmul.f32 %v325, 1.442695
  %v327 = vpow.pop %v326
  %v328 = vadd.f32 %v327, 1.0
  %v329 = vrcp.pop %v328
  %v330 = vmul.f32 1.0, %v329
  %332 = vrot.lane.b32.xlu0 %v323, 64
  %v333 = vpop.permute.xlu0 %332
  %v335 = vmul.f32 %v330, %v333
  %v336 = vadd.f32 %v323, %v335
  %v337 = vtanh.pop %v336
  %v338 = vsub.f32 1.0, %v330
  %340 = vrot.lane.b32.xlu0 %v337, 64
  %v341 = vpop.permute.xlu0 %340
  %v343 = vmul.f32 %v338, %v341
  %v344 = vmul.f32 %v330, %v207
  %v345 = vadd.f32 %v343, %v344
  %v346 = vld [vmem:[%s4] sm:$0xff]
  %v347 = vld [vmem:[%s4 + $0x8] sm:$0xff]
  %v348 = vld [vmem:[%s4 + $0x10] sm:$0xff]
  %v349 = vld [vmem:[%s4 + $0x18] sm:$0xff]
  %v350 = vld [vmem:[%s4 + $0x20] sm:$0xff]
  %v351 = vld [vmem:[%s4 + $0x28] sm:$0xff]
  %v352 = vld [vmem:[%s4 + $0x30] sm:$0xff]
  %v353 = vld [vmem:[%s4 + $0x38] sm:$0xff]
  %v354 = vld [vmem:[%s5] sm:$0x1]
  %v356 = vlaneseq
  %v357 = vshrl.u32 %v356, 7
  %v358 = vsub.s32 0, %v357
  %v359 = vrot.slane %v354, %v358
  %362 = vrot.lane.b32.xlu0 %v345, 64
  %v363 = vpop.permute.xlu0 %362
  %v364 = vsel %vm102, %v363, 0
  %366 = vmatprep.subr.mxu0 0.0
  %367 = vmatpush1.msra.mxu0 %v346
  %368 = vmatprep.subr.mxu0 0.0
  %369 = vmatpush1.msra.mxu0 %v347
  %370 = vmatprep.subr.mxu0 0.0
  %371 = vmatpush1.msra.mxu0 %v348
  %372 = vmatprep.subr.mxu0 0.0
  %373 = vmatpush1.msra.mxu0 %v349
  %374 = vmatprep.subr.mxu0 0.0
  %375 = vmatpush1.msra.mxu0 %v350
  %376 = vmatprep.subr.mxu0 0.0
  %377 = vmatpush1.msra.mxu0 %v351
  %378 = vmatprep.subr.mxu0 0.0
  %379 = vmatpush1.msra.mxu0 %v352
  %380 = vmatprep.subr.mxu0 0.0
  %381 = vmatpush1.msra.mxu0 %v353
  %382 = vmatprep.subr.mxu0 0.0
  %383 = vmatpush1.msra.mxu0 0.0
  %384 = vmatprep.subr.mxu0 0.0
  %385 = vmatpush1.msra.mxu0 0.0
  %386 = vmatprep.subr.mxu0 0.0
  %387 = vmatpush1.msra.mxu0 0.0
  %388 = vmatprep.subr.mxu0 0.0
  %389 = vmatpush1.msra.mxu0 0.0
  %390 = vmatprep.subr.mxu0 0.0
  %391 = vmatpush1.msra.mxu0 0.0
  %392 = vmatprep.subr.mxu0 0.0
  %393 = vmatpush1.msra.mxu0 0.0
  %394 = vmatprep.subr.mxu0 0.0
  %395 = vmatpush1.msra.mxu0 0.0
  %396 = vmatprep.subr.mxu0 0.0
  %397 = vmatpush1.msra.mxu0 0.0
  %398 = vmatprep.subr.mxu0 0.0
  %399 = vmatpush1.msra.mxu0 0.0
  %400 = vmatprep.subr.mxu0 0.0
  %401 = vmatpush1.msra.mxu0 0.0
  %402 = vmatprep.subr.mxu0 0.0
  %403 = vmatpush1.msra.mxu0 0.0
  %404 = vmatprep.subr.mxu0 0.0
  %405 = vmatpush1.msra.mxu0 0.0
  %406 = vmatprep.subr.mxu0 0.0
  %407 = vmatpush1.msra.mxu0 0.0
  %408 = vmatprep.subr.mxu0 0.0
  %409 = vmatpush1.msra.mxu0 0.0
  %410 = vmatprep.subr.mxu0 0.0
  %411 = vmatpush1.msra.mxu0 0.0
  %412 = vmatprep.subr.mxu0 0.0
  %413 = vmatpush1.msra.mxu0 0.0
  %414 = vmatprep.subr.mxu0 0.0
  %415 = vmatpush1.msra.mxu0 0.0
  %416 = vmatprep.subr.mxu0 0.0
  %417 = vmatpush1.msra.mxu0 0.0
  %418 = vmatprep.subr.mxu0 0.0
  %419 = vmatpush1.msra.mxu0 0.0
  %420 = vmatprep.subr.mxu0 0.0
  %421 = vmatpush1.msra.mxu0 0.0
  %422 = vmatprep.subr.mxu0 0.0
  %423 = vmatpush1.msra.mxu0 0.0
  %424 = vmatprep.subr.mxu0 0.0
  %425 = vmatpush1.msra.mxu0 0.0
  %426 = vmatprep.subr.mxu0 0.0
  %427 = vmatpush1.msra.mxu0 0.0
  %428 = vmatprep.subr.mxu0 0.0
  %429 = vmatpush1.msra.mxu0 0.0
  %430 = vmatprep.mubr.f32.mxu0 0.0
  %431 = vmatmul.mubr.f32.gmra.mrb[0].mxu0 %v364
  %v432 = vpop.f32.mrb[0].mxu0
  %v433 = vadd.f32 %v359, %v432
  %v434 = vpop.f32.mrb[0].mxu0
  %435 = vdwg.mxu0
  %v436 = vmax.f32 %v433, 0.0
  %v437 = vld [vmem:[%s6] sm:$0xff]
  %v438 = vld [vmem:[%s6 + $0x8] sm:$0xff]
  %v439 = vld [vmem:[%s6 + $0x10] sm:$0xff]
  %v440 = vld [vmem:[%s6 + $0x18] sm:$0xff]
  %v441 = vld [vmem:[%s7] sm:$0x1]
  %v443 = vlaneseq
  %v444 = vshrl.u32 %v443, 7
  %v445 = vsub.s32 0, %v444
  %v446 = vrot.slane %v441, %v445
  %vm448 = vcmask 261120
  %v450 = vsel %vm448, %v436, 0
  %452 = vmatprep.subr.mxu0 0.0
  %453 = vmatpush1.msra.mxu0 %v437
  %454 = vmatprep.subr.mxu0 0.0
  %455 = vmatpush1.msra.mxu0 %v438
  %456 = vmatprep.subr.mxu0 0.0
  %457 = vmatpush1.msra.mxu0 %v439
  %458 = vmatprep.subr.mxu0 0.0
  %459 = vmatpush1.msra.mxu0 %v440
  %460 = vmatprep.subr.mxu0 0.0
  %461 = vmatpush1.msra.mxu0 0.0
  %462 = vmatprep.subr.mxu0 0.0
  %463 = vmatpush1.msra.mxu0 0.0
  %464 = vmatprep.subr.mxu0 0.0
  %465 = vmatpush1.msra.mxu0 0.0
  %466 = vmatprep.subr.mxu0 0.0
  %467 = vmatpush1.msra.mxu0 0.0
  %468 = vmatprep.subr.mxu0 0.0
  %469 = vmatpush1.msra.mxu0 0.0
  %470 = vmatprep.subr.mxu0 0.0
  %471 = vmatpush1.msra.mxu0 0.0
  %472 = vmatprep.subr.mxu0 0.0
  %473 = vmatpush1.msra.mxu0 0.0
  %474 = vmatprep.subr.mxu0 0.0
  %475 = vmatpush1.msra.mxu0 0.0
  %476 = vmatprep.subr.mxu0 0.0
  %477 = vmatpush1.msra.mxu0 0.0
  %478 = vmatprep.subr.mxu0 0.0
  %479 = vmatpush1.msra.mxu0 0.0
  %480 = vmatprep.subr.mxu0 0.0
  %481 = vmatpush1.msra.mxu0 0.0
  %482 = vmatprep.subr.mxu0 0.0
  %483 = vmatpush1.msra.mxu0 0.0
  %484 = vmatprep.subr.mxu0 0.0
  %485 = vmatpush1.msra.mxu0 0.0
  %486 = vmatprep.subr.mxu0 0.0
  %487 = vmatpush1.msra.mxu0 0.0
  %488 = vmatprep.subr.mxu0 0.0
  %489 = vmatpush1.msra.mxu0 0.0
  %490 = vmatprep.subr.mxu0 0.0
  %491 = vmatpush1.msra.mxu0 0.0
  %492 = vmatprep.subr.mxu0 0.0
  %493 = vmatpush1.msra.mxu0 0.0
  %494 = vmatprep.subr.mxu0 0.0
  %495 = vmatpush1.msra.mxu0 0.0
  %496 = vmatprep.subr.mxu0 0.0
  %497 = vmatpush1.msra.mxu0 0.0
  %498 = vmatprep.subr.mxu0 0.0
  %499 = vmatpush1.msra.mxu0 0.0
  %500 = vmatprep.subr.mxu0 0.0
  %501 = vmatpush1.msra.mxu0 0.0
  %502 = vmatprep.subr.mxu0 0.0
  %503 = vmatpush1.msra.mxu0 0.0
  %504 = vmatprep.subr.mxu0 0.0
  %505 = vmatpush1.msra.mxu0 0.0
  %506 = vmatprep.subr.mxu0 0.0
  %507 = vmatpush1.msra.mxu0 0.0
  %508 = vmatprep.subr.mxu0 0.0
  %509 = vmatpush1.msra.mxu0 0.0
  %510 = vmatprep.subr.mxu0 0.0
  %511 = vmatpush1.msra.mxu0 0.0
  %512 = vmatprep.subr.mxu0 0.0
  %513 = vmatpush1.msra.mxu0 0.0
  %514 = vmatprep.subr.mxu0 0.0
  %515 = vmatpush1.msra.mxu0 0.0
  %516 = vmatprep.mubr.f32.mxu0 0.0
  %517 = vmatmul.mubr.f32.gmra.mrb[0].mxu0 %v450
  %v518 = vpop.f32.mrb[0].mxu0
  %v519 = vadd.f32 %v446, %v518
  %v520 = vpop.f32.mrb[0].mxu0
  %521 = vdwg.mxu0
  %522 = vst [vmem:[%s10] sm:$0x3] %v519
  %vm523 = vcmask 1041408
  %v524 = vsel %vm523, %v519, -inf
  %525 = vmax.xlane.f32.xlu0 %v524
  %v526 = vpop.xlane.xlu0 %525
  %vm527 = vcmp.eq.f32.partialorder %v519, %v526
  %v528 = vsel %vm527, %v36, 128
  %v529 = vsel %vm523, %v528, 2147483647
  %v530 = vand.u32 %v529, 65535
  %v531 = vshra.s32 %v529, 16
  %v532 = vcvt.s32.f32 %v530
  %v533 = vcvt.s32.f32 %v531
  %534 = vmin.xlane.f32.xlu0 %v533
  %v535 = vpop.xlane.xlu0 %534
  %vm536 = vcmp.eq.f32.partialorder %v533, %v535
  %v537 = vsel %vm536, %v532, inf
  %538 = vmin.xlane.f32.xlu0 %v537
  %v539 = vpop.xlane.xlu0 %538
  %v540 = vcvt.f32.s32 %v539
  %v541 = vcvt.f32.s32 %v535
  %v542 = vshll.u32 %v541, 16
  %v543 = vadd.s32 %v542, %v540
  %vm544 = vcmp.eq.s32.totalorder %v36, %v543
  %v545 = vsel %vm544, 1, 0
  %v546 = vcvt.s32.f32 %v545
  %v547 = vld [vmem:[%s0] sm:$0xff]
  %v548 = vld [vmem:[%s0 + $0x8] sm:$0xff]
  %v549 = vld [vmem:[%s0 + $0x10] sm:$0xff]
  %v550 = vld [vmem:[%s0 + $0x18] sm:$0xff]
  %v551 = vld [vmem:[%s0 + $0x20] sm:$0xff]
  %v552 = vld [vmem:[%s0 + $0x28] sm:$0xff]
  %v553 = vld [vmem:[%s0 + $0x30] sm:$0xff]
  %v554 = vld [vmem:[%s0 + $0x38] sm:$0xff]
  %v555 = vld [vmem:[%s0 + $0x40] sm:$0xff]
  %v556 = vld [vmem:[%s0 + $0x48] sm:$0xff]
  %v557 = vld [vmem:[%s0 + $0x50] sm:$0xff]
  %v558 = vld [vmem:[%s0 + $0x58] sm:$0xff]
  %v559 = vld [vmem:[%s0 + $0x60] sm:$0xff]
  %v560 = vld [vmem:[%s0 + $0x68] sm:$0xff]
  %v561 = vld [vmem:[%s0 + $0x70] sm:$0xff]
  %v562 = vld [vmem:[%s0 + $0x78] sm:$0xff]
  %v563 = vld [vmem:[%s0 + $0x80] sm:$0xff]
  %v564 = vld [vmem:[%s0 + $0x88] sm:$0xff]
  %v565 = vld [vmem:[%s0 + $0x90] sm:$0xff]
  %v566 = vld [vmem:[%s0 + $0x98] sm:$0xff]
  %v567 = vld [vmem:[%s0 + $0xa0] sm:$0xff]
  %v568 = vld [vmem:[%s0 + $0xa8] sm:$0xff]
  %v569 = vld [vmem:[%s0 + $0xb0] sm:$0xff]
  %v570 = vld [vmem:[%s0 + $0xb8] sm:$0xff]
  %v571 = vld [vmem:[%s0 + $0xc0] sm:$0xff]
  %v572 = vld [vmem:[%s0 + $0xc8] sm:$0xff]
  %v573 = vld [vmem:[%s0 + $0xd0] sm:$0xff]
  %v574 = vld [vmem:[%s0 + $0xd8] sm:$0xff]
  %v575 = vld [vmem:[%s0 + $0xe0] sm:$0xff]
  %v576 = vld [vmem:[%s0 + $0xe8] sm:$0xff]
  %v577 = vld [vmem:[%s0 + $0xf0] sm:$0xff]
  %v578 = vld [vmem:[%s0 + $0xf8] sm:$0xff]
  %v579 = vld [vmem:[%s0 + $0x100] sm:$0xff]
  %v580 = vld [vmem:[%s0 + $0x108] sm:$0xff]
  %v581 = vld [vmem:[%s0 + $0x110] sm:$0xff]
  %v582 = vld [vmem:[%s0 + $0x118] sm:$0xff]
  %v583 = vld [vmem:[%s0 + $0x120] sm:$0xff]
  %v584 = vld [vmem:[%s0 + $0x128] sm:$0xff]
  %v585 = vld [vmem:[%s0 + $0x130] sm:$0xff]
  %v586 = vld [vmem:[%s0 + $0x138] sm:$0xff]
  %v587 = vld [vmem:[%s0 + $0x140] sm:$0xff]
  %v588 = vld [vmem:[%s0 + $0x148] sm:$0xff]
  %v589 = vld [vmem:[%s0 + $0x150] sm:$0xff]
  %v590 = vld [vmem:[%s0 + $0x158] sm:$0xff]
  %v591 = vld [vmem:[%s0 + $0x160] sm:$0xff]
  %v592 = vld [vmem:[%s0 + $0x168] sm:$0xff]
  %v593 = vld [vmem:[%s0 + $0x170] sm:$0xff]
  %v594 = vld [vmem:[%s0 + $0x178] sm:$0xff]
  %v595 = vld [vmem:[%s1] sm:$0x3]
  %v597 = vlaneseq
  %v598 = vshrl.u32 %v597, 7
  %v599 = vsub.s32 0, %v598
  %v600 = vrot.slane %v595, %v599
  %v601 = vlaneseq
  %v602 = vshrl.u32 %v601, 7
  %v603 = vsub.s32 1, %v602
  %v604 = vrot.slane %v595, %v603
  %v607 = vsel %vm102, %v203, 0
  %609 = vmatprep.subr.mxu0 %v548
  %610 = vmatpush1.msra.mxu0 %v547
  %611 = vmatprep.subr.mxu0 %v550
  %612 = vmatpush1.msra.mxu0 %v549
  %613 = vmatprep.subr.mxu0 %v552
  %614 = vmatpush1.msra.mxu0 %v551
  %615 = vmatprep.subr.mxu0 %v554
  %616 = vmatpush1.msra.mxu0 %v553
  %617 = vmatprep.subr.mxu0 %v556
  %618 = vmatpush1.msra.mxu0 %v555
  %619 = vmatprep.subr.mxu0 %v558
  %620 = vmatpush1.msra.mxu0 %v557
  %621 = vmatprep.subr.mxu0 %v560
  %622 = vmatpush1.msra.mxu0 %v559
  %623 = vmatprep.subr.mxu0 %v562
  %624 = vmatpush1.msra.mxu0 %v561
  %625 = vmatprep.subr.mxu0 %v564
  %626 = vmatpush1.msra.mxu0 %v563
  %627 = vmatprep.subr.mxu0 %v566
  %628 = vmatpush1.msra.mxu0 %v565
  %629 = vmatprep.subr.mxu0 %v568
  %630 = vmatpush1.msra.mxu0 %v567
  %631 = vmatprep.subr.mxu0 %v570
  %632 = vmatpush1.msra.mxu0 %v569
  %633 = vmatprep.subr.mxu0 %v572
  %634 = vmatpush1.msra.mxu0 %v571
  %635 = vmatprep.subr.mxu0 %v574
  %636 = vmatpush1.msra.mxu0 %v573
  %637 = vmatprep.subr.mxu0 %v576
  %638 = vmatpush1.msra.mxu0 %v575
  %639 = vmatprep.subr.mxu0 %v578
  %640 = vmatpush1.msra.mxu0 %v577
  %641 = vmatprep.subr.mxu0 %v580
  %642 = vmatpush1.msra.mxu0 %v579
  %643 = vmatprep.subr.mxu0 %v582
  %644 = vmatpush1.msra.mxu0 %v581
  %645 = vmatprep.subr.mxu0 %v584
  %646 = vmatpush1.msra.mxu0 %v583
  %647 = vmatprep.subr.mxu0 %v586
  %648 = vmatpush1.msra.mxu0 %v585
  %649 = vmatprep.subr.mxu0 %v588
  %650 = vmatpush1.msra.mxu0 %v587
  %651 = vmatprep.subr.mxu0 %v590
  %652 = vmatpush1.msra.mxu0 %v589
  %653 = vmatprep.subr.mxu0 %v592
  %654 = vmatpush1.msra.mxu0 %v591
  %655 = vmatprep.subr.mxu0 %v594
  %656 = vmatpush1.msra.mxu0 %v593
  %657 = vmatprep.subr.mxu0 0.0
  %658 = vmatpush1.msra.mxu0 0.0
  %659 = vmatprep.subr.mxu0 0.0
  %660 = vmatpush1.msra.mxu0 0.0
  %661 = vmatprep.subr.mxu0 0.0
  %662 = vmatpush1.msra.mxu0 0.0
  %663 = vmatprep.subr.mxu0 0.0
  %664 = vmatpush1.msra.mxu0 0.0
  %665 = vmatprep.subr.mxu0 0.0
  %666 = vmatpush1.msra.mxu0 0.0
  %667 = vmatprep.subr.mxu0 0.0
  %668 = vmatpush1.msra.mxu0 0.0
  %669 = vmatprep.subr.mxu0 0.0
  %670 = vmatpush1.msra.mxu0 0.0
  %671 = vmatprep.subr.mxu0 0.0
  %672 = vmatpush1.msra.mxu0 0.0
  %673 = vmatprep.mubr.f32.mxu0 %v607
  %674 = vmatmul.mubr.f32.gmra.mrb[0].mxu0 %v546
  %v675 = vpop.f32.mrb[0].mxu0
  %v676 = vadd.f32 %v600, %v675
  %v677 = vpop.f32.mrb[0].mxu0
  %v678 = vadd.f32 %v604, %v677
  %679 = vdwg.mxu0
  %v680 = vxor.u32 %v676, 2147483648
  %v681 = vmul.f32 %v680, 1.442695
  %v682 = vpow.pop %v681
  %v683 = vadd.f32 %v682, 1.0
  %v684 = vrcp.pop %v683
  %v685 = vmul.f32 1.0, %v684
  %687 = vrot.lane.b32.xlu0 %v678, 64
  %v688 = vpop.permute.xlu0 %687
  %v690 = vmul.f32 %v685, %v688
  %v691 = vadd.f32 %v678, %v690
  %v692 = vtanh.pop %v691
  %v693 = vsub.f32 1.0, %v685
  %695 = vrot.lane.b32.xlu0 %v692, 64
  %v696 = vpop.permute.xlu0 %695
  %v698 = vmul.f32 %v693, %v696
  %v699 = vmul.f32 %v685, %v200
  %v700 = vadd.f32 %v698, %v699
  %702 = vrot.lane.b32.xlu0 %v700, 64
  %v703 = vpop.permute.xlu0 %702
  %v705 = vsel %vm102, %v703, %v345
  %v706 = vld [vmem:[%s2] sm:$0xff]
  %v707 = vld [vmem:[%s2 + $0x8] sm:$0xff]
  %v708 = vld [vmem:[%s2 + $0x10] sm:$0xff]
  %v709 = vld [vmem:[%s2 + $0x18] sm:$0xff]
  %v710 = vld [vmem:[%s2 + $0x20] sm:$0xff]
  %v711 = vld [vmem:[%s2 + $0x28] sm:$0xff]
  %v712 = vld [vmem:[%s2 + $0x30] sm:$0xff]
  %v713 = vld [vmem:[%s2 + $0x38] sm:$0xff]
  %v714 = vld [vmem:[%s2 + $0x40] sm:$0xff]
  %v715 = vld [vmem:[%s2 + $0x48] sm:$0xff]
  %v716 = vld [vmem:[%s2 + $0x50] sm:$0xff]
  %v717 = vld [vmem:[%s2 + $0x58] sm:$0xff]
  %v718 = vld [vmem:[%s2 + $0x60] sm:$0xff]
  %v719 = vld [vmem:[%s2 + $0x68] sm:$0xff]
  %v720 = vld [vmem:[%s2 + $0x70] sm:$0xff]
  %v721 = vld [vmem:[%s2 + $0x78] sm:$0xff]
  %v722 = vld [vmem:[%s2 + $0x80] sm:$0xff]
  %v723 = vld [vmem:[%s2 + $0x88] sm:$0xff]
  %v724 = vld [vmem:[%s2 + $0x90] sm:$0xff]
  %v725 = vld [vmem:[%s2 + $0x98] sm:$0xff]
  %v726 = vld [vmem:[%s2 + $0xa0] sm:$0xff]
  %v727 = vld [vmem:[%s2 + $0xa8] sm:$0xff]
  %v728 = vld [vmem:[%s2 + $0xb0] sm:$0xff]
  %v729 = vld [vmem:[%s2 + $0xb8] sm:$0xff]
  %v730 = vld [vmem:[%s2 + $0xc0] sm:$0xff]
  %v731 = vld [vmem:[%s2 + $0xc8] sm:$0xff]
  %v732 = vld [vmem:[%s2 + $0xd0] sm:$0xff]
  %v733 = vld [vmem:[%s2 + $0xd8] sm:$0xff]
  %v734 = vld [vmem:[%s2 + $0xe0] sm:$0xff]
  %v735 = vld [vmem:[%s2 + $0xe8] sm:$0xff]
  %v736 = vld [vmem:[%s2 + $0xf0] sm:$0xff]
  %v737 = vld [vmem:[%s2 + $0xf8] sm:$0xff]
  %v738 = vld [vmem:[%s3] sm:$0x3]
  %v740 = vlaneseq
  %v741 = vshrl.u32 %v740, 7
  %v742 = vsub.s32 0, %v741
  %v743 = vrot.slane %v738, %v742
  %v744 = vlaneseq
  %v745 = vshrl.u32 %v744, 7
  %v746 = vsub.s32 1, %v745
  %v747 = vrot.slane %v738, %v746
  %750 = vmatprep.subr.mxu0 %v707
  %751 = vmatpush1.msra.mxu0 %v706
  %752 = vmatprep.subr.mxu0 %v709
  %753 = vmatpush1.msra.mxu0 %v708
  %754 = vmatprep.subr.mxu0 %v711
  %755 = vmatpush1.msra.mxu0 %v710
  %756 = vmatprep.subr.mxu0 %v713
  %757 = vmatpush1.msra.mxu0 %v712
  %758 = vmatprep.subr.mxu0 %v715
  %759 = vmatpush1.msra.mxu0 %v714
  %760 = vmatprep.subr.mxu0 %v717
  %761 = vmatpush1.msra.mxu0 %v716
  %762 = vmatprep.subr.mxu0 %v719
  %763 = vmatpush1.msra.mxu0 %v718
  %764 = vmatprep.subr.mxu0 %v721
  %765 = vmatpush1.msra.mxu0 %v720
  %766 = vmatprep.subr.mxu0 %v723
  %767 = vmatpush1.msra.mxu0 %v722
  %768 = vmatprep.subr.mxu0 %v725
  %769 = vmatpush1.msra.mxu0 %v724
  %770 = vmatprep.subr.mxu0 %v727
  %771 = vmatpush1.msra.mxu0 %v726
  %772 = vmatprep.subr.mxu0 %v729
  %773 = vmatpush1.msra.mxu0 %v728
  %774 = vmatprep.subr.mxu0 %v731
  %775 = vmatpush1.msra.mxu0 %v730
  %776 = vmatprep.subr.mxu0 %v733
  %777 = vmatpush1.msra.mxu0 %v732
  %778 = vmatprep.subr.mxu0 %v735
  %779 = vmatpush1.msra.mxu0 %v734
  %780 = vmatprep.subr.mxu0 %v737
  %781 = vmatpush1.msra.mxu0 %v736
  %782 = vmatprep.subr.mxu0 0.0
  %783 = vmatpush1.msra.mxu0 0.0
  %784 = vmatprep.subr.mxu0 0.0
  %785 = vmatpush1.msra.mxu0 0.0
  %786 = vmatprep.subr.mxu0 0.0
  %787 = vmatpush1.msra.mxu0 0.0
  %788 = vmatprep.subr.mxu0 0.0
  %789 = vmatpush1.msra.mxu0 0.0
  %790 = vmatprep.subr.mxu0 0.0
  %791 = vmatpush1.msra.mxu0 0.0
  %792 = vmatprep.subr.mxu0 0.0
  %793 = vmatpush1.msra.mxu0 0.0
  %794 = vmatprep.subr.mxu0 0.0
  %795 = vmatpush1.msra.mxu0 0.0
  %796 = vmatprep.subr.mxu0 0.0
  %797 = vmatpush1.msra.mxu0 0.0
  %798 = vmatprep.subr.mxu0 0.0
  %799 = vmatpush1.msra.mxu0 0.0
  %800 = vmatprep.subr.mxu0 0.0
  %801 = vmatpush1.msra.mxu0 0.0
  %802 = vmatprep.subr.mxu0 0.0
  %803 = vmatpush1.msra.mxu0 0.0
  %804 = vmatprep.subr.mxu0 0.0
  %805 = vmatpush1.msra.mxu0 0.0
  %806 = vmatprep.subr.mxu0 0.0
  %807 = vmatpush1.msra.mxu0 0.0
  %808 = vmatprep.subr.mxu0 0.0
  %809 = vmatpush1.msra.mxu0 0.0
  %810 = vmatprep.subr.mxu0 0.0
  %811 = vmatpush1.msra.mxu0 0.0
  %812 = vmatprep.subr.mxu0 0.0
  %813 = vmatpush1.msra.mxu0 0.0
  %814 = vmatprep.mubr.f32.mxu0 0.0
  %815 = vmatmul.mubr.f32.gmra.mrb[0].mxu0 %v705
  %v816 = vpop.f32.mrb[0].mxu0
  %v817 = vadd.f32 %v743, %v816
  %v818 = vpop.f32.mrb[0].mxu0
  %v819 = vadd.f32 %v747, %v818
  %820 = vdwg.mxu0
  %v821 = vxor.u32 %v817, 2147483648
  %v822 = vmul.f32 %v821, 1.442695
  %v823 = vpow.pop %v822
  %v824 = vadd.f32 %v823, 1.0
  %v825 = vrcp.pop %v824
  %v826 = vmul.f32 1.0, %v825
  %828 = vrot.lane.b32.xlu0 %v819, 64
  %v829 = vpop.permute.xlu0 %828
  %v831 = vmul.f32 %v826, %v829
  %v832 = vadd.f32 %v819, %v831
  %v833 = vtanh.pop %v832
  %v834 = vsub.f32 1.0, %v826
  %836 = vrot.lane.b32.xlu0 %v833, 64
  %v837 = vpop.permute.xlu0 %836
  %v839 = vmul.f32 %v834, %v837
  %v840 = vmul.f32 %v826, %v345
  %v841 = vadd.f32 %v839, %v840
  %v842 = vld [vmem:[%s4] sm:$0xff]
  %v843 = vld [vmem:[%s4 + $0x8] sm:$0xff]
  %v844 = vld [vmem:[%s4 + $0x10] sm:$0xff]
  %v845 = vld [vmem:[%s4 + $0x18] sm:$0xff]
  %v846 = vld [vmem:[%s4 + $0x20] sm:$0xff]
  %v847 = vld [vmem:[%s4 + $0x28] sm:$0xff]
  %v848 = vld [vmem:[%s4 + $0x30] sm:$0xff]
  %v849 = vld [vmem:[%s4 + $0x38] sm:$0xff]
  %v850 = vld [vmem:[%s5] sm:$0x1]
  %v852 = vlaneseq
  %v853 = vshrl.u32 %v852, 7
  %v854 = vsub.s32 0, %v853
  %v855 = vrot.slane %v850, %v854
  %858 = vrot.lane.b32.xlu0 %v841, 64
  %v859 = vpop.permute.xlu0 %858
  %v860 = vsel %vm102, %v859, 0
  %862 = vmatprep.subr.mxu0 0.0
  %863 = vmatpush1.msra.mxu0 %v842
  %864 = vmatprep.subr.mxu0 0.0
  %865 = vmatpush1.msra.mxu0 %v843
  %866 = vmatprep.subr.mxu0 0.0
  %867 = vmatpush1.msra.mxu0 %v844
  %868 = vmatprep.subr.mxu0 0.0
  %869 = vmatpush1.msra.mxu0 %v845
  %870 = vmatprep.subr.mxu0 0.0
  %871 = vmatpush1.msra.mxu0 %v846
  %872 = vmatprep.subr.mxu0 0.0
  %873 = vmatpush1.msra.mxu0 %v847
  %874 = vmatprep.subr.mxu0 0.0
  %875 = vmatpush1.msra.mxu0 %v848
  %876 = vmatprep.subr.mxu0 0.0
  %877 = vmatpush1.msra.mxu0 %v849
  %878 = vmatprep.subr.mxu0 0.0
  %879 = vmatpush1.msra.mxu0 0.0
  %880 = vmatprep.subr.mxu0 0.0
  %881 = vmatpush1.msra.mxu0 0.0
  %882 = vmatprep.subr.mxu0 0.0
  %883 = vmatpush1.msra.mxu0 0.0
  %884 = vmatprep.subr.mxu0 0.0
  %885 = vmatpush1.msra.mxu0 0.0
  %886 = vmatprep.subr.mxu0 0.0
  %887 = vmatpush1.msra.mxu0 0.0
  %888 = vmatprep.subr.mxu0 0.0
  %889 = vmatpush1.msra.mxu0 0.0
  %890 = vmatprep.subr.mxu0 0.0
  %891 = vmatpush1.msra.mxu0 0.0
  %892 = vmatprep.subr.mxu0 0.0
  %893 = vmatpush1.msra.mxu0 0.0
  %894 = vmatprep.subr.mxu0 0.0
  %895 = vmatpush1.msra.mxu0 0.0
  %896 = vmatprep.subr.mxu0 0.0
  %897 = vmatpush1.msra.mxu0 0.0
  %898 = vmatprep.subr.mxu0 0.0
  %899 = vmatpush1.msra.mxu0 0.0
  %900 = vmatprep.subr.mxu0 0.0
  %901 = vmatpush1.msra.mxu0 0.0
  %902 = vmatprep.subr.mxu0 0.0
  %903 = vmatpush1.msra.mxu0 0.0
  %904 = vmatprep.subr.mxu0 0.0
  %905 = vmatpush1.msra.mxu0 0.0
  %906 = vmatprep.subr.mxu0 0.0
  %907 = vmatpush1.msra.mxu0 0.0
  %908 = vmatprep.subr.mxu0 0.0
  %909 = vmatpush1.msra.mxu0 0.0
  %910 = vmatprep.subr.mxu0 0.0
  %911 = vmatpush1.msra.mxu0 0.0
  %912 = vmatprep.subr.mxu0 0.0
  %913 = vmatpush1.msra.mxu0 0.0
  %914 = vmatprep.subr.mxu0 0.0
  %915 = vmatpush1.msra.mxu0 0.0
  %916 = vmatprep.subr.mxu0 0.0
  %917 = vmatpush1.msra.mxu0 0.0
  %918 = vmatprep.subr.mxu0 0.0
  %919 = vmatpush1.msra.mxu0 0.0
  %920 = vmatprep.subr.mxu0 0.0
  %921 = vmatpush1.msra.mxu0 0.0
  %922 = vmatprep.subr.mxu0 0.0
  %923 = vmatpush1.msra.mxu0 0.0
  %924 = vmatprep.subr.mxu0 0.0
  %925 = vmatpush1.msra.mxu0 0.0
  %926 = vmatprep.mubr.f32.mxu0 0.0
  %927 = vmatmul.mubr.f32.gmra.mrb[0].mxu0 %v860
  %v928 = vpop.f32.mrb[0].mxu0
  %v929 = vadd.f32 %v855, %v928
  %v930 = vpop.f32.mrb[0].mxu0
  %931 = vdwg.mxu0
  %v932 = vmax.f32 %v929, 0.0
  %v933 = vld [vmem:[%s6] sm:$0xff]
  %v934 = vld [vmem:[%s6 + $0x8] sm:$0xff]
  %v935 = vld [vmem:[%s6 + $0x10] sm:$0xff]
  %v936 = vld [vmem:[%s6 + $0x18] sm:$0xff]
  %v937 = vld [vmem:[%s7] sm:$0x1]
  %v939 = vlaneseq
  %v940 = vshrl.u32 %v939, 7
  %v941 = vsub.s32 0, %v940
  %v942 = vrot.slane %v937, %v941
  %v945 = vsel %vm448, %v932, 0
  %947 = vmatprep.subr.mxu0 0.0
  %948 = vmatpush1.msra.mxu0 %v933
  %949 = vmatprep.subr.mxu0 0.0
  %950 = vmatpush1.msra.mxu0 %v934
  %951 = vmatprep.subr.mxu0 0.0
  %952 = vmatpush1.msra.mxu0 %v935
  %953 = vmatprep.subr.mxu0 0.0
  %954 = vmatpush1.msra.mxu0 %v936
  %955 = vmatprep.subr.mxu0 0.0
  %956 = vmatpush1.msra.mxu0 0.0
  %957 = vmatprep.subr.mxu0 0.0
  %958 = vmatpush1.msra.mxu0 0.0
  %959 = vmatprep.subr.mxu0 0.0
  %960 = vmatpush1.msra.mxu0 0.0
  %961 = vmatprep.subr.mxu0 0.0
  %962 = vmatpush1.msra.mxu0 0.0
  %963 = vmatprep.subr.mxu0 0.0
  %964 = vmatpush1.msra.mxu0 0.0
  %965 = vmatprep.subr.mxu0 0.0
  %966 = vmatpush1.msra.mxu0 0.0
  %967 = vmatprep.subr.mxu0 0.0
  %968 = vmatpush1.msra.mxu0 0.0
  %969 = vmatprep.subr.mxu0 0.0
  %970 = vmatpush1.msra.mxu0 0.0
  %971 = vmatprep.subr.mxu0 0.0
  %972 = vmatpush1.msra.mxu0 0.0
  %973 = vmatprep.subr.mxu0 0.0
  %974 = vmatpush1.msra.mxu0 0.0
  %975 = vmatprep.subr.mxu0 0.0
  %976 = vmatpush1.msra.mxu0 0.0
  %977 = vmatprep.subr.mxu0 0.0
  %978 = vmatpush1.msra.mxu0 0.0
  %979 = vmatprep.subr.mxu0 0.0
  %980 = vmatpush1.msra.mxu0 0.0
  %981 = vmatprep.subr.mxu0 0.0
  %982 = vmatpush1.msra.mxu0 0.0
  %983 = vmatprep.subr.mxu0 0.0
  %984 = vmatpush1.msra.mxu0 0.0
  %985 = vmatprep.subr.mxu0 0.0
  %986 = vmatpush1.msra.mxu0 0.0
  %987 = vmatprep.subr.mxu0 0.0
  %988 = vmatpush1.msra.mxu0 0.0
  %989 = vmatprep.subr.mxu0 0.0
  %990 = vmatpush1.msra.mxu0 0.0
  %991 = vmatprep.subr.mxu0 0.0
  %992 = vmatpush1.msra.mxu0 0.0
  %993 = vmatprep.subr.mxu0 0.0
  %994 = vmatpush1.msra.mxu0 0.0
  %995 = vmatprep.subr.mxu0 0.0
  %996 = vmatpush1.msra.mxu0 0.0
  %997 = vmatprep.subr.mxu0 0.0
  %998 = vmatpush1.msra.mxu0 0.0
  %999 = vmatprep.subr.mxu0 0.0
  %1000 = vmatpush1.msra.mxu0 0.0
  %1001 = vmatprep.subr.mxu0 0.0
  %1002 = vmatpush1.msra.mxu0 0.0
  %1003 = vmatprep.subr.mxu0 0.0
  %1004 = vmatpush1.msra.mxu0 0.0
  %1005 = vmatprep.subr.mxu0 0.0
  %1006 = vmatpush1.msra.mxu0 0.0
  %1007 = vmatprep.subr.mxu0 0.0
  %1008 = vmatpush1.msra.mxu0 0.0
  %1009 = vmatprep.subr.mxu0 0.0
  %1010 = vmatpush1.msra.mxu0 0.0
  %1011 = vmatprep.mubr.f32.mxu0 0.0
  %1012 = vmatmul.mubr.f32.gmra.mrb[0].mxu0 %v945
  %v1013 = vpop.f32.mrb[0].mxu0
  %v1014 = vadd.f32 %v942, %v1013
  %v1015 = vpop.f32.mrb[0].mxu0
  %1016 = vdwg.mxu0
  %s1017 = scalar_lea.vmem %s10, 2
  %1018 = vst [vmem:[%s1017] sm:$0x3] %v1014
  %v1019 = vsel %vm523, %v1014, -inf
  %1020 = vmax.xlane.f32.xlu0 %v1019
  %v1021 = vpop.xlane.xlu0 %1020
  %vm1022 = vcmp.eq.f32.partialorder %v1014, %v1021
  %v1023 = vsel %vm1022, %v36, 128
  %v1024 = vsel %vm523, %v1023, 2147483647
  %v1025 = vand.u32 %v1024, 65535
  %v1026 = vshra.s32 %v1024, 16
  %v1027 = vcvt.s32.f32 %v1025
  %v1028 = vcvt.s32.f32 %v1026
  %1029 = vmin.xlane.f32.xlu0 %v1028
  %v1030 = vpop.xlane.xlu0 %1029
  %vm1031 = vcmp.eq.f32.partialorder %v1028, %v1030
  %v1032 = vsel %vm1031, %v1027, inf
  %1033 = vmin.xlane.f32.xlu0 %v1032
  %v1034 = vpop.xlane.xlu0 %1033
  %v1035 = vcvt.f32.s32 %v1034
  %v1036 = vcvt.f32.s32 %v1030
  %v1037 = vshll.u32 %v1036, 16
  %v1038 = vadd.s32 %v1037, %v1035
  %vm1039 = vcmp.eq.s32.totalorder %v36, %v1038
  %v1040 = vsel %vm1039, 1, 0
  %v1041 = vcvt.s32.f32 %v1040
  %v1042 = vld [vmem:[%s0] sm:$0xff]
  %v1043 = vld [vmem:[%s0 + $0x8] sm:$0xff]
  %v1044 = vld [vmem:[%s0 + $0x10] sm:$0xff]
  %v1045 = vld [vmem:[%s0 + $0x18] sm:$0xff]
  %v1046 = vld [vmem:[%s0 + $0x20] sm:$0xff]
  %v1047 = vld [vmem:[%s0 + $0x28] sm:$0xff]
  %v1048 = vld [vmem:[%s0 + $0x30] sm:$0xff]
  %v1049 = vld [vmem:[%s0 + $0x38] sm:$0xff]
  %v1050 = vld [vmem:[%s0 + $0x40] sm:$0xff]
  %v1051 = vld [vmem:[%s0 + $0x48] sm:$0xff]
  %v1052 = vld [vmem:[%s0 + $0x50] sm:$0xff]
  %v1053 = vld [vmem:[%s0 + $0x58] sm:$0xff]
  %v1054 = vld [vmem:[%s0 + $0x60] sm:$0xff]
  %v1055 = vld [vmem:[%s0 + $0x68] sm:$0xff]
  %v1056 = vld [vmem:[%s0 + $0x70] sm:$0xff]
  %v1057 = vld [vmem:[%s0 + $0x78] sm:$0xff]
  %v1058 = vld [vmem:[%s0 + $0x80] sm:$0xff]
  %v1059 = vld [vmem:[%s0 + $0x88] sm:$0xff]
  %v1060 = vld [vmem:[%s0 + $0x90] sm:$0xff]
  %v1061 = vld [vmem:[%s0 + $0x98] sm:$0xff]
  %v1062 = vld [vmem:[%s0 + $0xa0] sm:$0xff]
  %v1063 = vld [vmem:[%s0 + $0xa8] sm:$0xff]
  %v1064 = vld [vmem:[%s0 + $0xb0] sm:$0xff]
  %v1065 = vld [vmem:[%s0 + $0xb8] sm:$0xff]
  %v1066 = vld [vmem:[%s0 + $0xc0] sm:$0xff]
  %v1067 = vld [vmem:[%s0 + $0xc8] sm:$0xff]
  %v1068 = vld [vmem:[%s0 + $0xd0] sm:$0xff]
  %v1069 = vld [vmem:[%s0 + $0xd8] sm:$0xff]
  %v1070 = vld [vmem:[%s0 + $0xe0] sm:$0xff]
  %v1071 = vld [vmem:[%s0 + $0xe8] sm:$0xff]
  %v1072 = vld [vmem:[%s0 + $0xf0] sm:$0xff]
  %v1073 = vld [vmem:[%s0 + $0xf8] sm:$0xff]
  %v1074 = vld [vmem:[%s0 + $0x100] sm:$0xff]
  %v1075 = vld [vmem:[%s0 + $0x108] sm:$0xff]
  %v1076 = vld [vmem:[%s0 + $0x110] sm:$0xff]
  %v1077 = vld [vmem:[%s0 + $0x118] sm:$0xff]
  %v1078 = vld [vmem:[%s0 + $0x120] sm:$0xff]
  %v1079 = vld [vmem:[%s0 + $0x128] sm:$0xff]
  %v1080 = vld [vmem:[%s0 + $0x130] sm:$0xff]
  %v1081 = vld [vmem:[%s0 + $0x138] sm:$0xff]
  %v1082 = vld [vmem:[%s0 + $0x140] sm:$0xff]
  %v1083 = vld [vmem:[%s0 + $0x148] sm:$0xff]
  %v1084 = vld [vmem:[%s0 + $0x150] sm:$0xff]
  %v1085 = vld [vmem:[%s0 + $0x158] sm:$0xff]
  %v1086 = vld [vmem:[%s0 + $0x160] sm:$0xff]
  %v1087 = vld [vmem:[%s0 + $0x168] sm:$0xff]
  %v1088 = vld [vmem:[%s0 + $0x170] sm:$0xff]
  %v1089 = vld [vmem:[%s0 + $0x178] sm:$0xff]
  %v1090 = vld [vmem:[%s1] sm:$0x3]
  %v1092 = vlaneseq
  %v1093 = vshrl.u32 %v1092, 7
  %v1094 = vsub.s32 0, %v1093
  %v1095 = vrot.slane %v1090, %v1094
  %v1096 = vlaneseq
  %v1097 = vshrl.u32 %v1096, 7
  %v1098 = vsub.s32 1, %v1097
  %v1099 = vrot.slane %v1090, %v1098
  %v1102 = vsel %vm102, %v703, 0
  %1104 = vmatprep.subr.mxu0 %v1043
  %1105 = vmatpush1.msra.mxu0 %v1042
  %1106 = vmatprep.subr.mxu0 %v1045
  %1107 = vmatpush1.msra.mxu0 %v1044
  %1108 = vmatprep.subr.mxu0 %v1047
  %1109 = vmatpush1.msra.mxu0 %v1046
  %1110 = vmatprep.subr.mxu0 %v1049
  %1111 = vmatpush1.msra.mxu0 %v1048
  %1112 = vmatprep.subr.mxu0 %v1051
  %1113 = vmatpush1.msra.mxu0 %v1050
  %1114 = vmatprep.subr.mxu0 %v1053
  %1115 = vmatpush1.msra.mxu0 %v1052
  %1116 = vmatprep.subr.mxu0 %v1055
  %1117 = vmatpush1.msra.mxu0 %v1054
  %1118 = vmatprep.subr.mxu0 %v1057
  %1119 = vmatpush1.msra.mxu0 %v1056
  %1120 = vmatprep.subr.mxu0 %v1059
  %1121 = vmatpush1.msra.mxu0 %v1058
  %1122 = vmatprep.subr.mxu0 %v1061
  %1123 = vmatpush1.msra.mxu0 %v1060
  %1124 = vmatprep.subr.mxu0 %v1063
  %1125 = vmatpush1.msra.mxu0 %v1062
  %1126 = vmatprep.subr.mxu0 %v1065
  %1127 = vmatpush1.msra.mxu0 %v1064
  %1128 = vmatprep.subr.mxu0 %v1067
  %1129 = vmatpush1.msra.mxu0 %v1066
  %1130 = vmatprep.subr.mxu0 %v1069
  %1131 = vmatpush1.msra.mxu0 %v1068
  %1132 = vmatprep.subr.mxu0 %v1071
  %1133 = vmatpush1.msra.mxu0 %v1070
  %1134 = vmatprep.subr.mxu0 %v1073
  %1135 = vmatpush1.msra.mxu0 %v1072
  %1136 = vmatprep.subr.mxu0 %v1075
  %1137 = vmatpush1.msra.mxu0 %v1074
  %1138 = vmatprep.subr.mxu0 %v1077
  %1139 = vmatpush1.msra.mxu0 %v1076
  %1140 = vmatprep.subr.mxu0 %v1079
  %1141 = vmatpush1.msra.mxu0 %v1078
  %1142 = vmatprep.subr.mxu0 %v1081
  %1143 = vmatpush1.msra.mxu0 %v1080
  %1144 = vmatprep.subr.mxu0 %v1083
  %1145 = vmatpush1.msra.mxu0 %v1082
  %1146 = vmatprep.subr.mxu0 %v1085
  %1147 = vmatpush1.msra.mxu0 %v1084
  %1148 = vmatprep.subr.mxu0 %v1087
  %1149 = vmatpush1.msra.mxu0 %v1086
  %1150 = vmatprep.subr.mxu0 %v1089
  %1151 = vmatpush1.msra.mxu0 %v1088
  %1152 = vmatprep.subr.mxu0 0.0
  %1153 = vmatpush1.msra.mxu0 0.0
  %1154 = vmatprep.subr.mxu0 0.0
  %1155 = vmatpush1.msra.mxu0 0.0
  %1156 = vmatprep.subr.mxu0 0.0
  %1157 = vmatpush1.msra.mxu0 0.0
  %1158 = vmatprep.subr.mxu0 0.0
  %1159 = vmatpush1.msra.mxu0 0.0
  %1160 = vmatprep.subr.mxu0 0.0
  %1161 = vmatpush1.msra.mxu0 0.0
  %1162 = vmatprep.subr.mxu0 0.0
  %1163 = vmatpush1.msra.mxu0 0.0
  %1164 = vmatprep.subr.mxu0 0.0
  %1165 = vmatpush1.msra.mxu0 0.0
  %1166 = vmatprep.subr.mxu0 0.0
  %1167 = vmatpush1.msra.mxu0 0.0
  %1168 = vmatprep.mubr.f32.mxu0 %v1102
  %1169 = vmatmul.mubr.f32.gmra.mrb[0].mxu0 %v1041
  %v1170 = vpop.f32.mrb[0].mxu0
  %v1171 = vadd.f32 %v1095, %v1170
  %v1172 = vpop.f32.mrb[0].mxu0
  %v1173 = vadd.f32 %v1099, %v1172
  %1174 = vdwg.mxu0
  %v1175 = vxor.u32 %v1171, 2147483648
  %v1176 = vmul.f32 %v1175, 1.442695
  %v1177 = vpow.pop %v1176
  %v1178 = vadd.f32 %v1177, 1.0
  %v1179 = vrcp.pop %v1178
  %v1180 = vmul.f32 1.0, %v1179
  %1182 = vrot.lane.b32.xlu0 %v1173, 64
  %v1183 = vpop.permute.xlu0 %1182
  %v1185 = vmul.f32 %v1180, %v1183
  %v1186 = vadd.f32 %v1173, %v1185
  %v1187 = vtanh.pop %v1186
  %v1188 = vsub.f32 1.0, %v1180
  %1190 = vrot.lane.b32.xlu0 %v1187, 64
  %v1191 = vpop.permute.xlu0 %1190
  %v1193 = vmul.f32 %v1188, %v1191
  %v1194 = vmul.f32 %v1180, %v700
  %v1195 = vadd.f32 %v1193, %v1194
  %1197 = vrot.lane.b32.xlu0 %v1195, 64
  %v1198 = vpop.permute.xlu0 %1197
  %v1200 = vsel %vm102, %v1198, %v841
  %v1201 = vld [vmem:[%s2] sm:$0xff]
  %v1202 = vld [vmem:[%s2 + $0x8] sm:$0xff]
  %v1203 = vld [vmem:[%s2 + $0x10] sm:$0xff]
  %v1204 = vld [vmem:[%s2 + $0x18] sm:$0xff]
  %v1205 = vld [vmem:[%s2 + $0x20] sm:$0xff]
  %v1206 = vld [vmem:[%s2 + $0x28] sm:$0xff]
  %v1207 = vld [vmem:[%s2 + $0x30] sm:$0xff]
  %v1208 = vld [vmem:[%s2 + $0x38] sm:$0xff]
  %v1209 = vld [vmem:[%s2 + $0x40] sm:$0xff]
  %v1210 = vld [vmem:[%s2 + $0x48] sm:$0xff]
  %v1211 = vld [vmem:[%s2 + $0x50] sm:$0xff]
  %v1212 = vld [vmem:[%s2 + $0x58] sm:$0xff]
  %v1213 = vld [vmem:[%s2 + $0x60] sm:$0xff]
  %v1214 = vld [vmem:[%s2 + $0x68] sm:$0xff]
  %v1215 = vld [vmem:[%s2 + $0x70] sm:$0xff]
  %v1216 = vld [vmem:[%s2 + $0x78] sm:$0xff]
  %v1217 = vld [vmem:[%s2 + $0x80] sm:$0xff]
  %v1218 = vld [vmem:[%s2 + $0x88] sm:$0xff]
  %v1219 = vld [vmem:[%s2 + $0x90] sm:$0xff]
  %v1220 = vld [vmem:[%s2 + $0x98] sm:$0xff]
  %v1221 = vld [vmem:[%s2 + $0xa0] sm:$0xff]
  %v1222 = vld [vmem:[%s2 + $0xa8] sm:$0xff]
  %v1223 = vld [vmem:[%s2 + $0xb0] sm:$0xff]
  %v1224 = vld [vmem:[%s2 + $0xb8] sm:$0xff]
  %v1225 = vld [vmem:[%s2 + $0xc0] sm:$0xff]
  %v1226 = vld [vmem:[%s2 + $0xc8] sm:$0xff]
  %v1227 = vld [vmem:[%s2 + $0xd0] sm:$0xff]
  %v1228 = vld [vmem:[%s2 + $0xd8] sm:$0xff]
  %v1229 = vld [vmem:[%s2 + $0xe0] sm:$0xff]
  %v1230 = vld [vmem:[%s2 + $0xe8] sm:$0xff]
  %v1231 = vld [vmem:[%s2 + $0xf0] sm:$0xff]
  %v1232 = vld [vmem:[%s2 + $0xf8] sm:$0xff]
  %v1233 = vld [vmem:[%s3] sm:$0x3]
  %v1235 = vlaneseq
  %v1236 = vshrl.u32 %v1235, 7
  %v1237 = vsub.s32 0, %v1236
  %v1238 = vrot.slane %v1233, %v1237
  %v1239 = vlaneseq
  %v1240 = vshrl.u32 %v1239, 7
  %v1241 = vsub.s32 1, %v1240
  %v1242 = vrot.slane %v1233, %v1241
  %1245 = vmatprep.subr.mxu0 %v1202
  %1246 = vmatpush1.msra.mxu0 %v1201
  %1247 = vmatprep.subr.mxu0 %v1204
  %1248 = vmatpush1.msra.mxu0 %v1203
  %1249 = vmatprep.subr.mxu0 %v1206
  %1250 = vmatpush1.msra.mxu0 %v1205
  %1251 = vmatprep.subr.mxu0 %v1208
  %1252 = vmatpush1.msra.mxu0 %v1207
  %1253 = vmatprep.subr.mxu0 %v1210
  %1254 = vmatpush1.msra.mxu0 %v1209
  %1255 = vmatprep.subr.mxu0 %v1212
  %1256 = vmatpush1.msra.mxu0 %v1211
  %1257 = vmatprep.subr.mxu0 %v1214
  %1258 = vmatpush1.msra.mxu0 %v1213
  %1259 = vmatprep.subr.mxu0 %v1216
  %1260 = vmatpush1.msra.mxu0 %v1215
  %1261 = vmatprep.subr.mxu0 %v1218
  %1262 = vmatpush1.msra.mxu0 %v1217
  %1263 = vmatprep.subr.mxu0 %v1220
  %1264 = vmatpush1.msra.mxu0 %v1219
  %1265 = vmatprep.subr.mxu0 %v1222
  %1266 = vmatpush1.msra.mxu0 %v1221
  %1267 = vmatprep.subr.mxu0 %v1224
  %1268 = vmatpush1.msra.mxu0 %v1223
  %1269 = vmatprep.subr.mxu0 %v1226
  %1270 = vmatpush1.msra.mxu0 %v1225
  %1271 = vmatprep.subr.mxu0 %v1228
  %1272 = vmatpush1.msra.mxu0 %v1227
  %1273 = vmatprep.subr.mxu0 %v1230
  %1274 = vmatpush1.msra.mxu0 %v1229
  %1275 = vmatprep.subr.mxu0 %v1232
  %1276 = vmatpush1.msra.mxu0 %v1231
  %1277 = vmatprep.subr.mxu0 0.0
  %1278 = vmatpush1.msra.mxu0 0.0
  %1279 = vmatprep.subr.mxu0 0.0
  %1280 = vmatpush1.msra.mxu0 0.0
  %1281 = vmatprep.subr.mxu0 0.0
  %1282 = vmatpush1.msra.mxu0 0.0
  %1283 = vmatprep.subr.mxu0 0.0
  %1284 = vmatpush1.msra.mxu0 0.0
  %1285 = vmatprep.subr.mxu0 0.0
  %1286 = vmatpush1.msra.mxu0 0.0
  %1287 = vmatprep.subr.mxu0 0.0
  %1288 = vmatpush1.msra.mxu0 0.0
  %1289 = vmatprep.subr.mxu0 0.0
  %1290 = vmatpush1.msra.mxu0 0.0
  %1291 = vmatprep.subr.mxu0 0.0
  %1292 = vmatpush1.msra.mxu0 0.0
  %1293 = vmatprep.subr.mxu0 0.0
  %1294 = vmatpush1.msra.mxu0 0.0
  %1295 = vmatprep.subr.mxu0 0.0
  %1296 = vmatpush1.msra.mxu0 0.0
  %1297 = vmatprep.subr.mxu0 0.0
  %1298 = vmatpush1.msra.mxu0 0.0
  %1299 = vmatprep.subr.mxu0 0.0
  %1300 = vmatpush1.msra.mxu0 0.0
  %1301 = vmatprep.subr.mxu0 0.0
  %1302 = vmatpush1.msra.mxu0 0.0
  %1303 = vmatprep.subr.mxu0 0.0
  %1304 = vmatpush1.msra.mxu0 0.0
  %1305 = vmatprep.subr.mxu0 0.0
  %1306 = vmatpush1.msra.mxu0 0.0
  %1307 = vmatprep.subr.mxu0 0.0
  %1308 = vmatpush1.msra.mxu0 0.0
  %1309 = vmatprep.mubr.f32.mxu0 0.0
  %1310 = vmatmul.mubr.f32.gmra.mrb[0].mxu0 %v1200
  %v1311 = vpop.f32.mrb[0].mxu0
  %v1312 = vadd.f32 %v1238, %v1311
  %v1313 = vpop.f32.mrb[0].mxu0
  %v1314 = vadd.f32 %v1242, %v1313
  %1315 = vdwg.mxu0
  %v1316 = vxor.u32 %v1312, 2147483648
  %v1317 = vmul.f32 %v1316, 1.442695
  %v1318 = vpow.pop %v1317
  %v1319 = vadd.f32 %v1318, 1.0
  %v1320 = vrcp.pop %v1319
  %v1321 = vmul.f32 1.0, %v1320
  %1323 = vrot.lane.b32.xlu0 %v1314, 64
  %v1324 = vpop.permute.xlu0 %1323
  %v1326 = vmul.f32 %v1321, %v1324
  %v1327 = vadd.f32 %v1314, %v1326
  %v1328 = vtanh.pop %v1327
  %v1329 = vsub.f32 1.0, %v1321
  %1331 = vrot.lane.b32.xlu0 %v1328, 64
  %v1332 = vpop.permute.xlu0 %1331
  %v1334 = vmul.f32 %v1329, %v1332
  %v1335 = vmul.f32 %v1321, %v841
  %v1336 = vadd.f32 %v1334, %v1335
  %v1337 = vld [vmem:[%s4] sm:$0xff]
  %v1338 = vld [vmem:[%s4 + $0x8] sm:$0xff]
  %v1339 = vld [vmem:[%s4 + $0x10] sm:$0xff]
  %v1340 = vld [vmem:[%s4 + $0x18] sm:$0xff]
  %v1341 = vld [vmem:[%s4 + $0x20] sm:$0xff]
  %v1342 = vld [vmem:[%s4 + $0x28] sm:$0xff]
  %v1343 = vld [vmem:[%s4 + $0x30] sm:$0xff]
  %v1344 = vld [vmem:[%s4 + $0x38] sm:$0xff]
  %v1345 = vld [vmem:[%s5] sm:$0x1]
  %v1347 = vlaneseq
  %v1348 = vshrl.u32 %v1347, 7
  %v1349 = vsub.s32 0, %v1348
  %v1350 = vrot.slane %v1345, %v1349
  %1353 = vrot.lane.b32.xlu0 %v1336, 64
  %v1354 = vpop.permute.xlu0 %1353
  %v1355 = vsel %vm102, %v1354, 0
  %1357 = vmatprep.subr.mxu0 0.0
  %1358 = vmatpush1.msra.mxu0 %v1337
  %1359 = vmatprep.subr.mxu0 0.0
  %1360 = vmatpush1.msra.mxu0 %v1338
  %1361 = vmatprep.subr.mxu0 0.0
  %1362 = vmatpush1.msra.mxu0 %v1339
  %1363 = vmatprep.subr.mxu0 0.0
  %1364 = vmatpush1.msra.mxu0 %v1340
  %1365 = vmatprep.subr.mxu0 0.0
  %1366 = vmatpush1.msra.mxu0 %v1341
  %1367 = vmatprep.subr.mxu0 0.0
  %1368 = vmatpush1.msra.mxu0 %v1342
  %1369 = vmatprep.subr.mxu0 0.0
  %1370 = vmatpush1.msra.mxu0 %v1343
  %1371 = vmatprep.subr.mxu0 0.0
  %1372 = vmatpush1.msra.mxu0 %v1344
  %1373 = vmatprep.subr.mxu0 0.0
  %1374 = vmatpush1.msra.mxu0 0.0
  %1375 = vmatprep.subr.mxu0 0.0
  %1376 = vmatpush1.msra.mxu0 0.0
  %1377 = vmatprep.subr.mxu0 0.0
  %1378 = vmatpush1.msra.mxu0 0.0
  %1379 = vmatprep.subr.mxu0 0.0
  %1380 = vmatpush1.msra.mxu0 0.0
  %1381 = vmatprep.subr.mxu0 0.0
  %1382 = vmatpush1.msra.mxu0 0.0
  %1383 = vmatprep.subr.mxu0 0.0
  %1384 = vmatpush1.msra.mxu0 0.0
  %1385 = vmatprep.subr.mxu0 0.0
  %1386 = vmatpush1.msra.mxu0 0.0
  %1387 = vmatprep.subr.mxu0 0.0
  %1388 = vmatpush1.msra.mxu0 0.0
  %1389 = vmatprep.subr.mxu0 0.0
  %1390 = vmatpush1.msra.mxu0 0.0
  %1391 = vmatprep.subr.mxu0 0.0
  %1392 = vmatpush1.msra.mxu0 0.0
  %1393 = vmatprep.subr.mxu0 0.0
  %1394 = vmatpush1.msra.mxu0 0.0
  %1395 = vmatprep.subr.mxu0 0.0
  %1396 = vmatpush1.msra.mxu0 0.0
  %1397 = vmatprep.subr.mxu0 0.0
  %1398 = vmatpush1.msra.mxu0 0.0
  %1399 = vmatprep.subr.mxu0 0.0
  %1400 = vmatpush1.msra.mxu0 0.0
  %1401 = vmatprep.subr.mxu0 0.0
  %1402 = vmatpush1.msra.mxu0 0.0
  %1403 = vmatprep.subr.mxu0 0.0
  %1404 = vmatpush1.msra.mxu0 0.0
  %1405 = vmatprep.subr.mxu0 0.0
  %1406 = vmatpush1.msra.mxu0 0.0
  %1407 = vmatprep.subr.mxu0 0.0
  %1408 = vmatpush1.msra.mxu0 0.0
  %1409 = vmatprep.subr.mxu0 0.0
  %1410 = vmatpush1.msra.mxu0 0.0
  %1411 = vmatprep.subr.mxu0 0.0
  %1412 = vmatpush1.msra.mxu0 0.0
  %1413 = vmatprep.subr.mxu0 0.0
  %1414 = vmatpush1.msra.mxu0 0.0
  %1415 = vmatprep.subr.mxu0 0.0
  %1416 = vmatpush1.msra.mxu0 0.0
  %1417 = vmatprep.subr.mxu0 0.0
  %1418 = vmatpush1.msra.mxu0 0.0
  %1419 = vmatprep.subr.mxu0 0.0
  %1420 = vmatpush1.msra.mxu0 0.0
  %1421 = vmatprep.mubr.f32.mxu0 0.0
  %1422 = vmatmul.mubr.f32.gmra.mrb[0].mxu0 %v1355
  %v1423 = vpop.f32.mrb[0].mxu0
  %v1424 = vadd.f32 %v1350, %v1423
  %v1425 = vpop.f32.mrb[0].mxu0
  %1426 = vdwg.mxu0
  %v1427 = vmax.f32 %v1424, 0.0
  %v1428 = vld [vmem:[%s6] sm:$0xff]
  %v1429 = vld [vmem:[%s6 + $0x8] sm:$0xff]
  %v1430 = vld [vmem:[%s6 + $0x10] sm:$0xff]
  %v1431 = vld [vmem:[%s6 + $0x18] sm:$0xff]
  %v1432 = vld [vmem:[%s7] sm:$0x1]
  %v1434 = vlaneseq
  %v1435 = vshrl.u32 %v1434, 7
  %v1436 = vsub.s32 0, %v1435
  %v1437 = vrot.slane %v1432, %v1436
  %v1440 = vsel %vm448, %v1427, 0
  %1442 = vmatprep.subr.mxu0 0.0
  %1443 = vmatpush1.msra.mxu0 %v1428
  %1444 = vmatprep.subr.mxu0 0.0
  %1445 = vmatpush1.msra.mxu0 %v1429
  %1446 = vmatprep.subr.mxu0 0.0
  %1447 = vmatpush1.msra.mxu0 %v1430
  %1448 = vmatprep.subr.mxu0 0.0
  %1449 = vmatpush1.msra.mxu0 %v1431
  %1450 = vmatprep.subr.mxu0 0.0
  %1451 = vmatpush1.msra.mxu0 0.0
  %1452 = vmatprep.subr.mxu0 0.0
  %1453 = vmatpush1.msra.mxu0 0.0
  %1454 = vmatprep.subr.mxu0 0.0
  %1455 = vmatpush1.msra.mxu0 0.0
  %1456 = vmatprep.subr.mxu0 0.0
  %1457 = vmatpush1.msra.mxu0 0.0
  %1458 = vmatprep.subr.mxu0 0.0
  %1459 = vmatpush1.msra.mxu0 0.0
  %1460 = vmatprep.subr.mxu0 0.0
  %1461 = vmatpush1.msra.mxu0 0.0
  %1462 = vmatprep.subr.mxu0 0.0
  %1463 = vmatpush1.msra.mxu0 0.0
  %1464 = vmatprep.subr.mxu0 0.0
  %1465 = vmatpush1.msra.mxu0 0.0
  %1466 = vmatprep.subr.mxu0 0.0
  %1467 = vmatpush1.msra.mxu0 0.0
  %1468 = vmatprep.subr.mxu0 0.0
  %1469 = vmatpush1.msra.mxu0 0.0
  %1470 = vmatprep.subr.mxu0 0.0
  %1471 = vmatpush1.msra.mxu0 0.0
  %1472 = vmatprep.subr.mxu0 0.0
  %1473 = vmatpush1.msra.mxu0 0.0
  %1474 = vmatprep.subr.mxu0 0.0
  %1475 = vmatpush1.msra.mxu0 0.0
  %1476 = vmatprep.subr.mxu0 0.0
  %1477 = vmatpush1.msra.mxu0 0.0
  %1478 = vmatprep.subr.mxu0 0.0
  %1479 = vmatpush1.msra.mxu0 0.0
  %1480 = vmatprep.subr.mxu0 0.0
  %1481 = vmatpush1.msra.mxu0 0.0
  %1482 = vmatprep.subr.mxu0 0.0
  %1483 = vmatpush1.msra.mxu0 0.0
  %1484 = vmatprep.subr.mxu0 0.0
  %1485 = vmatpush1.msra.mxu0 0.0
  %1486 = vmatprep.subr.mxu0 0.0
  %1487 = vmatpush1.msra.mxu0 0.0
  %1488 = vmatprep.subr.mxu0 0.0
  %1489 = vmatpush1.msra.mxu0 0.0
  %1490 = vmatprep.subr.mxu0 0.0
  %1491 = vmatpush1.msra.mxu0 0.0
  %1492 = vmatprep.subr.mxu0 0.0
  %1493 = vmatpush1.msra.mxu0 0.0
  %1494 = vmatprep.subr.mxu0 0.0
  %1495 = vmatpush1.msra.mxu0 0.0
  %1496 = vmatprep.subr.mxu0 0.0
  %1497 = vmatpush1.msra.mxu0 0.0
  %1498 = vmatprep.subr.mxu0 0.0
  %1499 = vmatpush1.msra.mxu0 0.0
  %1500 = vmatprep.subr.mxu0 0.0
  %1501 = vmatpush1.msra.mxu0 0.0
  %1502 = vmatprep.subr.mxu0 0.0
  %1503 = vmatpush1.msra.mxu0 0.0
  %1504 = vmatprep.subr.mxu0 0.0
  %1505 = vmatpush1.msra.mxu0 0.0
  %1506 = vmatprep.mubr.f32.mxu0 0.0
  %1507 = vmatmul.mubr.f32.gmra.mrb[0].mxu0 %v1440
  %v1508 = vpop.f32.mrb[0].mxu0
  %v1509 = vadd.f32 %v1437, %v1508
  %v1510 = vpop.f32.mrb[0].mxu0
  %1511 = vdwg.mxu0
  %s1512 = scalar_lea.vmem %s10, 4
  %1513 = vst [vmem:[%s1512] sm:$0x3] %v1509
  %v1514 = vsel %vm523, %v1509, -inf
  %1515 = vmax.xlane.f32.xlu0 %v1514
  %v1516 = vpop.xlane.xlu0 %1515
  %vm1517 = vcmp.eq.f32.partialorder %v1509, %v1516
  %v1518 = vsel %vm1517, %v36, 128
  %v1519 = vsel %vm523, %v1518, 2147483647
  %v1520 = vand.u32 %v1519, 65535
  %v1521 = vshra.s32 %v1519, 16
  %v1522 = vcvt.s32.f32 %v1520
  %v1523 = vcvt.s32.f32 %v1521
  %1524 = vmin.xlane.f32.xlu0 %v1523
  %v1525 = vpop.xlane.xlu0 %1524
  %vm1526 = vcmp.eq.f32.partialorder %v1523, %v1525
  %v1527 = vsel %vm1526, %v1522, inf
  %1528 = vmin.xlane.f32.xlu0 %v1527
  %v1529 = vpop.xlane.xlu0 %1528
  %v1530 = vcvt.f32.s32 %v1529
  %v1531 = vcvt.f32.s32 %v1525
  %v1532 = vshll.u32 %v1531, 16
  %v1533 = vadd.s32 %v1532, %v1530
  %vm1534 = vcmp.eq.s32.totalorder %v36, %v1533
  %v1535 = vsel %vm1534, 1, 0
  %v1536 = vcvt.s32.f32 %v1535
  %v1537 = vld [vmem:[%s0] sm:$0xff]
  %v1538 = vld [vmem:[%s0 + $0x8] sm:$0xff]
  %v1539 = vld [vmem:[%s0 + $0x10] sm:$0xff]
  %v1540 = vld [vmem:[%s0 + $0x18] sm:$0xff]
  %v1541 = vld [vmem:[%s0 + $0x20] sm:$0xff]
  %v1542 = vld [vmem:[%s0 + $0x28] sm:$0xff]
  %v1543 = vld [vmem:[%s0 + $0x30] sm:$0xff]
  %v1544 = vld [vmem:[%s0 + $0x38] sm:$0xff]
  %v1545 = vld [vmem:[%s0 + $0x40] sm:$0xff]
  %v1546 = vld [vmem:[%s0 + $0x48] sm:$0xff]
  %v1547 = vld [vmem:[%s0 + $0x50] sm:$0xff]
  %v1548 = vld [vmem:[%s0 + $0x58] sm:$0xff]
  %v1549 = vld [vmem:[%s0 + $0x60] sm:$0xff]
  %v1550 = vld [vmem:[%s0 + $0x68] sm:$0xff]
  %v1551 = vld [vmem:[%s0 + $0x70] sm:$0xff]
  %v1552 = vld [vmem:[%s0 + $0x78] sm:$0xff]
  %v1553 = vld [vmem:[%s0 + $0x80] sm:$0xff]
  %v1554 = vld [vmem:[%s0 + $0x88] sm:$0xff]
  %v1555 = vld [vmem:[%s0 + $0x90] sm:$0xff]
  %v1556 = vld [vmem:[%s0 + $0x98] sm:$0xff]
  %v1557 = vld [vmem:[%s0 + $0xa0] sm:$0xff]
  %v1558 = vld [vmem:[%s0 + $0xa8] sm:$0xff]
  %v1559 = vld [vmem:[%s0 + $0xb0] sm:$0xff]
  %v1560 = vld [vmem:[%s0 + $0xb8] sm:$0xff]
  %v1561 = vld [vmem:[%s0 + $0xc0] sm:$0xff]
  %v1562 = vld [vmem:[%s0 + $0xc8] sm:$0xff]
  %v1563 = vld [vmem:[%s0 + $0xd0] sm:$0xff]
  %v1564 = vld [vmem:[%s0 + $0xd8] sm:$0xff]
  %v1565 = vld [vmem:[%s0 + $0xe0] sm:$0xff]
  %v1566 = vld [vmem:[%s0 + $0xe8] sm:$0xff]
  %v1567 = vld [vmem:[%s0 + $0xf0] sm:$0xff]
  %v1568 = vld [vmem:[%s0 + $0xf8] sm:$0xff]
  %v1569 = vld [vmem:[%s0 + $0x100] sm:$0xff]
  %v1570 = vld [vmem:[%s0 + $0x108] sm:$0xff]
  %v1571 = vld [vmem:[%s0 + $0x110] sm:$0xff]
  %v1572 = vld [vmem:[%s0 + $0x118] sm:$0xff]
  %v1573 = vld [vmem:[%s0 + $0x120] sm:$0xff]
  %v1574 = vld [vmem:[%s0 + $0x128] sm:$0xff]
  %v1575 = vld [vmem:[%s0 + $0x130] sm:$0xff]
  %v1576 = vld [vmem:[%s0 + $0x138] sm:$0xff]
  %v1577 = vld [vmem:[%s0 + $0x140] sm:$0xff]
  %v1578 = vld [vmem:[%s0 + $0x148] sm:$0xff]
  %v1579 = vld [vmem:[%s0 + $0x150] sm:$0xff]
  %v1580 = vld [vmem:[%s0 + $0x158] sm:$0xff]
  %v1581 = vld [vmem:[%s0 + $0x160] sm:$0xff]
  %v1582 = vld [vmem:[%s0 + $0x168] sm:$0xff]
  %v1583 = vld [vmem:[%s0 + $0x170] sm:$0xff]
  %v1584 = vld [vmem:[%s0 + $0x178] sm:$0xff]
  %v1585 = vld [vmem:[%s1] sm:$0x3]
  %v1587 = vlaneseq
  %v1588 = vshrl.u32 %v1587, 7
  %v1589 = vsub.s32 0, %v1588
  %v1590 = vrot.slane %v1585, %v1589
  %v1591 = vlaneseq
  %v1592 = vshrl.u32 %v1591, 7
  %v1593 = vsub.s32 1, %v1592
  %v1594 = vrot.slane %v1585, %v1593
  %v1597 = vsel %vm102, %v1198, 0
  %1599 = vmatprep.subr.mxu0 %v1538
  %1600 = vmatpush1.msra.mxu0 %v1537
  %1601 = vmatprep.subr.mxu0 %v1540
  %1602 = vmatpush1.msra.mxu0 %v1539
  %1603 = vmatprep.subr.mxu0 %v1542
  %1604 = vmatpush1.msra.mxu0 %v1541
  %1605 = vmatprep.subr.mxu0 %v1544
  %1606 = vmatpush1.msra.mxu0 %v1543
  %1607 = vmatprep.subr.mxu0 %v1546
  %1608 = vmatpush1.msra.mxu0 %v1545
  %1609 = vmatprep.subr.mxu0 %v1548
  %1610 = vmatpush1.msra.mxu0 %v1547
  %1611 = vmatprep.subr.mxu0 %v1550
  %1612 = vmatpush1.msra.mxu0 %v1549
  %1613 = vmatprep.subr.mxu0 %v1552
  %1614 = vmatpush1.msra.mxu0 %v1551
  %1615 = vmatprep.subr.mxu0 %v1554
  %1616 = vmatpush1.msra.mxu0 %v1553
  %1617 = vmatprep.subr.mxu0 %v1556
  %1618 = vmatpush1.msra.mxu0 %v1555
  %1619 = vmatprep.subr.mxu0 %v1558
  %1620 = vmatpush1.msra.mxu0 %v1557
  %1621 = vmatprep.subr.mxu0 %v1560
  %1622 = vmatpush1.msra.mxu0 %v1559
  %1623 = vmatprep.subr.mxu0 %v1562
  %1624 = vmatpush1.msra.mxu0 %v1561
  %1625 = vmatprep.subr.mxu0 %v1564
  %1626 = vmatpush1.msra.mxu0 %v1563
  %1627 = vmatprep.subr.mxu0 %v1566
  %1628 = vmatpush1.msra.mxu0 %v1565
  %1629 = vmatprep.subr.mxu0 %v1568
  %1630 = vmatpush1.msra.mxu0 %v1567
  %1631 = vmatprep.subr.mxu0 %v1570
  %1632 = vmatpush1.msra.mxu0 %v1569
  %1633 = vmatprep.subr.mxu0 %v1572
  %1634 = vmatpush1.msra.mxu0 %v1571
  %1635 = vmatprep.subr.mxu0 %v1574
  %1636 = vmatpush1.msra.mxu0 %v1573
  %1637 = vmatprep.subr.mxu0 %v1576
  %1638 = vmatpush1.msra.mxu0 %v1575
  %1639 = vmatprep.subr.mxu0 %v1578
  %1640 = vmatpush1.msra.mxu0 %v1577
  %1641 = vmatprep.subr.mxu0 %v1580
  %1642 = vmatpush1.msra.mxu0 %v1579
  %1643 = vmatprep.subr.mxu0 %v1582
  %1644 = vmatpush1.msra.mxu0 %v1581
  %1645 = vmatprep.subr.mxu0 %v1584
  %1646 = vmatpush1.msra.mxu0 %v1583
  %1647 = vmatprep.subr.mxu0 0.0
  %1648 = vmatpush1.msra.mxu0 0.0
  %1649 = vmatprep.subr.mxu0 0.0
  %1650 = vmatpush1.msra.mxu0 0.0
  %1651 = vmatprep.subr.mxu0 0.0
  %1652 = vmatpush1.msra.mxu0 0.0
  %1653 = vmatprep.subr.mxu0 0.0
  %1654 = vmatpush1.msra.mxu0 0.0
  %1655 = vmatprep.subr.mxu0 0.0
  %1656 = vmatpush1.msra.mxu0 0.0
  %1657 = vmatprep.subr.mxu0 0.0
  %1658 = vmatpush1.msra.mxu0 0.0
  %1659 = vmatprep.subr.mxu0 0.0
  %1660 = vmatpush1.msra.mxu0 0.0
  %1661 = vmatprep.subr.mxu0 0.0
  %1662 = vmatpush1.msra.mxu0 0.0
  %1663 = vmatprep.mubr.f32.mxu0 %v1597
  %1664 = vmatmul.mubr.f32.gmra.mrb[0].mxu0 %v1536
  %v1665 = vpop.f32.mrb[0].mxu0
  %v1666 = vadd.f32 %v1590, %v1665
  %v1667 = vpop.f32.mrb[0].mxu0
  %v1668 = vadd.f32 %v1594, %v1667
  %1669 = vdwg.mxu0
  %v1670 = vxor.u32 %v1666, 2147483648
  %v1671 = vmul.f32 %v1670, 1.442695
  %v1672 = vpow.pop %v1671
  %v1673 = vadd.f32 %v1672, 1.0
  %v1674 = vrcp.pop %v1673
  %v1675 = vmul.f32 1.0, %v1674
  %1677 = vrot.lane.b32.xlu0 %v1668, 64
  %v1678 = vpop.permute.xlu0 %1677
  %v1680 = vmul.f32 %v1675, %v1678
  %v1681 = vadd.f32 %v1668, %v1680
  %v1682 = vtanh.pop %v1681
  %v1683 = vsub.f32 1.0, %v1675
  %1685 = vrot.lane.b32.xlu0 %v1682, 64
  %v1686 = vpop.permute.xlu0 %1685
  %v1688 = vmul.f32 %v1683, %v1686
  %v1689 = vmul.f32 %v1675, %v1195
  %v1690 = vadd.f32 %v1688, %v1689
  %1692 = vrot.lane.b32.xlu0 %v1690, 64
  %v1693 = vpop.permute.xlu0 %1692
  %v1695 = vsel %vm102, %v1693, %v1336
  %v1696 = vld [vmem:[%s2] sm:$0xff]
  %v1697 = vld [vmem:[%s2 + $0x8] sm:$0xff]
  %v1698 = vld [vmem:[%s2 + $0x10] sm:$0xff]
  %v1699 = vld [vmem:[%s2 + $0x18] sm:$0xff]
  %v1700 = vld [vmem:[%s2 + $0x20] sm:$0xff]
  %v1701 = vld [vmem:[%s2 + $0x28] sm:$0xff]
  %v1702 = vld [vmem:[%s2 + $0x30] sm:$0xff]
  %v1703 = vld [vmem:[%s2 + $0x38] sm:$0xff]
  %v1704 = vld [vmem:[%s2 + $0x40] sm:$0xff]
  %v1705 = vld [vmem:[%s2 + $0x48] sm:$0xff]
  %v1706 = vld [vmem:[%s2 + $0x50] sm:$0xff]
  %v1707 = vld [vmem:[%s2 + $0x58] sm:$0xff]
  %v1708 = vld [vmem:[%s2 + $0x60] sm:$0xff]
  %v1709 = vld [vmem:[%s2 + $0x68] sm:$0xff]
  %v1710 = vld [vmem:[%s2 + $0x70] sm:$0xff]
  %v1711 = vld [vmem:[%s2 + $0x78] sm:$0xff]
  %v1712 = vld [vmem:[%s2 + $0x80] sm:$0xff]
  %v1713 = vld [vmem:[%s2 + $0x88] sm:$0xff]
  %v1714 = vld [vmem:[%s2 + $0x90] sm:$0xff]
  %v1715 = vld [vmem:[%s2 + $0x98] sm:$0xff]
  %v1716 = vld [vmem:[%s2 + $0xa0] sm:$0xff]
  %v1717 = vld [vmem:[%s2 + $0xa8] sm:$0xff]
  %v1718 = vld [vmem:[%s2 + $0xb0] sm:$0xff]
  %v1719 = vld [vmem:[%s2 + $0xb8] sm:$0xff]
  %v1720 = vld [vmem:[%s2 + $0xc0] sm:$0xff]
  %v1721 = vld [vmem:[%s2 + $0xc8] sm:$0xff]
  %v1722 = vld [vmem:[%s2 + $0xd0] sm:$0xff]
  %v1723 = vld [vmem:[%s2 + $0xd8] sm:$0xff]
  %v1724 = vld [vmem:[%s2 + $0xe0] sm:$0xff]
  %v1725 = vld [vmem:[%s2 + $0xe8] sm:$0xff]
  %v1726 = vld [vmem:[%s2 + $0xf0] sm:$0xff]
  %v1727 = vld [vmem:[%s2 + $0xf8] sm:$0xff]
  %v1728 = vld [vmem:[%s3] sm:$0x3]
  %v1730 = vlaneseq
  %v1731 = vshrl.u32 %v1730, 7
  %v1732 = vsub.s32 0, %v1731
  %v1733 = vrot.slane %v1728, %v1732
  %v1734 = vlaneseq
  %v1735 = vshrl.u32 %v1734, 7
  %v1736 = vsub.s32 1, %v1735
  %v1737 = vrot.slane %v1728, %v1736
  %1740 = vmatprep.subr.mxu0 %v1697
  %1741 = vmatpush1.msra.mxu0 %v1696
  %1742 = vmatprep.subr.mxu0 %v1699
  %1743 = vmatpush1.msra.mxu0 %v1698
  %1744 = vmatprep.subr.mxu0 %v1701
  %1745 = vmatpush1.msra.mxu0 %v1700
  %1746 = vmatprep.subr.mxu0 %v1703
  %1747 = vmatpush1.msra.mxu0 %v1702
  %1748 = vmatprep.subr.mxu0 %v1705
  %1749 = vmatpush1.msra.mxu0 %v1704
  %1750 = vmatprep.subr.mxu0 %v1707
  %1751 = vmatpush1.msra.mxu0 %v1706
  %1752 = vmatprep.subr.mxu0 %v1709
  %1753 = vmatpush1.msra.mxu0 %v1708
  %1754 = vmatprep.subr.mxu0 %v1711
  %1755 = vmatpush1.msra.mxu0 %v1710
  %1756 = vmatprep.subr.mxu0 %v1713
  %1757 = vmatpush1.msra.mxu0 %v1712
  %1758 = vmatprep.subr.mxu0 %v1715
  %1759 = vmatpush1.msra.mxu0 %v1714
  %1760 = vmatprep.subr.mxu0 %v1717
  %1761 = vmatpush1.msra.mxu0 %v1716
  %1762 = vmatprep.subr.mxu0 %v1719
  %1763 = vmatpush1.msra.mxu0 %v1718
  %1764 = vmatprep.subr.mxu0 %v1721
  %1765 = vmatpush1.msra.mxu0 %v1720
  %1766 = vmatprep.subr.mxu0 %v1723
  %1767 = vmatpush1.msra.mxu0 %v1722
  %1768 = vmatprep.subr.mxu0 %v1725
  %1769 = vmatpush1.msra.mxu0 %v1724
  %1770 = vmatprep.subr.mxu0 %v1727
  %1771 = vmatpush1.msra.mxu0 %v1726
  %1772 = vmatprep.subr.mxu0 0.0
  %1773 = vmatpush1.msra.mxu0 0.0
  %1774 = vmatprep.subr.mxu0 0.0
  %1775 = vmatpush1.msra.mxu0 0.0
  %1776 = vmatprep.subr.mxu0 0.0
  %1777 = vmatpush1.msra.mxu0 0.0
  %1778 = vmatprep.subr.mxu0 0.0
  %1779 = vmatpush1.msra.mxu0 0.0
  %1780 = vmatprep.subr.mxu0 0.0
  %1781 = vmatpush1.msra.mxu0 0.0
  %1782 = vmatprep.subr.mxu0 0.0
  %1783 = vmatpush1.msra.mxu0 0.0
  %1784 = vmatprep.subr.mxu0 0.0
  %1785 = vmatpush1.msra.mxu0 0.0
  %1786 = vmatprep.subr.mxu0 0.0
  %1787 = vmatpush1.msra.mxu0 0.0
  %1788 = vmatprep.subr.mxu0 0.0
  %1789 = vmatpush1.msra.mxu0 0.0
  %1790 = vmatprep.subr.mxu0 0.0
  %1791 = vmatpush1.msra.mxu0 0.0
  %1792 = vmatprep.subr.mxu0 0.0
  %1793 = vmatpush1.msra.mxu0 0.0
  %1794 = vmatprep.subr.mxu0 0.0
  %1795 = vmatpush1.msra.mxu0 0.0
  %1796 = vmatprep.subr.mxu0 0.0
  %1797 = vmatpush1.msra.mxu0 0.0
  %1798 = vmatprep.subr.mxu0 0.0
  %1799 = vmatpush1.msra.mxu0 0.0
  %1800 = vmatprep.subr.mxu0 0.0
  %1801 = vmatpush1.msra.mxu0 0.0
  %1802 = vmatprep.subr.mxu0 0.0
  %1803 = vmatpush1.msra.mxu0 0.0
  %1804 = vmatprep.mubr.f32.mxu0 0.0
  %1805 = vmatmul.mubr.f32.gmra.mrb[0].mxu0 %v1695
  %v1806 = vpop.f32.mrb[0].mxu0
  %v1807 = vadd.f32 %v1733, %v1806
  %v1808 = vpop.f32.mrb[0].mxu0
  %v1809 = vadd.f32 %v1737, %v1808
  %1810 = vdwg.mxu0
  %v1811 = vxor.u32 %v1807, 2147483648
  %v1812 = vmul.f32 %v1811, 1.442695
  %v1813 = vpow.pop %v1812
  %v1814 = vadd.f32 %v1813, 1.0
  %v1815 = vrcp.pop %v1814
  %v1816 = vmul.f32 1.0, %v1815
  %1818 = vrot.lane.b32.xlu0 %v1809, 64
  %v1819 = vpop.permute.xlu0 %1818
  %v1821 = vmul.f32 %v1816, %v1819
  %v1822 = vadd.f32 %v1809, %v1821
  %v1823 = vtanh.pop %v1822
  %v1824 = vsub.f32 1.0, %v1816
  %1826 = vrot.lane.b32.xlu0 %v1823, 64
  %v1827 = vpop.permute.xlu0 %1826
  %v1829 = vmul.f32 %v1824, %v1827
  %v1830 = vmul.f32 %v1816, %v1336
  %v1831 = vadd.f32 %v1829, %v1830
  %v1832 = vld [vmem:[%s4] sm:$0xff]
  %v1833 = vld [vmem:[%s4 + $0x8] sm:$0xff]
  %v1834 = vld [vmem:[%s4 + $0x10] sm:$0xff]
  %v1835 = vld [vmem:[%s4 + $0x18] sm:$0xff]
  %v1836 = vld [vmem:[%s4 + $0x20] sm:$0xff]
  %v1837 = vld [vmem:[%s4 + $0x28] sm:$0xff]
  %v1838 = vld [vmem:[%s4 + $0x30] sm:$0xff]
  %v1839 = vld [vmem:[%s4 + $0x38] sm:$0xff]
  %v1840 = vld [vmem:[%s5] sm:$0x1]
  %v1842 = vlaneseq
  %v1843 = vshrl.u32 %v1842, 7
  %v1844 = vsub.s32 0, %v1843
  %v1845 = vrot.slane %v1840, %v1844
  %1848 = vrot.lane.b32.xlu0 %v1831, 64
  %v1849 = vpop.permute.xlu0 %1848
  %v1850 = vsel %vm102, %v1849, 0
  %1852 = vmatprep.subr.mxu0 0.0
  %1853 = vmatpush1.msra.mxu0 %v1832
  %1854 = vmatprep.subr.mxu0 0.0
  %1855 = vmatpush1.msra.mxu0 %v1833
  %1856 = vmatprep.subr.mxu0 0.0
  %1857 = vmatpush1.msra.mxu0 %v1834
  %1858 = vmatprep.subr.mxu0 0.0
  %1859 = vmatpush1.msra.mxu0 %v1835
  %1860 = vmatprep.subr.mxu0 0.0
  %1861 = vmatpush1.msra.mxu0 %v1836
  %1862 = vmatprep.subr.mxu0 0.0
  %1863 = vmatpush1.msra.mxu0 %v1837
  %1864 = vmatprep.subr.mxu0 0.0
  %1865 = vmatpush1.msra.mxu0 %v1838
  %1866 = vmatprep.subr.mxu0 0.0
  %1867 = vmatpush1.msra.mxu0 %v1839
  %1868 = vmatprep.subr.mxu0 0.0
  %1869 = vmatpush1.msra.mxu0 0.0
  %1870 = vmatprep.subr.mxu0 0.0
  %1871 = vmatpush1.msra.mxu0 0.0
  %1872 = vmatprep.subr.mxu0 0.0
  %1873 = vmatpush1.msra.mxu0 0.0
  %1874 = vmatprep.subr.mxu0 0.0
  %1875 = vmatpush1.msra.mxu0 0.0
  %1876 = vmatprep.subr.mxu0 0.0
  %1877 = vmatpush1.msra.mxu0 0.0
  %1878 = vmatprep.subr.mxu0 0.0
  %1879 = vmatpush1.msra.mxu0 0.0
  %1880 = vmatprep.subr.mxu0 0.0
  %1881 = vmatpush1.msra.mxu0 0.0
  %1882 = vmatprep.subr.mxu0 0.0
  %1883 = vmatpush1.msra.mxu0 0.0
  %1884 = vmatprep.subr.mxu0 0.0
  %1885 = vmatpush1.msra.mxu0 0.0
  %1886 = vmatprep.subr.mxu0 0.0
  %1887 = vmatpush1.msra.mxu0 0.0
  %1888 = vmatprep.subr.mxu0 0.0
  %1889 = vmatpush1.msra.mxu0 0.0
  %1890 = vmatprep.subr.mxu0 0.0
  %1891 = vmatpush1.msra.mxu0 0.0
  %1892 = vmatprep.subr.mxu0 0.0
  %1893 = vmatpush1.msra.mxu0 0.0
  %1894 = vmatprep.subr.mxu0 0.0
  %1895 = vmatpush1.msra.mxu0 0.0
  %1896 = vmatprep.subr.mxu0 0.0
  %1897 = vmatpush1.msra.mxu0 0.0
  %1898 = vmatprep.subr.mxu0 0.0
  %1899 = vmatpush1.msra.mxu0 0.0
  %1900 = vmatprep.subr.mxu0 0.0
  %1901 = vmatpush1.msra.mxu0 0.0
  %1902 = vmatprep.subr.mxu0 0.0
  %1903 = vmatpush1.msra.mxu0 0.0
  %1904 = vmatprep.subr.mxu0 0.0
  %1905 = vmatpush1.msra.mxu0 0.0
  %1906 = vmatprep.subr.mxu0 0.0
  %1907 = vmatpush1.msra.mxu0 0.0
  %1908 = vmatprep.subr.mxu0 0.0
  %1909 = vmatpush1.msra.mxu0 0.0
  %1910 = vmatprep.subr.mxu0 0.0
  %1911 = vmatpush1.msra.mxu0 0.0
  %1912 = vmatprep.subr.mxu0 0.0
  %1913 = vmatpush1.msra.mxu0 0.0
  %1914 = vmatprep.subr.mxu0 0.0
  %1915 = vmatpush1.msra.mxu0 0.0
  %1916 = vmatprep.mubr.f32.mxu0 0.0
  %1917 = vmatmul.mubr.f32.gmra.mrb[0].mxu0 %v1850
  %v1918 = vpop.f32.mrb[0].mxu0
  %v1919 = vadd.f32 %v1845, %v1918
  %v1920 = vpop.f32.mrb[0].mxu0
  %1921 = vdwg.mxu0
  %v1922 = vmax.f32 %v1919, 0.0
  %v1923 = vld [vmem:[%s6] sm:$0xff]
  %v1924 = vld [vmem:[%s6 + $0x8] sm:$0xff]
  %v1925 = vld [vmem:[%s6 + $0x10] sm:$0xff]
  %v1926 = vld [vmem:[%s6 + $0x18] sm:$0xff]
  %v1927 = vld [vmem:[%s7] sm:$0x1]
  %v1929 = vlaneseq
  %v1930 = vshrl.u32 %v1929, 7
  %v1931 = vsub.s32 0, %v1930
  %v1932 = vrot.slane %v1927, %v1931
  %v1935 = vsel %vm448, %v1922, 0
  %1937 = vmatprep.subr.mxu0 0.0
  %1938 = vmatpush1.msra.mxu0 %v1923
  %1939 = vmatprep.subr.mxu0 0.0
  %1940 = vmatpush1.msra.mxu0 %v1924
  %1941 = vmatprep.subr.mxu0 0.0
  %1942 = vmatpush1.msra.mxu0 %v1925
  %1943 = vmatprep.subr.mxu0 0.0
  %1944 = vmatpush1.msra.mxu0 %v1926
  %1945 = vmatprep.subr.mxu0 0.0
  %1946 = vmatpush1.msra.mxu0 0.0
  %1947 = vmatprep.subr.mxu0 0.0
  %1948 = vmatpush1.msra.mxu0 0.0
  %1949 = vmatprep.subr.mxu0 0.0
  %1950 = vmatpush1.msra.mxu0 0.0
  %1951 = vmatprep.subr.mxu0 0.0
  %1952 = vmatpush1.msra.mxu0 0.0
  %1953 = vmatprep.subr.mxu0 0.0
  %1954 = vmatpush1.msra.mxu0 0.0
  %1955 = vmatprep.subr.mxu0 0.0
  %1956 = vmatpush1.msra.mxu0 0.0
  %1957 = vmatprep.subr.mxu0 0.0
  %1958 = vmatpush1.msra.mxu0 0.0
  %1959 = vmatprep.subr.mxu0 0.0
  %1960 = vmatpush1.msra.mxu0 0.0
  %1961 = vmatprep.subr.mxu0 0.0
  %1962 = vmatpush1.msra.mxu0 0.0
  %1963 = vmatprep.subr.mxu0 0.0
  %1964 = vmatpush1.msra.mxu0 0.0
  %1965 = vmatprep.subr.mxu0 0.0
  %1966 = vmatpush1.msra.mxu0 0.0
  %1967 = vmatprep.subr.mxu0 0.0
  %1968 = vmatpush1.msra.mxu0 0.0
  %1969 = vmatprep.subr.mxu0 0.0
  %1970 = vmatpush1.msra.mxu0 0.0
  %1971 = vmatprep.subr.mxu0 0.0
  %1972 = vmatpush1.msra.mxu0 0.0
  %1973 = vmatprep.subr.mxu0 0.0
  %1974 = vmatpush1.msra.mxu0 0.0
  %1975 = vmatprep.subr.mxu0 0.0
  %1976 = vmatpush1.msra.mxu0 0.0
  %1977 = vmatprep.subr.mxu0 0.0
  %1978 = vmatpush1.msra.mxu0 0.0
  %1979 = vmatprep.subr.mxu0 0.0
  %1980 = vmatpush1.msra.mxu0 0.0
  %1981 = vmatprep.subr.mxu0 0.0
  %1982 = vmatpush1.msra.mxu0 0.0
  %1983 = vmatprep.subr.mxu0 0.0
  %1984 = vmatpush1.msra.mxu0 0.0
  %1985 = vmatprep.subr.mxu0 0.0
  %1986 = vmatpush1.msra.mxu0 0.0
  %1987 = vmatprep.subr.mxu0 0.0
  %1988 = vmatpush1.msra.mxu0 0.0
  %1989 = vmatprep.subr.mxu0 0.0
  %1990 = vmatpush1.msra.mxu0 0.0
  %1991 = vmatprep.subr.mxu0 0.0
  %1992 = vmatpush1.msra.mxu0 0.0
  %1993 = vmatprep.subr.mxu0 0.0
  %1994 = vmatpush1.msra.mxu0 0.0
  %1995 = vmatprep.subr.mxu0 0.0
  %1996 = vmatpush1.msra.mxu0 0.0
  %1997 = vmatprep.subr.mxu0 0.0
  %1998 = vmatpush1.msra.mxu0 0.0
  %1999 = vmatprep.subr.mxu0 0.0
  %2000 = vmatpush1.msra.mxu0 0.0
  %2001 = vmatprep.mubr.f32.mxu0 0.0
  %2002 = vmatmul.mubr.f32.gmra.mrb[0].mxu0 %v1935
  %v2003 = vpop.f32.mrb[0].mxu0
  %v2004 = vadd.f32 %v1932, %v2003
  %v2005 = vpop.f32.mrb[0].mxu0
  %2006 = vdwg.mxu0
  %s2007 = scalar_lea.vmem %s10, 6
  %2008 = vst [vmem:[%s2007] sm:$0x3] %v2004
  %v2009 = vsel %vm523, %v2004, -inf
  %2010 = vmax.xlane.f32.xlu0 %v2009
  %v2011 = vpop.xlane.xlu0 %2010
  %vm2012 = vcmp.eq.f32.partialorder %v2004, %v2011
  %v2013 = vsel %vm2012, %v36, 128
  %v2014 = vsel %vm523, %v2013, 2147483647
  %v2015 = vand.u32 %v2014, 65535
  %v2016 = vshra.s32 %v2014, 16
  %v2017 = vcvt.s32.f32 %v2015
  %v2018 = vcvt.s32.f32 %v2016
  %2019 = vmin.xlane.f32.xlu0 %v2018
  %v2020 = vpop.xlane.xlu0 %2019
  %vm2021 = vcmp.eq.f32.partialorder %v2018, %v2020
  %v2022 = vsel %vm2021, %v2017, inf
  %2023 = vmin.xlane.f32.xlu0 %v2022
  %v2024 = vpop.xlane.xlu0 %2023
  %v2025 = vcvt.f32.s32 %v2024
  %v2026 = vcvt.f32.s32 %v2020
  %v2027 = vshll.u32 %v2026, 16
  %v2028 = vadd.s32 %v2027, %v2025
  %vm2029 = vcmp.eq.s32.totalorder %v36, %v2028
  %v2030 = vsel %vm2029, 1, 0
  %v2031 = vcvt.s32.f32 %v2030
  %v2032 = vld [vmem:[%s0] sm:$0xff]
  %v2033 = vld [vmem:[%s0 + $0x8] sm:$0xff]
  %v2034 = vld [vmem:[%s0 + $0x10] sm:$0xff]
  %v2035 = vld [vmem:[%s0 + $0x18] sm:$0xff]
  %v2036 = vld [vmem:[%s0 + $0x20] sm:$0xff]
  %v2037 = vld [vmem:[%s0 + $0x28] sm:$0xff]
  %v2038 = vld [vmem:[%s0 + $0x30] sm:$0xff]
  %v2039 = vld [vmem:[%s0 + $0x38] sm:$0xff]
  %v2040 = vld [vmem:[%s0 + $0x40] sm:$0xff]
  %v2041 = vld [vmem:[%s0 + $0x48] sm:$0xff]
  %v2042 = vld [vmem:[%s0 + $0x50] sm:$0xff]
  %v2043 = vld [vmem:[%s0 + $0x58] sm:$0xff]
  %v2044 = vld [vmem:[%s0 + $0x60] sm:$0xff]
  %v2045 = vld [vmem:[%s0 + $0x68] sm:$0xff]
  %v2046 = vld [vmem:[%s0 + $0x70] sm:$0xff]
  %v2047 = vld [vmem:[%s0 + $0x78] sm:$0xff]
  %v2048 = vld [vmem:[%s0 + $0x80] sm:$0xff]
  %v2049 = vld [vmem:[%s0 + $0x88] sm:$0xff]
  %v2050 = vld [vmem:[%s0 + $0x90] sm:$0xff]
  %v2051 = vld [vmem:[%s0 + $0x98] sm:$0xff]
  %v2052 = vld [vmem:[%s0 + $0xa0] sm:$0xff]
  %v2053 = vld [vmem:[%s0 + $0xa8] sm:$0xff]
  %v2054 = vld [vmem:[%s0 + $0xb0] sm:$0xff]
  %v2055 = vld [vmem:[%s0 + $0xb8] sm:$0xff]
  %v2056 = vld [vmem:[%s0 + $0xc0] sm:$0xff]
  %v2057 = vld [vmem:[%s0 + $0xc8] sm:$0xff]
  %v2058 = vld [vmem:[%s0 + $0xd0] sm:$0xff]
  %v2059 = vld [vmem:[%s0 + $0xd8] sm:$0xff]
  %v2060 = vld [vmem:[%s0 + $0xe0] sm:$0xff]
  %v2061 = vld [vmem:[%s0 + $0xe8] sm:$0xff]
  %v2062 = vld [vmem:[%s0 + $0xf0] sm:$0xff]
  %v2063 = vld [vmem:[%s0 + $0xf8] sm:$0xff]
  %v2064 = vld [vmem:[%s0 + $0x100] sm:$0xff]
  %v2065 = vld [vmem:[%s0 + $0x108] sm:$0xff]
  %v2066 = vld [vmem:[%s0 + $0x110] sm:$0xff]
  %v2067 = vld [vmem:[%s0 + $0x118] sm:$0xff]
  %v2068 = vld [vmem:[%s0 + $0x120] sm:$0xff]
  %v2069 = vld [vmem:[%s0 + $0x128] sm:$0xff]
  %v2070 = vld [vmem:[%s0 + $0x130] sm:$0xff]
  %v2071 = vld [vmem:[%s0 + $0x138] sm:$0xff]
  %v2072 = vld [vmem:[%s0 + $0x140] sm:$0xff]
  %v2073 = vld [vmem:[%s0 + $0x148] sm:$0xff]
  %v2074 = vld [vmem:[%s0 + $0x150] sm:$0xff]
  %v2075 = vld [vmem:[%s0 + $0x158] sm:$0xff]
  %v2076 = vld [vmem:[%s0 + $0x160] sm:$0xff]
  %v2077 = vld [vmem:[%s0 + $0x168] sm:$0xff]
  %v2078 = vld [vmem:[%s0 + $0x170] sm:$0xff]
  %v2079 = vld [vmem:[%s0 + $0x178] sm:$0xff]
  %v2080 = vld [vmem:[%s1] sm:$0x3]
  %v2082 = vlaneseq
  %v2083 = vshrl.u32 %v2082, 7
  %v2084 = vsub.s32 0, %v2083
  %v2085 = vrot.slane %v2080, %v2084
  %v2086 = vlaneseq
  %v2087 = vshrl.u32 %v2086, 7
  %v2088 = vsub.s32 1, %v2087
  %v2089 = vrot.slane %v2080, %v2088
  %v2092 = vsel %vm102, %v1693, 0
  %2094 = vmatprep.subr.mxu0 %v2033
  %2095 = vmatpush1.msra.mxu0 %v2032
  %2096 = vmatprep.subr.mxu0 %v2035
  %2097 = vmatpush1.msra.mxu0 %v2034
  %2098 = vmatprep.subr.mxu0 %v2037
  %2099 = vmatpush1.msra.mxu0 %v2036
  %2100 = vmatprep.subr.mxu0 %v2039
  %2101 = vmatpush1.msra.mxu0 %v2038
  %2102 = vmatprep.subr.mxu0 %v2041
  %2103 = vmatpush1.msra.mxu0 %v2040
  %2104 = vmatprep.subr.mxu0 %v2043
  %2105 = vmatpush1.msra.mxu0 %v2042
  %2106 = vmatprep.subr.mxu0 %v2045
  %2107 = vmatpush1.msra.mxu0 %v2044
  %2108 = vmatprep.subr.mxu0 %v2047
  %2109 = vmatpush1.msra.mxu0 %v2046
  %2110 = vmatprep.subr.mxu0 %v2049
  %2111 = vmatpush1.msra.mxu0 %v2048
  %2112 = vmatprep.subr.mxu0 %v2051
  %2113 = vmatpush1.msra.mxu0 %v2050
  %2114 = vmatprep.subr.mxu0 %v2053
  %2115 = vmatpush1.msra.mxu0 %v2052
  %2116 = vmatprep.subr.mxu0 %v2055
  %2117 = vmatpush1.msra.mxu0 %v2054
  %2118 = vmatprep.subr.mxu0 %v2057
  %2119 = vmatpush1.msra.mxu0 %v2056
  %2120 = vmatprep.subr.mxu0 %v2059
  %2121 = vmatpush1.msra.mxu0 %v2058
  %2122 = vmatprep.subr.mxu0 %v2061
  %2123 = vmatpush1.msra.mxu0 %v2060
  %2124 = vmatprep.subr.mxu0 %v2063
  %2125 = vmatpush1.msra.mxu0 %v2062
  %2126 = vmatprep.subr.mxu0 %v2065
  %2127 = vmatpush1.msra.mxu0 %v2064
  %2128 = vmatprep.subr.mxu0 %v2067
  %2129 = vmatpush1.msra.mxu0 %v2066
  %2130 = vmatprep.subr.mxu0 %v2069
  %2131 = vmatpush1.msra.mxu0 %v2068
  %2132 = vmatprep.subr.mxu0 %v2071
  %2133 = vmatpush1.msra.mxu0 %v2070
  %2134 = vmatprep.subr.mxu0 %v2073
  %2135 = vmatpush1.msra.mxu0 %v2072
  %2136 = vmatprep.subr.mxu0 %v2075
  %2137 = vmatpush1.msra.mxu0 %v2074
  %2138 = vmatprep.subr.mxu0 %v2077
  %2139 = vmatpush1.msra.mxu0 %v2076
  %2140 = vmatprep.subr.mxu0 %v2079
  %2141 = vmatpush1.msra.mxu0 %v2078
  %2142 = vmatprep.subr.mxu0 0.0
  %2143 = vmatpush1.msra.mxu0 0.0
  %2144 = vmatprep.subr.mxu0 0.0
  %2145 = vmatpush1.msra.mxu0 0.0
  %2146 = vmatprep.subr.mxu0 0.0
  %2147 = vmatpush1.msra.mxu0 0.0
  %2148 = vmatprep.subr.mxu0 0.0
  %2149 = vmatpush1.msra.mxu0 0.0
  %2150 = vmatprep.subr.mxu0 0.0
  %2151 = vmatpush1.msra.mxu0 0.0
  %2152 = vmatprep.subr.mxu0 0.0
  %2153 = vmatpush1.msra.mxu0 0.0
  %2154 = vmatprep.subr.mxu0 0.0
  %2155 = vmatpush1.msra.mxu0 0.0
  %2156 = vmatprep.subr.mxu0 0.0
  %2157 = vmatpush1.msra.mxu0 0.0
  %2158 = vmatprep.mubr.f32.mxu0 %v2092
  %2159 = vmatmul.mubr.f32.gmra.mrb[0].mxu0 %v2031
  %v2160 = vpop.f32.mrb[0].mxu0
  %v2161 = vadd.f32 %v2085, %v2160
  %v2162 = vpop.f32.mrb[0].mxu0
  %v2163 = vadd.f32 %v2089, %v2162
  %2164 = vdwg.mxu0
  %v2165 = vxor.u32 %v2161, 2147483648
  %v2166 = vmul.f32 %v2165, 1.442695
  %v2167 = vpow.pop %v2166
  %v2168 = vadd.f32 %v2167, 1.0
  %v2169 = vrcp.pop %v2168
  %v2170 = vmul.f32 1.0, %v2169
  %2172 = vrot.lane.b32.xlu0 %v2163, 64
  %v2173 = vpop.permute.xlu0 %2172
  %v2175 = vmul.f32 %v2170, %v2173
  %v2176 = vadd.f32 %v2163, %v2175
  %v2177 = vtanh.pop %v2176
  %v2178 = vsub.f32 1.0, %v2170
  %2180 = vrot.lane.b32.xlu0 %v2177, 64
  %v2181 = vpop.permute.xlu0 %2180
  %v2183 = vmul.f32 %v2178, %v2181
  %v2184 = vmul.f32 %v2170, %v1690
  %v2185 = vadd.f32 %v2183, %v2184
  %2187 = vrot.lane.b32.xlu0 %v2185, 64
  %v2188 = vpop.permute.xlu0 %2187
  %v2190 = vsel %vm102, %v2188, %v1831
  %v2191 = vld [vmem:[%s2] sm:$0xff]
  %v2192 = vld [vmem:[%s2 + $0x8] sm:$0xff]
  %v2193 = vld [vmem:[%s2 + $0x10] sm:$0xff]
  %v2194 = vld [vmem:[%s2 + $0x18] sm:$0xff]
  %v2195 = vld [vmem:[%s2 + $0x20] sm:$0xff]
  %v2196 = vld [vmem:[%s2 + $0x28] sm:$0xff]
  %v2197 = vld [vmem:[%s2 + $0x30] sm:$0xff]
  %v2198 = vld [vmem:[%s2 + $0x38] sm:$0xff]
  %v2199 = vld [vmem:[%s2 + $0x40] sm:$0xff]
  %v2200 = vld [vmem:[%s2 + $0x48] sm:$0xff]
  %v2201 = vld [vmem:[%s2 + $0x50] sm:$0xff]
  %v2202 = vld [vmem:[%s2 + $0x58] sm:$0xff]
  %v2203 = vld [vmem:[%s2 + $0x60] sm:$0xff]
  %v2204 = vld [vmem:[%s2 + $0x68] sm:$0xff]
  %v2205 = vld [vmem:[%s2 + $0x70] sm:$0xff]
  %v2206 = vld [vmem:[%s2 + $0x78] sm:$0xff]
  %v2207 = vld [vmem:[%s2 + $0x80] sm:$0xff]
  %v2208 = vld [vmem:[%s2 + $0x88] sm:$0xff]
  %v2209 = vld [vmem:[%s2 + $0x90] sm:$0xff]
  %v2210 = vld [vmem:[%s2 + $0x98] sm:$0xff]
  %v2211 = vld [vmem:[%s2 + $0xa0] sm:$0xff]
  %v2212 = vld [vmem:[%s2 + $0xa8] sm:$0xff]
  %v2213 = vld [vmem:[%s2 + $0xb0] sm:$0xff]
  %v2214 = vld [vmem:[%s2 + $0xb8] sm:$0xff]
  %v2215 = vld [vmem:[%s2 + $0xc0] sm:$0xff]
  %v2216 = vld [vmem:[%s2 + $0xc8] sm:$0xff]
  %v2217 = vld [vmem:[%s2 + $0xd0] sm:$0xff]
  %v2218 = vld [vmem:[%s2 + $0xd8] sm:$0xff]
  %v2219 = vld [vmem:[%s2 + $0xe0] sm:$0xff]
  %v2220 = vld [vmem:[%s2 + $0xe8] sm:$0xff]
  %v2221 = vld [vmem:[%s2 + $0xf0] sm:$0xff]
  %v2222 = vld [vmem:[%s2 + $0xf8] sm:$0xff]
  %v2223 = vld [vmem:[%s3] sm:$0x3]
  %v2225 = vlaneseq
  %v2226 = vshrl.u32 %v2225, 7
  %v2227 = vsub.s32 0, %v2226
  %v2228 = vrot.slane %v2223, %v2227
  %v2229 = vlaneseq
  %v2230 = vshrl.u32 %v2229, 7
  %v2231 = vsub.s32 1, %v2230
  %v2232 = vrot.slane %v2223, %v2231
  %2235 = vmatprep.subr.mxu0 %v2192
  %2236 = vmatpush1.msra.mxu0 %v2191
  %2237 = vmatprep.subr.mxu0 %v2194
  %2238 = vmatpush1.msra.mxu0 %v2193
  %2239 = vmatprep.subr.mxu0 %v2196
  %2240 = vmatpush1.msra.mxu0 %v2195
  %2241 = vmatprep.subr.mxu0 %v2198
  %2242 = vmatpush1.msra.mxu0 %v2197
  %2243 = vmatprep.subr.mxu0 %v2200
  %2244 = vmatpush1.msra.mxu0 %v2199
  %2245 = vmatprep.subr.mxu0 %v2202
  %2246 = vmatpush1.msra.mxu0 %v2201
  %2247 = vmatprep.subr.mxu0 %v2204
  %2248 = vmatpush1.msra.mxu0 %v2203
  %2249 = vmatprep.subr.mxu0 %v2206
  %2250 = vmatpush1.msra.mxu0 %v2205
  %2251 = vmatprep.subr.mxu0 %v2208
  %2252 = vmatpush1.msra.mxu0 %v2207
  %2253 = vmatprep.subr.mxu0 %v2210
  %2254 = vmatpush1.msra.mxu0 %v2209
  %2255 = vmatprep.subr.mxu0 %v2212
  %2256 = vmatpush1.msra.mxu0 %v2211
  %2257 = vmatprep.subr.mxu0 %v2214
  %2258 = vmatpush1.msra.mxu0 %v2213
  %2259 = vmatprep.subr.mxu0 %v2216
  %2260 = vmatpush1.msra.mxu0 %v2215
  %2261 = vmatprep.subr.mxu0 %v2218
  %2262 = vmatpush1.msra.mxu0 %v2217
  %2263 = vmatprep.subr.mxu0 %v2220
  %2264 = vmatpush1.msra.mxu0 %v2219
  %2265 = vmatprep.subr.mxu0 %v2222
  %2266 = vmatpush1.msra.mxu0 %v2221
  %2267 = vmatprep.subr.mxu0 0.0
  %2268 = vmatpush1.msra.mxu0 0.0
  %2269 = vmatprep.subr.mxu0 0.0
  %2270 = vmatpush1.msra.mxu0 0.0
  %2271 = vmatprep.subr.mxu0 0.0
  %2272 = vmatpush1.msra.mxu0 0.0
  %2273 = vmatprep.subr.mxu0 0.0
  %2274 = vmatpush1.msra.mxu0 0.0
  %2275 = vmatprep.subr.mxu0 0.0
  %2276 = vmatpush1.msra.mxu0 0.0
  %2277 = vmatprep.subr.mxu0 0.0
  %2278 = vmatpush1.msra.mxu0 0.0
  %2279 = vmatprep.subr.mxu0 0.0
  %2280 = vmatpush1.msra.mxu0 0.0
  %2281 = vmatprep.subr.mxu0 0.0
  %2282 = vmatpush1.msra.mxu0 0.0
  %2283 = vmatprep.subr.mxu0 0.0
  %2284 = vmatpush1.msra.mxu0 0.0
  %2285 = vmatprep.subr.mxu0 0.0
  %2286 = vmatpush1.msra.mxu0 0.0
  %2287 = vmatprep.subr.mxu0 0.0
  %2288 = vmatpush1.msra.mxu0 0.0
  %2289 = vmatprep.subr.mxu0 0.0
  %2290 = vmatpush1.msra.mxu0 0.0
  %2291 = vmatprep.subr.mxu0 0.0
  %2292 = vmatpush1.msra.mxu0 0.0
  %2293 = vmatprep.subr.mxu0 0.0
  %2294 = vmatpush1.msra.mxu0 0.0
  %2295 = vmatprep.subr.mxu0 0.0
  %2296 = vmatpush1.msra.mxu0 0.0
  %2297 = vmatprep.subr.mxu0 0.0
  %2298 = vmatpush1.msra.mxu0 0.0
  %2299 = vmatprep.mubr.f32.mxu0 0.0
  %2300 = vmatmul.mubr.f32.gmra.mrb[0].mxu0 %v2190
  %v2301 = vpop.f32.mrb[0].mxu0
  %v2302 = vadd.f32 %v2228, %v2301
  %v2303 = vpop.f32.mrb[0].mxu0
  %v2304 = vadd.f32 %v2232, %v2303
  %2305 = vdwg.mxu0
  %v2306 = vxor.u32 %v2302, 2147483648
  %v2307 = vmul.f32 %v2306, 1.442695
  %v2308 = vpow.pop %v2307
  %v2309 = vadd.f32 %v2308, 1.0
  %v2310 = vrcp.pop %v2309
  %v2311 = vmul.f32 1.0, %v2310
  %2313 = vrot.lane.b32.xlu0 %v2304, 64
  %v2314 = vpop.permute.xlu0 %2313
  %v2316 = vmul.f32 %v2311, %v2314
  %v2317 = vadd.f32 %v2304, %v2316
  %v2318 = vtanh.pop %v2317
  %v2319 = vsub.f32 1.0, %v2311
  %2321 = vrot.lane.b32.xlu0 %v2318, 64
  %v2322 = vpop.permute.xlu0 %2321
  %v2324 = vmul.f32 %v2319, %v2322
  %v2325 = vmul.f32 %v2311, %v1831
  %v2326 = vadd.f32 %v2324, %v2325
  %v2327 = vld [vmem:[%s4] sm:$0xff]
  %v2328 = vld [vmem:[%s4 + $0x8] sm:$0xff]
  %v2329 = vld [vmem:[%s4 + $0x10] sm:$0xff]
  %v2330 = vld [vmem:[%s4 + $0x18] sm:$0xff]
  %v2331 = vld [vmem:[%s4 + $0x20] sm:$0xff]
  %v2332 = vld [vmem:[%s4 + $0x28] sm:$0xff]
  %v2333 = vld [vmem:[%s4 + $0x30] sm:$0xff]
  %v2334 = vld [vmem:[%s4 + $0x38] sm:$0xff]
  %v2335 = vld [vmem:[%s5] sm:$0x1]
  %v2337 = vlaneseq
  %v2338 = vshrl.u32 %v2337, 7
  %v2339 = vsub.s32 0, %v2338
  %v2340 = vrot.slane %v2335, %v2339
  %2343 = vrot.lane.b32.xlu0 %v2326, 64
  %v2344 = vpop.permute.xlu0 %2343
  %v2345 = vsel %vm102, %v2344, 0
  %2347 = vmatprep.subr.mxu0 0.0
  %2348 = vmatpush1.msra.mxu0 %v2327
  %2349 = vmatprep.subr.mxu0 0.0
  %2350 = vmatpush1.msra.mxu0 %v2328
  %2351 = vmatprep.subr.mxu0 0.0
  %2352 = vmatpush1.msra.mxu0 %v2329
  %2353 = vmatprep.subr.mxu0 0.0
  %2354 = vmatpush1.msra.mxu0 %v2330
  %2355 = vmatprep.subr.mxu0 0.0
  %2356 = vmatpush1.msra.mxu0 %v2331
  %2357 = vmatprep.subr.mxu0 0.0
  %2358 = vmatpush1.msra.mxu0 %v2332
  %2359 = vmatprep.subr.mxu0 0.0
  %2360 = vmatpush1.msra.mxu0 %v2333
  %2361 = vmatprep.subr.mxu0 0.0
  %2362 = vmatpush1.msra.mxu0 %v2334
  %2363 = vmatprep.subr.mxu0 0.0
  %2364 = vmatpush1.msra.mxu0 0.0
  %2365 = vmatprep.subr.mxu0 0.0
  %2366 = vmatpush1.msra.mxu0 0.0
  %2367 = vmatprep.subr.mxu0 0.0
  %2368 = vmatpush1.msra.mxu0 0.0
  %2369 = vmatprep.subr.mxu0 0.0
  %2370 = vmatpush1.msra.mxu0 0.0
  %2371 = vmatprep.subr.mxu0 0.0
  %2372 = vmatpush1.msra.mxu0 0.0
  %2373 = vmatprep.subr.mxu0 0.0
  %2374 = vmatpush1.msra.mxu0 0.0
  %2375 = vmatprep.subr.mxu0 0.0
  %2376 = vmatpush1.msra.mxu0 0.0
  %2377 = vmatprep.subr.mxu0 0.0
  %2378 = vmatpush1.msra.mxu0 0.0
  %2379 = vmatprep.subr.mxu0 0.0
  %2380 = vmatpush1.msra.mxu0 0.0
  %2381 = vmatprep.subr.mxu0 0.0
  %2382 = vmatpush1.msra.mxu0 0.0
  %2383 = vmatprep.subr.mxu0 0.0
  %2384 = vmatpush1.msra.mxu0 0.0
  %2385 = vmatprep.subr.mxu0 0.0
  %2386 = vmatpush1.msra.mxu0 0.0
  %2387 = vmatprep.subr.mxu0 0.0
  %2388 = vmatpush1.msra.mxu0 0.0
  %2389 = vmatprep.subr.mxu0 0.0
  %2390 = vmatpush1.msra.mxu0 0.0
  %2391 = vmatprep.subr.mxu0 0.0
  %2392 = vmatpush1.msra.mxu0 0.0
  %2393 = vmatprep.subr.mxu0 0.0
  %2394 = vmatpush1.msra.mxu0 0.0
  %2395 = vmatprep.subr.mxu0 0.0
  %2396 = vmatpush1.msra.mxu0 0.0
  %2397 = vmatprep.subr.mxu0 0.0
  %2398 = vmatpush1.msra.mxu0 0.0
  %2399 = vmatprep.subr.mxu0 0.0
  %2400 = vmatpush1.msra.mxu0 0.0
  %2401 = vmatprep.subr.mxu0 0.0
  %2402 = vmatpush1.msra.mxu0 0.0
  %2403 = vmatprep.subr.mxu0 0.0
  %2404 = vmatpush1.msra.mxu0 0.0
  %2405 = vmatprep.subr.mxu0 0.0
  %2406 = vmatpush1.msra.mxu0 0.0
  %2407 = vmatprep.subr.mxu0 0.0
  %2408 = vmatpush1.msra.mxu0 0.0
  %2409 = vmatprep.subr.mxu0 0.0
  %2410 = vmatpush1.msra.mxu0 0.0
  %2411 = vmatprep.mubr.f32.mxu0 0.0
  %2412 = vmatmul.mubr.f32.gmra.mrb[0].mxu0 %v2345
  %v2413 = vpop.f32.mrb[0].mxu0
  %v2414 = vadd.f32 %v2340, %v2413
  %v2415 = vpop.f32.mrb[0].mxu0
  %2416 = vdwg.mxu0
  %v2417 = vmax.f32 %v2414, 0.0
  %v2418 = vld [vmem:[%s6] sm:$0xff]
  %v2419 = vld [vmem:[%s6 + $0x8] sm:$0xff]
  %v2420 = vld [vmem:[%s6 + $0x10] sm:$0xff]
  %v2421 = vld [vmem:[%s6 + $0x18] sm:$0xff]
  %v2422 = vld [vmem:[%s7] sm:$0x1]
  %v2424 = vlaneseq
  %v2425 = vshrl.u32 %v2424, 7
  %v2426 = vsub.s32 0, %v2425
  %v2427 = vrot.slane %v2422, %v2426
  %v2430 = vsel %vm448, %v2417, 0
  %2432 = vmatprep.subr.mxu0 0.0
  %2433 = vmatpush1.msra.mxu0 %v2418
  %2434 = vmatprep.subr.mxu0 0.0
  %2435 = vmatpush1.msra.mxu0 %v2419
  %2436 = vmatprep.subr.mxu0 0.0
  %2437 = vmatpush1.msra.mxu0 %v2420
  %2438 = vmatprep.subr.mxu0 0.0
  %2439 = vmatpush1.msra.mxu0 %v2421
  %2440 = vmatprep.subr.mxu0 0.0
  %2441 = vmatpush1.msra.mxu0 0.0
  %2442 = vmatprep.subr.mxu0 0.0
  %2443 = vmatpush1.msra.mxu0 0.0
  %2444 = vmatprep.subr.mxu0 0.0
  %2445 = vmatpush1.msra.mxu0 0.0
  %2446 = vmatprep.subr.mxu0 0.0
  %2447 = vmatpush1.msra.mxu0 0.0
  %2448 = vmatprep.subr.mxu0 0.0
  %2449 = vmatpush1.msra.mxu0 0.0
  %2450 = vmatprep.subr.mxu0 0.0
  %2451 = vmatpush1.msra.mxu0 0.0
  %2452 = vmatprep.subr.mxu0 0.0
  %2453 = vmatpush1.msra.mxu0 0.0
  %2454 = vmatprep.subr.mxu0 0.0
  %2455 = vmatpush1.msra.mxu0 0.0
  %2456 = vmatprep.subr.mxu0 0.0
  %2457 = vmatpush1.msra.mxu0 0.0
  %2458 = vmatprep.subr.mxu0 0.0
  %2459 = vmatpush1.msra.mxu0 0.0
  %2460 = vmatprep.subr.mxu0 0.0
  %2461 = vmatpush1.msra.mxu0 0.0
  %2462 = vmatprep.subr.mxu0 0.0
  %2463 = vmatpush1.msra.mxu0 0.0
  %2464 = vmatprep.subr.mxu0 0.0
  %2465 = vmatpush1.msra.mxu0 0.0
  %2466 = vmatprep.subr.mxu0 0.0
  %2467 = vmatpush1.msra.mxu0 0.0
  %2468 = vmatprep.subr.mxu0 0.0
  %2469 = vmatpush1.msra.mxu0 0.0
  %2470 = vmatprep.subr.mxu0 0.0
  %2471 = vmatpush1.msra.mxu0 0.0
  %2472 = vmatprep.subr.mxu0 0.0
  %2473 = vmatpush1.msra.mxu0 0.0
  %2474 = vmatprep.subr.mxu0 0.0
  %2475 = vmatpush1.msra.mxu0 0.0
  %2476 = vmatprep.subr.mxu0 0.0
  %2477 = vmatpush1.msra.mxu0 0.0
  %2478 = vmatprep.subr.mxu0 0.0
  %2479 = vmatpush1.msra.mxu0 0.0
  %2480 = vmatprep.subr.mxu0 0.0
  %2481 = vmatpush1.msra.mxu0 0.0
  %2482 = vmatprep.subr.mxu0 0.0
  %2483 = vmatpush1.msra.mxu0 0.0
  %2484 = vmatprep.subr.mxu0 0.0
  %2485 = vmatpush1.msra.mxu0 0.0
  %2486 = vmatprep.subr.mxu0 0.0
  %2487 = vmatpush1.msra.mxu0 0.0
  %2488 = vmatprep.subr.mxu0 0.0
  %2489 = vmatpush1.msra.mxu0 0.0
  %2490 = vmatprep.subr.mxu0 0.0
  %2491 = vmatpush1.msra.mxu0 0.0
  %2492 = vmatprep.subr.mxu0 0.0
  %2493 = vmatpush1.msra.mxu0 0.0
  %2494 = vmatprep.subr.mxu0 0.0
  %2495 = vmatpush1.msra.mxu0 0.0
  %2496 = vmatprep.mubr.f32.mxu0 0.0
  %2497 = vmatmul.mubr.f32.gmra.mrb[0].mxu0 %v2430
  %v2498 = vpop.f32.mrb[0].mxu0
  %v2499 = vadd.f32 %v2427, %v2498
  %v2500 = vpop.f32.mrb[0].mxu0
  %2501 = vdwg.mxu0
  %s2502 = scalar_lea.vmem %s10, 8
  %2503 = vst [vmem:[%s2502] sm:$0x3] %v2499
  %v2504 = vsel %vm523, %v2499, -inf
  %2505 = vmax.xlane.f32.xlu0 %v2504
  %v2506 = vpop.xlane.xlu0 %2505
  %vm2507 = vcmp.eq.f32.partialorder %v2499, %v2506
  %v2508 = vsel %vm2507, %v36, 128
  %v2509 = vsel %vm523, %v2508, 2147483647
  %v2510 = vand.u32 %v2509, 65535
  %v2511 = vshra.s32 %v2509, 16
  %v2512 = vcvt.s32.f32 %v2510
  %v2513 = vcvt.s32.f32 %v2511
  %2514 = vmin.xlane.f32.xlu0 %v2513
  %v2515 = vpop.xlane.xlu0 %2514
  %vm2516 = vcmp.eq.f32.partialorder %v2513, %v2515
  %v2517 = vsel %vm2516, %v2512, inf
  %2518 = vmin.xlane.f32.xlu0 %v2517
  %v2519 = vpop.xlane.xlu0 %2518
  %v2520 = vcvt.f32.s32 %v2519
  %v2521 = vcvt.f32.s32 %v2515
  %v2522 = vshll.u32 %v2521, 16
  %v2523 = vadd.s32 %v2522, %v2520
  %vm2524 = vcmp.eq.s32.totalorder %v36, %v2523
  %v2525 = vsel %vm2524, 1, 0
  %v2526 = vcvt.s32.f32 %v2525
  %v2527 = vld [vmem:[%s0] sm:$0xff]
  %v2528 = vld [vmem:[%s0 + $0x8] sm:$0xff]
  %v2529 = vld [vmem:[%s0 + $0x10] sm:$0xff]
  %v2530 = vld [vmem:[%s0 + $0x18] sm:$0xff]
  %v2531 = vld [vmem:[%s0 + $0x20] sm:$0xff]
  %v2532 = vld [vmem:[%s0 + $0x28] sm:$0xff]
  %v2533 = vld [vmem:[%s0 + $0x30] sm:$0xff]
  %v2534 = vld [vmem:[%s0 + $0x38] sm:$0xff]
  %v2535 = vld [vmem:[%s0 + $0x40] sm:$0xff]
  %v2536 = vld [vmem:[%s0 + $0x48] sm:$0xff]
  %v2537 = vld [vmem:[%s0 + $0x50] sm:$0xff]
  %v2538 = vld [vmem:[%s0 + $0x58] sm:$0xff]
  %v2539 = vld [vmem:[%s0 + $0x60] sm:$0xff]
  %v2540 = vld [vmem:[%s0 + $0x68] sm:$0xff]
  %v2541 = vld [vmem:[%s0 + $0x70] sm:$0xff]
  %v2542 = vld [vmem:[%s0 + $0x78] sm:$0xff]
  %v2543 = vld [vmem:[%s0 + $0x80] sm:$0xff]
  %v2544 = vld [vmem:[%s0 + $0x88] sm:$0xff]
  %v2545 = vld [vmem:[%s0 + $0x90] sm:$0xff]
  %v2546 = vld [vmem:[%s0 + $0x98] sm:$0xff]
  %v2547 = vld [vmem:[%s0 + $0xa0] sm:$0xff]
  %v2548 = vld [vmem:[%s0 + $0xa8] sm:$0xff]
  %v2549 = vld [vmem:[%s0 + $0xb0] sm:$0xff]
  %v2550 = vld [vmem:[%s0 + $0xb8] sm:$0xff]
  %v2551 = vld [vmem:[%s0 + $0xc0] sm:$0xff]
  %v2552 = vld [vmem:[%s0 + $0xc8] sm:$0xff]
  %v2553 = vld [vmem:[%s0 + $0xd0] sm:$0xff]
  %v2554 = vld [vmem:[%s0 + $0xd8] sm:$0xff]
  %v2555 = vld [vmem:[%s0 + $0xe0] sm:$0xff]
  %v2556 = vld [vmem:[%s0 + $0xe8] sm:$0xff]
  %v2557 = vld [vmem:[%s0 + $0xf0] sm:$0xff]
  %v2558 = vld [vmem:[%s0 + $0xf8] sm:$0xff]
  %v2559 = vld [vmem:[%s0 + $0x100] sm:$0xff]
  %v2560 = vld [vmem:[%s0 + $0x108] sm:$0xff]
  %v2561 = vld [vmem:[%s0 + $0x110] sm:$0xff]
  %v2562 = vld [vmem:[%s0 + $0x118] sm:$0xff]
  %v2563 = vld [vmem:[%s0 + $0x120] sm:$0xff]
  %v2564 = vld [vmem:[%s0 + $0x128] sm:$0xff]
  %v2565 = vld [vmem:[%s0 + $0x130] sm:$0xff]
  %v2566 = vld [vmem:[%s0 + $0x138] sm:$0xff]
  %v2567 = vld [vmem:[%s0 + $0x140] sm:$0xff]
  %v2568 = vld [vmem:[%s0 + $0x148] sm:$0xff]
  %v2569 = vld [vmem:[%s0 + $0x150] sm:$0xff]
  %v2570 = vld [vmem:[%s0 + $0x158] sm:$0xff]
  %v2571 = vld [vmem:[%s0 + $0x160] sm:$0xff]
  %v2572 = vld [vmem:[%s0 + $0x168] sm:$0xff]
  %v2573 = vld [vmem:[%s0 + $0x170] sm:$0xff]
  %v2574 = vld [vmem:[%s0 + $0x178] sm:$0xff]
  %v2575 = vld [vmem:[%s1] sm:$0x3]
  %v2577 = vlaneseq
  %v2578 = vshrl.u32 %v2577, 7
  %v2579 = vsub.s32 0, %v2578
  %v2580 = vrot.slane %v2575, %v2579
  %v2581 = vlaneseq
  %v2582 = vshrl.u32 %v2581, 7
  %v2583 = vsub.s32 1, %v2582
  %v2584 = vrot.slane %v2575, %v2583
  %v2587 = vsel %vm102, %v2188, 0
  %2589 = vmatprep.subr.mxu0 %v2528
  %2590 = vmatpush1.msra.mxu0 %v2527
  %2591 = vmatprep.subr.mxu0 %v2530
  %2592 = vmatpush1.msra.mxu0 %v2529
  %2593 = vmatprep.subr.mxu0 %v2532
  %2594 = vmatpush1.msra.mxu0 %v2531
  %2595 = vmatprep.subr.mxu0 %v2534
  %2596 = vmatpush1.msra.mxu0 %v2533
  %2597 = vmatprep.subr.mxu0 %v2536
  %2598 = vmatpush1.msra.mxu0 %v2535
  %2599 = vmatprep.subr.mxu0 %v2538
  %2600 = vmatpush1.msra.mxu0 %v2537
  %2601 = vmatprep.subr.mxu0 %v2540
  %2602 = vmatpush1.msra.mxu0 %v2539
  %2603 = vmatprep.subr.mxu0 %v2542
  %2604 = vmatpush1.msra.mxu0 %v2541
  %2605 = vmatprep.subr.mxu0 %v2544
  %2606 = vmatpush1.msra.mxu0 %v2543
  %2607 = vmatprep.subr.mxu0 %v2546
  %2608 = vmatpush1.msra.mxu0 %v2545
  %2609 = vmatprep.subr.mxu0 %v2548
  %2610 = vmatpush1.msra.mxu0 %v2547
  %2611 = vmatprep.subr.mxu0 %v2550
  %2612 = vmatpush1.msra.mxu0 %v2549
  %2613 = vmatprep.subr.mxu0 %v2552
  %2614 = vmatpush1.msra.mxu0 %v2551
  %2615 = vmatprep.subr.mxu0 %v2554
  %2616 = vmatpush1.msra.mxu0 %v2553
  %2617 = vmatprep.subr.mxu0 %v2556
  %2618 = vmatpush1.msra.mxu0 %v2555
  %2619 = vmatprep.subr.mxu0 %v2558
  %2620 = vmatpush1.msra.mxu0 %v2557
  %2621 = vmatprep.subr.mxu0 %v2560
  %2622 = vmatpush1.msra.mxu0 %v2559
  %2623 = vmatprep.subr.mxu0 %v2562
  %2624 = vmatpush1.msra.mxu0 %v2561
  %2625 = vmatprep.subr.mxu0 %v2564
  %2626 = vmatpush1.msra.mxu0 %v2563
  %2627 = vmatprep.subr.mxu0 %v2566
  %2628 = vmatpush1.msra.mxu0 %v2565
  %2629 = vmatprep.subr.mxu0 %v2568
  %2630 = vmatpush1.msra.mxu0 %v2567
  %2631 = vmatprep.subr.mxu0 %v2570
  %2632 = vmatpush1.msra.mxu0 %v2569
  %2633 = vmatprep.subr.mxu0 %v2572
  %2634 = vmatpush1.msra.mxu0 %v2571
  %2635 = vmatprep.subr.mxu0 %v2574
  %2636 = vmatpush1.msra.mxu0 %v2573
  %2637 = vmatprep.subr.mxu0 0.0
  %2638 = vmatpush1.msra.mxu0 0.0
  %2639 = vmatprep.subr.mxu0 0.0
  %2640 = vmatpush1.msra.mxu0 0.0
  %2641 = vmatprep.subr.mxu0 0.0
  %2642 = vmatpush1.msra.mxu0 0.0
  %2643 = vmatprep.subr.mxu0 0.0
  %2644 = vmatpush1.msra.mxu0 0.0
  %2645 = vmatprep.subr.mxu0 0.0
  %2646 = vmatpush1.msra.mxu0 0.0
  %2647 = vmatprep.subr.mxu0 0.0
  %2648 = vmatpush1.msra.mxu0 0.0
  %2649 = vmatprep.subr.mxu0 0.0
  %2650 = vmatpush1.msra.mxu0 0.0
  %2651 = vmatprep.subr.mxu0 0.0
  %2652 = vmatpush1.msra.mxu0 0.0
  %2653 = vmatprep.mubr.f32.mxu0 %v2587
  %2654 = vmatmul.mubr.f32.gmra.mrb[0].mxu0 %v2526
  %v2655 = vpop.f32.mrb[0].mxu0
  %v2656 = vadd.f32 %v2580, %v2655
  %v2657 = vpop.f32.mrb[0].mxu0
  %v2658 = vadd.f32 %v2584, %v2657
  %2659 = vdwg.mxu0
  %v2660 = vxor.u32 %v2656, 2147483648
  %v2661 = vmul.f32 %v2660, 1.442695
  %v2662 = vpow.pop %v2661
  %v2663 = vadd.f32 %v2662, 1.0
  %v2664 = vrcp.pop %v2663
  %v2665 = vmul.f32 1.0, %v2664
  %2667 = vrot.lane.b32.xlu0 %v2658, 64
  %v2668 = vpop.permute.xlu0 %2667
  %v2670 = vmul.f32 %v2665, %v2668
  %v2671 = vadd.f32 %v2658, %v2670
  %v2672 = vtanh.pop %v2671
  %v2673 = vsub.f32 1.0, %v2665
  %2675 = vrot.lane.b32.xlu0 %v2672, 64
  %v2676 = vpop.permute.xlu0 %2675
  %v2678 = vmul.f32 %v2673, %v2676
  %v2679 = vmul.f32 %v2665, %v2185
  %v2680 = vadd.f32 %v2678, %v2679
  %2682 = vrot.lane.b32.xlu0 %v2680, 64
  %v2683 = vpop.permute.xlu0 %2682
  %v2685 = vsel %vm102, %v2683, %v2326
  %v2686 = vld [vmem:[%s2] sm:$0xff]
  %v2687 = vld [vmem:[%s2 + $0x8] sm:$0xff]
  %v2688 = vld [vmem:[%s2 + $0x10] sm:$0xff]
  %v2689 = vld [vmem:[%s2 + $0x18] sm:$0xff]
  %v2690 = vld [vmem:[%s2 + $0x20] sm:$0xff]
  %v2691 = vld [vmem:[%s2 + $0x28] sm:$0xff]
  %v2692 = vld [vmem:[%s2 + $0x30] sm:$0xff]
  %v2693 = vld [vmem:[%s2 + $0x38] sm:$0xff]
  %v2694 = vld [vmem:[%s2 + $0x40] sm:$0xff]
  %v2695 = vld [vmem:[%s2 + $0x48] sm:$0xff]
  %v2696 = vld [vmem:[%s2 + $0x50] sm:$0xff]
  %v2697 = vld [vmem:[%s2 + $0x58] sm:$0xff]
  %v2698 = vld [vmem:[%s2 + $0x60] sm:$0xff]
  %v2699 = vld [vmem:[%s2 + $0x68] sm:$0xff]
  %v2700 = vld [vmem:[%s2 + $0x70] sm:$0xff]
  %v2701 = vld [vmem:[%s2 + $0x78] sm:$0xff]
  %v2702 = vld [vmem:[%s2 + $0x80] sm:$0xff]
  %v2703 = vld [vmem:[%s2 + $0x88] sm:$0xff]
  %v2704 = vld [vmem:[%s2 + $0x90] sm:$0xff]
  %v2705 = vld [vmem:[%s2 + $0x98] sm:$0xff]
  %v2706 = vld [vmem:[%s2 + $0xa0] sm:$0xff]
  %v2707 = vld [vmem:[%s2 + $0xa8] sm:$0xff]
  %v2708 = vld [vmem:[%s2 + $0xb0] sm:$0xff]
  %v2709 = vld [vmem:[%s2 + $0xb8] sm:$0xff]
  %v2710 = vld [vmem:[%s2 + $0xc0] sm:$0xff]
  %v2711 = vld [vmem:[%s2 + $0xc8] sm:$0xff]
  %v2712 = vld [vmem:[%s2 + $0xd0] sm:$0xff]
  %v2713 = vld [vmem:[%s2 + $0xd8] sm:$0xff]
  %v2714 = vld [vmem:[%s2 + $0xe0] sm:$0xff]
  %v2715 = vld [vmem:[%s2 + $0xe8] sm:$0xff]
  %v2716 = vld [vmem:[%s2 + $0xf0] sm:$0xff]
  %v2717 = vld [vmem:[%s2 + $0xf8] sm:$0xff]
  %v2718 = vld [vmem:[%s3] sm:$0x3]
  %v2720 = vlaneseq
  %v2721 = vshrl.u32 %v2720, 7
  %v2722 = vsub.s32 0, %v2721
  %v2723 = vrot.slane %v2718, %v2722
  %v2724 = vlaneseq
  %v2725 = vshrl.u32 %v2724, 7
  %v2726 = vsub.s32 1, %v2725
  %v2727 = vrot.slane %v2718, %v2726
  %2730 = vmatprep.subr.mxu0 %v2687
  %2731 = vmatpush1.msra.mxu0 %v2686
  %2732 = vmatprep.subr.mxu0 %v2689
  %2733 = vmatpush1.msra.mxu0 %v2688
  %2734 = vmatprep.subr.mxu0 %v2691
  %2735 = vmatpush1.msra.mxu0 %v2690
  %2736 = vmatprep.subr.mxu0 %v2693
  %2737 = vmatpush1.msra.mxu0 %v2692
  %2738 = vmatprep.subr.mxu0 %v2695
  %2739 = vmatpush1.msra.mxu0 %v2694
  %2740 = vmatprep.subr.mxu0 %v2697
  %2741 = vmatpush1.msra.mxu0 %v2696
  %2742 = vmatprep.subr.mxu0 %v2699
  %2743 = vmatpush1.msra.mxu0 %v2698
  %2744 = vmatprep.subr.mxu0 %v2701
  %2745 = vmatpush1.msra.mxu0 %v2700
  %2746 = vmatprep.subr.mxu0 %v2703
  %2747 = vmatpush1.msra.mxu0 %v2702
  %2748 = vmatprep.subr.mxu0 %v2705
  %2749 = vmatpush1.msra.mxu0 %v2704
  %2750 = vmatprep.subr.mxu0 %v2707
  %2751 = vmatpush1.msra.mxu0 %v2706
  %2752 = vmatprep.subr.mxu0 %v2709
  %2753 = vmatpush1.msra.mxu0 %v2708
  %2754 = vmatprep.subr.mxu0 %v2711
  %2755 = vmatpush1.msra.mxu0 %v2710
  %2756 = vmatprep.subr.mxu0 %v2713
  %2757 = vmatpush1.msra.mxu0 %v2712
  %2758 = vmatprep.subr.mxu0 %v2715
  %2759 = vmatpush1.msra.mxu0 %v2714
  %2760 = vmatprep.subr.mxu0 %v2717
  %2761 = vmatpush1.msra.mxu0 %v2716
  %2762 = vmatprep.subr.mxu0 0.0
  %2763 = vmatpush1.msra.mxu0 0.0
  %2764 = vmatprep.subr.mxu0 0.0
  %2765 = vmatpush1.msra.mxu0 0.0
  %2766 = vmatprep.subr.mxu0 0.0
  %2767 = vmatpush1.msra.mxu0 0.0
  %2768 = vmatprep.subr.mxu0 0.0
  %2769 = vmatpush1.msra.mxu0 0.0
  %2770 = vmatprep.subr.mxu0 0.0
  %2771 = vmatpush1.msra.mxu0 0.0
  %2772 = vmatprep.subr.mxu0 0.0
  %2773 = vmatpush1.msra.mxu0 0.0
  %2774 = vmatprep.subr.mxu0 0.0
  %2775 = vmatpush1.msra.mxu0 0.0
  %2776 = vmatprep.subr.mxu0 0.0
  %2777 = vmatpush1.msra.mxu0 0.0
  %2778 = vmatprep.subr.mxu0 0.0
  %2779 = vmatpush1.msra.mxu0 0.0
  %2780 = vmatprep.subr.mxu0 0.0
  %2781 = vmatpush1.msra.mxu0 0.0
  %2782 = vmatprep.subr.mxu0 0.0
  %2783 = vmatpush1.msra.mxu0 0.0
  %2784 = vmatprep.subr.mxu0 0.0
  %2785 = vmatpush1.msra.mxu0 0.0
  %2786 = vmatprep.subr.mxu0 0.0
  %2787 = vmatpush1.msra.mxu0 0.0
  %2788 = vmatprep.subr.mxu0 0.0
  %2789 = vmatpush1.msra.mxu0 0.0
  %2790 = vmatprep.subr.mxu0 0.0
  %2791 = vmatpush1.msra.mxu0 0.0
  %2792 = vmatprep.subr.mxu0 0.0
  %2793 = vmatpush1.msra.mxu0 0.0
  %2794 = vmatprep.mubr.f32.mxu0 0.0
  %2795 = vmatmul.mubr.f32.gmra.mrb[0].mxu0 %v2685
  %v2796 = vpop.f32.mrb[0].mxu0
  %v2797 = vadd.f32 %v2723, %v2796
  %v2798 = vpop.f32.mrb[0].mxu0
  %v2799 = vadd.f32 %v2727, %v2798
  %2800 = vdwg.mxu0
  %v2801 = vxor.u32 %v2797, 2147483648
  %v2802 = vmul.f32 %v2801, 1.442695
  %v2803 = vpow.pop %v2802
  %v2804 = vadd.f32 %v2803, 1.0
  %v2805 = vrcp.pop %v2804
  %v2806 = vmul.f32 1.0, %v2805
  %2808 = vrot.lane.b32.xlu0 %v2799, 64
  %v2809 = vpop.permute.xlu0 %2808
  %v2811 = vmul.f32 %v2806, %v2809
  %v2812 = vadd.f32 %v2799, %v2811
  %v2813 = vtanh.pop %v2812
  %v2814 = vsub.f32 1.0, %v2806
  %2816 = vrot.lane.b32.xlu0 %v2813, 64
  %v2817 = vpop.permute.xlu0 %2816
  %v2819 = vmul.f32 %v2814, %v2817
  %v2820 = vmul.f32 %v2806, %v2326
  %v2821 = vadd.f32 %v2819, %v2820
  %v2822 = vld [vmem:[%s4] sm:$0xff]
  %v2823 = vld [vmem:[%s4 + $0x8] sm:$0xff]
  %v2824 = vld [vmem:[%s4 + $0x10] sm:$0xff]
  %v2825 = vld [vmem:[%s4 + $0x18] sm:$0xff]
  %v2826 = vld [vmem:[%s4 + $0x20] sm:$0xff]
  %v2827 = vld [vmem:[%s4 + $0x28] sm:$0xff]
  %v2828 = vld [vmem:[%s4 + $0x30] sm:$0xff]
  %v2829 = vld [vmem:[%s4 + $0x38] sm:$0xff]
  %v2830 = vld [vmem:[%s5] sm:$0x1]
  %v2832 = vlaneseq
  %v2833 = vshrl.u32 %v2832, 7
  %v2834 = vsub.s32 0, %v2833
  %v2835 = vrot.slane %v2830, %v2834
  %2838 = vrot.lane.b32.xlu0 %v2821, 64
  %v2839 = vpop.permute.xlu0 %2838
  %v2840 = vsel %vm102, %v2839, 0
  %2842 = vmatprep.subr.mxu0 0.0
  %2843 = vmatpush1.msra.mxu0 %v2822
  %2844 = vmatprep.subr.mxu0 0.0
  %2845 = vmatpush1.msra.mxu0 %v2823
  %2846 = vmatprep.subr.mxu0 0.0
  %2847 = vmatpush1.msra.mxu0 %v2824
  %2848 = vmatprep.subr.mxu0 0.0
  %2849 = vmatpush1.msra.mxu0 %v2825
  %2850 = vmatprep.subr.mxu0 0.0
  %2851 = vmatpush1.msra.mxu0 %v2826
  %2852 = vmatprep.subr.mxu0 0.0
  %2853 = vmatpush1.msra.mxu0 %v2827
  %2854 = vmatprep.subr.mxu0 0.0
  %2855 = vmatpush1.msra.mxu0 %v2828
  %2856 = vmatprep.subr.mxu0 0.0
  %2857 = vmatpush1.msra.mxu0 %v2829
  %2858 = vmatprep.subr.mxu0 0.0
  %2859 = vmatpush1.msra.mxu0 0.0
  %2860 = vmatprep.subr.mxu0 0.0
  %2861 = vmatpush1.msra.mxu0 0.0
  %2862 = vmatprep.subr.mxu0 0.0
  %2863 = vmatpush1.msra.mxu0 0.0
  %2864 = vmatprep.subr.mxu0 0.0
  %2865 = vmatpush1.msra.mxu0 0.0
  %2866 = vmatprep.subr.mxu0 0.0
  %2867 = vmatpush1.msra.mxu0 0.0
  %2868 = vmatprep.subr.mxu0 0.0
  %2869 = vmatpush1.msra.mxu0 0.0
  %2870 = vmatprep.subr.mxu0 0.0
  %2871 = vmatpush1.msra.mxu0 0.0
  %2872 = vmatprep.subr.mxu0 0.0
  %2873 = vmatpush1.msra.mxu0 0.0
  %2874 = vmatprep.subr.mxu0 0.0
  %2875 = vmatpush1.msra.mxu0 0.0
  %2876 = vmatprep.subr.mxu0 0.0
  %2877 = vmatpush1.msra.mxu0 0.0
  %2878 = vmatprep.subr.mxu0 0.0
  %2879 = vmatpush1.msra.mxu0 0.0
  %2880 = vmatprep.subr.mxu0 0.0
  %2881 = vmatpush1.msra.mxu0 0.0
  %2882 = vmatprep.subr.mxu0 0.0
  %2883 = vmatpush1.msra.mxu0 0.0
  %2884 = vmatprep.subr.mxu0 0.0
  %2885 = vmatpush1.msra.mxu0 0.0
  %2886 = vmatprep.subr.mxu0 0.0
  %2887 = vmatpush1.msra.mxu0 0.0
  %2888 = vmatprep.subr.mxu0 0.0
  %2889 = vmatpush1.msra.mxu0 0.0
  %2890 = vmatprep.subr.mxu0 0.0
  %2891 = vmatpush1.msra.mxu0 0.0
  %2892 = vmatprep.subr.mxu0 0.0
  %2893 = vmatpush1.msra.mxu0 0.0
  %2894 = vmatprep.subr.mxu0 0.0
  %2895 = vmatpush1.msra.mxu0 0.0
  %2896 = vmatprep.subr.mxu0 0.0
  %2897 = vmatpush1.msra.mxu0 0.0
  %2898 = vmatprep.subr.mxu0 0.0
  %2899 = vmatpush1.msra.mxu0 0.0
  %2900 = vmatprep.subr.mxu0 0.0
  %2901 = vmatpush1.msra.mxu0 0.0
  %2902 = vmatprep.subr.mxu0 0.0
  %2903 = vmatpush1.msra.mxu0 0.0
  %2904 = vmatprep.subr.mxu0 0.0
  %2905 = vmatpush1.msra.mxu0 0.0
  %2906 = vmatprep.mubr.f32.mxu0 0.0
  %2907 = vmatmul.mubr.f32.gmra.mrb[0].mxu0 %v2840
  %v2908 = vpop.f32.mrb[0].mxu0
  %v2909 = vadd.f32 %v2835, %v2908
  %v2910 = vpop.f32.mrb[0].mxu0
  %2911 = vdwg.mxu0
  %v2912 = vmax.f32 %v2909, 0.0
  %v2913 = vld [vmem:[%s6] sm:$0xff]
  %v2914 = vld [vmem:[%s6 + $0x8] sm:$0xff]
  %v2915 = vld [vmem:[%s6 + $0x10] sm:$0xff]
  %v2916 = vld [vmem:[%s6 + $0x18] sm:$0xff]
  %v2917 = vld [vmem:[%s7] sm:$0x1]
  %v2919 = vlaneseq
  %v2920 = vshrl.u32 %v2919, 7
  %v2921 = vsub.s32 0, %v2920
  %v2922 = vrot.slane %v2917, %v2921
  %v2925 = vsel %vm448, %v2912, 0
  %2927 = vmatprep.subr.mxu0 0.0
  %2928 = vmatpush1.msra.mxu0 %v2913
  %2929 = vmatprep.subr.mxu0 0.0
  %2930 = vmatpush1.msra.mxu0 %v2914
  %2931 = vmatprep.subr.mxu0 0.0
  %2932 = vmatpush1.msra.mxu0 %v2915
  %2933 = vmatprep.subr.mxu0 0.0
  %2934 = vmatpush1.msra.mxu0 %v2916
  %2935 = vmatprep.subr.mxu0 0.0
  %2936 = vmatpush1.msra.mxu0 0.0
  %2937 = vmatprep.subr.mxu0 0.0
  %2938 = vmatpush1.msra.mxu0 0.0
  %2939 = vmatprep.subr.mxu0 0.0
  %2940 = vmatpush1.msra.mxu0 0.0
  %2941 = vmatprep.subr.mxu0 0.0
  %2942 = vmatpush1.msra.mxu0 0.0
  %2943 = vmatprep.subr.mxu0 0.0
  %2944 = vmatpush1.msra.mxu0 0.0
  %2945 = vmatprep.subr.mxu0 0.0
  %2946 = vmatpush1.msra.mxu0 0.0
  %2947 = vmatprep.subr.mxu0 0.0
  %2948 = vmatpush1.msra.mxu0 0.0
  %2949 = vmatprep.subr.mxu0 0.0
  %2950 = vmatpush1.msra.mxu0 0.0
  %2951 = vmatprep.subr.mxu0 0.0
  %2952 = vmatpush1.msra.mxu0 0.0
  %2953 = vmatprep.subr.mxu0 0.0
  %2954 = vmatpush1.msra.mxu0 0.0
  %2955 = vmatprep.subr.mxu0 0.0
  %2956 = vmatpush1.msra.mxu0 0.0
  %2957 = vmatprep.subr.mxu0 0.0
  %2958 = vmatpush1.msra.mxu0 0.0
  %2959 = vmatprep.subr.mxu0 0.0
  %2960 = vmatpush1.msra.mxu0 0.0
  %2961 = vmatprep.subr.mxu0 0.0
  %2962 = vmatpush1.msra.mxu0 0.0
  %2963 = vmatprep.subr.mxu0 0.0
  %2964 = vmatpush1.msra.mxu0 0.0
  %2965 = vmatprep.subr.mxu0 0.0
  %2966 = vmatpush1.msra.mxu0 0.0
  %2967 = vmatprep.subr.mxu0 0.0
  %2968 = vmatpush1.msra.mxu0 0.0
  %2969 = vmatprep.subr.mxu0 0.0
  %2970 = vmatpush1.msra.mxu0 0.0
  %2971 = vmatprep.subr.mxu0 0.0
  %2972 = vmatpush1.msra.mxu0 0.0
  %2973 = vmatprep.subr.mxu0 0.0
  %2974 = vmatpush1.msra.mxu0 0.0
  %2975 = vmatprep.subr.mxu0 0.0
  %2976 = vmatpush1.msra.mxu0 0.0
  %2977 = vmatprep.subr.mxu0 0.0
  %2978 = vmatpush1.msra.mxu0 0.0
  %2979 = vmatprep.subr.mxu0 0.0
  %2980 = vmatpush1.msra.mxu0 0.0
  %2981 = vmatprep.subr.mxu0 0.0
  %2982 = vmatpush1.msra.mxu0 0.0
  %2983 = vmatprep.subr.mxu0 0.0
  %2984 = vmatpush1.msra.mxu0 0.0
  %2985 = vmatprep.subr.mxu0 0.0
  %2986 = vmatpush1.msra.mxu0 0.0
  %2987 = vmatprep.subr.mxu0 0.0
  %2988 = vmatpush1.msra.mxu0 0.0
  %2989 = vmatprep.subr.mxu0 0.0
  %2990 = vmatpush1.msra.mxu0 0.0
  %2991 = vmatprep.mubr.f32.mxu0 0.0
  %2992 = vmatmul.mubr.f32.gmra.mrb[0].mxu0 %v2925
  %v2993 = vpop.f32.mrb[0].mxu0
  %v2994 = vadd.f32 %v2922, %v2993
  %v2995 = vpop.f32.mrb[0].mxu0
  %2996 = vdwg.mxu0
  %s2997 = scalar_lea.vmem %s10, 10
  %2998 = vst [vmem:[%s2997] sm:$0x3] %v2994
  %v2999 = vsel %vm523, %v2994, -inf
  %3000 = vmax.xlane.f32.xlu0 %v2999
  %v3001 = vpop.xlane.xlu0 %3000
  %vm3002 = vcmp.eq.f32.partialorder %v2994, %v3001
  %v3003 = vsel %vm3002, %v36, 128
  %v3004 = vsel %vm523, %v3003, 2147483647
  %v3005 = vand.u32 %v3004, 65535
  %v3006 = vshra.s32 %v3004, 16
  %v3007 = vcvt.s32.f32 %v3005
  %v3008 = vcvt.s32.f32 %v3006
  %3009 = vmin.xlane.f32.xlu0 %v3008
  %v3010 = vpop.xlane.xlu0 %3009
  %vm3011 = vcmp.eq.f32.partialorder %v3008, %v3010
  %v3012 = vsel %vm3011, %v3007, inf
  %3013 = vmin.xlane.f32.xlu0 %v3012
  %v3014 = vpop.xlane.xlu0 %3013
  %v3015 = vcvt.f32.s32 %v3014
  %v3016 = vcvt.f32.s32 %v3010
  %v3017 = vshll.u32 %v3016, 16
  %v3018 = vadd.s32 %v3017, %v3015
  %vm3019 = vcmp.eq.s32.totalorder %v36, %v3018
  %v3020 = vsel %vm3019, 1, 0
  %v3021 = vcvt.s32.f32 %v3020
  %v3022 = vld [vmem:[%s0] sm:$0xff]
  %v3023 = vld [vmem:[%s0 + $0x8] sm:$0xff]
  %v3024 = vld [vmem:[%s0 + $0x10] sm:$0xff]
  %v3025 = vld [vmem:[%s0 + $0x18] sm:$0xff]
  %v3026 = vld [vmem:[%s0 + $0x20] sm:$0xff]
  %v3027 = vld [vmem:[%s0 + $0x28] sm:$0xff]
  %v3028 = vld [vmem:[%s0 + $0x30] sm:$0xff]
  %v3029 = vld [vmem:[%s0 + $0x38] sm:$0xff]
  %v3030 = vld [vmem:[%s0 + $0x40] sm:$0xff]
  %v3031 = vld [vmem:[%s0 + $0x48] sm:$0xff]
  %v3032 = vld [vmem:[%s0 + $0x50] sm:$0xff]
  %v3033 = vld [vmem:[%s0 + $0x58] sm:$0xff]
  %v3034 = vld [vmem:[%s0 + $0x60] sm:$0xff]
  %v3035 = vld [vmem:[%s0 + $0x68] sm:$0xff]
  %v3036 = vld [vmem:[%s0 + $0x70] sm:$0xff]
  %v3037 = vld [vmem:[%s0 + $0x78] sm:$0xff]
  %v3038 = vld [vmem:[%s0 + $0x80] sm:$0xff]
  %v3039 = vld [vmem:[%s0 + $0x88] sm:$0xff]
  %v3040 = vld [vmem:[%s0 + $0x90] sm:$0xff]
  %v3041 = vld [vmem:[%s0 + $0x98] sm:$0xff]
  %v3042 = vld [vmem:[%s0 + $0xa0] sm:$0xff]
  %v3043 = vld [vmem:[%s0 + $0xa8] sm:$0xff]
  %v3044 = vld [vmem:[%s0 + $0xb0] sm:$0xff]
  %v3045 = vld [vmem:[%s0 + $0xb8] sm:$0xff]
  %v3046 = vld [vmem:[%s0 + $0xc0] sm:$0xff]
  %v3047 = vld [vmem:[%s0 + $0xc8] sm:$0xff]
  %v3048 = vld [vmem:[%s0 + $0xd0] sm:$0xff]
  %v3049 = vld [vmem:[%s0 + $0xd8] sm:$0xff]
  %v3050 = vld [vmem:[%s0 + $0xe0] sm:$0xff]
  %v3051 = vld [vmem:[%s0 + $0xe8] sm:$0xff]
  %v3052 = vld [vmem:[%s0 + $0xf0] sm:$0xff]
  %v3053 = vld [vmem:[%s0 + $0xf8] sm:$0xff]
  %v3054 = vld [vmem:[%s0 + $0x100] sm:$0xff]
  %v3055 = vld [vmem:[%s0 + $0x108] sm:$0xff]
  %v3056 = vld [vmem:[%s0 + $0x110] sm:$0xff]
  %v3057 = vld [vmem:[%s0 + $0x118] sm:$0xff]
  %v3058 = vld [vmem:[%s0 + $0x120] sm:$0xff]
  %v3059 = vld [vmem:[%s0 + $0x128] sm:$0xff]
  %v3060 = vld [vmem:[%s0 + $0x130] sm:$0xff]
  %v3061 = vld [vmem:[%s0 + $0x138] sm:$0xff]
  %v3062 = vld [vmem:[%s0 + $0x140] sm:$0xff]
  %v3063 = vld [vmem:[%s0 + $0x148] sm:$0xff]
  %v3064 = vld [vmem:[%s0 + $0x150] sm:$0xff]
  %v3065 = vld [vmem:[%s0 + $0x158] sm:$0xff]
  %v3066 = vld [vmem:[%s0 + $0x160] sm:$0xff]
  %v3067 = vld [vmem:[%s0 + $0x168] sm:$0xff]
  %v3068 = vld [vmem:[%s0 + $0x170] sm:$0xff]
  %v3069 = vld [vmem:[%s0 + $0x178] sm:$0xff]
  %v3070 = vld [vmem:[%s1] sm:$0x3]
  %v3072 = vlaneseq
  %v3073 = vshrl.u32 %v3072, 7
  %v3074 = vsub.s32 0, %v3073
  %v3075 = vrot.slane %v3070, %v3074
  %v3076 = vlaneseq
  %v3077 = vshrl.u32 %v3076, 7
  %v3078 = vsub.s32 1, %v3077
  %v3079 = vrot.slane %v3070, %v3078
  %v3082 = vsel %vm102, %v2683, 0
  %3084 = vmatprep.subr.mxu0 %v3023
  %3085 = vmatpush1.msra.mxu0 %v3022
  %3086 = vmatprep.subr.mxu0 %v3025
  %3087 = vmatpush1.msra.mxu0 %v3024
  %3088 = vmatprep.subr.mxu0 %v3027
  %3089 = vmatpush1.msra.mxu0 %v3026
  %3090 = vmatprep.subr.mxu0 %v3029
  %3091 = vmatpush1.msra.mxu0 %v3028
  %3092 = vmatprep.subr.mxu0 %v3031
  %3093 = vmatpush1.msra.mxu0 %v3030
  %3094 = vmatprep.subr.mxu0 %v3033
  %3095 = vmatpush1.msra.mxu0 %v3032
  %3096 = vmatprep.subr.mxu0 %v3035
  %3097 = vmatpush1.msra.mxu0 %v3034
  %3098 = vmatprep.subr.mxu0 %v3037
  %3099 = vmatpush1.msra.mxu0 %v3036
  %3100 = vmatprep.subr.mxu0 %v3039
  %3101 = vmatpush1.msra.mxu0 %v3038
  %3102 = vmatprep.subr.mxu0 %v3041
  %3103 = vmatpush1.msra.mxu0 %v3040
  %3104 = vmatprep.subr.mxu0 %v3043
  %3105 = vmatpush1.msra.mxu0 %v3042
  %3106 = vmatprep.subr.mxu0 %v3045
  %3107 = vmatpush1.msra.mxu0 %v3044
  %3108 = vmatprep.subr.mxu0 %v3047
  %3109 = vmatpush1.msra.mxu0 %v3046
  %3110 = vmatprep.subr.mxu0 %v3049
  %3111 = vmatpush1.msra.mxu0 %v3048
  %3112 = vmatprep.subr.mxu0 %v3051
  %3113 = vmatpush1.msra.mxu0 %v3050
  %3114 = vmatprep.subr.mxu0 %v3053
  %3115 = vmatpush1.msra.mxu0 %v3052
  %3116 = vmatprep.subr.mxu0 %v3055
  %3117 = vmatpush1.msra.mxu0 %v3054
  %3118 = vmatprep.subr.mxu0 %v3057
  %3119 = vmatpush1.msra.mxu0 %v3056
  %3120 = vmatprep.subr.mxu0 %v3059
  %3121 = vmatpush1.msra.mxu0 %v3058
  %3122 = vmatprep.subr.mxu0 %v3061
  %3123 = vmatpush1.msra.mxu0 %v3060
  %3124 = vmatprep.subr.mxu0 %v3063
  %3125 = vmatpush1.msra.mxu0 %v3062
  %3126 = vmatprep.subr.mxu0 %v3065
  %3127 = vmatpush1.msra.mxu0 %v3064
  %3128 = vmatprep.subr.mxu0 %v3067
  %3129 = vmatpush1.msra.mxu0 %v3066
  %3130 = vmatprep.subr.mxu0 %v3069
  %3131 = vmatpush1.msra.mxu0 %v3068
  %3132 = vmatprep.subr.mxu0 0.0
  %3133 = vmatpush1.msra.mxu0 0.0
  %3134 = vmatprep.subr.mxu0 0.0
  %3135 = vmatpush1.msra.mxu0 0.0
  %3136 = vmatprep.subr.mxu0 0.0
  %3137 = vmatpush1.msra.mxu0 0.0
  %3138 = vmatprep.subr.mxu0 0.0
  %3139 = vmatpush1.msra.mxu0 0.0
  %3140 = vmatprep.subr.mxu0 0.0
  %3141 = vmatpush1.msra.mxu0 0.0
  %3142 = vmatprep.subr.mxu0 0.0
  %3143 = vmatpush1.msra.mxu0 0.0
  %3144 = vmatprep.subr.mxu0 0.0
  %3145 = vmatpush1.msra.mxu0 0.0
  %3146 = vmatprep.subr.mxu0 0.0
  %3147 = vmatpush1.msra.mxu0 0.0
  %3148 = vmatprep.mubr.f32.mxu0 %v3082
  %3149 = vmatmul.mubr.f32.gmra.mrb[0].mxu0 %v3021
  %v3150 = vpop.f32.mrb[0].mxu0
  %v3151 = vadd.f32 %v3075, %v3150
  %v3152 = vpop.f32.mrb[0].mxu0
  %v3153 = vadd.f32 %v3079, %v3152
  %3154 = vdwg.mxu0
  %v3155 = vxor.u32 %v3151, 2147483648
  %v3156 = vmul.f32 %v3155, 1.442695
  %v3157 = vpow.pop %v3156
  %v3158 = vadd.f32 %v3157, 1.0
  %v3159 = vrcp.pop %v3158
  %v3160 = vmul.f32 1.0, %v3159
  %3162 = vrot.lane.b32.xlu0 %v3153, 64
  %v3163 = vpop.permute.xlu0 %3162
  %v3165 = vmul.f32 %v3160, %v3163
  %v3166 = vadd.f32 %v3153, %v3165
  %v3167 = vtanh.pop %v3166
  %v3168 = vsub.f32 1.0, %v3160
  %3170 = vrot.lane.b32.xlu0 %v3167, 64
  %v3171 = vpop.permute.xlu0 %3170
  %v3173 = vmul.f32 %v3168, %v3171
  %v3174 = vmul.f32 %v3160, %v2680
  %v3175 = vadd.f32 %v3173, %v3174
  %3177 = vrot.lane.b32.xlu0 %v3175, 64
  %v3178 = vpop.permute.xlu0 %3177
  %v3180 = vsel %vm102, %v3178, %v2821
  %v3181 = vld [vmem:[%s2] sm:$0xff]
  %v3182 = vld [vmem:[%s2 + $0x8] sm:$0xff]
  %v3183 = vld [vmem:[%s2 + $0x10] sm:$0xff]
  %v3184 = vld [vmem:[%s2 + $0x18] sm:$0xff]
  %v3185 = vld [vmem:[%s2 + $0x20] sm:$0xff]
  %v3186 = vld [vmem:[%s2 + $0x28] sm:$0xff]
  %v3187 = vld [vmem:[%s2 + $0x30] sm:$0xff]
  %v3188 = vld [vmem:[%s2 + $0x38] sm:$0xff]
  %v3189 = vld [vmem:[%s2 + $0x40] sm:$0xff]
  %v3190 = vld [vmem:[%s2 + $0x48] sm:$0xff]
  %v3191 = vld [vmem:[%s2 + $0x50] sm:$0xff]
  %v3192 = vld [vmem:[%s2 + $0x58] sm:$0xff]
  %v3193 = vld [vmem:[%s2 + $0x60] sm:$0xff]
  %v3194 = vld [vmem:[%s2 + $0x68] sm:$0xff]
  %v3195 = vld [vmem:[%s2 + $0x70] sm:$0xff]
  %v3196 = vld [vmem:[%s2 + $0x78] sm:$0xff]
  %v3197 = vld [vmem:[%s2 + $0x80] sm:$0xff]
  %v3198 = vld [vmem:[%s2 + $0x88] sm:$0xff]
  %v3199 = vld [vmem:[%s2 + $0x90] sm:$0xff]
  %v3200 = vld [vmem:[%s2 + $0x98] sm:$0xff]
  %v3201 = vld [vmem:[%s2 + $0xa0] sm:$0xff]
  %v3202 = vld [vmem:[%s2 + $0xa8] sm:$0xff]
  %v3203 = vld [vmem:[%s2 + $0xb0] sm:$0xff]
  %v3204 = vld [vmem:[%s2 + $0xb8] sm:$0xff]
  %v3205 = vld [vmem:[%s2 + $0xc0] sm:$0xff]
  %v3206 = vld [vmem:[%s2 + $0xc8] sm:$0xff]
  %v3207 = vld [vmem:[%s2 + $0xd0] sm:$0xff]
  %v3208 = vld [vmem:[%s2 + $0xd8] sm:$0xff]
  %v3209 = vld [vmem:[%s2 + $0xe0] sm:$0xff]
  %v3210 = vld [vmem:[%s2 + $0xe8] sm:$0xff]
  %v3211 = vld [vmem:[%s2 + $0xf0] sm:$0xff]
  %v3212 = vld [vmem:[%s2 + $0xf8] sm:$0xff]
  %v3213 = vld [vmem:[%s3] sm:$0x3]
  %v3215 = vlaneseq
  %v3216 = vshrl.u32 %v3215, 7
  %v3217 = vsub.s32 0, %v3216
  %v3218 = vrot.slane %v3213, %v3217
  %v3219 = vlaneseq
  %v3220 = vshrl.u32 %v3219, 7
  %v3221 = vsub.s32 1, %v3220
  %v3222 = vrot.slane %v3213, %v3221
  %3225 = vmatprep.subr.mxu0 %v3182
  %3226 = vmatpush1.msra.mxu0 %v3181
  %3227 = vmatprep.subr.mxu0 %v3184
  %3228 = vmatpush1.msra.mxu0 %v3183
  %3229 = vmatprep.subr.mxu0 %v3186
  %3230 = vmatpush1.msra.mxu0 %v3185
  %3231 = vmatprep.subr.mxu0 %v3188
  %3232 = vmatpush1.msra.mxu0 %v3187
  %3233 = vmatprep.subr.mxu0 %v3190
  %3234 = vmatpush1.msra.mxu0 %v3189
  %3235 = vmatprep.subr.mxu0 %v3192
  %3236 = vmatpush1.msra.mxu0 %v3191
  %3237 = vmatprep.subr.mxu0 %v3194
  %3238 = vmatpush1.msra.mxu0 %v3193
  %3239 = vmatprep.subr.mxu0 %v3196
  %3240 = vmatpush1.msra.mxu0 %v3195
  %3241 = vmatprep.subr.mxu0 %v3198
  %3242 = vmatpush1.msra.mxu0 %v3197
  %3243 = vmatprep.subr.mxu0 %v3200
  %3244 = vmatpush1.msra.mxu0 %v3199
  %3245 = vmatprep.subr.mxu0 %v3202
  %3246 = vmatpush1.msra.mxu0 %v3201
  %3247 = vmatprep.subr.mxu0 %v3204
  %3248 = vmatpush1.msra.mxu0 %v3203
  %3249 = vmatprep.subr.mxu0 %v3206
  %3250 = vmatpush1.msra.mxu0 %v3205
  %3251 = vmatprep.subr.mxu0 %v3208
  %3252 = vmatpush1.msra.mxu0 %v3207
  %3253 = vmatprep.subr.mxu0 %v3210
  %3254 = vmatpush1.msra.mxu0 %v3209
  %3255 = vmatprep.subr.mxu0 %v3212
  %3256 = vmatpush1.msra.mxu0 %v3211
  %3257 = vmatprep.subr.mxu0 0.0
  %3258 = vmatpush1.msra.mxu0 0.0
  %3259 = vmatprep.subr.mxu0 0.0
  %3260 = vmatpush1.msra.mxu0 0.0
  %3261 = vmatprep.subr.mxu0 0.0
  %3262 = vmatpush1.msra.mxu0 0.0
  %3263 = vmatprep.subr.mxu0 0.0
  %3264 = vmatpush1.msra.mxu0 0.0
  %3265 = vmatprep.subr.mxu0 0.0
  %3266 = vmatpush1.msra.mxu0 0.0
  %3267 = vmatprep.subr.mxu0 0.0
  %3268 = vmatpush1.msra.mxu0 0.0
  %3269 = vmatprep.subr.mxu0 0.0
  %3270 = vmatpush1.msra.mxu0 0.0
  %3271 = vmatprep.subr.mxu0 0.0
  %3272 = vmatpush1.msra.mxu0 0.0
  %3273 = vmatprep.subr.mxu0 0.0
  %3274 = vmatpush1.msra.mxu0 0.0
  %3275 = vmatprep.subr.mxu0 0.0
  %3276 = vmatpush1.msra.mxu0 0.0
  %3277 = vmatprep.subr.mxu0 0.0
  %3278 = vmatpush1.msra.mxu0 0.0
  %3279 = vmatprep.subr.mxu0 0.0
  %3280 = vmatpush1.msra.mxu0 0.0
  %3281 = vmatprep.subr.mxu0 0.0
  %3282 = vmatpush1.msra.mxu0 0.0
  %3283 = vmatprep.subr.mxu0 0.0
  %3284 = vmatpush1.msra.mxu0 0.0
  %3285 = vmatprep.subr.mxu0 0.0
  %3286 = vmatpush1.msra.mxu0 0.0
  %3287 = vmatprep.subr.mxu0 0.0
  %3288 = vmatpush1.msra.mxu0 0.0
  %3289 = vmatprep.mubr.f32.mxu0 0.0
  %3290 = vmatmul.mubr.f32.gmra.mrb[0].mxu0 %v3180
  %v3291 = vpop.f32.mrb[0].mxu0
  %v3292 = vadd.f32 %v3218, %v3291
  %v3293 = vpop.f32.mrb[0].mxu0
  %v3294 = vadd.f32 %v3222, %v3293
  %3295 = vdwg.mxu0
  %v3296 = vxor.u32 %v3292, 2147483648
  %v3297 = vmul.f32 %v3296, 1.442695
  %v3298 = vpow.pop %v3297
  %v3299 = vadd.f32 %v3298, 1.0
  %v3300 = vrcp.pop %v3299
  %v3301 = vmul.f32 1.0, %v3300
  %3303 = vrot.lane.b32.xlu0 %v3294, 64
  %v3304 = vpop.permute.xlu0 %3303
  %v3306 = vmul.f32 %v3301, %v3304
  %v3307 = vadd.f32 %v3294, %v3306
  %v3308 = vtanh.pop %v3307
  %v3309 = vsub.f32 1.0, %v3301
  %3311 = vrot.lane.b32.xlu0 %v3308, 64
  %v3312 = vpop.permute.xlu0 %3311
  %v3314 = vmul.f32 %v3309, %v3312
  %v3315 = vmul.f32 %v3301, %v2821
  %v3316 = vadd.f32 %v3314, %v3315
  %v3317 = vld [vmem:[%s4] sm:$0xff]
  %v3318 = vld [vmem:[%s4 + $0x8] sm:$0xff]
  %v3319 = vld [vmem:[%s4 + $0x10] sm:$0xff]
  %v3320 = vld [vmem:[%s4 + $0x18] sm:$0xff]
  %v3321 = vld [vmem:[%s4 + $0x20] sm:$0xff]
  %v3322 = vld [vmem:[%s4 + $0x28] sm:$0xff]
  %v3323 = vld [vmem:[%s4 + $0x30] sm:$0xff]
  %v3324 = vld [vmem:[%s4 + $0x38] sm:$0xff]
  %v3325 = vld [vmem:[%s5] sm:$0x1]
  %v3327 = vlaneseq
  %v3328 = vshrl.u32 %v3327, 7
  %v3329 = vsub.s32 0, %v3328
  %v3330 = vrot.slane %v3325, %v3329
  %3333 = vrot.lane.b32.xlu0 %v3316, 64
  %v3334 = vpop.permute.xlu0 %3333
  %v3335 = vsel %vm102, %v3334, 0
  %3337 = vmatprep.subr.mxu0 0.0
  %3338 = vmatpush1.msra.mxu0 %v3317
  %3339 = vmatprep.subr.mxu0 0.0
  %3340 = vmatpush1.msra.mxu0 %v3318
  %3341 = vmatprep.subr.mxu0 0.0
  %3342 = vmatpush1.msra.mxu0 %v3319
  %3343 = vmatprep.subr.mxu0 0.0
  %3344 = vmatpush1.msra.mxu0 %v3320
  %3345 = vmatprep.subr.mxu0 0.0
  %3346 = vmatpush1.msra.mxu0 %v3321
  %3347 = vmatprep.subr.mxu0 0.0
  %3348 = vmatpush1.msra.mxu0 %v3322
  %3349 = vmatprep.subr.mxu0 0.0
  %3350 = vmatpush1.msra.mxu0 %v3323
  %3351 = vmatprep.subr.mxu0 0.0
  %3352 = vmatpush1.msra.mxu0 %v3324
  %3353 = vmatprep.subr.mxu0 0.0
  %3354 = vmatpush1.msra.mxu0 0.0
  %3355 = vmatprep.subr.mxu0 0.0
  %3356 = vmatpush1.msra.mxu0 0.0
  %3357 = vmatprep.subr.mxu0 0.0
  %3358 = vmatpush1.msra.mxu0 0.0
  %3359 = vmatprep.subr.mxu0 0.0
  %3360 = vmatpush1.msra.mxu0 0.0
  %3361 = vmatprep.subr.mxu0 0.0
  %3362 = vmatpush1.msra.mxu0 0.0
  %3363 = vmatprep.subr.mxu0 0.0
  %3364 = vmatpush1.msra.mxu0 0.0
  %3365 = vmatprep.subr.mxu0 0.0
  %3366 = vmatpush1.msra.mxu0 0.0
  %3367 = vmatprep.subr.mxu0 0.0
  %3368 = vmatpush1.msra.mxu0 0.0
  %3369 = vmatprep.subr.mxu0 0.0
  %3370 = vmatpush1.msra.mxu0 0.0
  %3371 = vmatprep.subr.mxu0 0.0
  %3372 = vmatpush1.msra.mxu0 0.0
  %3373 = vmatprep.subr.mxu0 0.0
  %3374 = vmatpush1.msra.mxu0 0.0
  %3375 = vmatprep.subr.mxu0 0.0
  %3376 = vmatpush1.msra.mxu0 0.0
  %3377 = vmatprep.subr.mxu0 0.0
  %3378 = vmatpush1.msra.mxu0 0.0
  %3379 = vmatprep.subr.mxu0 0.0
  %3380 = vmatpush1.msra.mxu0 0.0
  %3381 = vmatprep.subr.mxu0 0.0
  %3382 = vmatpush1.msra.mxu0 0.0
  %3383 = vmatprep.subr.mxu0 0.0
  %3384 = vmatpush1.msra.mxu0 0.0
  %3385 = vmatprep.subr.mxu0 0.0
  %3386 = vmatpush1.msra.mxu0 0.0
  %3387 = vmatprep.subr.mxu0 0.0
  %3388 = vmatpush1.msra.mxu0 0.0
  %3389 = vmatprep.subr.mxu0 0.0
  %3390 = vmatpush1.msra.mxu0 0.0
  %3391 = vmatprep.subr.mxu0 0.0
  %3392 = vmatpush1.msra.mxu0 0.0
  %3393 = vmatprep.subr.mxu0 0.0
  %3394 = vmatpush1.msra.mxu0 0.0
  %3395 = vmatprep.subr.mxu0 0.0
  %3396 = vmatpush1.msra.mxu0 0.0
  %3397 = vmatprep.subr.mxu0 0.0
  %3398 = vmatpush1.msra.mxu0 0.0
  %3399 = vmatprep.subr.mxu0 0.0
  %3400 = vmatpush1.msra.mxu0 0.0
  %3401 = vmatprep.mubr.f32.mxu0 0.0
  %3402 = vmatmul.mubr.f32.gmra.mrb[0].mxu0 %v3335
  %v3403 = vpop.f32.mrb[0].mxu0
  %v3404 = vadd.f32 %v3330, %v3403
  %v3405 = vpop.f32.mrb[0].mxu0
  %3406 = vdwg.mxu0
  %v3407 = vmax.f32 %v3404, 0.0
  %v3408 = vld [vmem:[%s6] sm:$0xff]
  %v3409 = vld [vmem:[%s6 + $0x8] sm:$0xff]
  %v3410 = vld [vmem:[%s6 + $0x10] sm:$0xff]
  %v3411 = vld [vmem:[%s6 + $0x18] sm:$0xff]
  %v3412 = vld [vmem:[%s7] sm:$0x1]
  %v3414 = vlaneseq
  %v3415 = vshrl.u32 %v3414, 7
  %v3416 = vsub.s32 0, %v3415
  %v3417 = vrot.slane %v3412, %v3416
  %v3420 = vsel %vm448, %v3407, 0
  %3422 = vmatprep.subr.mxu0 0.0
  %3423 = vmatpush1.msra.mxu0 %v3408
  %3424 = vmatprep.subr.mxu0 0.0
  %3425 = vmatpush1.msra.mxu0 %v3409
  %3426 = vmatprep.subr.mxu0 0.0
  %3427 = vmatpush1.msra.mxu0 %v3410
  %3428 = vmatprep.subr.mxu0 0.0
  %3429 = vmatpush1.msra.mxu0 %v3411
  %3430 = vmatprep.subr.mxu0 0.0
  %3431 = vmatpush1.msra.mxu0 0.0
  %3432 = vmatprep.subr.mxu0 0.0
  %3433 = vmatpush1.msra.mxu0 0.0
  %3434 = vmatprep.subr.mxu0 0.0
  %3435 = vmatpush1.msra.mxu0 0.0
  %3436 = vmatprep.subr.mxu0 0.0
  %3437 = vmatpush1.msra.mxu0 0.0
  %3438 = vmatprep.subr.mxu0 0.0
  %3439 = vmatpush1.msra.mxu0 0.0
  %3440 = vmatprep.subr.mxu0 0.0
  %3441 = vmatpush1.msra.mxu0 0.0
  %3442 = vmatprep.subr.mxu0 0.0
  %3443 = vmatpush1.msra.mxu0 0.0
  %3444 = vmatprep.subr.mxu0 0.0
  %3445 = vmatpush1.msra.mxu0 0.0
  %3446 = vmatprep.subr.mxu0 0.0
  %3447 = vmatpush1.msra.mxu0 0.0
  %3448 = vmatprep.subr.mxu0 0.0
  %3449 = vmatpush1.msra.mxu0 0.0
  %3450 = vmatprep.subr.mxu0 0.0
  %3451 = vmatpush1.msra.mxu0 0.0
  %3452 = vmatprep.subr.mxu0 0.0
  %3453 = vmatpush1.msra.mxu0 0.0
  %3454 = vmatprep.subr.mxu0 0.0
  %3455 = vmatpush1.msra.mxu0 0.0
  %3456 = vmatprep.subr.mxu0 0.0
  %3457 = vmatpush1.msra.mxu0 0.0
  %3458 = vmatprep.subr.mxu0 0.0
  %3459 = vmatpush1.msra.mxu0 0.0
  %3460 = vmatprep.subr.mxu0 0.0
  %3461 = vmatpush1.msra.mxu0 0.0
  %3462 = vmatprep.subr.mxu0 0.0
  %3463 = vmatpush1.msra.mxu0 0.0
  %3464 = vmatprep.subr.mxu0 0.0
  %3465 = vmatpush1.msra.mxu0 0.0
  %3466 = vmatprep.subr.mxu0 0.0
  %3467 = vmatpush1.msra.mxu0 0.0
  %3468 = vmatprep.subr.mxu0 0.0
  %3469 = vmatpush1.msra.mxu0 0.0
  %3470 = vmatprep.subr.mxu0 0.0
  %3471 = vmatpush1.msra.mxu0 0.0
  %3472 = vmatprep.subr.mxu0 0.0
  %3473 = vmatpush1.msra.mxu0 0.0
  %3474 = vmatprep.subr.mxu0 0.0
  %3475 = vmatpush1.msra.mxu0 0.0
  %3476 = vmatprep.subr.mxu0 0.0
  %3477 = vmatpush1.msra.mxu0 0.0
  %3478 = vmatprep.subr.mxu0 0.0
  %3479 = vmatpush1.msra.mxu0 0.0
  %3480 = vmatprep.subr.mxu0 0.0
  %3481 = vmatpush1.msra.mxu0 0.0
  %3482 = vmatprep.subr.mxu0 0.0
  %3483 = vmatpush1.msra.mxu0 0.0
  %3484 = vmatprep.subr.mxu0 0.0
  %3485 = vmatpush1.msra.mxu0 0.0
  %3486 = vmatprep.mubr.f32.mxu0 0.0
  %3487 = vmatmul.mubr.f32.gmra.mrb[0].mxu0 %v3420
  %v3488 = vpop.f32.mrb[0].mxu0
  %v3489 = vadd.f32 %v3417, %v3488
  %v3490 = vpop.f32.mrb[0].mxu0
  %3491 = vdwg.mxu0
  %s3492 = scalar_lea.vmem %s10, 12
  %3493 = vst [vmem:[%s3492] sm:$0x3] %v3489
  %v3494 = vsel %vm523, %v3489, -inf
  %3495 = vmax.xlane.f32.xlu0 %v3494
  %v3496 = vpop.xlane.xlu0 %3495
  %vm3497 = vcmp.eq.f32.partialorder %v3489, %v3496
  %v3498 = vsel %vm3497, %v36, 128
  %v3499 = vsel %vm523, %v3498, 2147483647
  %v3500 = vand.u32 %v3499, 65535
  %v3501 = vshra.s32 %v3499, 16
  %v3502 = vcvt.s32.f32 %v3500
  %v3503 = vcvt.s32.f32 %v3501
  %3504 = vmin.xlane.f32.xlu0 %v3503
  %v3505 = vpop.xlane.xlu0 %3504
  %vm3506 = vcmp.eq.f32.partialorder %v3503, %v3505
  %v3507 = vsel %vm3506, %v3502, inf
  %3508 = vmin.xlane.f32.xlu0 %v3507
  %v3509 = vpop.xlane.xlu0 %3508
  %v3510 = vcvt.f32.s32 %v3509
  %v3511 = vcvt.f32.s32 %v3505
  %v3512 = vshll.u32 %v3511, 16
  %v3513 = vadd.s32 %v3512, %v3510
  %vm3514 = vcmp.eq.s32.totalorder %v36, %v3513
  %v3515 = vsel %vm3514, 1, 0
  %v3516 = vcvt.s32.f32 %v3515
  %v3517 = vld [vmem:[%s0] sm:$0xff]
  %v3518 = vld [vmem:[%s0 + $0x8] sm:$0xff]
  %v3519 = vld [vmem:[%s0 + $0x10] sm:$0xff]
  %v3520 = vld [vmem:[%s0 + $0x18] sm:$0xff]
  %v3521 = vld [vmem:[%s0 + $0x20] sm:$0xff]
  %v3522 = vld [vmem:[%s0 + $0x28] sm:$0xff]
  %v3523 = vld [vmem:[%s0 + $0x30] sm:$0xff]
  %v3524 = vld [vmem:[%s0 + $0x38] sm:$0xff]
  %v3525 = vld [vmem:[%s0 + $0x40] sm:$0xff]
  %v3526 = vld [vmem:[%s0 + $0x48] sm:$0xff]
  %v3527 = vld [vmem:[%s0 + $0x50] sm:$0xff]
  %v3528 = vld [vmem:[%s0 + $0x58] sm:$0xff]
  %v3529 = vld [vmem:[%s0 + $0x60] sm:$0xff]
  %v3530 = vld [vmem:[%s0 + $0x68] sm:$0xff]
  %v3531 = vld [vmem:[%s0 + $0x70] sm:$0xff]
  %v3532 = vld [vmem:[%s0 + $0x78] sm:$0xff]
  %v3533 = vld [vmem:[%s0 + $0x80] sm:$0xff]
  %v3534 = vld [vmem:[%s0 + $0x88] sm:$0xff]
  %v3535 = vld [vmem:[%s0 + $0x90] sm:$0xff]
  %v3536 = vld [vmem:[%s0 + $0x98] sm:$0xff]
  %v3537 = vld [vmem:[%s0 + $0xa0] sm:$0xff]
  %v3538 = vld [vmem:[%s0 + $0xa8] sm:$0xff]
  %v3539 = vld [vmem:[%s0 + $0xb0] sm:$0xff]
  %v3540 = vld [vmem:[%s0 + $0xb8] sm:$0xff]
  %v3541 = vld [vmem:[%s0 + $0xc0] sm:$0xff]
  %v3542 = vld [vmem:[%s0 + $0xc8] sm:$0xff]
  %v3543 = vld [vmem:[%s0 + $0xd0] sm:$0xff]
  %v3544 = vld [vmem:[%s0 + $0xd8] sm:$0xff]
  %v3545 = vld [vmem:[%s0 + $0xe0] sm:$0xff]
  %v3546 = vld [vmem:[%s0 + $0xe8] sm:$0xff]
  %v3547 = vld [vmem:[%s0 + $0xf0] sm:$0xff]
  %v3548 = vld [vmem:[%s0 + $0xf8] sm:$0xff]
  %v3549 = vld [vmem:[%s0 + $0x100] sm:$0xff]
  %v3550 = vld [vmem:[%s0 + $0x108] sm:$0xff]
  %v3551 = vld [vmem:[%s0 + $0x110] sm:$0xff]
  %v3552 = vld [vmem:[%s0 + $0x118] sm:$0xff]
  %v3553 = vld [vmem:[%s0 + $0x120] sm:$0xff]
  %v3554 = vld [vmem:[%s0 + $0x128] sm:$0xff]
  %v3555 = vld [vmem:[%s0 + $0x130] sm:$0xff]
  %v3556 = vld [vmem:[%s0 + $0x138] sm:$0xff]
  %v3557 = vld [vmem:[%s0 + $0x140] sm:$0xff]
  %v3558 = vld [vmem:[%s0 + $0x148] sm:$0xff]
  %v3559 = vld [vmem:[%s0 + $0x150] sm:$0xff]
  %v3560 = vld [vmem:[%s0 + $0x158] sm:$0xff]
  %v3561 = vld [vmem:[%s0 + $0x160] sm:$0xff]
  %v3562 = vld [vmem:[%s0 + $0x168] sm:$0xff]
  %v3563 = vld [vmem:[%s0 + $0x170] sm:$0xff]
  %v3564 = vld [vmem:[%s0 + $0x178] sm:$0xff]
  %v3565 = vld [vmem:[%s1] sm:$0x3]
  %v3567 = vlaneseq
  %v3568 = vshrl.u32 %v3567, 7
  %v3569 = vsub.s32 0, %v3568
  %v3570 = vrot.slane %v3565, %v3569
  %v3571 = vlaneseq
  %v3572 = vshrl.u32 %v3571, 7
  %v3573 = vsub.s32 1, %v3572
  %v3574 = vrot.slane %v3565, %v3573
  %v3577 = vsel %vm102, %v3178, 0
  %3579 = vmatprep.subr.mxu0 %v3518
  %3580 = vmatpush1.msra.mxu0 %v3517
  %3581 = vmatprep.subr.mxu0 %v3520
  %3582 = vmatpush1.msra.mxu0 %v3519
  %3583 = vmatprep.subr.mxu0 %v3522
  %3584 = vmatpush1.msra.mxu0 %v3521
  %3585 = vmatprep.subr.mxu0 %v3524
  %3586 = vmatpush1.msra.mxu0 %v3523
  %3587 = vmatprep.subr.mxu0 %v3526
  %3588 = vmatpush1.msra.mxu0 %v3525
  %3589 = vmatprep.subr.mxu0 %v3528
  %3590 = vmatpush1.msra.mxu0 %v3527
  %3591 = vmatprep.subr.mxu0 %v3530
  %3592 = vmatpush1.msra.mxu0 %v3529
  %3593 = vmatprep.subr.mxu0 %v3532
  %3594 = vmatpush1.msra.mxu0 %v3531
  %3595 = vmatprep.subr.mxu0 %v3534
  %3596 = vmatpush1.msra.mxu0 %v3533
  %3597 = vmatprep.subr.mxu0 %v3536
  %3598 = vmatpush1.msra.mxu0 %v3535
  %3599 = vmatprep.subr.mxu0 %v3538
  %3600 = vmatpush1.msra.mxu0 %v3537
  %3601 = vmatprep.subr.mxu0 %v3540
  %3602 = vmatpush1.msra.mxu0 %v3539
  %3603 = vmatprep.subr.mxu0 %v3542
  %3604 = vmatpush1.msra.mxu0 %v3541
  %3605 = vmatprep.subr.mxu0 %v3544
  %3606 = vmatpush1.msra.mxu0 %v3543
  %3607 = vmatprep.subr.mxu0 %v3546
  %3608 = vmatpush1.msra.mxu0 %v3545
  %3609 = vmatprep.subr.mxu0 %v3548
  %3610 = vmatpush1.msra.mxu0 %v3547
  %3611 = vmatprep.subr.mxu0 %v3550
  %3612 = vmatpush1.msra.mxu0 %v3549
  %3613 = vmatprep.subr.mxu0 %v3552
  %3614 = vmatpush1.msra.mxu0 %v3551
  %3615 = vmatprep.subr.mxu0 %v3554
  %3616 = vmatpush1.msra.mxu0 %v3553
  %3617 = vmatprep.subr.mxu0 %v3556
  %3618 = vmatpush1.msra.mxu0 %v3555
  %3619 = vmatprep.subr.mxu0 %v3558
  %3620 = vmatpush1.msra.mxu0 %v3557
  %3621 = vmatprep.subr.mxu0 %v3560
  %3622 = vmatpush1.msra.mxu0 %v3559
  %3623 = vmatprep.subr.mxu0 %v3562
  %3624 = vmatpush1.msra.mxu0 %v3561
  %3625 = vmatprep.subr.mxu0 %v3564
  %3626 = vmatpush1.msra.mxu0 %v3563
  %3627 = vmatprep.subr.mxu0 0.0
  %3628 = vmatpush1.msra.mxu0 0.0
  %3629 = vmatprep.subr.mxu0 0.0
  %3630 = vmatpush1.msra.mxu0 0.0
  %3631 = vmatprep.subr.mxu0 0.0
  %3632 = vmatpush1.msra.mxu0 0.0
  %3633 = vmatprep.subr.mxu0 0.0
  %3634 = vmatpush1.msra.mxu0 0.0
  %3635 = vmatprep.subr.mxu0 0.0
  %3636 = vmatpush1.msra.mxu0 0.0
  %3637 = vmatprep.subr.mxu0 0.0
  %3638 = vmatpush1.msra.mxu0 0.0
  %3639 = vmatprep.subr.mxu0 0.0
  %3640 = vmatpush1.msra.mxu0 0.0
  %3641 = vmatprep.subr.mxu0 0.0
  %3642 = vmatpush1.msra.mxu0 0.0
  %3643 = vmatprep.mubr.f32.mxu0 %v3577
  %3644 = vmatmul.mubr.f32.gmra.mrb[0].mxu0 %v3516
  %v3645 = vpop.f32.mrb[0].mxu0
  %v3646 = vadd.f32 %v3570, %v3645
  %v3647 = vpop.f32.mrb[0].mxu0
  %v3648 = vadd.f32 %v3574, %v3647
  %3649 = vdwg.mxu0
  %v3650 = vxor.u32 %v3646, 2147483648
  %v3651 = vmul.f32 %v3650, 1.442695
  %v3652 = vpow.pop %v3651
  %v3653 = vadd.f32 %v3652, 1.0
  %v3654 = vrcp.pop %v3653
  %v3655 = vmul.f32 1.0, %v3654
  %3657 = vrot.lane.b32.xlu0 %v3648, 64
  %v3658 = vpop.permute.xlu0 %3657
  %v3660 = vmul.f32 %v3655, %v3658
  %v3661 = vadd.f32 %v3648, %v3660
  %v3662 = vtanh.pop %v3661
  %v3663 = vsub.f32 1.0, %v3655
  %3665 = vrot.lane.b32.xlu0 %v3662, 64
  %v3666 = vpop.permute.xlu0 %3665
  %v3668 = vmul.f32 %v3663, %v3666
  %v3669 = vmul.f32 %v3655, %v3175
  %v3670 = vadd.f32 %v3668, %v3669
  %3672 = vrot.lane.b32.xlu0 %v3670, 64
  %v3673 = vpop.permute.xlu0 %3672
  %v3675 = vsel %vm102, %v3673, %v3316
  %v3676 = vld [vmem:[%s2] sm:$0xff]
  %v3677 = vld [vmem:[%s2 + $0x8] sm:$0xff]
  %v3678 = vld [vmem:[%s2 + $0x10] sm:$0xff]
  %v3679 = vld [vmem:[%s2 + $0x18] sm:$0xff]
  %v3680 = vld [vmem:[%s2 + $0x20] sm:$0xff]
  %v3681 = vld [vmem:[%s2 + $0x28] sm:$0xff]
  %v3682 = vld [vmem:[%s2 + $0x30] sm:$0xff]
  %v3683 = vld [vmem:[%s2 + $0x38] sm:$0xff]
  %v3684 = vld [vmem:[%s2 + $0x40] sm:$0xff]
  %v3685 = vld [vmem:[%s2 + $0x48] sm:$0xff]
  %v3686 = vld [vmem:[%s2 + $0x50] sm:$0xff]
  %v3687 = vld [vmem:[%s2 + $0x58] sm:$0xff]
  %v3688 = vld [vmem:[%s2 + $0x60] sm:$0xff]
  %v3689 = vld [vmem:[%s2 + $0x68] sm:$0xff]
  %v3690 = vld [vmem:[%s2 + $0x70] sm:$0xff]
  %v3691 = vld [vmem:[%s2 + $0x78] sm:$0xff]
  %v3692 = vld [vmem:[%s2 + $0x80] sm:$0xff]
  %v3693 = vld [vmem:[%s2 + $0x88] sm:$0xff]
  %v3694 = vld [vmem:[%s2 + $0x90] sm:$0xff]
  %v3695 = vld [vmem:[%s2 + $0x98] sm:$0xff]
  %v3696 = vld [vmem:[%s2 + $0xa0] sm:$0xff]
  %v3697 = vld [vmem:[%s2 + $0xa8] sm:$0xff]
  %v3698 = vld [vmem:[%s2 + $0xb0] sm:$0xff]
  %v3699 = vld [vmem:[%s2 + $0xb8] sm:$0xff]
  %v3700 = vld [vmem:[%s2 + $0xc0] sm:$0xff]
  %v3701 = vld [vmem:[%s2 + $0xc8] sm:$0xff]
  %v3702 = vld [vmem:[%s2 + $0xd0] sm:$0xff]
  %v3703 = vld [vmem:[%s2 + $0xd8] sm:$0xff]
  %v3704 = vld [vmem:[%s2 + $0xe0] sm:$0xff]
  %v3705 = vld [vmem:[%s2 + $0xe8] sm:$0xff]
  %v3706 = vld [vmem:[%s2 + $0xf0] sm:$0xff]
  %v3707 = vld [vmem:[%s2 + $0xf8] sm:$0xff]
  %v3708 = vld [vmem:[%s3] sm:$0x3]
  %v3710 = vlaneseq
  %v3711 = vshrl.u32 %v3710, 7
  %v3712 = vsub.s32 0, %v3711
  %v3713 = vrot.slane %v3708, %v3712
  %v3714 = vlaneseq
  %v3715 = vshrl.u32 %v3714, 7
  %v3716 = vsub.s32 1, %v3715
  %v3717 = vrot.slane %v3708, %v3716
  %3720 = vmatprep.subr.mxu0 %v3677
  %3721 = vmatpush1.msra.mxu0 %v3676
  %3722 = vmatprep.subr.mxu0 %v3679
  %3723 = vmatpush1.msra.mxu0 %v3678
  %3724 = vmatprep.subr.mxu0 %v3681
  %3725 = vmatpush1.msra.mxu0 %v3680
  %3726 = vmatprep.subr.mxu0 %v3683
  %3727 = vmatpush1.msra.mxu0 %v3682
  %3728 = vmatprep.subr.mxu0 %v3685
  %3729 = vmatpush1.msra.mxu0 %v3684
  %3730 = vmatprep.subr.mxu0 %v3687
  %3731 = vmatpush1.msra.mxu0 %v3686
  %3732 = vmatprep.subr.mxu0 %v3689
  %3733 = vmatpush1.msra.mxu0 %v3688
  %3734 = vmatprep.subr.mxu0 %v3691
  %3735 = vmatpush1.msra.mxu0 %v3690
  %3736 = vmatprep.subr.mxu0 %v3693
  %3737 = vmatpush1.msra.mxu0 %v3692
  %3738 = vmatprep.subr.mxu0 %v3695
  %3739 = vmatpush1.msra.mxu0 %v3694
  %3740 = vmatprep.subr.mxu0 %v3697
  %3741 = vmatpush1.msra.mxu0 %v3696
  %3742 = vmatprep.subr.mxu0 %v3699
  %3743 = vmatpush1.msra.mxu0 %v3698
  %3744 = vmatprep.subr.mxu0 %v3701
  %3745 = vmatpush1.msra.mxu0 %v3700
  %3746 = vmatprep.subr.mxu0 %v3703
  %3747 = vmatpush1.msra.mxu0 %v3702
  %3748 = vmatprep.subr.mxu0 %v3705
  %3749 = vmatpush1.msra.mxu0 %v3704
  %3750 = vmatprep.subr.mxu0 %v3707
  %3751 = vmatpush1.msra.mxu0 %v3706
  %3752 = vmatprep.subr.mxu0 0.0
  %3753 = vmatpush1.msra.mxu0 0.0
  %3754 = vmatprep.subr.mxu0 0.0
  %3755 = vmatpush1.msra.mxu0 0.0
  %3756 = vmatprep.subr.mxu0 0.0
  %3757 = vmatpush1.msra.mxu0 0.0
  %3758 = vmatprep.subr.mxu0 0.0
  %3759 = vmatpush1.msra.mxu0 0.0
  %3760 = vmatprep.subr.mxu0 0.0
  %3761 = vmatpush1.msra.mxu0 0.0
  %3762 = vmatprep.subr.mxu0 0.0
  %3763 = vmatpush1.msra.mxu0 0.0
  %3764 = vmatprep.subr.mxu0 0.0
  %3765 = vmatpush1.msra.mxu0 0.0
  %3766 = vmatprep.subr.mxu0 0.0
  %3767 = vmatpush1.msra.mxu0 0.0
  %3768 = vmatprep.subr.mxu0 0.0
  %3769 = vmatpush1.msra.mxu0 0.0
  %3770 = vmatprep.subr.mxu0 0.0
  %3771 = vmatpush1.msra.mxu0 0.0
  %3772 = vmatprep.subr.mxu0 0.0
  %3773 = vmatpush1.msra.mxu0 0.0
  %3774 = vmatprep.subr.mxu0 0.0
  %3775 = vmatpush1.msra.mxu0 0.0
  %3776 = vmatprep.subr.mxu0 0.0
  %3777 = vmatpush1.msra.mxu0 0.0
  %3778 = vmatprep.subr.mxu0 0.0
  %3779 = vmatpush1.msra.mxu0 0.0
  %3780 = vmatprep.subr.mxu0 0.0
  %3781 = vmatpush1.msra.mxu0 0.0
  %3782 = vmatprep.subr.mxu0 0.0
  %3783 = vmatpush1.msra.mxu0 0.0
  %3784 = vmatprep.mubr.f32.mxu0 0.0
  %3785 = vmatmul.mubr.f32.gmra.mrb[0].mxu0 %v3675
  %v3786 = vpop.f32.mrb[0].mxu0
  %v3787 = vadd.f32 %v3713, %v3786
  %v3788 = vpop.f32.mrb[0].mxu0
  %v3789 = vadd.f32 %v3717, %v3788
  %3790 = vdwg.mxu0
  %v3791 = vxor.u32 %v3787, 2147483648
  %v3792 = vmul.f32 %v3791, 1.442695
  %v3793 = vpow.pop %v3792
  %v3794 = vadd.f32 %v3793, 1.0
  %v3795 = vrcp.pop %v3794
  %v3796 = vmul.f32 1.0, %v3795
  %3798 = vrot.lane.b32.xlu0 %v3789, 64
  %v3799 = vpop.permute.xlu0 %3798
  %v3801 = vmul.f32 %v3796, %v3799
  %v3802 = vadd.f32 %v3789, %v3801
  %v3803 = vtanh.pop %v3802
  %v3804 = vsub.f32 1.0, %v3796
  %3806 = vrot.lane.b32.xlu0 %v3803, 64
  %v3807 = vpop.permute.xlu0 %3806
  %v3809 = vmul.f32 %v3804, %v3807
  %v3810 = vmul.f32 %v3796, %v3316
  %v3811 = vadd.f32 %v3809, %v3810
  %v3812 = vld [vmem:[%s4] sm:$0xff]
  %v3813 = vld [vmem:[%s4 + $0x8] sm:$0xff]
  %v3814 = vld [vmem:[%s4 + $0x10] sm:$0xff]
  %v3815 = vld [vmem:[%s4 + $0x18] sm:$0xff]
  %v3816 = vld [vmem:[%s4 + $0x20] sm:$0xff]
  %v3817 = vld [vmem:[%s4 + $0x28] sm:$0xff]
  %v3818 = vld [vmem:[%s4 + $0x30] sm:$0xff]
  %v3819 = vld [vmem:[%s4 + $0x38] sm:$0xff]
  %v3820 = vld [vmem:[%s5] sm:$0x1]
  %v3822 = vlaneseq
  %v3823 = vshrl.u32 %v3822, 7
  %v3824 = vsub.s32 0, %v3823
  %v3825 = vrot.slane %v3820, %v3824
  %3828 = vrot.lane.b32.xlu0 %v3811, 64
  %v3829 = vpop.permute.xlu0 %3828
  %v3830 = vsel %vm102, %v3829, 0
  %3832 = vmatprep.subr.mxu0 0.0
  %3833 = vmatpush1.msra.mxu0 %v3812
  %3834 = vmatprep.subr.mxu0 0.0
  %3835 = vmatpush1.msra.mxu0 %v3813
  %3836 = vmatprep.subr.mxu0 0.0
  %3837 = vmatpush1.msra.mxu0 %v3814
  %3838 = vmatprep.subr.mxu0 0.0
  %3839 = vmatpush1.msra.mxu0 %v3815
  %3840 = vmatprep.subr.mxu0 0.0
  %3841 = vmatpush1.msra.mxu0 %v3816
  %3842 = vmatprep.subr.mxu0 0.0
  %3843 = vmatpush1.msra.mxu0 %v3817
  %3844 = vmatprep.subr.mxu0 0.0
  %3845 = vmatpush1.msra.mxu0 %v3818
  %3846 = vmatprep.subr.mxu0 0.0
  %3847 = vmatpush1.msra.mxu0 %v3819
  %3848 = vmatprep.subr.mxu0 0.0
  %3849 = vmatpush1.msra.mxu0 0.0
  %3850 = vmatprep.subr.mxu0 0.0
  %3851 = vmatpush1.msra.mxu0 0.0
  %3852 = vmatprep.subr.mxu0 0.0
  %3853 = vmatpush1.msra.mxu0 0.0
  %3854 = vmatprep.subr.mxu0 0.0
  %3855 = vmatpush1.msra.mxu0 0.0
  %3856 = vmatprep.subr.mxu0 0.0
  %3857 = vmatpush1.msra.mxu0 0.0
  %3858 = vmatprep.subr.mxu0 0.0
  %3859 = vmatpush1.msra.mxu0 0.0
  %3860 = vmatprep.subr.mxu0 0.0
  %3861 = vmatpush1.msra.mxu0 0.0
  %3862 = vmatprep.subr.mxu0 0.0
  %3863 = vmatpush1.msra.mxu0 0.0
  %3864 = vmatprep.subr.mxu0 0.0
  %3865 = vmatpush1.msra.mxu0 0.0
  %3866 = vmatprep.subr.mxu0 0.0
  %3867 = vmatpush1.msra.mxu0 0.0
  %3868 = vmatprep.subr.mxu0 0.0
  %3869 = vmatpush1.msra.mxu0 0.0
  %3870 = vmatprep.subr.mxu0 0.0
  %3871 = vmatpush1.msra.mxu0 0.0
  %3872 = vmatprep.subr.mxu0 0.0
  %3873 = vmatpush1.msra.mxu0 0.0
  %3874 = vmatprep.subr.mxu0 0.0
  %3875 = vmatpush1.msra.mxu0 0.0
  %3876 = vmatprep.subr.mxu0 0.0
  %3877 = vmatpush1.msra.mxu0 0.0
  %3878 = vmatprep.subr.mxu0 0.0
  %3879 = vmatpush1.msra.mxu0 0.0
  %3880 = vmatprep.subr.mxu0 0.0
  %3881 = vmatpush1.msra.mxu0 0.0
  %3882 = vmatprep.subr.mxu0 0.0
  %3883 = vmatpush1.msra.mxu0 0.0
  %3884 = vmatprep.subr.mxu0 0.0
  %3885 = vmatpush1.msra.mxu0 0.0
  %3886 = vmatprep.subr.mxu0 0.0
  %3887 = vmatpush1.msra.mxu0 0.0
  %3888 = vmatprep.subr.mxu0 0.0
  %3889 = vmatpush1.msra.mxu0 0.0
  %3890 = vmatprep.subr.mxu0 0.0
  %3891 = vmatpush1.msra.mxu0 0.0
  %3892 = vmatprep.subr.mxu0 0.0
  %3893 = vmatpush1.msra.mxu0 0.0
  %3894 = vmatprep.subr.mxu0 0.0
  %3895 = vmatpush1.msra.mxu0 0.0
  %3896 = vmatprep.mubr.f32.mxu0 0.0
  %3897 = vmatmul.mubr.f32.gmra.mrb[0].mxu0 %v3830
  %v3898 = vpop.f32.mrb[0].mxu0
  %v3899 = vadd.f32 %v3825, %v3898
  %v3900 = vpop.f32.mrb[0].mxu0
  %3901 = vdwg.mxu0
  %v3902 = vmax.f32 %v3899, 0.0
  %v3903 = vld [vmem:[%s6] sm:$0xff]
  %v3904 = vld [vmem:[%s6 + $0x8] sm:$0xff]
  %v3905 = vld [vmem:[%s6 + $0x10] sm:$0xff]
  %v3906 = vld [vmem:[%s6 + $0x18] sm:$0xff]
  %v3907 = vld [vmem:[%s7] sm:$0x1]
  %v3909 = vlaneseq
  %v3910 = vshrl.u32 %v3909, 7
  %v3911 = vsub.s32 0, %v3910
  %v3912 = vrot.slane %v3907, %v3911
  %v3915 = vsel %vm448, %v3902, 0
  %3917 = vmatprep.subr.mxu0 0.0
  %3918 = vmatpush1.msra.mxu0 %v3903
  %3919 = vmatprep.subr.mxu0 0.0
  %3920 = vmatpush1.msra.mxu0 %v3904
  %3921 = vmatprep.subr.mxu0 0.0
  %3922 = vmatpush1.msra.mxu0 %v3905
  %3923 = vmatprep.subr.mxu0 0.0
  %3924 = vmatpush1.msra.mxu0 %v3906
  %3925 = vmatprep.subr.mxu0 0.0
  %3926 = vmatpush1.msra.mxu0 0.0
  %3927 = vmatprep.subr.mxu0 0.0
  %3928 = vmatpush1.msra.mxu0 0.0
  %3929 = vmatprep.subr.mxu0 0.0
  %3930 = vmatpush1.msra.mxu0 0.0
  %3931 = vmatprep.subr.mxu0 0.0
  %3932 = vmatpush1.msra.mxu0 0.0
  %3933 = vmatprep.subr.mxu0 0.0
  %3934 = vmatpush1.msra.mxu0 0.0
  %3935 = vmatprep.subr.mxu0 0.0
  %3936 = vmatpush1.msra.mxu0 0.0
  %3937 = vmatprep.subr.mxu0 0.0
  %3938 = vmatpush1.msra.mxu0 0.0
  %3939 = vmatprep.subr.mxu0 0.0
  %3940 = vmatpush1.msra.mxu0 0.0
  %3941 = vmatprep.subr.mxu0 0.0
  %3942 = vmatpush1.msra.mxu0 0.0
  %3943 = vmatprep.subr.mxu0 0.0
  %3944 = vmatpush1.msra.mxu0 0.0
  %3945 = vmatprep.subr.mxu0 0.0
  %3946 = vmatpush1.msra.mxu0 0.0
  %3947 = vmatprep.subr.mxu0 0.0
  %3948 = vmatpush1.msra.mxu0 0.0
  %3949 = vmatprep.subr.mxu0 0.0
  %3950 = vmatpush1.msra.mxu0 0.0
  %3951 = vmatprep.subr.mxu0 0.0
  %3952 = vmatpush1.msra.mxu0 0.0
  %3953 = vmatprep.subr.mxu0 0.0
  %3954 = vmatpush1.msra.mxu0 0.0
  %3955 = vmatprep.subr.mxu0 0.0
  %3956 = vmatpush1.msra.mxu0 0.0
  %3957 = vmatprep.subr.mxu0 0.0
  %3958 = vmatpush1.msra.mxu0 0.0
  %3959 = vmatprep.subr.mxu0 0.0
  %3960 = vmatpush1.msra.mxu0 0.0
  %3961 = vmatprep.subr.mxu0 0.0
  %3962 = vmatpush1.msra.mxu0 0.0
  %3963 = vmatprep.subr.mxu0 0.0
  %3964 = vmatpush1.msra.mxu0 0.0
  %3965 = vmatprep.subr.mxu0 0.0
  %3966 = vmatpush1.msra.mxu0 0.0
  %3967 = vmatprep.subr.mxu0 0.0
  %3968 = vmatpush1.msra.mxu0 0.0
  %3969 = vmatprep.subr.mxu0 0.0
  %3970 = vmatpush1.msra.mxu0 0.0
  %3971 = vmatprep.subr.mxu0 0.0
  %3972 = vmatpush1.msra.mxu0 0.0
  %3973 = vmatprep.subr.mxu0 0.0
  %3974 = vmatpush1.msra.mxu0 0.0
  %3975 = vmatprep.subr.mxu0 0.0
  %3976 = vmatpush1.msra.mxu0 0.0
  %3977 = vmatprep.subr.mxu0 0.0
  %3978 = vmatpush1.msra.mxu0 0.0
  %3979 = vmatprep.subr.mxu0 0.0
  %3980 = vmatpush1.msra.mxu0 0.0
  %3981 = vmatprep.mubr.f32.mxu0 0.0
  %3982 = vmatmul.mubr.f32.gmra.mrb[0].mxu0 %v3915
  %v3983 = vpop.f32.mrb[0].mxu0
  %v3984 = vadd.f32 %v3912, %v3983
  %v3985 = vpop.f32.mrb[0].mxu0
  %3986 = vdwg.mxu0
  %s3987 = scalar_lea.vmem %s10, 14
  %3988 = vst [vmem:[%s3987] sm:$0x3] %v3984
  %v3989 = vsel %vm523, %v3984, -inf
  %3990 = vmax.xlane.f32.xlu0 %v3989
  %v3991 = vpop.xlane.xlu0 %3990
  %vm3992 = vcmp.eq.f32.partialorder %v3984, %v3991
  %v3993 = vsel %vm3992, %v36, 128
  %v3994 = vsel %vm523, %v3993, 2147483647
  %v3995 = vand.u32 %v3994, 65535
  %v3996 = vshra.s32 %v3994, 16
  %v3997 = vcvt.s32.f32 %v3995
  %v3998 = vcvt.s32.f32 %v3996
  %3999 = vmin.xlane.f32.xlu0 %v3998
  %v4000 = vpop.xlane.xlu0 %3999
  %vm4001 = vcmp.eq.f32.partialorder %v3998, %v4000
  %v4002 = vsel %vm4001, %v3997, inf
  %4003 = vmin.xlane.f32.xlu0 %v4002
  %v4004 = vpop.xlane.xlu0 %4003
  %v4005 = vcvt.f32.s32 %v4004
  %v4006 = vcvt.f32.s32 %v4000
  %v4007 = vshll.u32 %v4006, 16
  %v4008 = vadd.s32 %v4007, %v4005
  %vm4009 = vcmp.eq.s32.totalorder %v36, %v4008
  %v4010 = vsel %vm4009, 1, 0
  %v4011 = vcvt.s32.f32 %v4010
  %v4012 = vld [vmem:[%s0] sm:$0xff]
  %v4013 = vld [vmem:[%s0 + $0x8] sm:$0xff]
  %v4014 = vld [vmem:[%s0 + $0x10] sm:$0xff]
  %v4015 = vld [vmem:[%s0 + $0x18] sm:$0xff]
  %v4016 = vld [vmem:[%s0 + $0x20] sm:$0xff]
  %v4017 = vld [vmem:[%s0 + $0x28] sm:$0xff]
  %v4018 = vld [vmem:[%s0 + $0x30] sm:$0xff]
  %v4019 = vld [vmem:[%s0 + $0x38] sm:$0xff]
  %v4020 = vld [vmem:[%s0 + $0x40] sm:$0xff]
  %v4021 = vld [vmem:[%s0 + $0x48] sm:$0xff]
  %v4022 = vld [vmem:[%s0 + $0x50] sm:$0xff]
  %v4023 = vld [vmem:[%s0 + $0x58] sm:$0xff]
  %v4024 = vld [vmem:[%s0 + $0x60] sm:$0xff]
  %v4025 = vld [vmem:[%s0 + $0x68] sm:$0xff]
  %v4026 = vld [vmem:[%s0 + $0x70] sm:$0xff]
  %v4027 = vld [vmem:[%s0 + $0x78] sm:$0xff]
  %v4028 = vld [vmem:[%s0 + $0x80] sm:$0xff]
  %v4029 = vld [vmem:[%s0 + $0x88] sm:$0xff]
  %v4030 = vld [vmem:[%s0 + $0x90] sm:$0xff]
  %v4031 = vld [vmem:[%s0 + $0x98] sm:$0xff]
  %v4032 = vld [vmem:[%s0 + $0xa0] sm:$0xff]
  %v4033 = vld [vmem:[%s0 + $0xa8] sm:$0xff]
  %v4034 = vld [vmem:[%s0 + $0xb0] sm:$0xff]
  %v4035 = vld [vmem:[%s0 + $0xb8] sm:$0xff]
  %v4036 = vld [vmem:[%s0 + $0xc0] sm:$0xff]
  %v4037 = vld [vmem:[%s0 + $0xc8] sm:$0xff]
  %v4038 = vld [vmem:[%s0 + $0xd0] sm:$0xff]
  %v4039 = vld [vmem:[%s0 + $0xd8] sm:$0xff]
  %v4040 = vld [vmem:[%s0 + $0xe0] sm:$0xff]
  %v4041 = vld [vmem:[%s0 + $0xe8] sm:$0xff]
  %v4042 = vld [vmem:[%s0 + $0xf0] sm:$0xff]
  %v4043 = vld [vmem:[%s0 + $0xf8] sm:$0xff]
  %v4044 = vld [vmem:[%s0 + $0x100] sm:$0xff]
  %v4045 = vld [vmem:[%s0 + $0x108] sm:$0xff]
  %v4046 = vld [vmem:[%s0 + $0x110] sm:$0xff]
  %v4047 = vld [vmem:[%s0 + $0x118] sm:$0xff]
  %v4048 = vld [vmem:[%s0 + $0x120] sm:$0xff]
  %v4049 = vld [vmem:[%s0 + $0x128] sm:$0xff]
  %v4050 = vld [vmem:[%s0 + $0x130] sm:$0xff]
  %v4051 = vld [vmem:[%s0 + $0x138] sm:$0xff]
  %v4052 = vld [vmem:[%s0 + $0x140] sm:$0xff]
  %v4053 = vld [vmem:[%s0 + $0x148] sm:$0xff]
  %v4054 = vld [vmem:[%s0 + $0x150] sm:$0xff]
  %v4055 = vld [vmem:[%s0 + $0x158] sm:$0xff]
  %v4056 = vld [vmem:[%s0 + $0x160] sm:$0xff]
  %v4057 = vld [vmem:[%s0 + $0x168] sm:$0xff]
  %v4058 = vld [vmem:[%s0 + $0x170] sm:$0xff]
  %v4059 = vld [vmem:[%s0 + $0x178] sm:$0xff]
  %v4060 = vld [vmem:[%s1] sm:$0x3]
  %v4062 = vlaneseq
  %v4063 = vshrl.u32 %v4062, 7
  %v4064 = vsub.s32 0, %v4063
  %v4065 = vrot.slane %v4060, %v4064
  %v4066 = vlaneseq
  %v4067 = vshrl.u32 %v4066, 7
  %v4068 = vsub.s32 1, %v4067
  %v4069 = vrot.slane %v4060, %v4068
  %v4072 = vsel %vm102, %v3673, 0
  %4074 = vmatprep.subr.mxu0 %v4013
  %4075 = vmatpush1.msra.mxu0 %v4012
  %4076 = vmatprep.subr.mxu0 %v4015
  %4077 = vmatpush1.msra.mxu0 %v4014
  %4078 = vmatprep.subr.mxu0 %v4017
  %4079 = vmatpush1.msra.mxu0 %v4016
  %4080 = vmatprep.subr.mxu0 %v4019
  %4081 = vmatpush1.msra.mxu0 %v4018
  %4082 = vmatprep.subr.mxu0 %v4021
  %4083 = vmatpush1.msra.mxu0 %v4020
  %4084 = vmatprep.subr.mxu0 %v4023
  %4085 = vmatpush1.msra.mxu0 %v4022
  %4086 = vmatprep.subr.mxu0 %v4025
  %4087 = vmatpush1.msra.mxu0 %v4024
  %4088 = vmatprep.subr.mxu0 %v4027
  %4089 = vmatpush1.msra.mxu0 %v4026
  %4090 = vmatprep.subr.mxu0 %v4029
  %4091 = vmatpush1.msra.mxu0 %v4028
  %4092 = vmatprep.subr.mxu0 %v4031
  %4093 = vmatpush1.msra.mxu0 %v4030
  %4094 = vmatprep.subr.mxu0 %v4033
  %4095 = vmatpush1.msra.mxu0 %v4032
  %4096 = vmatprep.subr.mxu0 %v4035
  %4097 = vmatpush1.msra.mxu0 %v4034
  %4098 = vmatprep.subr.mxu0 %v4037
  %4099 = vmatpush1.msra.mxu0 %v4036
  %4100 = vmatprep.subr.mxu0 %v4039
  %4101 = vmatpush1.msra.mxu0 %v4038
  %4102 = vmatprep.subr.mxu0 %v4041
  %4103 = vmatpush1.msra.mxu0 %v4040
  %4104 = vmatprep.subr.mxu0 %v4043
  %4105 = vmatpush1.msra.mxu0 %v4042
  %4106 = vmatprep.subr.mxu0 %v4045
  %4107 = vmatpush1.msra.mxu0 %v4044
  %4108 = vmatprep.subr.mxu0 %v4047
  %4109 = vmatpush1.msra.mxu0 %v4046
  %4110 = vmatprep.subr.mxu0 %v4049
  %4111 = vmatpush1.msra.mxu0 %v4048
  %4112 = vmatprep.subr.mxu0 %v4051
  %4113 = vmatpush1.msra.mxu0 %v4050
  %4114 = vmatprep.subr.mxu0 %v4053
  %4115 = vmatpush1.msra.mxu0 %v4052
  %4116 = vmatprep.subr.mxu0 %v4055
  %4117 = vmatpush1.msra.mxu0 %v4054
  %4118 = vmatprep.subr.mxu0 %v4057
  %4119 = vmatpush1.msra.mxu0 %v4056
  %4120 = vmatprep.subr.mxu0 %v4059
  %4121 = vmatpush1.msra.mxu0 %v4058
  %4122 = vmatprep.subr.mxu0 0.0
  %4123 = vmatpush1.msra.mxu0 0.0
  %4124 = vmatprep.subr.mxu0 0.0
  %4125 = vmatpush1.msra.mxu0 0.0
  %4126 = vmatprep.subr.mxu0 0.0
  %4127 = vmatpush1.msra.mxu0 0.0
  %4128 = vmatprep.subr.mxu0 0.0
  %4129 = vmatpush1.msra.mxu0 0.0
  %4130 = vmatprep.subr.mxu0 0.0
  %4131 = vmatpush1.msra.mxu0 0.0
  %4132 = vmatprep.subr.mxu0 0.0
  %4133 = vmatpush1.msra.mxu0 0.0
  %4134 = vmatprep.subr.mxu0 0.0
  %4135 = vmatpush1.msra.mxu0 0.0
  %4136 = vmatprep.subr.mxu0 0.0
  %4137 = vmatpush1.msra.mxu0 0.0
  %4138 = vmatprep.mubr.f32.mxu0 %v4072
  %4139 = vmatmul.mubr.f32.gmra.mrb[0].mxu0 %v4011
  %v4140 = vpop.f32.mrb[0].mxu0
  %v4141 = vadd.f32 %v4065, %v4140
  %v4142 = vpop.f32.mrb[0].mxu0
  %v4143 = vadd.f32 %v4069, %v4142
  %4144 = vdwg.mxu0
  %v4145 = vxor.u32 %v4141, 2147483648
  %v4146 = vmul.f32 %v4145, 1.442695
  %v4147 = vpow.pop %v4146
  %v4148 = vadd.f32 %v4147, 1.0
  %v4149 = vrcp.pop %v4148
  %v4150 = vmul.f32 1.0, %v4149
  %4152 = vrot.lane.b32.xlu0 %v4143, 64
  %v4153 = vpop.permute.xlu0 %4152
  %v4155 = vmul.f32 %v4150, %v4153
  %v4156 = vadd.f32 %v4143, %v4155
  %v4157 = vtanh.pop %v4156
  %v4158 = vsub.f32 1.0, %v4150
  %4160 = vrot.lane.b32.xlu0 %v4157, 64
  %v4161 = vpop.permute.xlu0 %4160
  %v4163 = vmul.f32 %v4158, %v4161
  %v4164 = vmul.f32 %v4150, %v3670
  %v4165 = vadd.f32 %v4163, %v4164
  %4167 = vrot.lane.b32.xlu0 %v4165, 64
  %v4168 = vpop.permute.xlu0 %4167
  %v4170 = vsel %vm102, %v4168, %v3811
  %v4171 = vld [vmem:[%s2] sm:$0xff]
  %v4172 = vld [vmem:[%s2 + $0x8] sm:$0xff]
  %v4173 = vld [vmem:[%s2 + $0x10] sm:$0xff]
  %v4174 = vld [vmem:[%s2 + $0x18] sm:$0xff]
  %v4175 = vld [vmem:[%s2 + $0x20] sm:$0xff]
  %v4176 = vld [vmem:[%s2 + $0x28] sm:$0xff]
  %v4177 = vld [vmem:[%s2 + $0x30] sm:$0xff]
  %v4178 = vld [vmem:[%s2 + $0x38] sm:$0xff]
  %v4179 = vld [vmem:[%s2 + $0x40] sm:$0xff]
  %v4180 = vld [vmem:[%s2 + $0x48] sm:$0xff]
  %v4181 = vld [vmem:[%s2 + $0x50] sm:$0xff]
  %v4182 = vld [vmem:[%s2 + $0x58] sm:$0xff]
  %v4183 = vld [vmem:[%s2 + $0x60] sm:$0xff]
  %v4184 = vld [vmem:[%s2 + $0x68] sm:$0xff]
  %v4185 = vld [vmem:[%s2 + $0x70] sm:$0xff]
  %v4186 = vld [vmem:[%s2 + $0x78] sm:$0xff]
  %v4187 = vld [vmem:[%s2 + $0x80] sm:$0xff]
  %v4188 = vld [vmem:[%s2 + $0x88] sm:$0xff]
  %v4189 = vld [vmem:[%s2 + $0x90] sm:$0xff]
  %v4190 = vld [vmem:[%s2 + $0x98] sm:$0xff]
  %v4191 = vld [vmem:[%s2 + $0xa0] sm:$0xff]
  %v4192 = vld [vmem:[%s2 + $0xa8] sm:$0xff]
  %v4193 = vld [vmem:[%s2 + $0xb0] sm:$0xff]
  %v4194 = vld [vmem:[%s2 + $0xb8] sm:$0xff]
  %v4195 = vld [vmem:[%s2 + $0xc0] sm:$0xff]
  %v4196 = vld [vmem:[%s2 + $0xc8] sm:$0xff]
  %v4197 = vld [vmem:[%s2 + $0xd0] sm:$0xff]
  %v4198 = vld [vmem:[%s2 + $0xd8] sm:$0xff]
  %v4199 = vld [vmem:[%s2 + $0xe0] sm:$0xff]
  %v4200 = vld [vmem:[%s2 + $0xe8] sm:$0xff]
  %v4201 = vld [vmem:[%s2 + $0xf0] sm:$0xff]
  %v4202 = vld [vmem:[%s2 + $0xf8] sm:$0xff]
  %v4203 = vld [vmem:[%s3] sm:$0x3]
  %v4205 = vlaneseq
  %v4206 = vshrl.u32 %v4205, 7
  %v4207 = vsub.s32 0, %v4206
  %v4208 = vrot.slane %v4203, %v4207
  %v4209 = vlaneseq
  %v4210 = vshrl.u32 %v4209, 7
  %v4211 = vsub.s32 1, %v4210
  %v4212 = vrot.slane %v4203, %v4211
  %4215 = vmatprep.subr.mxu0 %v4172
  %4216 = vmatpush1.msra.mxu0 %v4171
  %4217 = vmatprep.subr.mxu0 %v4174
  %4218 = vmatpush1.msra.mxu0 %v4173
  %4219 = vmatprep.subr.mxu0 %v4176
  %4220 = vmatpush1.msra.mxu0 %v4175
  %4221 = vmatprep.subr.mxu0 %v4178
  %4222 = vmatpush1.msra.mxu0 %v4177
  %4223 = vmatprep.subr.mxu0 %v4180
  %4224 = vmatpush1.msra.mxu0 %v4179
  %4225 = vmatprep.subr.mxu0 %v4182
  %4226 = vmatpush1.msra.mxu0 %v4181
  %4227 = vmatprep.subr.mxu0 %v4184
  %4228 = vmatpush1.msra.mxu0 %v4183
  %4229 = vmatprep.subr.mxu0 %v4186
  %4230 = vmatpush1.msra.mxu0 %v4185
  %4231 = vmatprep.subr.mxu0 %v4188
  %4232 = vmatpush1.msra.mxu0 %v4187
  %4233 = vmatprep.subr.mxu0 %v4190
  %4234 = vmatpush1.msra.mxu0 %v4189
  %4235 = vmatprep.subr.mxu0 %v4192
  %4236 = vmatpush1.msra.mxu0 %v4191
  %4237 = vmatprep.subr.mxu0 %v4194
  %4238 = vmatpush1.msra.mxu0 %v4193
  %4239 = vmatprep.subr.mxu0 %v4196
  %4240 = vmatpush1.msra.mxu0 %v4195
  %4241 = vmatprep.subr.mxu0 %v4198
  %4242 = vmatpush1.msra.mxu0 %v4197
  %4243 = vmatprep.subr.mxu0 %v4200
  %4244 = vmatpush1.msra.mxu0 %v4199
  %4245 = vmatprep.subr.mxu0 %v4202
  %4246 = vmatpush1.msra.mxu0 %v4201
  %4247 = vmatprep.subr.mxu0 0.0
  %4248 = vmatpush1.msra.mxu0 0.0
  %4249 = vmatprep.subr.mxu0 0.0
  %4250 = vmatpush1.msra.mxu0 0.0
  %4251 = vmatprep.subr.mxu0 0.0
  %4252 = vmatpush1.msra.mxu0 0.0
  %4253 = vmatprep.subr.mxu0 0.0
  %4254 = vmatpush1.msra.mxu0 0.0
  %4255 = vmatprep.subr.mxu0 0.0
  %4256 = vmatpush1.msra.mxu0 0.0
  %4257 = vmatprep.subr.mxu0 0.0
  %4258 = vmatpush1.msra.mxu0 0.0
  %4259 = vmatprep.subr.mxu0 0.0
  %4260 = vmatpush1.msra.mxu0 0.0
  %4261 = vmatprep.subr.mxu0 0.0
  %4262 = vmatpush1.msra.mxu0 0.0
  %4263 = vmatprep.subr.mxu0 0.0
  %4264 = vmatpush1.msra.mxu0 0.0
  %4265 = vmatprep.subr.mxu0 0.0
  %4266 = vmatpush1.msra.mxu0 0.0
  %4267 = vmatprep.subr.mxu0 0.0
  %4268 = vmatpush1.msra.mxu0 0.0
  %4269 = vmatprep.subr.mxu0 0.0
  %4270 = vmatpush1.msra.mxu0 0.0
  %4271 = vmatprep.subr.mxu0 0.0
  %4272 = vmatpush1.msra.mxu0 0.0
  %4273 = vmatprep.subr.mxu0 0.0
  %4274 = vmatpush1.msra.mxu0 0.0
  %4275 = vmatprep.subr.mxu0 0.0
  %4276 = vmatpush1.msra.mxu0 0.0
  %4277 = vmatprep.subr.mxu0 0.0
  %4278 = vmatpush1.msra.mxu0 0.0
  %4279 = vmatprep.mubr.f32.mxu0 0.0
  %4280 = vmatmul.mubr.f32.gmra.mrb[0].mxu0 %v4170
  %v4281 = vpop.f32.mrb[0].mxu0
  %v4282 = vadd.f32 %v4208, %v4281
  %v4283 = vpop.f32.mrb[0].mxu0
  %v4284 = vadd.f32 %v4212, %v4283
  %4285 = vdwg.mxu0
  %v4286 = vxor.u32 %v4282, 2147483648
  %v4287 = vmul.f32 %v4286, 1.442695
  %v4288 = vpow.pop %v4287
  %v4289 = vadd.f32 %v4288, 1.0
  %v4290 = vrcp.pop %v4289
  %v4291 = vmul.f32 1.0, %v4290
  %4293 = vrot.lane.b32.xlu0 %v4284, 64
  %v4294 = vpop.permute.xlu0 %4293
  %v4296 = vmul.f32 %v4291, %v4294
  %v4297 = vadd.f32 %v4284, %v4296
  %v4298 = vtanh.pop %v4297
  %v4299 = vsub.f32 1.0, %v4291
  %4301 = vrot.lane.b32.xlu0 %v4298, 64
  %v4302 = vpop.permute.xlu0 %4301
  %v4304 = vmul.f32 %v4299, %v4302
  %v4305 = vmul.f32 %v4291, %v3811
  %v4306 = vadd.f32 %v4304, %v4305
  %v4307 = vld [vmem:[%s4] sm:$0xff]
  %v4308 = vld [vmem:[%s4 + $0x8] sm:$0xff]
  %v4309 = vld [vmem:[%s4 + $0x10] sm:$0xff]
  %v4310 = vld [vmem:[%s4 + $0x18] sm:$0xff]
  %v4311 = vld [vmem:[%s4 + $0x20] sm:$0xff]
  %v4312 = vld [vmem:[%s4 + $0x28] sm:$0xff]
  %v4313 = vld [vmem:[%s4 + $0x30] sm:$0xff]
  %v4314 = vld [vmem:[%s4 + $0x38] sm:$0xff]
  %v4315 = vld [vmem:[%s5] sm:$0x1]
  %v4317 = vlaneseq
  %v4318 = vshrl.u32 %v4317, 7
  %v4319 = vsub.s32 0, %v4318
  %v4320 = vrot.slane %v4315, %v4319
  %4323 = vrot.lane.b32.xlu0 %v4306, 64
  %v4324 = vpop.permute.xlu0 %4323
  %v4325 = vsel %vm102, %v4324, 0
  %4327 = vmatprep.subr.mxu0 0.0
  %4328 = vmatpush1.msra.mxu0 %v4307
  %4329 = vmatprep.subr.mxu0 0.0
  %4330 = vmatpush1.msra.mxu0 %v4308
  %4331 = vmatprep.subr.mxu0 0.0
  %4332 = vmatpush1.msra.mxu0 %v4309
  %4333 = vmatprep.subr.mxu0 0.0
  %4334 = vmatpush1.msra.mxu0 %v4310
  %4335 = vmatprep.subr.mxu0 0.0
  %4336 = vmatpush1.msra.mxu0 %v4311
  %4337 = vmatprep.subr.mxu0 0.0
  %4338 = vmatpush1.msra.mxu0 %v4312
  %4339 = vmatprep.subr.mxu0 0.0
  %4340 = vmatpush1.msra.mxu0 %v4313
  %4341 = vmatprep.subr.mxu0 0.0
  %4342 = vmatpush1.msra.mxu0 %v4314
  %4343 = vmatprep.subr.mxu0 0.0
  %4344 = vmatpush1.msra.mxu0 0.0
  %4345 = vmatprep.subr.mxu0 0.0
  %4346 = vmatpush1.msra.mxu0 0.0
  %4347 = vmatprep.subr.mxu0 0.0
  %4348 = vmatpush1.msra.mxu0 0.0
  %4349 = vmatprep.subr.mxu0 0.0
  %4350 = vmatpush1.msra.mxu0 0.0
  %4351 = vmatprep.subr.mxu0 0.0
  %4352 = vmatpush1.msra.mxu0 0.0
  %4353 = vmatprep.subr.mxu0 0.0
  %4354 = vmatpush1.msra.mxu0 0.0
  %4355 = vmatprep.subr.mxu0 0.0
  %4356 = vmatpush1.msra.mxu0 0.0
  %4357 = vmatprep.subr.mxu0 0.0
  %4358 = vmatpush1.msra.mxu0 0.0
  %4359 = vmatprep.subr.mxu0 0.0
  %4360 = vmatpush1.msra.mxu0 0.0
  %4361 = vmatprep.subr.mxu0 0.0
  %4362 = vmatpush1.msra.mxu0 0.0
  %4363 = vmatprep.subr.mxu0 0.0
  %4364 = vmatpush1.msra.mxu0 0.0
  %4365 = vmatprep.subr.mxu0 0.0
  %4366 = vmatpush1.msra.mxu0 0.0
  %4367 = vmatprep.subr.mxu0 0.0
  %4368 = vmatpush1.msra.mxu0 0.0
  %4369 = vmatprep.subr.mxu0 0.0
  %4370 = vmatpush1.msra.mxu0 0.0
  %4371 = vmatprep.subr.mxu0 0.0
  %4372 = vmatpush1.msra.mxu0 0.0
  %4373 = vmatprep.subr.mxu0 0.0
  %4374 = vmatpush1.msra.mxu0 0.0
  %4375 = vmatprep.subr.mxu0 0.0
  %4376 = vmatpush1.msra.mxu0 0.0
  %4377 = vmatprep.subr.mxu0 0.0
  %4378 = vmatpush1.msra.mxu0 0.0
  %4379 = vmatprep.subr.mxu0 0.0
  %4380 = vmatpush1.msra.mxu0 0.0
  %4381 = vmatprep.subr.mxu0 0.0
  %4382 = vmatpush1.msra.mxu0 0.0
  %4383 = vmatprep.subr.mxu0 0.0
  %4384 = vmatpush1.msra.mxu0 0.0
  %4385 = vmatprep.subr.mxu0 0.0
  %4386 = vmatpush1.msra.mxu0 0.0
  %4387 = vmatprep.subr.mxu0 0.0
  %4388 = vmatpush1.msra.mxu0 0.0
  %4389 = vmatprep.subr.mxu0 0.0
  %4390 = vmatpush1.msra.mxu0 0.0
  %4391 = vmatprep.mubr.f32.mxu0 0.0
  %4392 = vmatmul.mubr.f32.gmra.mrb[0].mxu0 %v4325
  %v4393 = vpop.f32.mrb[0].mxu0
  %v4394 = vadd.f32 %v4320, %v4393
  %v4395 = vpop.f32.mrb[0].mxu0
  %4396 = vdwg.mxu0
  %v4397 = vmax.f32 %v4394, 0.0
  %v4398 = vld [vmem:[%s6] sm:$0xff]
  %v4399 = vld [vmem:[%s6 + $0x8] sm:$0xff]
  %v4400 = vld [vmem:[%s6 + $0x10] sm:$0xff]
  %v4401 = vld [vmem:[%s6 + $0x18] sm:$0xff]
  %v4402 = vld [vmem:[%s7] sm:$0x1]
  %v4404 = vlaneseq
  %v4405 = vshrl.u32 %v4404, 7
  %v4406 = vsub.s32 0, %v4405
  %v4407 = vrot.slane %v4402, %v4406
  %v4410 = vsel %vm448, %v4397, 0
  %4412 = vmatprep.subr.mxu0 0.0
  %4413 = vmatpush1.msra.mxu0 %v4398
  %4414 = vmatprep.subr.mxu0 0.0
  %4415 = vmatpush1.msra.mxu0 %v4399
  %4416 = vmatprep.subr.mxu0 0.0
  %4417 = vmatpush1.msra.mxu0 %v4400
  %4418 = vmatprep.subr.mxu0 0.0
  %4419 = vmatpush1.msra.mxu0 %v4401
  %4420 = vmatprep.subr.mxu0 0.0
  %4421 = vmatpush1.msra.mxu0 0.0
  %4422 = vmatprep.subr.mxu0 0.0
  %4423 = vmatpush1.msra.mxu0 0.0
  %4424 = vmatprep.subr.mxu0 0.0
  %4425 = vmatpush1.msra.mxu0 0.0
  %4426 = vmatprep.subr.mxu0 0.0
  %4427 = vmatpush1.msra.mxu0 0.0
  %4428 = vmatprep.subr.mxu0 0.0
  %4429 = vmatpush1.msra.mxu0 0.0
  %4430 = vmatprep.subr.mxu0 0.0
  %4431 = vmatpush1.msra.mxu0 0.0
  %4432 = vmatprep.subr.mxu0 0.0
  %4433 = vmatpush1.msra.mxu0 0.0
  %4434 = vmatprep.subr.mxu0 0.0
  %4435 = vmatpush1.msra.mxu0 0.0
  %4436 = vmatprep.subr.mxu0 0.0
  %4437 = vmatpush1.msra.mxu0 0.0
  %4438 = vmatprep.subr.mxu0 0.0
  %4439 = vmatpush1.msra.mxu0 0.0
  %4440 = vmatprep.subr.mxu0 0.0
  %4441 = vmatpush1.msra.mxu0 0.0
  %4442 = vmatprep.subr.mxu0 0.0
  %4443 = vmatpush1.msra.mxu0 0.0
  %4444 = vmatprep.subr.mxu0 0.0
  %4445 = vmatpush1.msra.mxu0 0.0
  %4446 = vmatprep.subr.mxu0 0.0
  %4447 = vmatpush1.msra.mxu0 0.0
  %4448 = vmatprep.subr.mxu0 0.0
  %4449 = vmatpush1.msra.mxu0 0.0
  %4450 = vmatprep.subr.mxu0 0.0
  %4451 = vmatpush1.msra.mxu0 0.0
  %4452 = vmatprep.subr.mxu0 0.0
  %4453 = vmatpush1.msra.mxu0 0.0
  %4454 = vmatprep.subr.mxu0 0.0
  %4455 = vmatpush1.msra.mxu0 0.0
  %4456 = vmatprep.subr.mxu0 0.0
  %4457 = vmatpush1.msra.mxu0 0.0
  %4458 = vmatprep.subr.mxu0 0.0
  %4459 = vmatpush1.msra.mxu0 0.0
  %4460 = vmatprep.subr.mxu0 0.0
  %4461 = vmatpush1.msra.mxu0 0.0
  %4462 = vmatprep.subr.mxu0 0.0
  %4463 = vmatpush1.msra.mxu0 0.0
  %4464 = vmatprep.subr.mxu0 0.0
  %4465 = vmatpush1.msra.mxu0 0.0
  %4466 = vmatprep.subr.mxu0 0.0
  %4467 = vmatpush1.msra.mxu0 0.0
  %4468 = vmatprep.subr.mxu0 0.0
  %4469 = vmatpush1.msra.mxu0 0.0
  %4470 = vmatprep.subr.mxu0 0.0
  %4471 = vmatpush1.msra.mxu0 0.0
  %4472 = vmatprep.subr.mxu0 0.0
  %4473 = vmatpush1.msra.mxu0 0.0
  %4474 = vmatprep.subr.mxu0 0.0
  %4475 = vmatpush1.msra.mxu0 0.0
  %4476 = vmatprep.mubr.f32.mxu0 0.0
  %4477 = vmatmul.mubr.f32.gmra.mrb[0].mxu0 %v4410
  %v4478 = vpop.f32.mrb[0].mxu0
  %v4479 = vadd.f32 %v4407, %v4478
  %v4480 = vpop.f32.mrb[0].mxu0
  %4481 = vdwg.mxu0
  %s4482 = scalar_lea.vmem %s10, 16
  %4483 = vst [vmem:[%s4482] sm:$0x3] %v4479
  %v4484 = vsel %vm523, %v4479, -inf
  %4485 = vmax.xlane.f32.xlu0 %v4484
  %v4486 = vpop.xlane.xlu0 %4485
  %vm4487 = vcmp.eq.f32.partialorder %v4479, %v4486
  %v4488 = vsel %vm4487, %v36, 128
  %v4489 = vsel %vm523, %v4488, 2147483647
  %v4490 = vand.u32 %v4489, 65535
  %v4491 = vshra.s32 %v4489, 16
  %v4492 = vcvt.s32.f32 %v4490
  %v4493 = vcvt.s32.f32 %v4491
  %4494 = vmin.xlane.f32.xlu0 %v4493
  %v4495 = vpop.xlane.xlu0 %4494
  %vm4496 = vcmp.eq.f32.partialorder %v4493, %v4495
  %v4497 = vsel %vm4496, %v4492, inf
  %4498 = vmin.xlane.f32.xlu0 %v4497
  %v4499 = vpop.xlane.xlu0 %4498
  %v4500 = vcvt.f32.s32 %v4499
  %v4501 = vcvt.f32.s32 %v4495
  %v4502 = vshll.u32 %v4501, 16
  %v4503 = vadd.s32 %v4502, %v4500
  %vm4504 = vcmp.eq.s32.totalorder %v36, %v4503
  %v4505 = vsel %vm4504, 1, 0
  %v4506 = vcvt.s32.f32 %v4505
  %v4507 = vld [vmem:[%s0] sm:$0xff]
  %v4508 = vld [vmem:[%s0 + $0x8] sm:$0xff]
  %v4509 = vld [vmem:[%s0 + $0x10] sm:$0xff]
  %v4510 = vld [vmem:[%s0 + $0x18] sm:$0xff]
  %v4511 = vld [vmem:[%s0 + $0x20] sm:$0xff]
  %v4512 = vld [vmem:[%s0 + $0x28] sm:$0xff]
  %v4513 = vld [vmem:[%s0 + $0x30] sm:$0xff]
  %v4514 = vld [vmem:[%s0 + $0x38] sm:$0xff]
  %v4515 = vld [vmem:[%s0 + $0x40] sm:$0xff]
  %v4516 = vld [vmem:[%s0 + $0x48] sm:$0xff]
  %v4517 = vld [vmem:[%s0 + $0x50] sm:$0xff]
  %v4518 = vld [vmem:[%s0 + $0x58] sm:$0xff]
  %v4519 = vld [vmem:[%s0 + $0x60] sm:$0xff]
  %v4520 = vld [vmem:[%s0 + $0x68] sm:$0xff]
  %v4521 = vld [vmem:[%s0 + $0x70] sm:$0xff]
  %v4522 = vld [vmem:[%s0 + $0x78] sm:$0xff]
  %v4523 = vld [vmem:[%s0 + $0x80] sm:$0xff]
  %v4524 = vld [vmem:[%s0 + $0x88] sm:$0xff]
  %v4525 = vld [vmem:[%s0 + $0x90] sm:$0xff]
  %v4526 = vld [vmem:[%s0 + $0x98] sm:$0xff]
  %v4527 = vld [vmem:[%s0 + $0xa0] sm:$0xff]
  %v4528 = vld [vmem:[%s0 + $0xa8] sm:$0xff]
  %v4529 = vld [vmem:[%s0 + $0xb0] sm:$0xff]
  %v4530 = vld [vmem:[%s0 + $0xb8] sm:$0xff]
  %v4531 = vld [vmem:[%s0 + $0xc0] sm:$0xff]
  %v4532 = vld [vmem:[%s0 + $0xc8] sm:$0xff]
  %v4533 = vld [vmem:[%s0 + $0xd0] sm:$0xff]
  %v4534 = vld [vmem:[%s0 + $0xd8] sm:$0xff]
  %v4535 = vld [vmem:[%s0 + $0xe0] sm:$0xff]
  %v4536 = vld [vmem:[%s0 + $0xe8] sm:$0xff]
  %v4537 = vld [vmem:[%s0 + $0xf0] sm:$0xff]
  %v4538 = vld [vmem:[%s0 + $0xf8] sm:$0xff]
  %v4539 = vld [vmem:[%s0 + $0x100] sm:$0xff]
  %v4540 = vld [vmem:[%s0 + $0x108] sm:$0xff]
  %v4541 = vld [vmem:[%s0 + $0x110] sm:$0xff]
  %v4542 = vld [vmem:[%s0 + $0x118] sm:$0xff]
  %v4543 = vld [vmem:[%s0 + $0x120] sm:$0xff]
  %v4544 = vld [vmem:[%s0 + $0x128] sm:$0xff]
  %v4545 = vld [vmem:[%s0 + $0x130] sm:$0xff]
  %v4546 = vld [vmem:[%s0 + $0x138] sm:$0xff]
  %v4547 = vld [vmem:[%s0 + $0x140] sm:$0xff]
  %v4548 = vld [vmem:[%s0 + $0x148] sm:$0xff]
  %v4549 = vld [vmem:[%s0 + $0x150] sm:$0xff]
  %v4550 = vld [vmem:[%s0 + $0x158] sm:$0xff]
  %v4551 = vld [vmem:[%s0 + $0x160] sm:$0xff]
  %v4552 = vld [vmem:[%s0 + $0x168] sm:$0xff]
  %v4553 = vld [vmem:[%s0 + $0x170] sm:$0xff]
  %v4554 = vld [vmem:[%s0 + $0x178] sm:$0xff]
  %v4555 = vld [vmem:[%s1] sm:$0x3]
  %v4557 = vlaneseq
  %v4558 = vshrl.u32 %v4557, 7
  %v4559 = vsub.s32 0, %v4558
  %v4560 = vrot.slane %v4555, %v4559
  %v4561 = vlaneseq
  %v4562 = vshrl.u32 %v4561, 7
  %v4563 = vsub.s32 1, %v4562
  %v4564 = vrot.slane %v4555, %v4563
  %v4567 = vsel %vm102, %v4168, 0
  %4569 = vmatprep.subr.mxu0 %v4508
  %4570 = vmatpush1.msra.mxu0 %v4507
  %4571 = vmatprep.subr.mxu0 %v4510
  %4572 = vmatpush1.msra.mxu0 %v4509
  %4573 = vmatprep.subr.mxu0 %v4512
  %4574 = vmatpush1.msra.mxu0 %v4511
  %4575 = vmatprep.subr.mxu0 %v4514
  %4576 = vmatpush1.msra.mxu0 %v4513
  %4577 = vmatprep.subr.mxu0 %v4516
  %4578 = vmatpush1.msra.mxu0 %v4515
  %4579 = vmatprep.subr.mxu0 %v4518
  %4580 = vmatpush1.msra.mxu0 %v4517
  %4581 = vmatprep.subr.mxu0 %v4520
  %4582 = vmatpush1.msra.mxu0 %v4519
  %4583 = vmatprep.subr.mxu0 %v4522
  %4584 = vmatpush1.msra.mxu0 %v4521
  %4585 = vmatprep.subr.mxu0 %v4524
  %4586 = vmatpush1.msra.mxu0 %v4523
  %4587 = vmatprep.subr.mxu0 %v4526
  %4588 = vmatpush1.msra.mxu0 %v4525
  %4589 = vmatprep.subr.mxu0 %v4528
  %4590 = vmatpush1.msra.mxu0 %v4527
  %4591 = vmatprep.subr.mxu0 %v4530
  %4592 = vmatpush1.msra.mxu0 %v4529
  %4593 = vmatprep.subr.mxu0 %v4532
  %4594 = vmatpush1.msra.mxu0 %v4531
  %4595 = vmatprep.subr.mxu0 %v4534
  %4596 = vmatpush1.msra.mxu0 %v4533
  %4597 = vmatprep.subr.mxu0 %v4536
  %4598 = vmatpush1.msra.mxu0 %v4535
  %4599 = vmatprep.subr.mxu0 %v4538
  %4600 = vmatpush1.msra.mxu0 %v4537
  %4601 = vmatprep.subr.mxu0 %v4540
  %4602 = vmatpush1.msra.mxu0 %v4539
  %4603 = vmatprep.subr.mxu0 %v4542
  %4604 = vmatpush1.msra.mxu0 %v4541
  %4605 = vmatprep.subr.mxu0 %v4544
  %4606 = vmatpush1.msra.mxu0 %v4543
  %4607 = vmatprep.subr.mxu0 %v4546
  %4608 = vmatpush1.msra.mxu0 %v4545
  %4609 = vmatprep.subr.mxu0 %v4548
  %4610 = vmatpush1.msra.mxu0 %v4547
  %4611 = vmatprep.subr.mxu0 %v4550
  %4612 = vmatpush1.msra.mxu0 %v4549
  %4613 = vmatprep.subr.mxu0 %v4552
  %4614 = vmatpush1.msra.mxu0 %v4551
  %4615 = vmatprep.subr.mxu0 %v4554
  %4616 = vmatpush1.msra.mxu0 %v4553
  %4617 = vmatprep.subr.mxu0 0.0
  %4618 = vmatpush1.msra.mxu0 0.0
  %4619 = vmatprep.subr.mxu0 0.0
  %4620 = vmatpush1.msra.mxu0 0.0
  %4621 = vmatprep.subr.mxu0 0.0
  %4622 = vmatpush1.msra.mxu0 0.0
  %4623 = vmatprep.subr.mxu0 0.0
  %4624 = vmatpush1.msra.mxu0 0.0
  %4625 = vmatprep.subr.mxu0 0.0
  %4626 = vmatpush1.msra.mxu0 0.0
  %4627 = vmatprep.subr.mxu0 0.0
  %4628 = vmatpush1.msra.mxu0 0.0
  %4629 = vmatprep.subr.mxu0 0.0
  %4630 = vmatpush1.msra.mxu0 0.0
  %4631 = vmatprep.subr.mxu0 0.0
  %4632 = vmatpush1.msra.mxu0 0.0
  %4633 = vmatprep.mubr.f32.mxu0 %v4567
  %4634 = vmatmul.mubr.f32.gmra.mrb[0].mxu0 %v4506
  %v4635 = vpop.f32.mrb[0].mxu0
  %v4636 = vadd.f32 %v4560, %v4635
  %v4637 = vpop.f32.mrb[0].mxu0
  %v4638 = vadd.f32 %v4564, %v4637
  %4639 = vdwg.mxu0
  %v4640 = vxor.u32 %v4636, 2147483648
  %v4641 = vmul.f32 %v4640, 1.442695
  %v4642 = vpow.pop %v4641
  %v4643 = vadd.f32 %v4642, 1.0
  %v4644 = vrcp.pop %v4643
  %v4645 = vmul.f32 1.0, %v4644
  %4647 = vrot.lane.b32.xlu0 %v4638, 64
  %v4648 = vpop.permute.xlu0 %4647
  %v4650 = vmul.f32 %v4645, %v4648
  %v4651 = vadd.f32 %v4638, %v4650
  %v4652 = vtanh.pop %v4651
  %v4653 = vsub.f32 1.0, %v4645
  %4655 = vrot.lane.b32.xlu0 %v4652, 64
  %v4656 = vpop.permute.xlu0 %4655
  %v4658 = vmul.f32 %v4653, %v4656
  %v4659 = vmul.f32 %v4645, %v4165
  %v4660 = vadd.f32 %v4658, %v4659
  %4662 = vrot.lane.b32.xlu0 %v4660, 64
  %v4663 = vpop.permute.xlu0 %4662
  %v4665 = vsel %vm102, %v4663, %v4306
  %v4666 = vld [vmem:[%s2] sm:$0xff]
  %v4667 = vld [vmem:[%s2 + $0x8] sm:$0xff]
  %v4668 = vld [vmem:[%s2 + $0x10] sm:$0xff]
  %v4669 = vld [vmem:[%s2 + $0x18] sm:$0xff]
  %v4670 = vld [vmem:[%s2 + $0x20] sm:$0xff]
  %v4671 = vld [vmem:[%s2 + $0x28] sm:$0xff]
  %v4672 = vld [vmem:[%s2 + $0x30] sm:$0xff]
  %v4673 = vld [vmem:[%s2 + $0x38] sm:$0xff]
  %v4674 = vld [vmem:[%s2 + $0x40] sm:$0xff]
  %v4675 = vld [vmem:[%s2 + $0x48] sm:$0xff]
  %v4676 = vld [vmem:[%s2 + $0x50] sm:$0xff]
  %v4677 = vld [vmem:[%s2 + $0x58] sm:$0xff]
  %v4678 = vld [vmem:[%s2 + $0x60] sm:$0xff]
  %v4679 = vld [vmem:[%s2 + $0x68] sm:$0xff]
  %v4680 = vld [vmem:[%s2 + $0x70] sm:$0xff]
  %v4681 = vld [vmem:[%s2 + $0x78] sm:$0xff]
  %v4682 = vld [vmem:[%s2 + $0x80] sm:$0xff]
  %v4683 = vld [vmem:[%s2 + $0x88] sm:$0xff]
  %v4684 = vld [vmem:[%s2 + $0x90] sm:$0xff]
  %v4685 = vld [vmem:[%s2 + $0x98] sm:$0xff]
  %v4686 = vld [vmem:[%s2 + $0xa0] sm:$0xff]
  %v4687 = vld [vmem:[%s2 + $0xa8] sm:$0xff]
  %v4688 = vld [vmem:[%s2 + $0xb0] sm:$0xff]
  %v4689 = vld [vmem:[%s2 + $0xb8] sm:$0xff]
  %v4690 = vld [vmem:[%s2 + $0xc0] sm:$0xff]
  %v4691 = vld [vmem:[%s2 + $0xc8] sm:$0xff]
  %v4692 = vld [vmem:[%s2 + $0xd0] sm:$0xff]
  %v4693 = vld [vmem:[%s2 + $0xd8] sm:$0xff]
  %v4694 = vld [vmem:[%s2 + $0xe0] sm:$0xff]
  %v4695 = vld [vmem:[%s2 + $0xe8] sm:$0xff]
  %v4696 = vld [vmem:[%s2 + $0xf0] sm:$0xff]
  %v4697 = vld [vmem:[%s2 + $0xf8] sm:$0xff]
  %v4698 = vld [vmem:[%s3] sm:$0x3]
  %v4700 = vlaneseq
  %v4701 = vshrl.u32 %v4700, 7
  %v4702 = vsub.s32 0, %v4701
  %v4703 = vrot.slane %v4698, %v4702
  %v4704 = vlaneseq
  %v4705 = vshrl.u32 %v4704, 7
  %v4706 = vsub.s32 1, %v4705
  %v4707 = vrot.slane %v4698, %v4706
  %4710 = vmatprep.subr.mxu0 %v4667
  %4711 = vmatpush1.msra.mxu0 %v4666
  %4712 = vmatprep.subr.mxu0 %v4669
  %4713 = vmatpush1.msra.mxu0 %v4668
  %4714 = vmatprep.subr.mxu0 %v4671
  %4715 = vmatpush1.msra.mxu0 %v4670
  %4716 = vmatprep.subr.mxu0 %v4673
  %4717 = vmatpush1.msra.mxu0 %v4672
  %4718 = vmatprep.subr.mxu0 %v4675
  %4719 = vmatpush1.msra.mxu0 %v4674
  %4720 = vmatprep.subr.mxu0 %v4677
  %4721 = vmatpush1.msra.mxu0 %v4676
  %4722 = vmatprep.subr.mxu0 %v4679
  %4723 = vmatpush1.msra.mxu0 %v4678
  %4724 = vmatprep.subr.mxu0 %v4681
  %4725 = vmatpush1.msra.mxu0 %v4680
  %4726 = vmatprep.subr.mxu0 %v4683
  %4727 = vmatpush1.msra.mxu0 %v4682
  %4728 = vmatprep.subr.mxu0 %v4685
  %4729 = vmatpush1.msra.mxu0 %v4684
  %4730 = vmatprep.subr.mxu0 %v4687
  %4731 = vmatpush1.msra.mxu0 %v4686
  %4732 = vmatprep.subr.mxu0 %v4689
  %4733 = vmatpush1.msra.mxu0 %v4688
  %4734 = vmatprep.subr.mxu0 %v4691
  %4735 = vmatpush1.msra.mxu0 %v4690
  %4736 = vmatprep.subr.mxu0 %v4693
  %4737 = vmatpush1.msra.mxu0 %v4692
  %4738 = vmatprep.subr.mxu0 %v4695
  %4739 = vmatpush1.msra.mxu0 %v4694
  %4740 = vmatprep.subr.mxu0 %v4697
  %4741 = vmatpush1.msra.mxu0 %v4696
  %4742 = vmatprep.subr.mxu0 0.0
  %4743 = vmatpush1.msra.mxu0 0.0
  %4744 = vmatprep.subr.mxu0 0.0
  %4745 = vmatpush1.msra.mxu0 0.0
  %4746 = vmatprep.subr.mxu0 0.0
  %4747 = vmatpush1.msra.mxu0 0.0
  %4748 = vmatprep.subr.mxu0 0.0
  %4749 = vmatpush1.msra.mxu0 0.0
  %4750 = vmatprep.subr.mxu0 0.0
  %4751 = vmatpush1.msra.mxu0 0.0
  %4752 = vmatprep.subr.mxu0 0.0
  %4753 = vmatpush1.msra.mxu0 0.0
  %4754 = vmatprep.subr.mxu0 0.0
  %4755 = vmatpush1.msra.mxu0 0.0
  %4756 = vmatprep.subr.mxu0 0.0
  %4757 = vmatpush1.msra.mxu0 0.0
  %4758 = vmatprep.subr.mxu0 0.0
  %4759 = vmatpush1.msra.mxu0 0.0
  %4760 = vmatprep.subr.mxu0 0.0
  %4761 = vmatpush1.msra.mxu0 0.0
  %4762 = vmatprep.subr.mxu0 0.0
  %4763 = vmatpush1.msra.mxu0 0.0
  %4764 = vmatprep.subr.mxu0 0.0
  %4765 = vmatpush1.msra.mxu0 0.0
  %4766 = vmatprep.subr.mxu0 0.0
  %4767 = vmatpush1.msra.mxu0 0.0
  %4768 = vmatprep.subr.mxu0 0.0
  %4769 = vmatpush1.msra.mxu0 0.0
  %4770 = vmatprep.subr.mxu0 0.0
  %4771 = vmatpush1.msra.mxu0 0.0
  %4772 = vmatprep.subr.mxu0 0.0
  %4773 = vmatpush1.msra.mxu0 0.0
  %4774 = vmatprep.mubr.f32.mxu0 0.0
  %4775 = vmatmul.mubr.f32.gmra.mrb[0].mxu0 %v4665
  %v4776 = vpop.f32.mrb[0].mxu0
  %v4777 = vadd.f32 %v4703, %v4776
  %v4778 = vpop.f32.mrb[0].mxu0
  %v4779 = vadd.f32 %v4707, %v4778
  %4780 = vdwg.mxu0
  %v4781 = vxor.u32 %v4777, 2147483648
  %v4782 = vmul.f32 %v4781, 1.442695
  %v4783 = vpow.pop %v4782
  %v4784 = vadd.f32 %v4783, 1.0
  %v4785 = vrcp.pop %v4784
  %v4786 = vmul.f32 1.0, %v4785
  %4788 = vrot.lane.b32.xlu0 %v4779, 64
  %v4789 = vpop.permute.xlu0 %4788
  %v4791 = vmul.f32 %v4786, %v4789
  %v4792 = vadd.f32 %v4779, %v4791
  %v4793 = vtanh.pop %v4792
  %v4794 = vsub.f32 1.0, %v4786
  %4796 = vrot.lane.b32.xlu0 %v4793, 64
  %v4797 = vpop.permute.xlu0 %4796
  %v4799 = vmul.f32 %v4794, %v4797
  %v4800 = vmul.f32 %v4786, %v4306
  %v4801 = vadd.f32 %v4799, %v4800
  %v4802 = vld [vmem:[%s4] sm:$0xff]
  %v4803 = vld [vmem:[%s4 + $0x8] sm:$0xff]
  %v4804 = vld [vmem:[%s4 + $0x10] sm:$0xff]
  %v4805 = vld [vmem:[%s4 + $0x18] sm:$0xff]
  %v4806 = vld [vmem:[%s4 + $0x20] sm:$0xff]
  %v4807 = vld [vmem:[%s4 + $0x28] sm:$0xff]
  %v4808 = vld [vmem:[%s4 + $0x30] sm:$0xff]
  %v4809 = vld [vmem:[%s4 + $0x38] sm:$0xff]
  %v4810 = vld [vmem:[%s5] sm:$0x1]
  %v4812 = vlaneseq
  %v4813 = vshrl.u32 %v4812, 7
  %v4814 = vsub.s32 0, %v4813
  %v4815 = vrot.slane %v4810, %v4814
  %4818 = vrot.lane.b32.xlu0 %v4801, 64
  %v4819 = vpop.permute.xlu0 %4818
  %v4820 = vsel %vm102, %v4819, 0
  %4822 = vmatprep.subr.mxu0 0.0
  %4823 = vmatpush1.msra.mxu0 %v4802
  %4824 = vmatprep.subr.mxu0 0.0
  %4825 = vmatpush1.msra.mxu0 %v4803
  %4826 = vmatprep.subr.mxu0 0.0
  %4827 = vmatpush1.msra.mxu0 %v4804
  %4828 = vmatprep.subr.mxu0 0.0
  %4829 = vmatpush1.msra.mxu0 %v4805
  %4830 = vmatprep.subr.mxu0 0.0
  %4831 = vmatpush1.msra.mxu0 %v4806
  %4832 = vmatprep.subr.mxu0 0.0
  %4833 = vmatpush1.msra.mxu0 %v4807
  %4834 = vmatprep.subr.mxu0 0.0
  %4835 = vmatpush1.msra.mxu0 %v4808
  %4836 = vmatprep.subr.mxu0 0.0
  %4837 = vmatpush1.msra.mxu0 %v4809
  %4838 = vmatprep.subr.mxu0 0.0
  %4839 = vmatpush1.msra.mxu0 0.0
  %4840 = vmatprep.subr.mxu0 0.0
  %4841 = vmatpush1.msra.mxu0 0.0
  %4842 = vmatprep.subr.mxu0 0.0
  %4843 = vmatpush1.msra.mxu0 0.0
  %4844 = vmatprep.subr.mxu0 0.0
  %4845 = vmatpush1.msra.mxu0 0.0
  %4846 = vmatprep.subr.mxu0 0.0
  %4847 = vmatpush1.msra.mxu0 0.0
  %4848 = vmatprep.subr.mxu0 0.0
  %4849 = vmatpush1.msra.mxu0 0.0
  %4850 = vmatprep.subr.mxu0 0.0
  %4851 = vmatpush1.msra.mxu0 0.0
  %4852 = vmatprep.subr.mxu0 0.0
  %4853 = vmatpush1.msra.mxu0 0.0
  %4854 = vmatprep.subr.mxu0 0.0
  %4855 = vmatpush1.msra.mxu0 0.0
  %4856 = vmatprep.subr.mxu0 0.0
  %4857 = vmatpush1.msra.mxu0 0.0
  %4858 = vmatprep.subr.mxu0 0.0
  %4859 = vmatpush1.msra.mxu0 0.0
  %4860 = vmatprep.subr.mxu0 0.0
  %4861 = vmatpush1.msra.mxu0 0.0
  %4862 = vmatprep.subr.mxu0 0.0
  %4863 = vmatpush1.msra.mxu0 0.0
  %4864 = vmatprep.subr.mxu0 0.0
  %4865 = vmatpush1.msra.mxu0 0.0
  %4866 = vmatprep.subr.mxu0 0.0
  %4867 = vmatpush1.msra.mxu0 0.0
  %4868 = vmatprep.subr.mxu0 0.0
  %4869 = vmatpush1.msra.mxu0 0.0
  %4870 = vmatprep.subr.mxu0 0.0
  %4871 = vmatpush1.msra.mxu0 0.0
  %4872 = vmatprep.subr.mxu0 0.0
  %4873 = vmatpush1.msra.mxu0 0.0
  %4874 = vmatprep.subr.mxu0 0.0
  %4875 = vmatpush1.msra.mxu0 0.0
  %4876 = vmatprep.subr.mxu0 0.0
  %4877 = vmatpush1.msra.mxu0 0.0
  %4878 = vmatprep.subr.mxu0 0.0
  %4879 = vmatpush1.msra.mxu0 0.0
  %4880 = vmatprep.subr.mxu0 0.0
  %4881 = vmatpush1.msra.mxu0 0.0
  %4882 = vmatprep.subr.mxu0 0.0
  %4883 = vmatpush1.msra.mxu0 0.0
  %4884 = vmatprep.subr.mxu0 0.0
  %4885 = vmatpush1.msra.mxu0 0.0
  %4886 = vmatprep.mubr.f32.mxu0 0.0
  %4887 = vmatmul.mubr.f32.gmra.mrb[0].mxu0 %v4820
  %v4888 = vpop.f32.mrb[0].mxu0
  %v4889 = vadd.f32 %v4815, %v4888
  %v4890 = vpop.f32.mrb[0].mxu0
  %4891 = vdwg.mxu0
  %v4892 = vmax.f32 %v4889, 0.0
  %v4893 = vld [vmem:[%s6] sm:$0xff]
  %v4894 = vld [vmem:[%s6 + $0x8] sm:$0xff]
  %v4895 = vld [vmem:[%s6 + $0x10] sm:$0xff]
  %v4896 = vld [vmem:[%s6 + $0x18] sm:$0xff]
  %v4897 = vld [vmem:[%s7] sm:$0x1]
  %v4899 = vlaneseq
  %v4900 = vshrl.u32 %v4899, 7
  %v4901 = vsub.s32 0, %v4900
  %v4902 = vrot.slane %v4897, %v4901
  %v4905 = vsel %vm448, %v4892, 0
  %4907 = vmatprep.subr.mxu0 0.0
  %4908 = vmatpush1.msra.mxu0 %v4893
  %4909 = vmatprep.subr.mxu0 0.0
  %4910 = vmatpush1.msra.mxu0 %v4894
  %4911 = vmatprep.subr.mxu0 0.0
  %4912 = vmatpush1.msra.mxu0 %v4895
  %4913 = vmatprep.subr.mxu0 0.0
  %4914 = vmatpush1.msra.mxu0 %v4896
  %4915 = vmatprep.subr.mxu0 0.0
  %4916 = vmatpush1.msra.mxu0 0.0
  %4917 = vmatprep.subr.mxu0 0.0
  %4918 = vmatpush1.msra.mxu0 0.0
  %4919 = vmatprep.subr.mxu0 0.0
  %4920 = vmatpush1.msra.mxu0 0.0
  %4921 = vmatprep.subr.mxu0 0.0
  %4922 = vmatpush1.msra.mxu0 0.0
  %4923 = vmatprep.subr.mxu0 0.0
  %4924 = vmatpush1.msra.mxu0 0.0
  %4925 = vmatprep.subr.mxu0 0.0
  %4926 = vmatpush1.msra.mxu0 0.0
  %4927 = vmatprep.subr.mxu0 0.0
  %4928 = vmatpush1.msra.mxu0 0.0
  %4929 = vmatprep.subr.mxu0 0.0
  %4930 = vmatpush1.msra.mxu0 0.0
  %4931 = vmatprep.subr.mxu0 0.0
  %4932 = vmatpush1.msra.mxu0 0.0
  %4933 = vmatprep.subr.mxu0 0.0
  %4934 = vmatpush1.msra.mxu0 0.0
  %4935 = vmatprep.subr.mxu0 0.0
  %4936 = vmatpush1.msra.mxu0 0.0
  %4937 = vmatprep.subr.mxu0 0.0
  %4938 = vmatpush1.msra.mxu0 0.0
  %4939 = vmatprep.subr.mxu0 0.0
  %4940 = vmatpush1.msra.mxu0 0.0
  %4941 = vmatprep.subr.mxu0 0.0
  %4942 = vmatpush1.msra.mxu0 0.0
  %4943 = vmatprep.subr.mxu0 0.0
  %4944 = vmatpush1.msra.mxu0 0.0
  %4945 = vmatprep.subr.mxu0 0.0
  %4946 = vmatpush1.msra.mxu0 0.0
  %4947 = vmatprep.subr.mxu0 0.0
  %4948 = vmatpush1.msra.mxu0 0.0
  %4949 = vmatprep.subr.mxu0 0.0
  %4950 = vmatpush1.msra.mxu0 0.0
  %4951 = vmatprep.subr.mxu0 0.0
  %4952 = vmatpush1.msra.mxu0 0.0
  %4953 = vmatprep.subr.mxu0 0.0
  %4954 = vmatpush1.msra.mxu0 0.0
  %4955 = vmatprep.subr.mxu0 0.0
  %4956 = vmatpush1.msra.mxu0 0.0
  %4957 = vmatprep.subr.mxu0 0.0
  %4958 = vmatpush1.msra.mxu0 0.0
  %4959 = vmatprep.subr.mxu0 0.0
  %4960 = vmatpush1.msra.mxu0 0.0
  %4961 = vmatprep.subr.mxu0 0.0
  %4962 = vmatpush1.msra.mxu0 0.0
  %4963 = vmatprep.subr.mxu0 0.0
  %4964 = vmatpush1.msra.mxu0 0.0
  %4965 = vmatprep.subr.mxu0 0.0
  %4966 = vmatpush1.msra.mxu0 0.0
  %4967 = vmatprep.subr.mxu0 0.0
  %4968 = vmatpush1.msra.mxu0 0.0
  %4969 = vmatprep.subr.mxu0 0.0
  %4970 = vmatpush1.msra.mxu0 0.0
  %4971 = vmatprep.mubr.f32.mxu0 0.0
  %4972 = vmatmul.mubr.f32.gmra.mrb[0].mxu0 %v4905
  %v4973 = vpop.f32.mrb[0].mxu0
  %v4974 = vadd.f32 %v4902, %v4973
  %v4975 = vpop.f32.mrb[0].mxu0
  %4976 = vdwg.mxu0
  %s4977 = scalar_lea.vmem %s10, 18
  %4978 = vst [vmem:[%s4977] sm:$0x3] %v4974
  // Predicated region
  $region42: #{tag_decoder_forward.1} parent=0 // pred_check
    _
  $region43: #{tag_decoder_forward.1} parent=0 // pred_check_branch
    %4980 = sbr.rel (0) target = $region45
  $region44: #{tag_decoder_forward.1} parent=0 // pred_region
    _
  $region45: #{tag_decoder_forward.1} parent=0 // pred_fallthru
    _
  // Predicated region
  $region46: #{tag_decoder_forward.1} parent=0 // pred_check
    _
  $region47: #{tag_decoder_forward.1} parent=0 // pred_check_branch
    %4982 = sbr.rel (0) target = $region49
  $region48: #{tag_decoder_forward.1} parent=0 // pred_region
    _
  $region49: #{tag_decoder_forward.1} parent=0 // pred_fallthru
    _

</llo_original>
